<compile_context>
chip_gen: v7x
topology: tpu7x:2x2x1
jax: 0.10.0
libtpu: 0.0.40
codegen_flags: <defaults>
</compile_context>

<pallas_src>
import functools
import numpy as np
import jax
import jax.numpy as jnp
from jax.experimental import pallas as pl
from jax.experimental.pallas import tpu as pltpu


# ----------------------------------------------------------------------------
# The single fused kernel (no grid: whole problem fits in VMEM at these sizes)
# ----------------------------------------------------------------------------

def _gagnn_kernel(*refs, B, N, T, H, L):
    f32 = jnp.float32
    Bn = B * N

    n_fix = 20
    (xs_ref, loc_ref, urep_ref,
     megx_ref, mexg_ref, mdgx_ref, mdxg_ref,
     ggath_ref, gcg_ref, gscat_ref,
     ngath_ref, nscat_ref, eww_ref,
     wih_ref, whh_ref, blstm_ref,
     wloc_ref, bloc_ref, wei_ref, bei_ref) = refs[:n_fix]
    per = 4 * L
    idx = n_fix
    enc_grp = refs[idx:idx + per]; idx += per
    enc_glb = refs[idx:idx + per]; idx += per
    wxe_ref, bxe_ref = refs[idx:idx + 2]; idx += 2
    dec_grp = refs[idx:idx + per]; idx += per
    dec_glb = refs[idx:idx + per]; idx += per
    wp1_ref, bp1_ref, wp2_ref, bp2_ref = refs[idx:idx + 4]
    out_ref = refs[-1]

    def mm(a, b):
        return jnp.dot(a, b, preferred_element_type=f32)

    def relu(v):
        return jnp.maximum(v, 0.0)

    def gnn_stack(x, edge_attr, gath, scat, wrefs):
        # Fused NodeModel stack; single concatenated matmuls (wider K).
        for l in range(L):
            w1, b1, w2, b2 = (r[...] for r in wrefs[4 * l:4 * l + 4])
            xr = mm(gath, x)                                          # x[row] gather
            h = relu(mm(jnp.concatenate([xr, edge_attr], axis=1), w1) + b1)
            agg = mm(scat, h)                                         # scatter_mean
            x = relu(mm(jnp.concatenate([x, agg], axis=1), w2) + b2)
        return x

    # ---- fused LSTM encoder: gate-stacked weights (i,f,g,o along 4H columns);
    #      all input-gate activations precomputed with ONE matmul and kept as
    #      SSA values; ONE (Bn,H)@(H,4H) matmul per recurrent step.
    xg = mm(xs_ref[...], wih_ref[...]) + blstm_ref[...]               # (T*Bn, 4H)
    whh = whh_ref[...]
    h = jnp.zeros((Bn, H), f32)
    c = jnp.zeros((Bn, H), f32)
    # TODO(synk): for long seq_len switch to lax.fori_loop over a VMEM xg scratch.
    for t in range(T):
        pre = xg[t * Bn:(t + 1) * Bn, :] + mm(h, whh)
        ig = jax.nn.sigmoid(pre[:, 0:H])
        fg = jax.nn.sigmoid(pre[:, H:2 * H])
        gg = jnp.tanh(pre[:, 2 * H:3 * H])
        og = jax.nn.sigmoid(pre[:, 3 * H:4 * H])
        c = fg * c + ig * gg
        h = og * jnp.tanh(c)
    x_enc = h                                                         # (Bn, x_em)

    # ---- grouping: loc embed + block-diag softmax(w).T mixing
    loc_e = mm(loc_ref[...], wloc_ref[...]) + bloc_ref[...]
    x_loc = jnp.concatenate([x_enc, loc_e], axis=1)                   # (Bn, x_em+loc_em)
    g_x = mm(megx_ref[...], x_loc)                                    # (B*G, x_em+loc_em)

    # ---- group-edge inference over all ordered (i, j), i != j
    ggath = ggath_ref[...]
    gscat = gscat_ref[...]
    g_in = jnp.concatenate([mm(ggath, g_x), mm(gcg_ref[...], g_x), urep_ref[...]], axis=1)
    g_ew = relu(mm(g_in, wei_ref[...]) + bei_ref[...])                # (B*Ne, edge_h)

    # ---- encoder GNNs
    gx = gnn_stack(g_x, g_ew, ggath, gscat, enc_grp)                  # (B*G, gnn_h)
    new_x = mm(mexg_ref[...], gx)                                     # (Bn, gnn_h)
    ngath = ngath_ref[...]
    nscat = nscat_ref[...]
    eww = eww_ref[...]
    nx = gnn_stack(jnp.concatenate([x_enc, new_x], axis=1), eww, ngath, nscat, enc_glb)

    # ---- decoder (uses RAW w mixing, matching PyTorch DecoderModule)
    xd = mm(nx, wxe_ref[...]) + bxe_ref[...]                          # (Bn, x_em)
    gxd = gnn_stack(mm(mdgx_ref[...], xd), g_ew, ggath, gscat, dec_grp)
    nxd_mix = mm(mdxg_ref[...], gxd)
    nxd = gnn_stack(jnp.concatenate([xd, nxd_mix], axis=1), eww, ngath, nscat, dec_glb)

    # ---- prediction MLP; pred2 is zero-padded to 128 lanes -> lane-dense store
    hmid = relu(mm(nxd, wp1_ref[...]) + bp1_ref[...])
    out_ref[...] = mm(hmid, wp2_ref[...]) + bp2_ref[...]


# ----------------------------------------------------------------------------
# Host-side (NumPy) graph operator construction — static per graph
# ----------------------------------------------------------------------------

def build_graph_constants(edge_index_np, B, N, G):
    edge_index_np = np.asarray(edge_index_np)

    def one_hot(idx, n):
        m = np.zeros((idx.shape[0], n), np.float32)
        m[np.arange(idx.shape[0]), idx] = 1.0
        return m

    def scatter_mean_mat(idx, n):
        oh = one_hot(idx, n).T                       # (n, E)
        cnt = oh.sum(axis=1, keepdims=True)
        return (oh / np.maximum(cnt, 1.0)).astype(np.float32)

    # group graph: all ordered (i, j), i != j; batch-major edge ordering
    pairs = [(i, j) for i in range(G) for j in range(G) if i != j]
    rows = np.array([p[0] for p in pairs])
    cols = np.array([p[1] for p in pairs])
    offs_g = np.arange(B)[:, None] * G
    g_row = (offs_g + rows[None, :]).reshape(-1)
    g_col = (offs_g + cols[None, :]).reshape(-1)

    # global graph: batched copies of edge_index, batch-major edge ordering
    offs_n = np.arange(B)[:, None] * N
    e_row = (offs_n + edge_index_np[0][None, :]).reshape(-1)
    e_col = (offs_n + edge_index_np[1][None, :]).reshape(-1)

    # TODO(synk): these block-diagonal operators are O(B^2) at real sizes;
    #             use a per-batch grid + bf16 instead (v7x 64 MiB VMEM budget).
    return dict(
        g_gath=jnp.asarray(one_hot(g_row, B * G)),       # (B*Ne, B*G)
        g_cgath=jnp.asarray(one_hot(g_col, B * G)),      # (B*Ne, B*G)
        g_scat=jnp.asarray(scatter_mean_mat(g_col, B * G)),
        n_gath=jnp.asarray(one_hot(e_row, B * N)),       # (B*E0, B*N)
        n_scat=jnp.asarray(scatter_mean_mat(e_col, B * N)),
    )


# ----------------------------------------------------------------------------
# Forward wrapper (encoder='lstm', w_init='rand', mode != 'ag')
# ----------------------------------------------------------------------------

def gagnn_forward(params, x, graph, edge_w, loc, cfg):
    B, N, T, Feat = x.shape
    I, G = cfg['input_size'], cfg['group_num']
    x_em = cfg['x_em']
    pred_len = cfg['pred_len']
    L = cfg['gnn_layer']
    Bn = B * N
    Ne = G * (G - 1)
    E0 = edge_w.shape[0]

    # uu = cat(x[:,0,-1,-4:-3], x[:,0,-1,-2:]).long()  -> (month, weekday, hour)
    uu = jnp.concatenate([x[:, 0, -1, Feat - 4:Feat - 3],
                          x[:, 0, -1, Feat - 2:]], axis=-1).astype(jnp.int32)
    u_em = jnp.concatenate([params['u_embed1'][uu[:, 0]],
                            params['u_embed2'][uu[:, 1]],
                            params['u_embed3'][uu[:, 2]]], axis=-1)          # (B, 3*date_em)
    u_rep = jnp.repeat(u_em, Ne, axis=0)                                     # (B*Ne, 3*date_em)

    xs_tm = jnp.transpose(x[..., :I], (2, 0, 1, 3)).reshape(T * Bn, I)       # time-major
    loc_b = jnp.broadcast_to(loc[None], (B, N, 2)).reshape(Bn, 2)

    # batch-shared mixing as block-diagonal operators (encoder: softmax(w,dim=1);
    # decoder: raw w, matching PyTorch)
    w_raw = params['w']
    w_sm = jax.nn.softmax(w_raw, axis=1)
    eye_b = jnp.eye(B, dtype=jnp.float32)
    m_enc_gx = jnp.kron(eye_b, w_sm.T)        # (B*G, B*N)
    m_enc_xg = jnp.kron(eye_b, w_sm)          # (B*N, B*G)
    m_dec_gx = jnp.kron(eye_b, w_raw.T)
    m_dec_xg = jnp.kron(eye_b, w_raw)

    edge_w_flat = jnp.tile(edge_w.reshape(1, E0, 1), (B, 1, 1)).reshape(B * E0, 1)

    # pad pred2 to 128 output lanes -> the kernel's only HBM store is lane-dense
    padw = ((pred_len + 127) // 128) * 128
    w_p2, b_p2 = params['pred2']
    w_p2p = jnp.pad(w_p2, ((0, 0), (0, padw - pred_len)))
    b_p2p = jnp.pad(b_p2, ((0, 0), (0, padw - pred_len)))

    def nm_args(layers):
        out = []
        for lp in layers:
            out += [lp['w1'], lp['b1'], lp['w2'], lp['b2']]
        return out

    args = [xs_tm, loc_b, u_rep,
            m_enc_gx, m_enc_xg, m_dec_gx, m_dec_xg,
            graph['g_gath'], graph['g_cgath'], graph['g_scat'],
            graph['n_gath'], graph['n_scat'], edge_w_flat,
            params['lstm']['w_ih'], params['lstm']['w_hh'], params['lstm']['b'],
            params['loc_embed'][0], params['loc_embed'][1],
            params['edge_inf'][0], params['edge_inf'][1]]
    args += nm_args(params['group_gnn'])
    args += nm_args(params['global_gnn'])
    args += [params['decoder']['x_embed'][0], params['decoder']['x_embed'][1]]
    args += nm_args(params['decoder']['group_gnn'])
    args += nm_args(params['decoder']['global_gnn'])
    args += [params['pred1'][0], params['pred1'][1], w_p2p, b_p2p]

    out_pad = pl.pallas_call(
        functools.partial(_gagnn_kernel, B=B, N=N, T=T, H=x_em, L=L),
        out_shape=jax.ShapeDtypeStruct((Bn, padw), jnp.float32),
    )(*args)
    return out_pad[:, :pred_len].reshape(B, N, pred_len, 1)


# ----------------------------------------------------------------------------
# Deterministic synthetic parameter init
# ----------------------------------------------------------------------------

def init_linear(key, din, dout):
    k1, k2 = jax.random.split(key)
    s = 1.0 / np.sqrt(din)
    w = jax.random.uniform(k1, (din, dout), minval=-s, maxval=s, dtype=jnp.float32)
    b = jax.random.uniform(k2, (1, dout), minval=-s, maxval=s, dtype=jnp.float32)
    return w, b


def init_node_model(key, node_h, edge_h, gnn_h):
    k1, k2 = jax.random.split(key)
    w1, b1 = init_linear(k1, node_h + edge_h, gnn_h)
    w2, b2 = init_linear(k2, node_h + gnn_h, gnn_h)
    return {'w1': w1, 'b1': b1, 'w2': w2, 'b2': b2}


def init_params(key, cfg):
    I, H = cfg['input_size'], cfg['x_em']
    N, G = cfg['city_num'], cfg['group_num']
    edge_h, gnn_h, L = cfg['edge_h'], cfg['gnn_h'], cfg['gnn_layer']
    ks = list(jax.random.split(key, 40))
    it = iter(ks)
    nk = lambda: next(it)

    s = 1.0 / np.sqrt(H)
    p = {
        'lstm': {   # gate order (i,f,g,o) stacked along 4H columns; x @ W layout
            'w_ih': jax.random.uniform(nk(), (I, 4 * H), minval=-s, maxval=s, dtype=jnp.float32),
            'w_hh': jax.random.uniform(nk(), (H, 4 * H), minval=-s, maxval=s, dtype=jnp.float32),
            'b':    jax.random.uniform(nk(), (1, 4 * H), minval=-s, maxval=s, dtype=jnp.float32),
        },
        'w': jax.random.normal(nk(), (N, G), dtype=jnp.float32),                # w_init='rand'
        'loc_embed': init_linear(nk(), 2, cfg['loc_em']),
        'u_embed1': jax.random.normal(nk(), (13, cfg['date_em']), dtype=jnp.float32),
        'u_embed2': jax.random.normal(nk(), (7, cfg['date_em']), dtype=jnp.float32),
        'u_embed3': jax.random.normal(nk(), (24, cfg['date_em']), dtype=jnp.float32),
        'edge_inf': init_linear(nk(), 2 * cfg['x_em'] + 3 * cfg['date_em'] + 2 * cfg['loc_em'],
                                edge_h),
    }
    p['group_gnn'] = [init_node_model(nk(), cfg['x_em'] + cfg['loc_em'], edge_h, gnn_h)] + \
                     [init_node_model(nk(), gnn_h, edge_h, gnn_h) for _ in range(L - 1)]
    p['global_gnn'] = [init_node_model(nk(), cfg['x_em'] + gnn_h, 1, gnn_h)] + \
                      [init_node_model(nk(), gnn_h, 1, gnn_h) for _ in range(L - 1)]
    p['decoder'] = {
        'x_embed': init_linear(nk(), gnn_h, cfg['x_em']),
        'group_gnn': [init_node_model(nk(), cfg['x_em'], edge_h, gnn_h)] +
                     [init_node_model(nk(), gnn_h, edge_h, gnn_h) for _ in range(L - 1)],
        'global_gnn': [init_node_model(nk(), cfg['x_em'] + gnn_h, 1, gnn_h)] +
                      [init_node_model(nk(), gnn_h, 1, gnn_h) for _ in range(L - 1)],
    }
    p['pred1'] = init_linear(nk(), gnn_h, 16)
    p['pred2'] = init_linear(nk(), 16, cfg['pred_len'])
    return p


# ----------------------------------------------------------------------------
# Main
# ----------------------------------------------------------------------------

if __name__ == "__main__":
    cfg = dict(city_num=8, group_num=4, edge_h=16, gnn_h=32, gnn_layer=2,
               pred_len=3, seq_len=8, input_size=8, x_em=16, loc_em=4, date_em=4)
    B, N, T, I = 2, cfg['city_num'], cfg['seq_len'], cfg['input_size']
    E0 = 16

    key = jax.random.PRNGKey(0)
    k = jax.random.split(key, 9)
    x_feat = jax.random.normal(k[0], (B, N, T, I), dtype=jnp.float32)
    month = jax.random.randint(k[1], (B, N, T, 1), 1, 13).astype(jnp.float32)
    spare = jax.random.normal(k[2], (B, N, T, 1), dtype=jnp.float32)
    weekday = jax.random.randint(k[3], (B, N, T, 1), 0, 7).astype(jnp.float32)
    hour = jax.random.randint(k[4], (B, N, T, 1), 0, 24).astype(jnp.float32)
    x_in = jnp.concatenate([x_feat, month, spare, weekday, hour], axis=-1)   # (B,N,T,I+4)

    edge_index = jax.random.randint(k[5], (2, E0), 0, N).astype(jnp.int32)   # (2,E0)
    edge_w = jax.random.uniform(k[6], (E0,), dtype=jnp.float32)              # (E0,)
    loc = jax.random.normal(k[7], (N, 2), dtype=jnp.float32)                 # (N,2)

    params = init_params(k[8], cfg)

    # graph operators are static per graph: built once on host with NumPy
    graph = build_graph_constants(np.asarray(edge_index), B, N, cfg['group_num'])

    fwd = jax.jit(functools.partial(gagnn_forward, cfg=cfg))
    res = fwd(params, x_in, graph, edge_w, loc)
    res = jax.block_until_ready(res)

    assert res.shape == (B, N, cfg['pred_len'], 1), res.shape
    assert bool(jnp.all(jnp.isfinite(res)))
    print("KERNEL_OK")
</pallas_src>

<mosaic_0001>
module attributes {stable_mosaic.version = 11 : i64} {
  func.func @_gagnn_kernel(%arg0: memref<128x8xf32, #tpu.memory_space<vmem>>, %arg1: memref<16x2xf32, #tpu.memory_space<vmem>>, %arg2: memref<24x12xf32, #tpu.memory_space<vmem>>, %arg3: memref<8x16xf32, #tpu.memory_space<vmem>>, %arg4: memref<16x8xf32, #tpu.memory_space<vmem>>, %arg5: memref<8x16xf32, #tpu.memory_space<vmem>>, %arg6: memref<16x8xf32, #tpu.memory_space<vmem>>, %arg7: memref<24x8xf32, #tpu.memory_space<vmem>>, %arg8: memref<24x8xf32, #tpu.memory_space<vmem>>, %arg9: memref<8x24xf32, #tpu.memory_space<vmem>>, %arg10: memref<32x16xf32, #tpu.memory_space<vmem>>, %arg11: memref<16x32xf32, #tpu.memory_space<vmem>>, %arg12: memref<32x1xf32, #tpu.memory_space<vmem>>, %arg13: memref<8x64xf32, #tpu.memory_space<vmem>>, %arg14: memref<16x64xf32, #tpu.memory_space<vmem>>, %arg15: memref<1x64xf32, #tpu.memory_space<vmem>>, %arg16: memref<2x4xf32, #tpu.memory_space<vmem>>, %arg17: memref<1x4xf32, #tpu.memory_space<vmem>>, %arg18: memref<52x16xf32, #tpu.memory_space<vmem>>, %arg19: memref<1x16xf32, #tpu.memory_space<vmem>>, %arg20: memref<36x32xf32, #tpu.memory_space<vmem>>, %arg21: memref<1x32xf32, #tpu.memory_space<vmem>>, %arg22: memref<52x32xf32, #tpu.memory_space<vmem>>, %arg23: memref<1x32xf32, #tpu.memory_space<vmem>>, %arg24: memref<48x32xf32, #tpu.memory_space<vmem>>, %arg25: memref<1x32xf32, #tpu.memory_space<vmem>>, %arg26: memref<64x32xf32, #tpu.memory_space<vmem>>, %arg27: memref<1x32xf32, #tpu.memory_space<vmem>>, %arg28: memref<49x32xf32, #tpu.memory_space<vmem>>, %arg29: memref<1x32xf32, #tpu.memory_space<vmem>>, %arg30: memref<80x32xf32, #tpu.memory_space<vmem>>, %arg31: memref<1x32xf32, #tpu.memory_space<vmem>>, %arg32: memref<33x32xf32, #tpu.memory_space<vmem>>, %arg33: memref<1x32xf32, #tpu.memory_space<vmem>>, %arg34: memref<64x32xf32, #tpu.memory_space<vmem>>, %arg35: memref<1x32xf32, #tpu.memory_space<vmem>>, %arg36: memref<32x16xf32, #tpu.memory_space<vmem>>, %arg37: memref<1x16xf32, #tpu.memory_space<vmem>>, %arg38: memref<32x32xf32, #tpu.memory_space<vmem>>, %arg39: memref<1x32xf32, #tpu.memory_space<vmem>>, %arg40: memref<48x32xf32, #tpu.memory_space<vmem>>, %arg41: memref<1x32xf32, #tpu.memory_space<vmem>>, %arg42: memref<48x32xf32, #tpu.memory_space<vmem>>, %arg43: memref<1x32xf32, #tpu.memory_space<vmem>>, %arg44: memref<64x32xf32, #tpu.memory_space<vmem>>, %arg45: memref<1x32xf32, #tpu.memory_space<vmem>>, %arg46: memref<49x32xf32, #tpu.memory_space<vmem>>, %arg47: memref<1x32xf32, #tpu.memory_space<vmem>>, %arg48: memref<80x32xf32, #tpu.memory_space<vmem>>, %arg49: memref<1x32xf32, #tpu.memory_space<vmem>>, %arg50: memref<33x32xf32, #tpu.memory_space<vmem>>, %arg51: memref<1x32xf32, #tpu.memory_space<vmem>>, %arg52: memref<64x32xf32, #tpu.memory_space<vmem>>, %arg53: memref<1x32xf32, #tpu.memory_space<vmem>>, %arg54: memref<32x16xf32, #tpu.memory_space<vmem>>, %arg55: memref<1x16xf32, #tpu.memory_space<vmem>>, %arg56: memref<16x128xf32, #tpu.memory_space<vmem>>, %arg57: memref<1x128xf32, #tpu.memory_space<vmem>>, %arg58: memref<16x128xf32, #tpu.memory_space<vmem>>) attributes {dimension_semantics = [], scalar_prefetch = 0 : i64, scratch_operands = 0 : i64, tpu.core_type = #tpu.core_type<tc>} {
    %c0 = arith.constant 0 : index
    %c0_0 = arith.constant 0 : index
    %0 = vector.load %arg0[%c0, %c0_0] : memref<128x8xf32, #tpu.memory_space<vmem>>, vector<128x8xf32>
    %c0_1 = arith.constant 0 : index
    %c0_2 = arith.constant 0 : index
    %1 = vector.load %arg13[%c0_1, %c0_2] : memref<8x64xf32, #tpu.memory_space<vmem>>, vector<8x64xf32>
    %cst = arith.constant dense<0.000000e+00> : vector<128x64xf32>
    %2 = tpu.matmul %0, %1, %cst {dimension_numbers = #tpu.dot_dimension_numbers<[1], [0], [0], [1], [0, 0, 1, 1], [], []>} : vector<128x8xf32>, vector<8x64xf32>, vector<128x64xf32> -> vector<128x64xf32>
    %c0_3 = arith.constant 0 : index
    %c0_4 = arith.constant 0 : index
    %3 = vector.load %arg15[%c0_3, %c0_4] : memref<1x64xf32, #tpu.memory_space<vmem>>, vector<1x64xf32>
    %4 = vector.broadcast %3 : vector<1x64xf32> to vector<128x64xf32>
    %5 = arith.addf %2, %4 : vector<128x64xf32>
    %c0_5 = arith.constant 0 : index
    %c0_6 = arith.constant 0 : index
    %6 = vector.load %arg14[%c0_5, %c0_6] : memref<16x64xf32, #tpu.memory_space<vmem>>, vector<16x64xf32>
    %cst_7 = arith.constant 0.000000e+00 : f32
    %7 = vector.broadcast %cst_7 : f32 to vector<16x16xf32>
    %cst_8 = arith.constant 0.000000e+00 : f32
    %8 = vector.broadcast %cst_8 : f32 to vector<16x16xf32>
    %9 = vector.extract_strided_slice %5 {offsets = [0, 0], sizes = [16, 64], strides = [1, 1]} : vector<128x64xf32> to vector<16x64xf32>
    %cst_9 = arith.constant dense<0.000000e+00> : vector<16x64xf32>
    %10 = tpu.matmul %7, %6, %cst_9 {dimension_numbers = #tpu.dot_dimension_numbers<[1], [0], [0], [1], [0, 0, 1, 1], [], []>} : vector<16x16xf32>, vector<16x64xf32>, vector<16x64xf32> -> vector<16x64xf32>
    %11 = arith.addf %9, %10 : vector<16x64xf32>
    %12 = vector.extract_strided_slice %11 {offsets = [0, 0], sizes = [16, 16], strides = [1, 1]} : vector<16x64xf32> to vector<16x16xf32>
    %13 = arith.negf %12 : vector<16x16xf32>
    %14 = math.exp %13 : vector<16x16xf32>
    %cst_10 = arith.constant 1.000000e+00 : f32
    %15 = vector.broadcast %cst_10 : f32 to vector<16x16xf32>
    %16 = arith.addf %15, %14 : vector<16x16xf32>
    %17 = arith.divf %15, %16 : vector<16x16xf32>
    %18 = vector.extract_strided_slice %11 {offsets = [0, 16], sizes = [16, 16], strides = [1, 1]} : vector<16x64xf32> to vector<16x16xf32>
    %19 = arith.negf %18 : vector<16x16xf32>
    %20 = math.exp %19 : vector<16x16xf32>
    %cst_11 = arith.constant 1.000000e+00 : f32
    %21 = vector.broadcast %cst_11 : f32 to vector<16x16xf32>
    %22 = arith.addf %21, %20 : vector<16x16xf32>
    %23 = arith.divf %21, %22 : vector<16x16xf32>
    %24 = vector.extract_strided_slice %11 {offsets = [0, 32], sizes = [16, 16], strides = [1, 1]} : vector<16x64xf32> to vector<16x16xf32>
    %25 = math.tanh %24 : vector<16x16xf32>
    %26 = vector.extract_strided_slice %11 {offsets = [0, 48], sizes = [16, 16], strides = [1, 1]} : vector<16x64xf32> to vector<16x16xf32>
    %27 = arith.negf %26 : vector<16x16xf32>
    %28 = math.exp %27 : vector<16x16xf32>
    %cst_12 = arith.constant 1.000000e+00 : f32
    %29 = vector.broadcast %cst_12 : f32 to vector<16x16xf32>
    %30 = arith.addf %29, %28 : vector<16x16xf32>
    %31 = arith.divf %29, %30 : vector<16x16xf32>
    %32 = arith.mulf %23, %8 : vector<16x16xf32>
    %33 = arith.mulf %17, %25 : vector<16x16xf32>
    %34 = arith.addf %32, %33 : vector<16x16xf32>
    %35 = math.tanh %34 : vector<16x16xf32>
    %36 = arith.mulf %31, %35 : vector<16x16xf32>
    %37 = vector.extract_strided_slice %5 {offsets = [16, 0], sizes = [16, 64], strides = [1, 1]} : vector<128x64xf32> to vector<16x64xf32>
    %cst_13 = arith.constant dense<0.000000e+00> : vector<16x64xf32>
    %38 = tpu.matmul %36, %6, %cst_13 {dimension_numbers = #tpu.dot_dimension_numbers<[1], [0], [0], [1], [0, 0, 1, 1], [], []>} : vector<16x16xf32>, vector<16x64xf32>, vector<16x64xf32> -> vector<16x64xf32>
    %39 = arith.addf %37, %38 : vector<16x64xf32>
    %40 = vector.extract_strided_slice %39 {offsets = [0, 0], sizes = [16, 16], strides = [1, 1]} : vector<16x64xf32> to vector<16x16xf32>
    %41 = arith.negf %40 : vector<16x16xf32>
    %42 = math.exp %41 : vector<16x16xf32>
    %cst_14 = arith.constant 1.000000e+00 : f32
    %43 = vector.broadcast %cst_14 : f32 to vector<16x16xf32>
    %44 = arith.addf %43, %42 : vector<16x16xf32>
    %45 = arith.divf %43, %44 : vector<16x16xf32>
    %46 = vector.extract_strided_slice %39 {offsets = [0, 16], sizes = [16, 16], strides = [1, 1]} : vector<16x64xf32> to vector<16x16xf32>
    %47 = arith.negf %46 : vector<16x16xf32>
    %48 = math.exp %47 : vector<16x16xf32>
    %cst_15 = arith.constant 1.000000e+00 : f32
    %49 = vector.broadcast %cst_15 : f32 to vector<16x16xf32>
    %50 = arith.addf %49, %48 : vector<16x16xf32>
    %51 = arith.divf %49, %50 : vector<16x16xf32>
    %52 = vector.extract_strided_slice %39 {offsets = [0, 32], sizes = [16, 16], strides = [1, 1]} : vector<16x64xf32> to vector<16x16xf32>
    %53 = math.tanh %52 : vector<16x16xf32>
    %54 = vector.extract_strided_slice %39 {offsets = [0, 48], sizes = [16, 16], strides = [1, 1]} : vector<16x64xf32> to vector<16x16xf32>
    %55 = arith.negf %54 : vector<16x16xf32>
    %56 = math.exp %55 : vector<16x16xf32>
    %cst_16 = arith.constant 1.000000e+00 : f32
    %57 = vector.broadcast %cst_16 : f32 to vector<16x16xf32>
    %58 = arith.addf %57, %56 : vector<16x16xf32>
    %59 = arith.divf %57, %58 : vector<16x16xf32>
    %60 = arith.mulf %51, %34 : vector<16x16xf32>
    %61 = arith.mulf %45, %53 : vector<16x16xf32>
    %62 = arith.addf %60, %61 : vector<16x16xf32>
    %63 = math.tanh %62 : vector<16x16xf32>
    %64 = arith.mulf %59, %63 : vector<16x16xf32>
    %65 = vector.extract_strided_slice %5 {offsets = [32, 0], sizes = [16, 64], strides = [1, 1]} : vector<128x64xf32> to vector<16x64xf32>
    %cst_17 = arith.constant dense<0.000000e+00> : vector<16x64xf32>
    %66 = tpu.matmul %64, %6, %cst_17 {dimension_numbers = #tpu.dot_dimension_numbers<[1], [0], [0], [1], [0, 0, 1, 1], [], []>} : vector<16x16xf32>, vector<16x64xf32>, vector<16x64xf32> -> vector<16x64xf32>
    %67 = arith.addf %65, %66 : vector<16x64xf32>
    %68 = vector.extract_strided_slice %67 {offsets = [0, 0], sizes = [16, 16], strides = [1, 1]} : vector<16x64xf32> to vector<16x16xf32>
    %69 = arith.negf %68 : vector<16x16xf32>
    %70 = math.exp %69 : vector<16x16xf32>
    %cst_18 = arith.constant 1.000000e+00 : f32
    %71 = vector.broadcast %cst_18 : f32 to vector<16x16xf32>
    %72 = arith.addf %71, %70 : vector<16x16xf32>
    %73 = arith.divf %71, %72 : vector<16x16xf32>
    %74 = vector.extract_strided_slice %67 {offsets = [0, 16], sizes = [16, 16], strides = [1, 1]} : vector<16x64xf32> to vector<16x16xf32>
    %75 = arith.negf %74 : vector<16x16xf32>
    %76 = math.exp %75 : vector<16x16xf32>
    %cst_19 = arith.constant 1.000000e+00 : f32
    %77 = vector.broadcast %cst_19 : f32 to vector<16x16xf32>
    %78 = arith.addf %77, %76 : vector<16x16xf32>
    %79 = arith.divf %77, %78 : vector<16x16xf32>
    %80 = vector.extract_strided_slice %67 {offsets = [0, 32], sizes = [16, 16], strides = [1, 1]} : vector<16x64xf32> to vector<16x16xf32>
    %81 = math.tanh %80 : vector<16x16xf32>
    %82 = vector.extract_strided_slice %67 {offsets = [0, 48], sizes = [16, 16], strides = [1, 1]} : vector<16x64xf32> to vector<16x16xf32>
    %83 = arith.negf %82 : vector<16x16xf32>
    %84 = math.exp %83 : vector<16x16xf32>
    %cst_20 = arith.constant 1.000000e+00 : f32
    %85 = vector.broadcast %cst_20 : f32 to vector<16x16xf32>
    %86 = arith.addf %85, %84 : vector<16x16xf32>
    %87 = arith.divf %85, %86 : vector<16x16xf32>
    %88 = arith.mulf %79, %62 : vector<16x16xf32>
    %89 = arith.mulf %73, %81 : vector<16x16xf32>
    %90 = arith.addf %88, %89 : vector<16x16xf32>
    %91 = math.tanh %90 : vector<16x16xf32>
    %92 = arith.mulf %87, %91 : vector<16x16xf32>
    %93 = vector.extract_strided_slice %5 {offsets = [48, 0], sizes = [16, 64], strides = [1, 1]} : vector<128x64xf32> to vector<16x64xf32>
    %cst_21 = arith.constant dense<0.000000e+00> : vector<16x64xf32>
    %94 = tpu.matmul %92, %6, %cst_21 {dimension_numbers = #tpu.dot_dimension_numbers<[1], [0], [0], [1], [0, 0, 1, 1], [], []>} : vector<16x16xf32>, vector<16x64xf32>, vector<16x64xf32> -> vector<16x64xf32>
    %95 = arith.addf %93, %94 : vector<16x64xf32>
    %96 = vector.extract_strided_slice %95 {offsets = [0, 0], sizes = [16, 16], strides = [1, 1]} : vector<16x64xf32> to vector<16x16xf32>
    %97 = arith.negf %96 : vector<16x16xf32>
    %98 = math.exp %97 : vector<16x16xf32>
    %cst_22 = arith.constant 1.000000e+00 : f32
    %99 = vector.broadcast %cst_22 : f32 to vector<16x16xf32>
    %100 = arith.addf %99, %98 : vector<16x16xf32>
    %101 = arith.divf %99, %100 : vector<16x16xf32>
    %102 = vector.extract_strided_slice %95 {offsets = [0, 16], sizes = [16, 16], strides = [1, 1]} : vector<16x64xf32> to vector<16x16xf32>
    %103 = arith.negf %102 : vector<16x16xf32>
    %104 = math.exp %103 : vector<16x16xf32>
    %cst_23 = arith.constant 1.000000e+00 : f32
    %105 = vector.broadcast %cst_23 : f32 to vector<16x16xf32>
    %106 = arith.addf %105, %104 : vector<16x16xf32>
    %107 = arith.divf %105, %106 : vector<16x16xf32>
    %108 = vector.extract_strided_slice %95 {offsets = [0, 32], sizes = [16, 16], strides = [1, 1]} : vector<16x64xf32> to vector<16x16xf32>
    %109 = math.tanh %108 : vector<16x16xf32>
    %110 = vector.extract_strided_slice %95 {offsets = [0, 48], sizes = [16, 16], strides = [1, 1]} : vector<16x64xf32> to vector<16x16xf32>
    %111 = arith.negf %110 : vector<16x16xf32>
    %112 = math.exp %111 : vector<16x16xf32>
    %cst_24 = arith.constant 1.000000e+00 : f32
    %113 = vector.broadcast %cst_24 : f32 to vector<16x16xf32>
    %114 = arith.addf %113, %112 : vector<16x16xf32>
    %115 = arith.divf %113, %114 : vector<16x16xf32>
    %116 = arith.mulf %107, %90 : vector<16x16xf32>
    %117 = arith.mulf %101, %109 : vector<16x16xf32>
    %118 = arith.addf %116, %117 : vector<16x16xf32>
    %119 = math.tanh %118 : vector<16x16xf32>
    %120 = arith.mulf %115, %119 : vector<16x16xf32>
    %121 = vector.extract_strided_slice %5 {offsets = [64, 0], sizes = [16, 64], strides = [1, 1]} : vector<128x64xf32> to vector<16x64xf32>
    %cst_25 = arith.constant dense<0.000000e+00> : vector<16x64xf32>
    %122 = tpu.matmul %120, %6, %cst_25 {dimension_numbers = #tpu.dot_dimension_numbers<[1], [0], [0], [1], [0, 0, 1, 1], [], []>} : vector<16x16xf32>, vector<16x64xf32>, vector<16x64xf32> -> vector<16x64xf32>
    %123 = arith.addf %121, %122 : vector<16x64xf32>
    %124 = vector.extract_strided_slice %123 {offsets = [0, 0], sizes = [16, 16], strides = [1, 1]} : vector<16x64xf32> to vector<16x16xf32>
    %125 = arith.negf %124 : vector<16x16xf32>
    %126 = math.exp %125 : vector<16x16xf32>
    %cst_26 = arith.constant 1.000000e+00 : f32
    %127 = vector.broadcast %cst_26 : f32 to vector<16x16xf32>
    %128 = arith.addf %127, %126 : vector<16x16xf32>
    %129 = arith.divf %127, %128 : vector<16x16xf32>
    %130 = vector.extract_strided_slice %123 {offsets = [0, 16], sizes = [16, 16], strides = [1, 1]} : vector<16x64xf32> to vector<16x16xf32>
    %131 = arith.negf %130 : vector<16x16xf32>
    %132 = math.exp %131 : vector<16x16xf32>
    %cst_27 = arith.constant 1.000000e+00 : f32
    %133 = vector.broadcast %cst_27 : f32 to vector<16x16xf32>
    %134 = arith.addf %133, %132 : vector<16x16xf32>
    %135 = arith.divf %133, %134 : vector<16x16xf32>
    %136 = vector.extract_strided_slice %123 {offsets = [0, 32], sizes = [16, 16], strides = [1, 1]} : vector<16x64xf32> to vector<16x16xf32>
    %137 = math.tanh %136 : vector<16x16xf32>
    %138 = vector.extract_strided_slice %123 {offsets = [0, 48], sizes = [16, 16], strides = [1, 1]} : vector<16x64xf32> to vector<16x16xf32>
    %139 = arith.negf %138 : vector<16x16xf32>
    %140 = math.exp %139 : vector<16x16xf32>
    %cst_28 = arith.constant 1.000000e+00 : f32
    %141 = vector.broadcast %cst_28 : f32 to vector<16x16xf32>
    %142 = arith.addf %141, %140 : vector<16x16xf32>
    %143 = arith.divf %141, %142 : vector<16x16xf32>
    %144 = arith.mulf %135, %118 : vector<16x16xf32>
    %145 = arith.mulf %129, %137 : vector<16x16xf32>
    %146 = arith.addf %144, %145 : vector<16x16xf32>
    %147 = math.tanh %146 : vector<16x16xf32>
    %148 = arith.mulf %143, %147 : vector<16x16xf32>
    %149 = vector.extract_strided_slice %5 {offsets = [80, 0], sizes = [16, 64], strides = [1, 1]} : vector<128x64xf32> to vector<16x64xf32>
    %cst_29 = arith.constant dense<0.000000e+00> : vector<16x64xf32>
    %150 = tpu.matmul %148, %6, %cst_29 {dimension_numbers = #tpu.dot_dimension_numbers<[1], [0], [0], [1], [0, 0, 1, 1], [], []>} : vector<16x16xf32>, vector<16x64xf32>, vector<16x64xf32> -> vector<16x64xf32>
    %151 = arith.addf %149, %150 : vector<16x64xf32>
    %152 = vector.extract_strided_slice %151 {offsets = [0, 0], sizes = [16, 16], strides = [1, 1]} : vector<16x64xf32> to vector<16x16xf32>
    %153 = arith.negf %152 : vector<16x16xf32>
    %154 = math.exp %153 : vector<16x16xf32>
    %cst_30 = arith.constant 1.000000e+00 : f32
    %155 = vector.broadcast %cst_30 : f32 to vector<16x16xf32>
    %156 = arith.addf %155, %154 : vector<16x16xf32>
    %157 = arith.divf %155, %156 : vector<16x16xf32>
    %158 = vector.extract_strided_slice %151 {offsets = [0, 16], sizes = [16, 16], strides = [1, 1]} : vector<16x64xf32> to vector<16x16xf32>
    %159 = arith.negf %158 : vector<16x16xf32>
    %160 = math.exp %159 : vector<16x16xf32>
    %cst_31 = arith.constant 1.000000e+00 : f32
    %161 = vector.broadcast %cst_31 : f32 to vector<16x16xf32>
    %162 = arith.addf %161, %160 : vector<16x16xf32>
    %163 = arith.divf %161, %162 : vector<16x16xf32>
    %164 = vector.extract_strided_slice %151 {offsets = [0, 32], sizes = [16, 16], strides = [1, 1]} : vector<16x64xf32> to vector<16x16xf32>
    %165 = math.tanh %164 : vector<16x16xf32>
    %166 = vector.extract_strided_slice %151 {offsets = [0, 48], sizes = [16, 16], strides = [1, 1]} : vector<16x64xf32> to vector<16x16xf32>
    %167 = arith.negf %166 : vector<16x16xf32>
    %168 = math.exp %167 : vector<16x16xf32>
    %cst_32 = arith.constant 1.000000e+00 : f32
    %169 = vector.broadcast %cst_32 : f32 to vector<16x16xf32>
    %170 = arith.addf %169, %168 : vector<16x16xf32>
    %171 = arith.divf %169, %170 : vector<16x16xf32>
    %172 = arith.mulf %163, %146 : vector<16x16xf32>
    %173 = arith.mulf %157, %165 : vector<16x16xf32>
    %174 = arith.addf %172, %173 : vector<16x16xf32>
    %175 = math.tanh %174 : vector<16x16xf32>
    %176 = arith.mulf %171, %175 : vector<16x16xf32>
    %177 = vector.extract_strided_slice %5 {offsets = [96, 0], sizes = [16, 64], strides = [1, 1]} : vector<128x64xf32> to vector<16x64xf32>
    %cst_33 = arith.constant dense<0.000000e+00> : vector<16x64xf32>
    %178 = tpu.matmul %176, %6, %cst_33 {dimension_numbers = #tpu.dot_dimension_numbers<[1], [0], [0], [1], [0, 0, 1, 1], [], []>} : vector<16x16xf32>, vector<16x64xf32>, vector<16x64xf32> -> vector<16x64xf32>
    %179 = arith.addf %177, %178 : vector<16x64xf32>
    %180 = vector.extract_strided_slice %179 {offsets = [0, 0], sizes = [16, 16], strides = [1, 1]} : vector<16x64xf32> to vector<16x16xf32>
    %181 = arith.negf %180 : vector<16x16xf32>
    %182 = math.exp %181 : vector<16x16xf32>
    %cst_34 = arith.constant 1.000000e+00 : f32
    %183 = vector.broadcast %cst_34 : f32 to vector<16x16xf32>
    %184 = arith.addf %183, %182 : vector<16x16xf32>
    %185 = arith.divf %183, %184 : vector<16x16xf32>
    %186 = vector.extract_strided_slice %179 {offsets = [0, 16], sizes = [16, 16], strides = [1, 1]} : vector<16x64xf32> to vector<16x16xf32>
    %187 = arith.negf %186 : vector<16x16xf32>
    %188 = math.exp %187 : vector<16x16xf32>
    %cst_35 = arith.constant 1.000000e+00 : f32
    %189 = vector.broadcast %cst_35 : f32 to vector<16x16xf32>
    %190 = arith.addf %189, %188 : vector<16x16xf32>
    %191 = arith.divf %189, %190 : vector<16x16xf32>
    %192 = vector.extract_strided_slice %179 {offsets = [0, 32], sizes = [16, 16], strides = [1, 1]} : vector<16x64xf32> to vector<16x16xf32>
    %193 = math.tanh %192 : vector<16x16xf32>
    %194 = vector.extract_strided_slice %179 {offsets = [0, 48], sizes = [16, 16], strides = [1, 1]} : vector<16x64xf32> to vector<16x16xf32>
    %195 = arith.negf %194 : vector<16x16xf32>
    %196 = math.exp %195 : vector<16x16xf32>
    %cst_36 = arith.constant 1.000000e+00 : f32
    %197 = vector.broadcast %cst_36 : f32 to vector<16x16xf32>
    %198 = arith.addf %197, %196 : vector<16x16xf32>
    %199 = arith.divf %197, %198 : vector<16x16xf32>
    %200 = arith.mulf %191, %174 : vector<16x16xf32>
    %201 = arith.mulf %185, %193 : vector<16x16xf32>
    %202 = arith.addf %200, %201 : vector<16x16xf32>
    %203 = math.tanh %202 : vector<16x16xf32>
    %204 = arith.mulf %199, %203 : vector<16x16xf32>
    %205 = vector.extract_strided_slice %5 {offsets = [112, 0], sizes = [16, 64], strides = [1, 1]} : vector<128x64xf32> to vector<16x64xf32>
    %cst_37 = arith.constant dense<0.000000e+00> : vector<16x64xf32>
    %206 = tpu.matmul %204, %6, %cst_37 {dimension_numbers = #tpu.dot_dimension_numbers<[1], [0], [0], [1], [0, 0, 1, 1], [], []>} : vector<16x16xf32>, vector<16x64xf32>, vector<16x64xf32> -> vector<16x64xf32>
    %207 = arith.addf %205, %206 : vector<16x64xf32>
    %208 = vector.extract_strided_slice %207 {offsets = [0, 0], sizes = [16, 16], strides = [1, 1]} : vector<16x64xf32> to vector<16x16xf32>
    %209 = arith.negf %208 : vector<16x16xf32>
    %210 = math.exp %209 : vector<16x16xf32>
    %cst_38 = arith.constant 1.000000e+00 : f32
    %211 = vector.broadcast %cst_38 : f32 to vector<16x16xf32>
    %212 = arith.addf %211, %210 : vector<16x16xf32>
    %213 = arith.divf %211, %212 : vector<16x16xf32>
    %214 = vector.extract_strided_slice %207 {offsets = [0, 16], sizes = [16, 16], strides = [1, 1]} : vector<16x64xf32> to vector<16x16xf32>
    %215 = arith.negf %214 : vector<16x16xf32>
    %216 = math.exp %215 : vector<16x16xf32>
    %cst_39 = arith.constant 1.000000e+00 : f32
    %217 = vector.broadcast %cst_39 : f32 to vector<16x16xf32>
    %218 = arith.addf %217, %216 : vector<16x16xf32>
    %219 = arith.divf %217, %218 : vector<16x16xf32>
    %220 = vector.extract_strided_slice %207 {offsets = [0, 32], sizes = [16, 16], strides = [1, 1]} : vector<16x64xf32> to vector<16x16xf32>
    %221 = math.tanh %220 : vector<16x16xf32>
    %222 = vector.extract_strided_slice %207 {offsets = [0, 48], sizes = [16, 16], strides = [1, 1]} : vector<16x64xf32> to vector<16x16xf32>
    %223 = arith.negf %222 : vector<16x16xf32>
    %224 = math.exp %223 : vector<16x16xf32>
    %cst_40 = arith.constant 1.000000e+00 : f32
    %225 = vector.broadcast %cst_40 : f32 to vector<16x16xf32>
    %226 = arith.addf %225, %224 : vector<16x16xf32>
    %227 = arith.divf %225, %226 : vector<16x16xf32>
    %228 = arith.mulf %219, %202 : vector<16x16xf32>
    %229 = arith.mulf %213, %221 : vector<16x16xf32>
    %230 = arith.addf %228, %229 : vector<16x16xf32>
    %231 = math.tanh %230 : vector<16x16xf32>
    %232 = arith.mulf %227, %231 : vector<16x16xf32>
    %c0_41 = arith.constant 0 : index
    %c0_42 = arith.constant 0 : index
    %233 = vector.load %arg1[%c0_41, %c0_42] : memref<16x2xf32, #tpu.memory_space<vmem>>, vector<16x2xf32>
    %c0_43 = arith.constant 0 : index
    %c0_44 = arith.constant 0 : index
    %234 = vector.load %arg16[%c0_43, %c0_44] : memref<2x4xf32, #tpu.memory_space<vmem>>, vector<2x4xf32>
    %cst_45 = arith.constant dense<0.000000e+00> : vector<16x4xf32>
    %235 = tpu.matmul %233, %234, %cst_45 {dimension_numbers = #tpu.dot_dimension_numbers<[1], [0], [0], [1], [0, 0, 1, 1], [], []>} : vector<16x2xf32>, vector<2x4xf32>, vector<16x4xf32> -> vector<16x4xf32>
    %c0_46 = arith.constant 0 : index
    %c0_47 = arith.constant 0 : index
    %236 = vector.load %arg17[%c0_46, %c0_47] : memref<1x4xf32, #tpu.memory_space<vmem>>, vector<1x4xf32>
    %237 = vector.broadcast %236 : vector<1x4xf32> to vector<16x4xf32>
    %238 = arith.addf %235, %237 : vector<16x4xf32>
    %239 = tpu.concatenate %232, %238 in 1 : vector<16x16xf32>, vector<16x4xf32> -> vector<16x20xf32>
    %c0_48 = arith.constant 0 : index
    %c0_49 = arith.constant 0 : index
    %240 = vector.load %arg3[%c0_48, %c0_49] : memref<8x16xf32, #tpu.memory_space<vmem>>, vector<8x16xf32>
    %cst_50 = arith.constant dense<0.000000e+00> : vector<8x20xf32>
    %241 = tpu.matmul %240, %239, %cst_50 {dimension_numbers = #tpu.dot_dimension_numbers<[1], [0], [0], [1], [0, 0, 1, 1], [], []>} : vector<8x16xf32>, vector<16x20xf32>, vector<8x20xf32> -> vector<8x20xf32>
    %c0_51 = arith.constant 0 : index
    %c0_52 = arith.constant 0 : index
    %242 = vector.load %arg7[%c0_51, %c0_52] : memref<24x8xf32, #tpu.memory_space<vmem>>, vector<24x8xf32>
    %c0_53 = arith.constant 0 : index
    %c0_54 = arith.constant 0 : index
    %243 = vector.load %arg9[%c0_53, %c0_54] : memref<8x24xf32, #tpu.memory_space<vmem>>, vector<8x24xf32>
    %cst_55 = arith.constant dense<0.000000e+00> : vector<24x20xf32>
    %244 = tpu.matmul %242, %241, %cst_55 {dimension_numbers = #tpu.dot_dimension_numbers<[1], [0], [0], [1], [0, 0, 1, 1], [], []>} : vector<24x8xf32>, vector<8x20xf32>, vector<24x20xf32> -> vector<24x20xf32>
    %c0_56 = arith.constant 0 : index
    %c0_57 = arith.constant 0 : index
    %245 = vector.load %arg8[%c0_56, %c0_57] : memref<24x8xf32, #tpu.memory_space<vmem>>, vector<24x8xf32>
    %cst_58 = arith.constant dense<0.000000e+00> : vector<24x20xf32>
    %246 = tpu.matmul %245, %241, %cst_58 {dimension_numbers = #tpu.dot_dimension_numbers<[1], [0], [0], [1], [0, 0, 1, 1], [], []>} : vector<24x8xf32>, vector<8x20xf32>, vector<24x20xf32> -> vector<24x20xf32>
    %c0_59 = arith.constant 0 : index
    %c0_60 = arith.constant 0 : index
    %247 = vector.load %arg2[%c0_59, %c0_60] : memref<24x12xf32, #tpu.memory_space<vmem>>, vector<24x12xf32>
    %248 = tpu.concatenate %244, %246, %247 in 1 : vector<24x20xf32>, vector<24x20xf32>, vector<24x12xf32> -> vector<24x52xf32>
    %c0_61 = arith.constant 0 : index
    %c0_62 = arith.constant 0 : index
    %249 = vector.load %arg18[%c0_61, %c0_62] : memref<52x16xf32, #tpu.memory_space<vmem>>, vector<52x16xf32>
    %cst_63 = arith.constant dense<0.000000e+00> : vector<24x16xf32>
    %250 = tpu.matmul %248, %249, %cst_63 {dimension_numbers = #tpu.dot_dimension_numbers<[1], [0], [0], [1], [0, 0, 1, 1], [], []>} : vector<24x52xf32>, vector<52x16xf32>, vector<24x16xf32> -> vector<24x16xf32>
    %c0_64 = arith.constant 0 : index
    %c0_65 = arith.constant 0 : index
    %251 = vector.load %arg19[%c0_64, %c0_65] : memref<1x16xf32, #tpu.memory_space<vmem>>, vector<1x16xf32>
    %252 = vector.broadcast %251 : vector<1x16xf32> to vector<24x16xf32>
    %253 = arith.addf %250, %252 : vector<24x16xf32>
    %cst_66 = arith.constant 0.000000e+00 : f32
    %254 = vector.broadcast %cst_66 : f32 to vector<24x16xf32>
    %255 = arith.maximumf %253, %254 : vector<24x16xf32>
    %c0_67 = arith.constant 0 : index
    %c0_68 = arith.constant 0 : index
    %256 = vector.load %arg20[%c0_67, %c0_68] : memref<36x32xf32, #tpu.memory_space<vmem>>, vector<36x32xf32>
    %c0_69 = arith.constant 0 : index
    %c0_70 = arith.constant 0 : index
    %257 = vector.load %arg21[%c0_69, %c0_70] : memref<1x32xf32, #tpu.memory_space<vmem>>, vector<1x32xf32>
    %c0_71 = arith.constant 0 : index
    %c0_72 = arith.constant 0 : index
    %258 = vector.load %arg22[%c0_71, %c0_72] : memref<52x32xf32, #tpu.memory_space<vmem>>, vector<52x32xf32>
    %c0_73 = arith.constant 0 : index
    %c0_74 = arith.constant 0 : index
    %259 = vector.load %arg23[%c0_73, %c0_74] : memref<1x32xf32, #tpu.memory_space<vmem>>, vector<1x32xf32>
    %cst_75 = arith.constant dense<0.000000e+00> : vector<24x20xf32>
    %260 = tpu.matmul %242, %241, %cst_75 {dimension_numbers = #tpu.dot_dimension_numbers<[1], [0], [0], [1], [0, 0, 1, 1], [], []>} : vector<24x8xf32>, vector<8x20xf32>, vector<24x20xf32> -> vector<24x20xf32>
    %261 = tpu.concatenate %260, %255 in 1 : vector<24x20xf32>, vector<24x16xf32> -> vector<24x36xf32>
    %cst_76 = arith.constant dense<0.000000e+00> : vector<24x32xf32>
    %262 = tpu.matmul %261, %256, %cst_76 {dimension_numbers = #tpu.dot_dimension_numbers<[1], [0], [0], [1], [0, 0, 1, 1], [], []>} : vector<24x36xf32>, vector<36x32xf32>, vector<24x32xf32> -> vector<24x32xf32>
    %263 = vector.broadcast %257 : vector<1x32xf32> to vector<24x32xf32>
    %264 = arith.addf %262, %263 : vector<24x32xf32>
    %cst_77 = arith.constant 0.000000e+00 : f32
    %265 = vector.broadcast %cst_77 : f32 to vector<24x32xf32>
    %266 = arith.maximumf %264, %265 : vector<24x32xf32>
    %cst_78 = arith.constant dense<0.000000e+00> : vector<8x32xf32>
    %267 = tpu.matmul %243, %266, %cst_78 {dimension_numbers = #tpu.dot_dimension_numbers<[1], [0], [0], [1], [0, 0, 1, 1], [], []>} : vector<8x24xf32>, vector<24x32xf32>, vector<8x32xf32> -> vector<8x32xf32>
    %268 = tpu.concatenate %241, %267 in 1 : vector<8x20xf32>, vector<8x32xf32> -> vector<8x52xf32>
    %cst_79 = arith.constant dense<0.000000e+00> : vector<8x32xf32>
    %269 = tpu.matmul %268, %258, %cst_79 {dimension_numbers = #tpu.dot_dimension_numbers<[1], [0], [0], [1], [0, 0, 1, 1], [], []>} : vector<8x52xf32>, vector<52x32xf32>, vector<8x32xf32> -> vector<8x32xf32>
    %270 = vector.broadcast %259 : vector<1x32xf32> to vector<8x32xf32>
    %271 = arith.addf %269, %270 : vector<8x32xf32>
    %cst_80 = arith.constant 0.000000e+00 : f32
    %272 = vector.broadcast %cst_80 : f32 to vector<8x32xf32>
    %273 = arith.maximumf %271, %272 : vector<8x32xf32>
    %c0_81 = arith.constant 0 : index
    %c0_82 = arith.constant 0 : index
    %274 = vector.load %arg24[%c0_81, %c0_82] : memref<48x32xf32, #tpu.memory_space<vmem>>, vector<48x32xf32>
    %c0_83 = arith.constant 0 : index
    %c0_84 = arith.constant 0 : index
    %275 = vector.load %arg25[%c0_83, %c0_84] : memref<1x32xf32, #tpu.memory_space<vmem>>, vector<1x32xf32>
    %c0_85 = arith.constant 0 : index
    %c0_86 = arith.constant 0 : index
    %276 = vector.load %arg26[%c0_85, %c0_86] : memref<64x32xf32, #tpu.memory_space<vmem>>, vector<64x32xf32>
    %c0_87 = arith.constant 0 : index
    %c0_88 = arith.constant 0 : index
    %277 = vector.load %arg27[%c0_87, %c0_88] : memref<1x32xf32, #tpu.memory_space<vmem>>, vector<1x32xf32>
    %cst_89 = arith.constant dense<0.000000e+00> : vector<24x32xf32>
    %278 = tpu.matmul %242, %273, %cst_89 {dimension_numbers = #tpu.dot_dimension_numbers<[1], [0], [0], [1], [0, 0, 1, 1], [], []>} : vector<24x8xf32>, vector<8x32xf32>, vector<24x32xf32> -> vector<24x32xf32>
    %279 = tpu.concatenate %278, %255 in 1 : vector<24x32xf32>, vector<24x16xf32> -> vector<24x48xf32>
    %cst_90 = arith.constant dense<0.000000e+00> : vector<24x32xf32>
    %280 = tpu.matmul %279, %274, %cst_90 {dimension_numbers = #tpu.dot_dimension_numbers<[1], [0], [0], [1], [0, 0, 1, 1], [], []>} : vector<24x48xf32>, vector<48x32xf32>, vector<24x32xf32> -> vector<24x32xf32>
    %281 = vector.broadcast %275 : vector<1x32xf32> to vector<24x32xf32>
    %282 = arith.addf %280, %281 : vector<24x32xf32>
    %cst_91 = arith.constant 0.000000e+00 : f32
    %283 = vector.broadcast %cst_91 : f32 to vector<24x32xf32>
    %284 = arith.maximumf %282, %283 : vector<24x32xf32>
    %cst_92 = arith.constant dense<0.000000e+00> : vector<8x32xf32>
    %285 = tpu.matmul %243, %284, %cst_92 {dimension_numbers = #tpu.dot_dimension_numbers<[1], [0], [0], [1], [0, 0, 1, 1], [], []>} : vector<8x24xf32>, vector<24x32xf32>, vector<8x32xf32> -> vector<8x32xf32>
    %286 = tpu.concatenate %273, %285 in 1 : vector<8x32xf32>, vector<8x32xf32> -> vector<8x64xf32>
    %cst_93 = arith.constant dense<0.000000e+00> : vector<8x32xf32>
    %287 = tpu.matmul %286, %276, %cst_93 {dimension_numbers = #tpu.dot_dimension_numbers<[1], [0], [0], [1], [0, 0, 1, 1], [], []>} : vector<8x64xf32>, vector<64x32xf32>, vector<8x32xf32> -> vector<8x32xf32>
    %288 = vector.broadcast %277 : vector<1x32xf32> to vector<8x32xf32>
    %289 = arith.addf %287, %288 : vector<8x32xf32>
    %cst_94 = arith.constant 0.000000e+00 : f32
    %290 = vector.broadcast %cst_94 : f32 to vector<8x32xf32>
    %291 = arith.maximumf %289, %290 : vector<8x32xf32>
    %c0_95 = arith.constant 0 : index
    %c0_96 = arith.constant 0 : index
    %292 = vector.load %arg4[%c0_95, %c0_96] : memref<16x8xf32, #tpu.memory_space<vmem>>, vector<16x8xf32>
    %cst_97 = arith.constant dense<0.000000e+00> : vector<16x32xf32>
    %293 = tpu.matmul %292, %291, %cst_97 {dimension_numbers = #tpu.dot_dimension_numbers<[1], [0], [0], [1], [0, 0, 1, 1], [], []>} : vector<16x8xf32>, vector<8x32xf32>, vector<16x32xf32> -> vector<16x32xf32>
    %c0_98 = arith.constant 0 : index
    %c0_99 = arith.constant 0 : index
    %294 = vector.load %arg10[%c0_98, %c0_99] : memref<32x16xf32, #tpu.memory_space<vmem>>, vector<32x16xf32>
    %c0_100 = arith.constant 0 : index
    %c0_101 = arith.constant 0 : index
    %295 = vector.load %arg11[%c0_100, %c0_101] : memref<16x32xf32, #tpu.memory_space<vmem>>, vector<16x32xf32>
    %c0_102 = arith.constant 0 : index
    %c0_103 = arith.constant 0 : index
    %296 = vector.load %arg12[%c0_102, %c0_103] : memref<32x1xf32, #tpu.memory_space<vmem>>, vector<32x1xf32>
    %297 = tpu.concatenate %232, %293 in 1 : vector<16x16xf32>, vector<16x32xf32> -> vector<16x48xf32>
    %c0_104 = arith.constant 0 : index
    %c0_105 = arith.constant 0 : index
    %298 = vector.load %arg28[%c0_104, %c0_105] : memref<49x32xf32, #tpu.memory_space<vmem>>, vector<49x32xf32>
    %c0_106 = arith.constant 0 : index
    %c0_107 = arith.constant 0 : index
    %299 = vector.load %arg29[%c0_106, %c0_107] : memref<1x32xf32, #tpu.memory_space<vmem>>, vector<1x32xf32>
    %c0_108 = arith.constant 0 : index
    %c0_109 = arith.constant 0 : index
    %300 = vector.load %arg30[%c0_108, %c0_109] : memref<80x32xf32, #tpu.memory_space<vmem>>, vector<80x32xf32>
    %c0_110 = arith.constant 0 : index
    %c0_111 = arith.constant 0 : index
    %301 = vector.load %arg31[%c0_110, %c0_111] : memref<1x32xf32, #tpu.memory_space<vmem>>, vector<1x32xf32>
    %cst_112 = arith.constant dense<0.000000e+00> : vector<32x48xf32>
    %302 = tpu.matmul %294, %297, %cst_112 {dimension_numbers = #tpu.dot_dimension_numbers<[1], [0], [0], [1], [0, 0, 1, 1], [], []>} : vector<32x16xf32>, vector<16x48xf32>, vector<32x48xf32> -> vector<32x48xf32>
    %303 = tpu.concatenate %302, %296 in 1 : vector<32x48xf32>, vector<32x1xf32> -> vector<32x49xf32>
    %cst_113 = arith.constant dense<0.000000e+00> : vector<32x32xf32>
    %304 = tpu.matmul %303, %298, %cst_113 {dimension_numbers = #tpu.dot_dimension_numbers<[1], [0], [0], [1], [0, 0, 1, 1], [], []>} : vector<32x49xf32>, vector<49x32xf32>, vector<32x32xf32> -> vector<32x32xf32>
    %305 = vector.broadcast %299 : vector<1x32xf32> to vector<32x32xf32>
    %306 = arith.addf %304, %305 : vector<32x32xf32>
    %cst_114 = arith.constant 0.000000e+00 : f32
    %307 = vector.broadcast %cst_114 : f32 to vector<32x32xf32>
    %308 = arith.maximumf %306, %307 : vector<32x32xf32>
    %cst_115 = arith.constant dense<0.000000e+00> : vector<16x32xf32>
    %309 = tpu.matmul %295, %308, %cst_115 {dimension_numbers = #tpu.dot_dimension_numbers<[1], [0], [0], [1], [0, 0, 1, 1], [], []>} : vector<16x32xf32>, vector<32x32xf32>, vector<16x32xf32> -> vector<16x32xf32>
    %310 = tpu.concatenate %297, %309 in 1 : vector<16x48xf32>, vector<16x32xf32> -> vector<16x80xf32>
    %cst_116 = arith.constant dense<0.000000e+00> : vector<16x32xf32>
    %311 = tpu.matmul %310, %300, %cst_116 {dimension_numbers = #tpu.dot_dimension_numbers<[1], [0], [0], [1], [0, 0, 1, 1], [], []>} : vector<16x80xf32>, vector<80x32xf32>, vector<16x32xf32> -> vector<16x32xf32>
    %312 = vector.broadcast %301 : vector<1x32xf32> to vector<16x32xf32>
    %313 = arith.addf %311, %312 : vector<16x32xf32>
    %cst_117 = arith.constant 0.000000e+00 : f32
    %314 = vector.broadcast %cst_117 : f32 to vector<16x32xf32>
    %315 = arith.maximumf %313, %314 : vector<16x32xf32>
    %c0_118 = arith.constant 0 : index
    %c0_119 = arith.constant 0 : index
    %316 = vector.load %arg32[%c0_118, %c0_119] : memref<33x32xf32, #tpu.memory_space<vmem>>, vector<33x32xf32>
    %c0_120 = arith.constant 0 : index
    %c0_121 = arith.constant 0 : index
    %317 = vector.load %arg33[%c0_120, %c0_121] : memref<1x32xf32, #tpu.memory_space<vmem>>, vector<1x32xf32>
    %c0_122 = arith.constant 0 : index
    %c0_123 = arith.constant 0 : index
    %318 = vector.load %arg34[%c0_122, %c0_123] : memref<64x32xf32, #tpu.memory_space<vmem>>, vector<64x32xf32>
    %c0_124 = arith.constant 0 : index
    %c0_125 = arith.constant 0 : index
    %319 = vector.load %arg35[%c0_124, %c0_125] : memref<1x32xf32, #tpu.memory_space<vmem>>, vector<1x32xf32>
    %cst_126 = arith.constant dense<0.000000e+00> : vector<32x32xf32>
    %320 = tpu.matmul %294, %315, %cst_126 {dimension_numbers = #tpu.dot_dimension_numbers<[1], [0], [0], [1], [0, 0, 1, 1], [], []>} : vector<32x16xf32>, vector<16x32xf32>, vector<32x32xf32> -> vector<32x32xf32>
    %321 = tpu.concatenate %320, %296 in 1 : vector<32x32xf32>, vector<32x1xf32> -> vector<32x33xf32>
    %cst_127 = arith.constant dense<0.000000e+00> : vector<32x32xf32>
    %322 = tpu.matmul %321, %316, %cst_127 {dimension_numbers = #tpu.dot_dimension_numbers<[1], [0], [0], [1], [0, 0, 1, 1], [], []>} : vector<32x33xf32>, vector<33x32xf32>, vector<32x32xf32> -> vector<32x32xf32>
    %323 = vector.broadcast %317 : vector<1x32xf32> to vector<32x32xf32>
    %324 = arith.addf %322, %323 : vector<32x32xf32>
    %cst_128 = arith.constant 0.000000e+00 : f32
    %325 = vector.broadcast %cst_128 : f32 to vector<32x32xf32>
    %326 = arith.maximumf %324, %325 : vector<32x32xf32>
    %cst_129 = arith.constant dense<0.000000e+00> : vector<16x32xf32>
    %327 = tpu.matmul %295, %326, %cst_129 {dimension_numbers = #tpu.dot_dimension_numbers<[1], [0], [0], [1], [0, 0, 1, 1], [], []>} : vector<16x32xf32>, vector<32x32xf32>, vector<16x32xf32> -> vector<16x32xf32>
    %328 = tpu.concatenate %315, %327 in 1 : vector<16x32xf32>, vector<16x32xf32> -> vector<16x64xf32>
    %cst_130 = arith.constant dense<0.000000e+00> : vector<16x32xf32>
    %329 = tpu.matmul %328, %318, %cst_130 {dimension_numbers = #tpu.dot_dimension_numbers<[1], [0], [0], [1], [0, 0, 1, 1], [], []>} : vector<16x64xf32>, vector<64x32xf32>, vector<16x32xf32> -> vector<16x32xf32>
    %330 = vector.broadcast %319 : vector<1x32xf32> to vector<16x32xf32>
    %331 = arith.addf %329, %330 : vector<16x32xf32>
    %cst_131 = arith.constant 0.000000e+00 : f32
    %332 = vector.broadcast %cst_131 : f32 to vector<16x32xf32>
    %333 = arith.maximumf %331, %332 : vector<16x32xf32>
    %c0_132 = arith.constant 0 : index
    %c0_133 = arith.constant 0 : index
    %334 = vector.load %arg36[%c0_132, %c0_133] : memref<32x16xf32, #tpu.memory_space<vmem>>, vector<32x16xf32>
    %cst_134 = arith.constant dense<0.000000e+00> : vector<16x16xf32>
    %335 = tpu.matmul %333, %334, %cst_134 {dimension_numbers = #tpu.dot_dimension_numbers<[1], [0], [0], [1], [0, 0, 1, 1], [], []>} : vector<16x32xf32>, vector<32x16xf32>, vector<16x16xf32> -> vector<16x16xf32>
    %c0_135 = arith.constant 0 : index
    %c0_136 = arith.constant 0 : index
    %336 = vector.load %arg37[%c0_135, %c0_136] : memref<1x16xf32, #tpu.memory_space<vmem>>, vector<1x16xf32>
    %337 = vector.broadcast %336 : vector<1x16xf32> to vector<16x16xf32>
    %338 = arith.addf %335, %337 : vector<16x16xf32>
    %c0_137 = arith.constant 0 : index
    %c0_138 = arith.constant 0 : index
    %339 = vector.load %arg5[%c0_137, %c0_138] : memref<8x16xf32, #tpu.memory_space<vmem>>, vector<8x16xf32>
    %cst_139 = arith.constant dense<0.000000e+00> : vector<8x16xf32>
    %340 = tpu.matmul %339, %338, %cst_139 {dimension_numbers = #tpu.dot_dimension_numbers<[1], [0], [0], [1], [0, 0, 1, 1], [], []>} : vector<8x16xf32>, vector<16x16xf32>, vector<8x16xf32> -> vector<8x16xf32>
    %c0_140 = arith.constant 0 : index
    %c0_141 = arith.constant 0 : index
    %341 = vector.load %arg38[%c0_140, %c0_141] : memref<32x32xf32, #tpu.memory_space<vmem>>, vector<32x32xf32>
    %c0_142 = arith.constant 0 : index
    %c0_143 = arith.constant 0 : index
    %342 = vector.load %arg39[%c0_142, %c0_143] : memref<1x32xf32, #tpu.memory_space<vmem>>, vector<1x32xf32>
    %c0_144 = arith.constant 0 : index
    %c0_145 = arith.constant 0 : index
    %343 = vector.load %arg40[%c0_144, %c0_145] : memref<48x32xf32, #tpu.memory_space<vmem>>, vector<48x32xf32>
    %c0_146 = arith.constant 0 : index
    %c0_147 = arith.constant 0 : index
    %344 = vector.load %arg41[%c0_146, %c0_147] : memref<1x32xf32, #tpu.memory_space<vmem>>, vector<1x32xf32>
    %cst_148 = arith.constant dense<0.000000e+00> : vector<24x16xf32>
    %345 = tpu.matmul %242, %340, %cst_148 {dimension_numbers = #tpu.dot_dimension_numbers<[1], [0], [0], [1], [0, 0, 1, 1], [], []>} : vector<24x8xf32>, vector<8x16xf32>, vector<24x16xf32> -> vector<24x16xf32>
    %346 = tpu.concatenate %345, %255 in 1 : vector<24x16xf32>, vector<24x16xf32> -> vector<24x32xf32>
    %cst_149 = arith.constant dense<0.000000e+00> : vector<24x32xf32>
    %347 = tpu.matmul %346, %341, %cst_149 {dimension_numbers = #tpu.dot_dimension_numbers<[1], [0], [0], [1], [0, 0, 1, 1], [], []>} : vector<24x32xf32>, vector<32x32xf32>, vector<24x32xf32> -> vector<24x32xf32>
    %348 = vector.broadcast %342 : vector<1x32xf32> to vector<24x32xf32>
    %349 = arith.addf %347, %348 : vector<24x32xf32>
    %cst_150 = arith.constant 0.000000e+00 : f32
    %350 = vector.broadcast %cst_150 : f32 to vector<24x32xf32>
    %351 = arith.maximumf %349, %350 : vector<24x32xf32>
    %cst_151 = arith.constant dense<0.000000e+00> : vector<8x32xf32>
    %352 = tpu.matmul %243, %351, %cst_151 {dimension_numbers = #tpu.dot_dimension_numbers<[1], [0], [0], [1], [0, 0, 1, 1], [], []>} : vector<8x24xf32>, vector<24x32xf32>, vector<8x32xf32> -> vector<8x32xf32>
    %353 = tpu.concatenate %340, %352 in 1 : vector<8x16xf32>, vector<8x32xf32> -> vector<8x48xf32>
    %cst_152 = arith.constant dense<0.000000e+00> : vector<8x32xf32>
    %354 = tpu.matmul %353, %343, %cst_152 {dimension_numbers = #tpu.dot_dimension_numbers<[1], [0], [0], [1], [0, 0, 1, 1], [], []>} : vector<8x48xf32>, vector<48x32xf32>, vector<8x32xf32> -> vector<8x32xf32>
    %355 = vector.broadcast %344 : vector<1x32xf32> to vector<8x32xf32>
    %356 = arith.addf %354, %355 : vector<8x32xf32>
    %cst_153 = arith.constant 0.000000e+00 : f32
    %357 = vector.broadcast %cst_153 : f32 to vector<8x32xf32>
    %358 = arith.maximumf %356, %357 : vector<8x32xf32>
    %c0_154 = arith.constant 0 : index
    %c0_155 = arith.constant 0 : index
    %359 = vector.load %arg42[%c0_154, %c0_155] : memref<48x32xf32, #tpu.memory_space<vmem>>, vector<48x32xf32>
    %c0_156 = arith.constant 0 : index
    %c0_157 = arith.constant 0 : index
    %360 = vector.load %arg43[%c0_156, %c0_157] : memref<1x32xf32, #tpu.memory_space<vmem>>, vector<1x32xf32>
    %c0_158 = arith.constant 0 : index
    %c0_159 = arith.constant 0 : index
    %361 = vector.load %arg44[%c0_158, %c0_159] : memref<64x32xf32, #tpu.memory_space<vmem>>, vector<64x32xf32>
    %c0_160 = arith.constant 0 : index
    %c0_161 = arith.constant 0 : index
    %362 = vector.load %arg45[%c0_160, %c0_161] : memref<1x32xf32, #tpu.memory_space<vmem>>, vector<1x32xf32>
    %cst_162 = arith.constant dense<0.000000e+00> : vector<24x32xf32>
    %363 = tpu.matmul %242, %358, %cst_162 {dimension_numbers = #tpu.dot_dimension_numbers<[1], [0], [0], [1], [0, 0, 1, 1], [], []>} : vector<24x8xf32>, vector<8x32xf32>, vector<24x32xf32> -> vector<24x32xf32>
    %364 = tpu.concatenate %363, %255 in 1 : vector<24x32xf32>, vector<24x16xf32> -> vector<24x48xf32>
    %cst_163 = arith.constant dense<0.000000e+00> : vector<24x32xf32>
    %365 = tpu.matmul %364, %359, %cst_163 {dimension_numbers = #tpu.dot_dimension_numbers<[1], [0], [0], [1], [0, 0, 1, 1], [], []>} : vector<24x48xf32>, vector<48x32xf32>, vector<24x32xf32> -> vector<24x32xf32>
    %366 = vector.broadcast %360 : vector<1x32xf32> to vector<24x32xf32>
    %367 = arith.addf %365, %366 : vector<24x32xf32>
    %cst_164 = arith.constant 0.000000e+00 : f32
    %368 = vector.broadcast %cst_164 : f32 to vector<24x32xf32>
    %369 = arith.maximumf %367, %368 : vector<24x32xf32>
    %cst_165 = arith.constant dense<0.000000e+00> : vector<8x32xf32>
    %370 = tpu.matmul %243, %369, %cst_165 {dimension_numbers = #tpu.dot_dimension_numbers<[1], [0], [0], [1], [0, 0, 1, 1], [], []>} : vector<8x24xf32>, vector<24x32xf32>, vector<8x32xf32> -> vector<8x32xf32>
    %371 = tpu.concatenate %358, %370 in 1 : vector<8x32xf32>, vector<8x32xf32> -> vector<8x64xf32>
    %cst_166 = arith.constant dense<0.000000e+00> : vector<8x32xf32>
    %372 = tpu.matmul %371, %361, %cst_166 {dimension_numbers = #tpu.dot_dimension_numbers<[1], [0], [0], [1], [0, 0, 1, 1], [], []>} : vector<8x64xf32>, vector<64x32xf32>, vector<8x32xf32> -> vector<8x32xf32>
    %373 = vector.broadcast %362 : vector<1x32xf32> to vector<8x32xf32>
    %374 = arith.addf %372, %373 : vector<8x32xf32>
    %cst_167 = arith.constant 0.000000e+00 : f32
    %375 = vector.broadcast %cst_167 : f32 to vector<8x32xf32>
    %376 = arith.maximumf %374, %375 : vector<8x32xf32>
    %c0_168 = arith.constant 0 : index
    %c0_169 = arith.constant 0 : index
    %377 = vector.load %arg6[%c0_168, %c0_169] : memref<16x8xf32, #tpu.memory_space<vmem>>, vector<16x8xf32>
    %cst_170 = arith.constant dense<0.000000e+00> : vector<16x32xf32>
    %378 = tpu.matmul %377, %376, %cst_170 {dimension_numbers = #tpu.dot_dimension_numbers<[1], [0], [0], [1], [0, 0, 1, 1], [], []>} : vector<16x8xf32>, vector<8x32xf32>, vector<16x32xf32> -> vector<16x32xf32>
    %379 = tpu.concatenate %338, %378 in 1 : vector<16x16xf32>, vector<16x32xf32> -> vector<16x48xf32>
    %c0_171 = arith.constant 0 : index
    %c0_172 = arith.constant 0 : index
    %380 = vector.load %arg46[%c0_171, %c0_172] : memref<49x32xf32, #tpu.memory_space<vmem>>, vector<49x32xf32>
    %c0_173 = arith.constant 0 : index
    %c0_174 = arith.constant 0 : index
    %381 = vector.load %arg47[%c0_173, %c0_174] : memref<1x32xf32, #tpu.memory_space<vmem>>, vector<1x32xf32>
    %c0_175 = arith.constant 0 : index
    %c0_176 = arith.constant 0 : index
    %382 = vector.load %arg48[%c0_175, %c0_176] : memref<80x32xf32, #tpu.memory_space<vmem>>, vector<80x32xf32>
    %c0_177 = arith.constant 0 : index
    %c0_178 = arith.constant 0 : index
    %383 = vector.load %arg49[%c0_177, %c0_178] : memref<1x32xf32, #tpu.memory_space<vmem>>, vector<1x32xf32>
    %cst_179 = arith.constant dense<0.000000e+00> : vector<32x48xf32>
    %384 = tpu.matmul %294, %379, %cst_179 {dimension_numbers = #tpu.dot_dimension_numbers<[1], [0], [0], [1], [0, 0, 1, 1], [], []>} : vector<32x16xf32>, vector<16x48xf32>, vector<32x48xf32> -> vector<32x48xf32>
    %385 = tpu.concatenate %384, %296 in 1 : vector<32x48xf32>, vector<32x1xf32> -> vector<32x49xf32>
    %cst_180 = arith.constant dense<0.000000e+00> : vector<32x32xf32>
    %386 = tpu.matmul %385, %380, %cst_180 {dimension_numbers = #tpu.dot_dimension_numbers<[1], [0], [0], [1], [0, 0, 1, 1], [], []>} : vector<32x49xf32>, vector<49x32xf32>, vector<32x32xf32> -> vector<32x32xf32>
    %387 = vector.broadcast %381 : vector<1x32xf32> to vector<32x32xf32>
    %388 = arith.addf %386, %387 : vector<32x32xf32>
    %cst_181 = arith.constant 0.000000e+00 : f32
    %389 = vector.broadcast %cst_181 : f32 to vector<32x32xf32>
    %390 = arith.maximumf %388, %389 : vector<32x32xf32>
    %cst_182 = arith.constant dense<0.000000e+00> : vector<16x32xf32>
    %391 = tpu.matmul %295, %390, %cst_182 {dimension_numbers = #tpu.dot_dimension_numbers<[1], [0], [0], [1], [0, 0, 1, 1], [], []>} : vector<16x32xf32>, vector<32x32xf32>, vector<16x32xf32> -> vector<16x32xf32>
    %392 = tpu.concatenate %379, %391 in 1 : vector<16x48xf32>, vector<16x32xf32> -> vector<16x80xf32>
    %cst_183 = arith.constant dense<0.000000e+00> : vector<16x32xf32>
    %393 = tpu.matmul %392, %382, %cst_183 {dimension_numbers = #tpu.dot_dimension_numbers<[1], [0], [0], [1], [0, 0, 1, 1], [], []>} : vector<16x80xf32>, vector<80x32xf32>, vector<16x32xf32> -> vector<16x32xf32>
    %394 = vector.broadcast %383 : vector<1x32xf32> to vector<16x32xf32>
    %395 = arith.addf %393, %394 : vector<16x32xf32>
    %cst_184 = arith.constant 0.000000e+00 : f32
    %396 = vector.broadcast %cst_184 : f32 to vector<16x32xf32>
    %397 = arith.maximumf %395, %396 : vector<16x32xf32>
    %c0_185 = arith.constant 0 : index
    %c0_186 = arith.constant 0 : index
    %398 = vector.load %arg50[%c0_185, %c0_186] : memref<33x32xf32, #tpu.memory_space<vmem>>, vector<33x32xf32>
    %c0_187 = arith.constant 0 : index
    %c0_188 = arith.constant 0 : index
    %399 = vector.load %arg51[%c0_187, %c0_188] : memref<1x32xf32, #tpu.memory_space<vmem>>, vector<1x32xf32>
    %c0_189 = arith.constant 0 : index
    %c0_190 = arith.constant 0 : index
    %400 = vector.load %arg52[%c0_189, %c0_190] : memref<64x32xf32, #tpu.memory_space<vmem>>, vector<64x32xf32>
    %c0_191 = arith.constant 0 : index
    %c0_192 = arith.constant 0 : index
    %401 = vector.load %arg53[%c0_191, %c0_192] : memref<1x32xf32, #tpu.memory_space<vmem>>, vector<1x32xf32>
    %cst_193 = arith.constant dense<0.000000e+00> : vector<32x32xf32>
    %402 = tpu.matmul %294, %397, %cst_193 {dimension_numbers = #tpu.dot_dimension_numbers<[1], [0], [0], [1], [0, 0, 1, 1], [], []>} : vector<32x16xf32>, vector<16x32xf32>, vector<32x32xf32> -> vector<32x32xf32>
    %403 = tpu.concatenate %402, %296 in 1 : vector<32x32xf32>, vector<32x1xf32> -> vector<32x33xf32>
    %cst_194 = arith.constant dense<0.000000e+00> : vector<32x32xf32>
    %404 = tpu.matmul %403, %398, %cst_194 {dimension_numbers = #tpu.dot_dimension_numbers<[1], [0], [0], [1], [0, 0, 1, 1], [], []>} : vector<32x33xf32>, vector<33x32xf32>, vector<32x32xf32> -> vector<32x32xf32>
    %405 = vector.broadcast %399 : vector<1x32xf32> to vector<32x32xf32>
    %406 = arith.addf %404, %405 : vector<32x32xf32>
    %cst_195 = arith.constant 0.000000e+00 : f32
    %407 = vector.broadcast %cst_195 : f32 to vector<32x32xf32>
    %408 = arith.maximumf %406, %407 : vector<32x32xf32>
    %cst_196 = arith.constant dense<0.000000e+00> : vector<16x32xf32>
    %409 = tpu.matmul %295, %408, %cst_196 {dimension_numbers = #tpu.dot_dimension_numbers<[1], [0], [0], [1], [0, 0, 1, 1], [], []>} : vector<16x32xf32>, vector<32x32xf32>, vector<16x32xf32> -> vector<16x32xf32>
    %410 = tpu.concatenate %397, %409 in 1 : vector<16x32xf32>, vector<16x32xf32> -> vector<16x64xf32>
    %cst_197 = arith.constant dense<0.000000e+00> : vector<16x32xf32>
    %411 = tpu.matmul %410, %400, %cst_197 {dimension_numbers = #tpu.dot_dimension_numbers<[1], [0], [0], [1], [0, 0, 1, 1], [], []>} : vector<16x64xf32>, vector<64x32xf32>, vector<16x32xf32> -> vector<16x32xf32>
    %412 = vector.broadcast %401 : vector<1x32xf32> to vector<16x32xf32>
    %413 = arith.addf %411, %412 : vector<16x32xf32>
    %cst_198 = arith.constant 0.000000e+00 : f32
    %414 = vector.broadcast %cst_198 : f32 to vector<16x32xf32>
    %415 = arith.maximumf %413, %414 : vector<16x32xf32>
    %c0_199 = arith.constant 0 : index
    %c0_200 = arith.constant 0 : index
    %416 = vector.load %arg54[%c0_199, %c0_200] : memref<32x16xf32, #tpu.memory_space<vmem>>, vector<32x16xf32>
    %cst_201 = arith.constant dense<0.000000e+00> : vector<16x16xf32>
    %417 = tpu.matmul %415, %416, %cst_201 {dimension_numbers = #tpu.dot_dimension_numbers<[1], [0], [0], [1], [0, 0, 1, 1], [], []>} : vector<16x32xf32>, vector<32x16xf32>, vector<16x16xf32> -> vector<16x16xf32>
    %c0_202 = arith.constant 0 : index
    %c0_203 = arith.constant 0 : index
    %418 = vector.load %arg55[%c0_202, %c0_203] : memref<1x16xf32, #tpu.memory_space<vmem>>, vector<1x16xf32>
    %419 = vector.broadcast %418 : vector<1x16xf32> to vector<16x16xf32>
    %420 = arith.addf %417, %419 : vector<16x16xf32>
    %cst_204 = arith.constant 0.000000e+00 : f32
    %421 = vector.broadcast %cst_204 : f32 to vector<16x16xf32>
    %422 = arith.maximumf %420, %421 : vector<16x16xf32>
    %c0_205 = arith.constant 0 : index
    %c0_206 = arith.constant 0 : index
    %423 = vector.load %arg56[%c0_205, %c0_206] : memref<16x128xf32, #tpu.memory_space<vmem>>, vector<16x128xf32>
    %cst_207 = arith.constant dense<0.000000e+00> : vector<16x128xf32>
    %424 = tpu.matmul %422, %423, %cst_207 {dimension_numbers = #tpu.dot_dimension_numbers<[1], [0], [0], [1], [0, 0, 1, 1], [], []>} : vector<16x16xf32>, vector<16x128xf32>, vector<16x128xf32> -> vector<16x128xf32>
    %c0_208 = arith.constant 0 : index
    %c0_209 = arith.constant 0 : index
    %425 = vector.load %arg57[%c0_208, %c0_209] : memref<1x128xf32, #tpu.memory_space<vmem>>, vector<1x128xf32>
    %426 = vector.broadcast %425 : vector<1x128xf32> to vector<16x128xf32>
    %427 = arith.addf %424, %426 : vector<16x128xf32>
    %c0_210 = arith.constant 0 : index
    %c0_211 = arith.constant 0 : index
    %428 = vector.load %arg58[%c0_210, %c0_211] : memref<16x128xf32, #tpu.memory_space<vmem>>, vector<16x128xf32>
    tpu.vector_store %arg58[%c0_210, %c0_211], %427 {strides = array<i32>} : memref<16x128xf32, #tpu.memory_space<vmem>>, vector<16x128xf32>,
    return
  }
}

</mosaic_0001>

<llo_original>
// kernel: gagnn_forward.1
$region0: #{gagnn_forward.1}
  #allocation0 [shape = 'u32[]', space=smem, size = 0x4, offset = 0x4, fixed_abs, tag = 'smem constant byte address 0x4 - core index']
  #allocation1 [shape = 'u32[144,128]{1,0:T(1,128)}', space=vmem, size = 0x12000, scoped, tag = 'internal scratch']
  %s0 = inlined_call_operand.smem [shape: u32[59], index: -1, kind: input, shape index: {}]
  %s1 = sld [smem:[%s0]]
  %s2 = scalar_lea.smem %s0, 1
  %s3 = sld [smem:[%s2]]
  %s4 = scalar_lea.smem %s0, 2
  %s5 = sld [smem:[%s4]]
  %s6 = scalar_lea.smem %s0, 3
  %s7 = sld [smem:[%s6]]
  %s8 = scalar_lea.smem %s0, 4
  %s9 = sld [smem:[%s8]]
  %s10 = scalar_lea.smem %s0, 5
  %s11 = sld [smem:[%s10]]
  %s12 = scalar_lea.smem %s0, 6
  %s13 = sld [smem:[%s12]]
  %s14 = scalar_lea.smem %s0, 7
  %s15 = sld [smem:[%s14]]
  %s16 = scalar_lea.smem %s0, 8
  %s17 = sld [smem:[%s16]]
  %s18 = scalar_lea.smem %s0, 9
  %s19 = sld [smem:[%s18]]
  %s20 = scalar_lea.smem %s0, 10
  %s21 = sld [smem:[%s20]]
  %s22 = scalar_lea.smem %s0, 11
  %s23 = sld [smem:[%s22]]
  %s24 = scalar_lea.smem %s0, 12
  %s25 = sld [smem:[%s24]]
  %s26 = scalar_lea.smem %s0, 13
  %s27 = sld [smem:[%s26]]
  %s28 = scalar_lea.smem %s0, 14
  %s29 = sld [smem:[%s28]]
  %s30 = scalar_lea.smem %s0, 15
  %s31 = sld [smem:[%s30]]
  %s32 = scalar_lea.smem %s0, 16
  %s33 = sld [smem:[%s32]]
  %s34 = scalar_lea.smem %s0, 17
  %s35 = sld [smem:[%s34]]
  %s36 = scalar_lea.smem %s0, 18
  %s37 = sld [smem:[%s36]]
  %s38 = scalar_lea.smem %s0, 19
  %s39 = sld [smem:[%s38]]
  %s40 = scalar_lea.smem %s0, 20
  %s41 = sld [smem:[%s40]]
  %s42 = scalar_lea.smem %s0, 21
  %s43 = sld [smem:[%s42]]
  %s44 = scalar_lea.smem %s0, 22
  %s45 = sld [smem:[%s44]]
  %s46 = scalar_lea.smem %s0, 23
  %s47 = sld [smem:[%s46]]
  %s48 = scalar_lea.smem %s0, 24
  %s49 = sld [smem:[%s48]]
  %s50 = scalar_lea.smem %s0, 25
  %s51 = sld [smem:[%s50]]
  %s52 = scalar_lea.smem %s0, 26
  %s53 = sld [smem:[%s52]]
  %s54 = scalar_lea.smem %s0, 27
  %s55 = sld [smem:[%s54]]
  %s56 = scalar_lea.smem %s0, 28
  %s57 = sld [smem:[%s56]]
  %s58 = scalar_lea.smem %s0, 29
  %s59 = sld [smem:[%s58]]
  %s60 = scalar_lea.smem %s0, 30
  %s61 = sld [smem:[%s60]]
  %s62 = scalar_lea.smem %s0, 31
  %s63 = sld [smem:[%s62]]
  %s64 = scalar_lea.smem %s0, 32
  %s65 = sld [smem:[%s64]]
  %s66 = scalar_lea.smem %s0, 33
  %s67 = sld [smem:[%s66]]
  %s68 = scalar_lea.smem %s0, 34
  %s69 = sld [smem:[%s68]]
  %s70 = scalar_lea.smem %s0, 35
  %s71 = sld [smem:[%s70]]
  %s72 = scalar_lea.smem %s0, 36
  %s73 = sld [smem:[%s72]]
  %s74 = scalar_lea.smem %s0, 37
  %s75 = sld [smem:[%s74]]
  %s76 = scalar_lea.smem %s0, 38
  %s77 = sld [smem:[%s76]]
  %s78 = scalar_lea.smem %s0, 39
  %s79 = sld [smem:[%s78]]
  %s80 = scalar_lea.smem %s0, 40
  %s81 = sld [smem:[%s80]]
  %s82 = scalar_lea.smem %s0, 41
  %s83 = sld [smem:[%s82]]
  %s84 = scalar_lea.smem %s0, 42
  %s85 = sld [smem:[%s84]]
  %s86 = scalar_lea.smem %s0, 43
  %s87 = sld [smem:[%s86]]
  %s88 = scalar_lea.smem %s0, 44
  %s89 = sld [smem:[%s88]]
  %s90 = scalar_lea.smem %s0, 45
  %s91 = sld [smem:[%s90]]
  %s92 = scalar_lea.smem %s0, 46
  %s93 = sld [smem:[%s92]]
  %s94 = scalar_lea.smem %s0, 47
  %s95 = sld [smem:[%s94]]
  %s96 = scalar_lea.smem %s0, 48
  %s97 = sld [smem:[%s96]]
  %s98 = scalar_lea.smem %s0, 49
  %s99 = sld [smem:[%s98]]
  %s100 = scalar_lea.smem %s0, 50
  %s101 = sld [smem:[%s100]]
  %s102 = scalar_lea.smem %s0, 51
  %s103 = sld [smem:[%s102]]
  %s104 = scalar_lea.smem %s0, 52
  %s105 = sld [smem:[%s104]]
  %s106 = scalar_lea.smem %s0, 53
  %s107 = sld [smem:[%s106]]
  %s108 = scalar_lea.smem %s0, 54
  %s109 = sld [smem:[%s108]]
  %s110 = scalar_lea.smem %s0, 55
  %s111 = sld [smem:[%s110]]
  %s112 = scalar_lea.smem %s0, 56
  %s113 = sld [smem:[%s112]]
  %s114 = scalar_lea.smem %s0, 57
  %s115 = sld [smem:[%s114]]
  %s116 = scalar_lea.smem %s0, 58
  %s117 = sld [smem:[%s116]]
  %s118 = sld [smem:[#allocation0]]
  $region242: #{gagnn_forward.1} parent=0
    _
  %s120 = ssub.s32 1, %s118
  %s121 = scalar_select 0, %s120, %s118
  // Predicated region
  $region2: #{gagnn_forward.1} parent=0 // pred_check
    _
  $region3: #{gagnn_forward.1} parent=0 // pred_check_branch
    %123 = sbr.rel (0) target = $region5
  $region4: #{gagnn_forward.1} parent=0 // pred_region
    _
  $region5: #{gagnn_forward.1} parent=0 // pred_fallthru
    _
  // Predicated region
  $region6: #{gagnn_forward.1} parent=0 // pred_check
    _
  $region7: #{gagnn_forward.1} parent=0 // pred_check_branch
    %125 = sbr.rel (0) target = $region9
  $region8: #{gagnn_forward.1} parent=0 // pred_region
    _
  $region9: #{gagnn_forward.1} parent=0 // pred_fallthru
    _
  // Predicated region
  $region10: #{gagnn_forward.1} parent=0 // pred_check
    _
  $region11: #{gagnn_forward.1} parent=0 // pred_check_branch
    %127 = sbr.rel (0) target = $region13
  $region12: #{gagnn_forward.1} parent=0 // pred_region
    _
  $region13: #{gagnn_forward.1} parent=0 // pred_fallthru
    _
  // Predicated region
  $region14: #{gagnn_forward.1} parent=0 // pred_check
    _
  $region15: #{gagnn_forward.1} parent=0 // pred_check_branch
    %129 = sbr.rel (0) target = $region17
  $region16: #{gagnn_forward.1} parent=0 // pred_region
    _
  $region17: #{gagnn_forward.1} parent=0 // pred_fallthru
    _
  // Predicated region
  $region18: #{gagnn_forward.1} parent=0 // pred_check
    _
  $region19: #{gagnn_forward.1} parent=0 // pred_check_branch
    %131 = sbr.rel (0) target = $region21
  $region20: #{gagnn_forward.1} parent=0 // pred_region
    _
  $region21: #{gagnn_forward.1} parent=0 // pred_fallthru
    _
  // Predicated region
  $region22: #{gagnn_forward.1} parent=0 // pred_check
    _
  $region23: #{gagnn_forward.1} parent=0 // pred_check_branch
    %133 = sbr.rel (0) target = $region25
  $region24: #{gagnn_forward.1} parent=0 // pred_region
    _
  $region25: #{gagnn_forward.1} parent=0 // pred_fallthru
    _
  // Predicated region
  $region26: #{gagnn_forward.1} parent=0 // pred_check
    _
  $region27: #{gagnn_forward.1} parent=0 // pred_check_branch
    %135 = sbr.rel (0) target = $region29
  $region28: #{gagnn_forward.1} parent=0 // pred_region
    _
  $region29: #{gagnn_forward.1} parent=0 // pred_fallthru
    _
  // Predicated region
  $region30: #{gagnn_forward.1} parent=0 // pred_check
    _
  $region31: #{gagnn_forward.1} parent=0 // pred_check_branch
    %137 = sbr.rel (0) target = $region33
  $region32: #{gagnn_forward.1} parent=0 // pred_region
    _
  $region33: #{gagnn_forward.1} parent=0 // pred_fallthru
    _
  // Predicated region
  $region34: #{gagnn_forward.1} parent=0 // pred_check
    _
  $region35: #{gagnn_forward.1} parent=0 // pred_check_branch
    %139 = sbr.rel (0) target = $region37
  $region36: #{gagnn_forward.1} parent=0 // pred_region
    _
  $region37: #{gagnn_forward.1} parent=0 // pred_fallthru
    _
  // Predicated region
  $region38: #{gagnn_forward.1} parent=0 // pred_check
    _
  $region39: #{gagnn_forward.1} parent=0 // pred_check_branch
    %141 = sbr.rel (0) target = $region41
  $region40: #{gagnn_forward.1} parent=0 // pred_region
    _
  $region41: #{gagnn_forward.1} parent=0 // pred_fallthru
    _
  // Predicated region
  $region42: #{gagnn_forward.1} parent=0 // pred_check
    _
  $region43: #{gagnn_forward.1} parent=0 // pred_check_branch
    %143 = sbr.rel (0) target = $region45
  $region44: #{gagnn_forward.1} parent=0 // pred_region
    _
  $region45: #{gagnn_forward.1} parent=0 // pred_fallthru
    _
  // Predicated region
  $region46: #{gagnn_forward.1} parent=0 // pred_check
    _
  $region47: #{gagnn_forward.1} parent=0 // pred_check_branch
    %145 = sbr.rel (0) target = $region49
  $region48: #{gagnn_forward.1} parent=0 // pred_region
    _
  $region49: #{gagnn_forward.1} parent=0 // pred_fallthru
    _
  // Predicated region
  $region50: #{gagnn_forward.1} parent=0 // pred_check
    _
  $region51: #{gagnn_forward.1} parent=0 // pred_check_branch
    %147 = sbr.rel (0) target = $region53
  $region52: #{gagnn_forward.1} parent=0 // pred_region
    _
  $region53: #{gagnn_forward.1} parent=0 // pred_fallthru
    _
  // Predicated region
  $region54: #{gagnn_forward.1} parent=0 // pred_check
    _
  $region55: #{gagnn_forward.1} parent=0 // pred_check_branch
    %149 = sbr.rel (0) target = $region57
  $region56: #{gagnn_forward.1} parent=0 // pred_region
    _
  $region57: #{gagnn_forward.1} parent=0 // pred_fallthru
    _
  // Predicated region
  $region58: #{gagnn_forward.1} parent=0 // pred_check
    _
  $region59: #{gagnn_forward.1} parent=0 // pred_check_branch
    %151 = sbr.rel (0) target = $region61
  $region60: #{gagnn_forward.1} parent=0 // pred_region
    _
  $region61: #{gagnn_forward.1} parent=0 // pred_fallthru
    _
  // Predicated region
  $region62: #{gagnn_forward.1} parent=0 // pred_check
    _
  $region63: #{gagnn_forward.1} parent=0 // pred_check_branch
    %153 = sbr.rel (0) target = $region65
  $region64: #{gagnn_forward.1} parent=0 // pred_region
    _
  $region65: #{gagnn_forward.1} parent=0 // pred_fallthru
    _
  // Predicated region
  $region66: #{gagnn_forward.1} parent=0 // pred_check
    _
  $region67: #{gagnn_forward.1} parent=0 // pred_check_branch
    %155 = sbr.rel (0) target = $region69
  $region68: #{gagnn_forward.1} parent=0 // pred_region
    _
  $region69: #{gagnn_forward.1} parent=0 // pred_fallthru
    _
  // Predicated region
  $region70: #{gagnn_forward.1} parent=0 // pred_check
    _
  $region71: #{gagnn_forward.1} parent=0 // pred_check_branch
    %157 = sbr.rel (0) target = $region73
  $region72: #{gagnn_forward.1} parent=0 // pred_region
    _
  $region73: #{gagnn_forward.1} parent=0 // pred_fallthru
    _
  // Predicated region
  $region74: #{gagnn_forward.1} parent=0 // pred_check
    _
  $region75: #{gagnn_forward.1} parent=0 // pred_check_branch
    %159 = sbr.rel (0) target = $region77
  $region76: #{gagnn_forward.1} parent=0 // pred_region
    _
  $region77: #{gagnn_forward.1} parent=0 // pred_fallthru
    _
  // Predicated region
  $region78: #{gagnn_forward.1} parent=0 // pred_check
    _
  $region79: #{gagnn_forward.1} parent=0 // pred_check_branch
    %161 = sbr.rel (0) target = $region81
  $region80: #{gagnn_forward.1} parent=0 // pred_region
    _
  $region81: #{gagnn_forward.1} parent=0 // pred_fallthru
    _
  // Predicated region
  $region82: #{gagnn_forward.1} parent=0 // pred_check
    _
  $region83: #{gagnn_forward.1} parent=0 // pred_check_branch
    %163 = sbr.rel (0) target = $region85
  $region84: #{gagnn_forward.1} parent=0 // pred_region
    _
  $region85: #{gagnn_forward.1} parent=0 // pred_fallthru
    _
  // Predicated region
  $region86: #{gagnn_forward.1} parent=0 // pred_check
    _
  $region87: #{gagnn_forward.1} parent=0 // pred_check_branch
    %165 = sbr.rel (0) target = $region89
  $region88: #{gagnn_forward.1} parent=0 // pred_region
    _
  $region89: #{gagnn_forward.1} parent=0 // pred_fallthru
    _
  // Predicated region
  $region90: #{gagnn_forward.1} parent=0 // pred_check
    _
  $region91: #{gagnn_forward.1} parent=0 // pred_check_branch
    %167 = sbr.rel (0) target = $region93
  $region92: #{gagnn_forward.1} parent=0 // pred_region
    _
  $region93: #{gagnn_forward.1} parent=0 // pred_fallthru
    _
  // Predicated region
  $region94: #{gagnn_forward.1} parent=0 // pred_check
    _
  $region95: #{gagnn_forward.1} parent=0 // pred_check_branch
    %169 = sbr.rel (0) target = $region97
  $region96: #{gagnn_forward.1} parent=0 // pred_region
    _
  $region97: #{gagnn_forward.1} parent=0 // pred_fallthru
    _
  // Predicated region
  $region98: #{gagnn_forward.1} parent=0 // pred_check
    _
  $region99: #{gagnn_forward.1} parent=0 // pred_check_branch
    %171 = sbr.rel (0) target = $region101
  $region100: #{gagnn_forward.1} parent=0 // pred_region
    _
  $region101: #{gagnn_forward.1} parent=0 // pred_fallthru
    _
  // Predicated region
  $region102: #{gagnn_forward.1} parent=0 // pred_check
    _
  $region103: #{gagnn_forward.1} parent=0 // pred_check_branch
    %173 = sbr.rel (0) target = $region105
  $region104: #{gagnn_forward.1} parent=0 // pred_region
    _
  $region105: #{gagnn_forward.1} parent=0 // pred_fallthru
    _
  // Predicated region
  $region106: #{gagnn_forward.1} parent=0 // pred_check
    _
  $region107: #{gagnn_forward.1} parent=0 // pred_check_branch
    %175 = sbr.rel (0) target = $region109
  $region108: #{gagnn_forward.1} parent=0 // pred_region
    _
  $region109: #{gagnn_forward.1} parent=0 // pred_fallthru
    _
  // Predicated region
  $region110: #{gagnn_forward.1} parent=0 // pred_check
    _
  $region111: #{gagnn_forward.1} parent=0 // pred_check_branch
    %177 = sbr.rel (0) target = $region113
  $region112: #{gagnn_forward.1} parent=0 // pred_region
    _
  $region113: #{gagnn_forward.1} parent=0 // pred_fallthru
    _
  // Predicated region
  $region114: #{gagnn_forward.1} parent=0 // pred_check
    _
  $region115: #{gagnn_forward.1} parent=0 // pred_check_branch
    %179 = sbr.rel (0) target = $region117
  $region116: #{gagnn_forward.1} parent=0 // pred_region
    _
  $region117: #{gagnn_forward.1} parent=0 // pred_fallthru
    _
  // Predicated region
  $region118: #{gagnn_forward.1} parent=0 // pred_check
    _
  $region119: #{gagnn_forward.1} parent=0 // pred_check_branch
    %181 = sbr.rel (0) target = $region121
  $region120: #{gagnn_forward.1} parent=0 // pred_region
    _
  $region121: #{gagnn_forward.1} parent=0 // pred_fallthru
    _
  // Predicated region
  $region122: #{gagnn_forward.1} parent=0 // pred_check
    _
  $region123: #{gagnn_forward.1} parent=0 // pred_check_branch
    %183 = sbr.rel (0) target = $region125
  $region124: #{gagnn_forward.1} parent=0 // pred_region
    _
  $region125: #{gagnn_forward.1} parent=0 // pred_fallthru
    _
  // Predicated region
  $region126: #{gagnn_forward.1} parent=0 // pred_check
    _
  $region127: #{gagnn_forward.1} parent=0 // pred_check_branch
    %185 = sbr.rel (0) target = $region129
  $region128: #{gagnn_forward.1} parent=0 // pred_region
    _
  $region129: #{gagnn_forward.1} parent=0 // pred_fallthru
    _
  // Predicated region
  $region130: #{gagnn_forward.1} parent=0 // pred_check
    _
  $region131: #{gagnn_forward.1} parent=0 // pred_check_branch
    %187 = sbr.rel (0) target = $region133
  $region132: #{gagnn_forward.1} parent=0 // pred_region
    _
  $region133: #{gagnn_forward.1} parent=0 // pred_fallthru
    _
  // Predicated region
  $region134: #{gagnn_forward.1} parent=0 // pred_check
    _
  $region135: #{gagnn_forward.1} parent=0 // pred_check_branch
    %189 = sbr.rel (0) target = $region137
  $region136: #{gagnn_forward.1} parent=0 // pred_region
    _
  $region137: #{gagnn_forward.1} parent=0 // pred_fallthru
    _
  // Predicated region
  $region138: #{gagnn_forward.1} parent=0 // pred_check
    _
  $region139: #{gagnn_forward.1} parent=0 // pred_check_branch
    %191 = sbr.rel (0) target = $region141
  $region140: #{gagnn_forward.1} parent=0 // pred_region
    _
  $region141: #{gagnn_forward.1} parent=0 // pred_fallthru
    _
  // Predicated region
  $region142: #{gagnn_forward.1} parent=0 // pred_check
    _
  $region143: #{gagnn_forward.1} parent=0 // pred_check_branch
    %193 = sbr.rel (0) target = $region145
  $region144: #{gagnn_forward.1} parent=0 // pred_region
    _
  $region145: #{gagnn_forward.1} parent=0 // pred_fallthru
    _
  // Predicated region
  $region146: #{gagnn_forward.1} parent=0 // pred_check
    _
  $region147: #{gagnn_forward.1} parent=0 // pred_check_branch
    %195 = sbr.rel (0) target = $region149
  $region148: #{gagnn_forward.1} parent=0 // pred_region
    _
  $region149: #{gagnn_forward.1} parent=0 // pred_fallthru
    _
  // Predicated region
  $region150: #{gagnn_forward.1} parent=0 // pred_check
    _
  $region151: #{gagnn_forward.1} parent=0 // pred_check_branch
    %197 = sbr.rel (0) target = $region153
  $region152: #{gagnn_forward.1} parent=0 // pred_region
    _
  $region153: #{gagnn_forward.1} parent=0 // pred_fallthru
    _
  // Predicated region
  $region154: #{gagnn_forward.1} parent=0 // pred_check
    _
  $region155: #{gagnn_forward.1} parent=0 // pred_check_branch
    %199 = sbr.rel (0) target = $region157
  $region156: #{gagnn_forward.1} parent=0 // pred_region
    _
  $region157: #{gagnn_forward.1} parent=0 // pred_fallthru
    _
  // Predicated region
  $region158: #{gagnn_forward.1} parent=0 // pred_check
    _
  $region159: #{gagnn_forward.1} parent=0 // pred_check_branch
    %201 = sbr.rel (0) target = $region161
  $region160: #{gagnn_forward.1} parent=0 // pred_region
    _
  $region161: #{gagnn_forward.1} parent=0 // pred_fallthru
    _
  // Predicated region
  $region162: #{gagnn_forward.1} parent=0 // pred_check
    _
  $region163: #{gagnn_forward.1} parent=0 // pred_check_branch
    %203 = sbr.rel (0) target = $region165
  $region164: #{gagnn_forward.1} parent=0 // pred_region
    _
  $region165: #{gagnn_forward.1} parent=0 // pred_fallthru
    _
  // Predicated region
  $region166: #{gagnn_forward.1} parent=0 // pred_check
    _
  $region167: #{gagnn_forward.1} parent=0 // pred_check_branch
    %205 = sbr.rel (0) target = $region169
  $region168: #{gagnn_forward.1} parent=0 // pred_region
    _
  $region169: #{gagnn_forward.1} parent=0 // pred_fallthru
    _
  // Predicated region
  $region170: #{gagnn_forward.1} parent=0 // pred_check
    _
  $region171: #{gagnn_forward.1} parent=0 // pred_check_branch
    %207 = sbr.rel (0) target = $region173
  $region172: #{gagnn_forward.1} parent=0 // pred_region
    _
  $region173: #{gagnn_forward.1} parent=0 // pred_fallthru
    _
  // Predicated region
  $region174: #{gagnn_forward.1} parent=0 // pred_check
    _
  $region175: #{gagnn_forward.1} parent=0 // pred_check_branch
    %209 = sbr.rel (0) target = $region177
  $region176: #{gagnn_forward.1} parent=0 // pred_region
    _
  $region177: #{gagnn_forward.1} parent=0 // pred_fallthru
    _
  // Predicated region
  $region178: #{gagnn_forward.1} parent=0 // pred_check
    _
  $region179: #{gagnn_forward.1} parent=0 // pred_check_branch
    %211 = sbr.rel (0) target = $region181
  $region180: #{gagnn_forward.1} parent=0 // pred_region
    _
  $region181: #{gagnn_forward.1} parent=0 // pred_fallthru
    _
  // Predicated region
  $region182: #{gagnn_forward.1} parent=0 // pred_check
    _
  $region183: #{gagnn_forward.1} parent=0 // pred_check_branch
    %213 = sbr.rel (0) target = $region185
  $region184: #{gagnn_forward.1} parent=0 // pred_region
    _
  $region185: #{gagnn_forward.1} parent=0 // pred_fallthru
    _
  // Predicated region
  $region186: #{gagnn_forward.1} parent=0 // pred_check
    _
  $region187: #{gagnn_forward.1} parent=0 // pred_check_branch
    %215 = sbr.rel (0) target = $region189
  $region188: #{gagnn_forward.1} parent=0 // pred_region
    _
  $region189: #{gagnn_forward.1} parent=0 // pred_fallthru
    _
  // Predicated region
  $region190: #{gagnn_forward.1} parent=0 // pred_check
    _
  $region191: #{gagnn_forward.1} parent=0 // pred_check_branch
    %217 = sbr.rel (0) target = $region193
  $region192: #{gagnn_forward.1} parent=0 // pred_region
    _
  $region193: #{gagnn_forward.1} parent=0 // pred_fallthru
    _
  // Predicated region
  $region194: #{gagnn_forward.1} parent=0 // pred_check
    _
  $region195: #{gagnn_forward.1} parent=0 // pred_check_branch
    %219 = sbr.rel (0) target = $region197
  $region196: #{gagnn_forward.1} parent=0 // pred_region
    _
  $region197: #{gagnn_forward.1} parent=0 // pred_fallthru
    _
  // Predicated region
  $region198: #{gagnn_forward.1} parent=0 // pred_check
    _
  $region199: #{gagnn_forward.1} parent=0 // pred_check_branch
    %221 = sbr.rel (0) target = $region201
  $region200: #{gagnn_forward.1} parent=0 // pred_region
    _
  $region201: #{gagnn_forward.1} parent=0 // pred_fallthru
    _
  // Predicated region
  $region202: #{gagnn_forward.1} parent=0 // pred_check
    _
  $region203: #{gagnn_forward.1} parent=0 // pred_check_branch
    %223 = sbr.rel (0) target = $region205
  $region204: #{gagnn_forward.1} parent=0 // pred_region
    _
  $region205: #{gagnn_forward.1} parent=0 // pred_fallthru
    _
  // Predicated region
  $region206: #{gagnn_forward.1} parent=0 // pred_check
    _
  $region207: #{gagnn_forward.1} parent=0 // pred_check_branch
    %225 = sbr.rel (0) target = $region209
  $region208: #{gagnn_forward.1} parent=0 // pred_region
    _
  $region209: #{gagnn_forward.1} parent=0 // pred_fallthru
    _
  // Predicated region
  $region210: #{gagnn_forward.1} parent=0 // pred_check
    _
  $region211: #{gagnn_forward.1} parent=0 // pred_check_branch
    %227 = sbr.rel (0) target = $region213
  $region212: #{gagnn_forward.1} parent=0 // pred_region
    _
  $region213: #{gagnn_forward.1} parent=0 // pred_fallthru
    _
  // Predicated region
  $region214: #{gagnn_forward.1} parent=0 // pred_check
    _
  $region215: #{gagnn_forward.1} parent=0 // pred_check_branch
    %229 = sbr.rel (0) target = $region217
  $region216: #{gagnn_forward.1} parent=0 // pred_region
    _
  $region217: #{gagnn_forward.1} parent=0 // pred_fallthru
    _
  // Predicated region
  $region218: #{gagnn_forward.1} parent=0 // pred_check
    _
  $region219: #{gagnn_forward.1} parent=0 // pred_check_branch
    %231 = sbr.rel (0) target = $region221
  $region220: #{gagnn_forward.1} parent=0 // pred_region
    _
  $region221: #{gagnn_forward.1} parent=0 // pred_fallthru
    _
  // Predicated region
  $region222: #{gagnn_forward.1} parent=0 // pred_check
    _
  $region223: #{gagnn_forward.1} parent=0 // pred_check_branch
    %233 = sbr.rel (0) target = $region225
  $region224: #{gagnn_forward.1} parent=0 // pred_region
    _
  $region225: #{gagnn_forward.1} parent=0 // pred_fallthru
    _
  // Predicated region
  $region226: #{gagnn_forward.1} parent=0 // pred_check
    _
  $region227: #{gagnn_forward.1} parent=0 // pred_check_branch
    %235 = sbr.rel (0) target = $region229
  $region228: #{gagnn_forward.1} parent=0 // pred_region
    _
  $region229: #{gagnn_forward.1} parent=0 // pred_fallthru
    _
  // Predicated region
  $region230: #{gagnn_forward.1} parent=0 // pred_check
    _
  $region231: #{gagnn_forward.1} parent=0 // pred_check_branch
    %237 = sbr.rel (0) target = $region233
  $region232: #{gagnn_forward.1} parent=0 // pred_region
    _
  $region233: #{gagnn_forward.1} parent=0 // pred_fallthru
    _
  %v238 = vld [vmem:[%s1] sm:$0xff]
  %v239 = vld [vmem:[%s1 + $0x8] sm:$0xff]
  %v240 = vld [vmem:[%s1 + $0x10] sm:$0xff]
  %v241 = vld [vmem:[%s1 + $0x18] sm:$0xff]
  %v242 = vld [vmem:[%s1 + $0x20] sm:$0xff]
  %v243 = vld [vmem:[%s1 + $0x28] sm:$0xff]
  %v244 = vld [vmem:[%s1 + $0x30] sm:$0xff]
  %v245 = vld [vmem:[%s1 + $0x38] sm:$0xff]
  %v246 = vld [vmem:[%s1 + $0x40] sm:$0xff]
  %v247 = vld [vmem:[%s1 + $0x48] sm:$0xff]
  %v248 = vld [vmem:[%s1 + $0x50] sm:$0xff]
  %v249 = vld [vmem:[%s1 + $0x58] sm:$0xff]
  %v250 = vld [vmem:[%s1 + $0x60] sm:$0xff]
  %v251 = vld [vmem:[%s1 + $0x68] sm:$0xff]
  %v252 = vld [vmem:[%s1 + $0x70] sm:$0xff]
  %v253 = vld [vmem:[%s1 + $0x78] sm:$0xff]
  %v254 = vld [vmem:[%s27] sm:$0xff]
  %v255 = vld [vmem:[%s31] sm:$0x1]
  %v257 = vlaneseq
  %v258 = vshrl.u32 %v257, 7
  %v259 = vsub.s32 0, %v258
  %v260 = vrot.slane %v255, %v259
  %vm262 = vcmask 64512
  %v264 = vsel %vm262, %v238, 0
  %v267 = vsel %vm262, %v239, 0
  %v270 = vsel %vm262, %v240, 0
  %v273 = vsel %vm262, %v241, 0
  %v276 = vsel %vm262, %v242, 0
  %v279 = vsel %vm262, %v243, 0
  %v282 = vsel %vm262, %v244, 0
  %v285 = vsel %vm262, %v245, 0
  %v288 = vsel %vm262, %v246, 0
  %v291 = vsel %vm262, %v247, 0
  %v294 = vsel %vm262, %v248, 0
  %v297 = vsel %vm262, %v249, 0
  %v300 = vsel %vm262, %v250, 0
  %v303 = vsel %vm262, %v251, 0
  %v306 = vsel %vm262, %v252, 0
  %v309 = vsel %vm262, %v253, 0
  %311 = vmatprep.subr.mxu0 0.0
  %312 = vmatpush1.msra.mxu0 %v254
  %313 = vmatprep.subr.mxu0 0.0
  %314 = vmatpush1.msra.mxu0 0.0
  %315 = vmatprep.subr.mxu0 0.0
  %316 = vmatpush1.msra.mxu0 0.0
  %317 = vmatprep.subr.mxu0 0.0
  %318 = vmatpush1.msra.mxu0 0.0
  %319 = vmatprep.subr.mxu0 0.0
  %320 = vmatpush1.msra.mxu0 0.0
  %321 = vmatprep.subr.mxu0 0.0
  %322 = vmatpush1.msra.mxu0 0.0
  %323 = vmatprep.subr.mxu0 0.0
  %324 = vmatpush1.msra.mxu0 0.0
  %325 = vmatprep.subr.mxu0 0.0
  %326 = vmatpush1.msra.mxu0 0.0
  %327 = vmatprep.subr.mxu0 0.0
  %328 = vmatpush1.msra.mxu0 0.0
  %329 = vmatprep.subr.mxu0 0.0
  %330 = vmatpush1.msra.mxu0 0.0
  %331 = vmatprep.subr.mxu0 0.0
  %332 = vmatpush1.msra.mxu0 0.0
  %333 = vmatprep.subr.mxu0 0.0
  %334 = vmatpush1.msra.mxu0 0.0
  %335 = vmatprep.subr.mxu0 0.0
  %336 = vmatpush1.msra.mxu0 0.0
  %337 = vmatprep.subr.mxu0 0.0
  %338 = vmatpush1.msra.mxu0 0.0
  %339 = vmatprep.subr.mxu0 0.0
  %340 = vmatpush1.msra.mxu0 0.0
  %341 = vmatprep.subr.mxu0 0.0
  %342 = vmatpush1.msra.mxu0 0.0
  %343 = vmatprep.subr.mxu0 0.0
  %344 = vmatpush1.msra.mxu0 0.0
  %345 = vmatprep.subr.mxu0 0.0
  %346 = vmatpush1.msra.mxu0 0.0
  %347 = vmatprep.subr.mxu0 0.0
  %348 = vmatpush1.msra.mxu0 0.0
  %349 = vmatprep.subr.mxu0 0.0
  %350 = vmatpush1.msra.mxu0 0.0
  %351 = vmatprep.subr.mxu0 0.0
  %352 = vmatpush1.msra.mxu0 0.0
  %353 = vmatprep.subr.mxu0 0.0
  %354 = vmatpush1.msra.mxu0 0.0
  %355 = vmatprep.subr.mxu0 0.0
  %356 = vmatpush1.msra.mxu0 0.0
  %357 = vmatprep.subr.mxu0 0.0
  %358 = vmatpush1.msra.mxu0 0.0
  %359 = vmatprep.subr.mxu0 0.0
  %360 = vmatpush1.msra.mxu0 0.0
  %361 = vmatprep.subr.mxu0 0.0
  %362 = vmatpush1.msra.mxu0 0.0
  %363 = vmatprep.subr.mxu0 0.0
  %364 = vmatpush1.msra.mxu0 0.0
  %365 = vmatprep.subr.mxu0 0.0
  %366 = vmatpush1.msra.mxu0 0.0
  %367 = vmatprep.subr.mxu0 0.0
  %368 = vmatpush1.msra.mxu0 0.0
  %369 = vmatprep.subr.mxu0 0.0
  %370 = vmatpush1.msra.mxu0 0.0
  %371 = vmatprep.subr.mxu0 0.0
  %372 = vmatpush1.msra.mxu0 0.0
  %373 = vmatprep.subr.mxu0 0.0
  %374 = vmatpush1.msra.mxu0 0.0
  %375 = vmatprep.mubr.f32.mxu0 0.0
  %376 = vmatmul.mubr.f32.gmra.mrb[0].mxu0 %v264
  %v377 = vpop.f32.mrb[0].mxu0
  %v378 = vadd.f32 %v260, %v377
  %v379 = vpop.f32.mrb[0].mxu0
  %380 = vmatprep.mubr.f32.mxu0 0.0
  %381 = vmatmul.mubr.f32.gmra.mrb[0].mxu0 %v267
  %v382 = vpop.f32.mrb[0].mxu0
  %v383 = vadd.f32 %v260, %v382
  %v384 = vpop.f32.mrb[0].mxu0
  %385 = vmatprep.mubr.f32.mxu0 0.0
  %386 = vmatmul.mubr.f32.gmra.mrb[0].mxu0 %v270
  %v387 = vpop.f32.mrb[0].mxu0
  %v388 = vadd.f32 %v260, %v387
  %v389 = vpop.f32.mrb[0].mxu0
  %390 = vmatprep.mubr.f32.mxu0 0.0
  %391 = vmatmul.mubr.f32.gmra.mrb[0].mxu0 %v273
  %v392 = vpop.f32.mrb[0].mxu0
  %v393 = vadd.f32 %v260, %v392
  %v394 = vpop.f32.mrb[0].mxu0
  %395 = vmatprep.mubr.f32.mxu0 0.0
  %396 = vmatmul.mubr.f32.gmra.mrb[0].mxu0 %v276
  %v397 = vpop.f32.mrb[0].mxu0
  %v398 = vadd.f32 %v260, %v397
  %v399 = vpop.f32.mrb[0].mxu0
  %400 = vmatprep.mubr.f32.mxu0 0.0
  %401 = vmatmul.mubr.f32.gmra.mrb[0].mxu0 %v279
  %v402 = vpop.f32.mrb[0].mxu0
  %v403 = vadd.f32 %v260, %v402
  %v404 = vpop.f32.mrb[0].mxu0
  %405 = vmatprep.mubr.f32.mxu0 0.0
  %406 = vmatmul.mubr.f32.gmra.mrb[0].mxu0 %v282
  %v407 = vpop.f32.mrb[0].mxu0
  %v408 = vadd.f32 %v260, %v407
  %v409 = vpop.f32.mrb[0].mxu0
  %410 = vmatprep.mubr.f32.mxu0 0.0
  %411 = vmatmul.mubr.f32.gmra.mrb[0].mxu0 %v285
  %v412 = vpop.f32.mrb[0].mxu0
  %v413 = vadd.f32 %v260, %v412
  %v414 = vpop.f32.mrb[0].mxu0
  %415 = vmatprep.mubr.f32.mxu0 0.0
  %416 = vmatmul.mubr.f32.gmra.mrb[0].mxu0 %v288
  %v417 = vpop.f32.mrb[0].mxu0
  %v418 = vadd.f32 %v260, %v417
  %v419 = vpop.f32.mrb[0].mxu0
  %420 = vmatprep.mubr.f32.mxu0 0.0
  %421 = vmatmul.mubr.f32.gmra.mrb[0].mxu0 %v291
  %v422 = vpop.f32.mrb[0].mxu0
  %v423 = vadd.f32 %v260, %v422
  %v424 = vpop.f32.mrb[0].mxu0
  %425 = vmatprep.mubr.f32.mxu0 0.0
  %426 = vmatmul.mubr.f32.gmra.mrb[0].mxu0 %v294
  %v427 = vpop.f32.mrb[0].mxu0
  %v428 = vadd.f32 %v260, %v427
  %v429 = vpop.f32.mrb[0].mxu0
  %430 = vmatprep.mubr.f32.mxu0 0.0
  %431 = vmatmul.mubr.f32.gmra.mrb[0].mxu0 %v297
  %v432 = vpop.f32.mrb[0].mxu0
  %v433 = vadd.f32 %v260, %v432
  %v434 = vpop.f32.mrb[0].mxu0
  %435 = vmatprep.mubr.f32.mxu0 0.0
  %436 = vmatmul.mubr.f32.gmra.mrb[0].mxu0 %v300
  %v437 = vpop.f32.mrb[0].mxu0
  %v438 = vadd.f32 %v260, %v437
  %v439 = vpop.f32.mrb[0].mxu0
  %440 = vmatprep.mubr.f32.mxu0 0.0
  %441 = vmatmul.mubr.f32.gmra.mrb[0].mxu0 %v303
  %v442 = vpop.f32.mrb[0].mxu0
  %v443 = vadd.f32 %v260, %v442
  %v444 = vpop.f32.mrb[0].mxu0
  %445 = vmatprep.mubr.f32.mxu0 0.0
  %446 = vmatmul.mubr.f32.gmra.mrb[0].mxu0 %v306
  %v447 = vpop.f32.mrb[0].mxu0
  %v448 = vadd.f32 %v260, %v447
  %v449 = vpop.f32.mrb[0].mxu0
  %450 = vmatprep.mubr.f32.mxu0 0.0
  %451 = vmatmul.mubr.f32.gmra.mrb[0].mxu0 %v309
  %v452 = vpop.f32.mrb[0].mxu0
  %v453 = vadd.f32 %v260, %v452
  %v454 = vpop.f32.mrb[0].mxu0
  %455 = vdwg.mxu0
  %v456 = vld [vmem:[%s29] sm:$0xff]
  %v457 = vld [vmem:[%s29 + $0x8] sm:$0xff]
  %vm458 = vcmask 130048
  %v460 = vsel %vm458, 0.0, 0
  %462 = vmatprep.subr.mxu0 0.0
  %463 = vmatpush1.msra.mxu0 %v456
  %464 = vmatprep.subr.mxu0 0.0
  %465 = vmatpush1.msra.mxu0 %v457
  %466 = vmatprep.subr.mxu0 0.0
  %467 = vmatpush1.msra.mxu0 0.0
  %468 = vmatprep.subr.mxu0 0.0
  %469 = vmatpush1.msra.mxu0 0.0
  %470 = vmatprep.subr.mxu0 0.0
  %471 = vmatpush1.msra.mxu0 0.0
  %472 = vmatprep.subr.mxu0 0.0
  %473 = vmatpush1.msra.mxu0 0.0
  %474 = vmatprep.subr.mxu0 0.0
  %475 = vmatpush1.msra.mxu0 0.0
  %476 = vmatprep.subr.mxu0 0.0
  %477 = vmatpush1.msra.mxu0 0.0
  %478 = vmatprep.subr.mxu0 0.0
  %479 = vmatpush1.msra.mxu0 0.0
  %480 = vmatprep.subr.mxu0 0.0
  %481 = vmatpush1.msra.mxu0 0.0
  %482 = vmatprep.subr.mxu0 0.0
  %483 = vmatpush1.msra.mxu0 0.0
  %484 = vmatprep.subr.mxu0 0.0
  %485 = vmatpush1.msra.mxu0 0.0
  %486 = vmatprep.subr.mxu0 0.0
  %487 = vmatpush1.msra.mxu0 0.0
  %488 = vmatprep.subr.mxu0 0.0
  %489 = vmatpush1.msra.mxu0 0.0
  %490 = vmatprep.subr.mxu0 0.0
  %491 = vmatpush1.msra.mxu0 0.0
  %492 = vmatprep.subr.mxu0 0.0
  %493 = vmatpush1.msra.mxu0 0.0
  %494 = vmatprep.subr.mxu0 0.0
  %495 = vmatpush1.msra.mxu0 0.0
  %496 = vmatprep.subr.mxu0 0.0
  %497 = vmatpush1.msra.mxu0 0.0
  %498 = vmatprep.subr.mxu0 0.0
  %499 = vmatpush1.msra.mxu0 0.0
  %500 = vmatprep.subr.mxu0 0.0
  %501 = vmatpush1.msra.mxu0 0.0
  %502 = vmatprep.subr.mxu0 0.0
  %503 = vmatpush1.msra.mxu0 0.0
  %504 = vmatprep.subr.mxu0 0.0
  %505 = vmatpush1.msra.mxu0 0.0
  %506 = vmatprep.subr.mxu0 0.0
  %507 = vmatpush1.msra.mxu0 0.0
  %508 = vmatprep.subr.mxu0 0.0
  %509 = vmatpush1.msra.mxu0 0.0
  %510 = vmatprep.subr.mxu0 0.0
  %511 = vmatpush1.msra.mxu0 0.0
  %512 = vmatprep.subr.mxu0 0.0
  %513 = vmatpush1.msra.mxu0 0.0
  %514 = vmatprep.subr.mxu0 0.0
  %515 = vmatpush1.msra.mxu0 0.0
  %516 = vmatprep.subr.mxu0 0.0
  %517 = vmatpush1.msra.mxu0 0.0
  %518 = vmatprep.subr.mxu0 0.0
  %519 = vmatpush1.msra.mxu0 0.0
  %520 = vmatprep.subr.mxu0 0.0
  %521 = vmatpush1.msra.mxu0 0.0
  %522 = vmatprep.subr.mxu0 0.0
  %523 = vmatpush1.msra.mxu0 0.0
  %524 = vmatprep.subr.mxu0 0.0
  %525 = vmatpush1.msra.mxu0 0.0
  %526 = vmatprep.mubr.f32.mxu0 0.0
  %527 = vmatmul.mubr.f32.gmra.mrb[0].mxu0 %v460
  %v528 = vpop.f32.mrb[0].mxu0
  %v529 = vadd.f32 0.0, %v528
  %v530 = vpop.f32.mrb[0].mxu0
  %531 = vmatprep.mubr.f32.mxu0 0.0
  %532 = vmatmul.mubr.f32.gmra.mrb[0].mxu0 %v460
  %v533 = vpop.f32.mrb[0].mxu0
  %v534 = vadd.f32 0.0, %v533
  %v535 = vpop.f32.mrb[0].mxu0
  %536 = vdwg.mxu0
  %v537 = vadd.f32 %v378, %v529
  %v538 = vadd.f32 %v383, %v534
  %v539 = vxor.u32 %v537, 2147483648
  %v540 = vxor.u32 %v538, 2147483648
  %v541 = vmul.f32 %v539, 1.442695
  %v542 = vpow.pop %v541
  %v543 = vmul.f32 %v540, 1.442695
  %v544 = vpow.pop %v543
  %v545 = vadd.f32 %v542, 1.0
  %v546 = vadd.f32 %v544, 1.0
  %v547 = vrcp.pop %v545
  %v548 = vmul.f32 1.0, %v547
  %v549 = vrcp.pop %v546
  %v550 = vmul.f32 1.0, %v549
  %v551 = vtanh.pop %v537
  %v552 = vtanh.pop %v538
  %v553 = vmul.f32 %v548, 0.0
  %v554 = vmul.f32 %v550, 0.0
  %557 = vrot.lane.b32.xlu0 %v551, 96
  %v558 = vpop.permute.xlu0 %557
  %559 = vrot.lane.b32.xlu0 %v552, 96
  %v560 = vpop.permute.xlu0 %559
  %v563 = vmul.f32 %v548, %v558
  %v564 = vmul.f32 %v550, %v560
  %567 = vrot.lane.b32.xlu0 %v563, 16
  %v568 = vpop.permute.xlu0 %567
  %569 = vrot.lane.b32.xlu0 %v564, 16
  %v570 = vpop.permute.xlu0 %569
  %v573 = vadd.f32 %v553, %v568
  %v574 = vadd.f32 %v554, %v570
  %v575 = vtanh.pop %v573
  %v576 = vtanh.pop %v574
  %579 = vrot.lane.b32.xlu0 %v575, 32
  %v580 = vpop.permute.xlu0 %579
  %581 = vrot.lane.b32.xlu0 %v576, 32
  %v582 = vpop.permute.xlu0 %581
  %v585 = vmul.f32 %v548, %v580
  %v586 = vmul.f32 %v550, %v582
  %589 = vrot.lane.b32.xlu0 %v585, 80
  %v590 = vpop.permute.xlu0 %589
  %591 = vrot.lane.b32.xlu0 %v586, 80
  %v592 = vpop.permute.xlu0 %591
  %v593 = vsel %vm458, %v590, 0
  %v595 = vsel %vm458, %v592, 0
  %597 = vmatprep.subr.mxu0 0.0
  %598 = vmatpush1.msra.mxu0 %v456
  %599 = vmatprep.subr.mxu0 0.0
  %600 = vmatpush1.msra.mxu0 %v457
  %601 = vmatprep.subr.mxu0 0.0
  %602 = vmatpush1.msra.mxu0 0.0
  %603 = vmatprep.subr.mxu0 0.0
  %604 = vmatpush1.msra.mxu0 0.0
  %605 = vmatprep.subr.mxu0 0.0
  %606 = vmatpush1.msra.mxu0 0.0
  %607 = vmatprep.subr.mxu0 0.0
  %608 = vmatpush1.msra.mxu0 0.0
  %609 = vmatprep.subr.mxu0 0.0
  %610 = vmatpush1.msra.mxu0 0.0
  %611 = vmatprep.subr.mxu0 0.0
  %612 = vmatpush1.msra.mxu0 0.0
  %613 = vmatprep.subr.mxu0 0.0
  %614 = vmatpush1.msra.mxu0 0.0
  %615 = vmatprep.subr.mxu0 0.0
  %616 = vmatpush1.msra.mxu0 0.0
  %617 = vmatprep.subr.mxu0 0.0
  %618 = vmatpush1.msra.mxu0 0.0
  %619 = vmatprep.subr.mxu0 0.0
  %620 = vmatpush1.msra.mxu0 0.0
  %621 = vmatprep.subr.mxu0 0.0
  %622 = vmatpush1.msra.mxu0 0.0
  %623 = vmatprep.subr.mxu0 0.0
  %624 = vmatpush1.msra.mxu0 0.0
  %625 = vmatprep.subr.mxu0 0.0
  %626 = vmatpush1.msra.mxu0 0.0
  %627 = vmatprep.subr.mxu0 0.0
  %628 = vmatpush1.msra.mxu0 0.0
  %629 = vmatprep.subr.mxu0 0.0
  %630 = vmatpush1.msra.mxu0 0.0
  %631 = vmatprep.subr.mxu0 0.0
  %632 = vmatpush1.msra.mxu0 0.0
  %633 = vmatprep.subr.mxu0 0.0
  %634 = vmatpush1.msra.mxu0 0.0
  %635 = vmatprep.subr.mxu0 0.0
  %636 = vmatpush1.msra.mxu0 0.0
  %637 = vmatprep.subr.mxu0 0.0
  %638 = vmatpush1.msra.mxu0 0.0
  %639 = vmatprep.subr.mxu0 0.0
  %640 = vmatpush1.msra.mxu0 0.0
  %641 = vmatprep.subr.mxu0 0.0
  %642 = vmatpush1.msra.mxu0 0.0
  %643 = vmatprep.subr.mxu0 0.0
  %644 = vmatpush1.msra.mxu0 0.0
  %645 = vmatprep.subr.mxu0 0.0
  %646 = vmatpush1.msra.mxu0 0.0
  %647 = vmatprep.subr.mxu0 0.0
  %648 = vmatpush1.msra.mxu0 0.0
  %649 = vmatprep.subr.mxu0 0.0
  %650 = vmatpush1.msra.mxu0 0.0
  %651 = vmatprep.subr.mxu0 0.0
  %652 = vmatpush1.msra.mxu0 0.0
  %653 = vmatprep.subr.mxu0 0.0
  %654 = vmatpush1.msra.mxu0 0.0
  %655 = vmatprep.subr.mxu0 0.0
  %656 = vmatpush1.msra.mxu0 0.0
  %657 = vmatprep.subr.mxu0 0.0
  %658 = vmatpush1.msra.mxu0 0.0
  %659 = vmatprep.subr.mxu0 0.0
  %660 = vmatpush1.msra.mxu0 0.0
  %661 = vmatprep.mubr.f32.mxu0 0.0
  %662 = vmatmul.mubr.f32.gmra.mrb[0].mxu0 %v593
  %v663 = vpop.f32.mrb[0].mxu0
  %v664 = vadd.f32 0.0, %v663
  %v665 = vpop.f32.mrb[0].mxu0
  %666 = vmatprep.mubr.f32.mxu0 0.0
  %667 = vmatmul.mubr.f32.gmra.mrb[0].mxu0 %v595
  %v668 = vpop.f32.mrb[0].mxu0
  %v669 = vadd.f32 0.0, %v668
  %v670 = vpop.f32.mrb[0].mxu0
  %671 = vdwg.mxu0
  %v672 = vadd.f32 %v388, %v664
  %v673 = vadd.f32 %v393, %v669
  %v674 = vxor.u32 %v672, 2147483648
  %v675 = vxor.u32 %v673, 2147483648
  %v676 = vmul.f32 %v674, 1.442695
  %v677 = vpow.pop %v676
  %v678 = vmul.f32 %v675, 1.442695
  %v679 = vpow.pop %v678
  %v680 = vadd.f32 %v677, 1.0
  %v681 = vadd.f32 %v679, 1.0
  %v682 = vrcp.pop %v680
  %v683 = vmul.f32 1.0, %v682
  %v684 = vrcp.pop %v681
  %v685 = vmul.f32 1.0, %v684
  %v686 = vtanh.pop %v672
  %v687 = vtanh.pop %v673
  %v688 = vmul.f32 %v683, %v573
  %v689 = vmul.f32 %v685, %v574
  %692 = vrot.lane.b32.xlu0 %v686, 96
  %v693 = vpop.permute.xlu0 %692
  %694 = vrot.lane.b32.xlu0 %v687, 96
  %v695 = vpop.permute.xlu0 %694
  %v698 = vmul.f32 %v683, %v693
  %v699 = vmul.f32 %v685, %v695
  %702 = vrot.lane.b32.xlu0 %v698, 16
  %v703 = vpop.permute.xlu0 %702
  %704 = vrot.lane.b32.xlu0 %v699, 16
  %v705 = vpop.permute.xlu0 %704
  %v708 = vadd.f32 %v688, %v703
  %v709 = vadd.f32 %v689, %v705
  %v710 = vtanh.pop %v708
  %v711 = vtanh.pop %v709
  %714 = vrot.lane.b32.xlu0 %v710, 32
  %v715 = vpop.permute.xlu0 %714
  %716 = vrot.lane.b32.xlu0 %v711, 32
  %v717 = vpop.permute.xlu0 %716
  %v720 = vmul.f32 %v683, %v715
  %v721 = vmul.f32 %v685, %v717
  %724 = vrot.lane.b32.xlu0 %v720, 80
  %v725 = vpop.permute.xlu0 %724
  %726 = vrot.lane.b32.xlu0 %v721, 80
  %v727 = vpop.permute.xlu0 %726
  %v728 = vsel %vm458, %v725, 0
  %v730 = vsel %vm458, %v727, 0
  %732 = vmatprep.subr.mxu0 0.0
  %733 = vmatpush1.msra.mxu0 %v456
  %734 = vmatprep.subr.mxu0 0.0
  %735 = vmatpush1.msra.mxu0 %v457
  %736 = vmatprep.subr.mxu0 0.0
  %737 = vmatpush1.msra.mxu0 0.0
  %738 = vmatprep.subr.mxu0 0.0
  %739 = vmatpush1.msra.mxu0 0.0
  %740 = vmatprep.subr.mxu0 0.0
  %741 = vmatpush1.msra.mxu0 0.0
  %742 = vmatprep.subr.mxu0 0.0
  %743 = vmatpush1.msra.mxu0 0.0
  %744 = vmatprep.subr.mxu0 0.0
  %745 = vmatpush1.msra.mxu0 0.0
  %746 = vmatprep.subr.mxu0 0.0
  %747 = vmatpush1.msra.mxu0 0.0
  %748 = vmatprep.subr.mxu0 0.0
  %749 = vmatpush1.msra.mxu0 0.0
  %750 = vmatprep.subr.mxu0 0.0
  %751 = vmatpush1.msra.mxu0 0.0
  %752 = vmatprep.subr.mxu0 0.0
  %753 = vmatpush1.msra.mxu0 0.0
  %754 = vmatprep.subr.mxu0 0.0
  %755 = vmatpush1.msra.mxu0 0.0
  %756 = vmatprep.subr.mxu0 0.0
  %757 = vmatpush1.msra.mxu0 0.0
  %758 = vmatprep.subr.mxu0 0.0
  %759 = vmatpush1.msra.mxu0 0.0
  %760 = vmatprep.subr.mxu0 0.0
  %761 = vmatpush1.msra.mxu0 0.0
  %762 = vmatprep.subr.mxu0 0.0
  %763 = vmatpush1.msra.mxu0 0.0
  %764 = vmatprep.subr.mxu0 0.0
  %765 = vmatpush1.msra.mxu0 0.0
  %766 = vmatprep.subr.mxu0 0.0
  %767 = vmatpush1.msra.mxu0 0.0
  %768 = vmatprep.subr.mxu0 0.0
  %769 = vmatpush1.msra.mxu0 0.0
  %770 = vmatprep.subr.mxu0 0.0
  %771 = vmatpush1.msra.mxu0 0.0
  %772 = vmatprep.subr.mxu0 0.0
  %773 = vmatpush1.msra.mxu0 0.0
  %774 = vmatprep.subr.mxu0 0.0
  %775 = vmatpush1.msra.mxu0 0.0
  %776 = vmatprep.subr.mxu0 0.0
  %777 = vmatpush1.msra.mxu0 0.0
  %778 = vmatprep.subr.mxu0 0.0
  %779 = vmatpush1.msra.mxu0 0.0
  %780 = vmatprep.subr.mxu0 0.0
  %781 = vmatpush1.msra.mxu0 0.0
  %782 = vmatprep.subr.mxu0 0.0
  %783 = vmatpush1.msra.mxu0 0.0
  %784 = vmatprep.subr.mxu0 0.0
  %785 = vmatpush1.msra.mxu0 0.0
  %786 = vmatprep.subr.mxu0 0.0
  %787 = vmatpush1.msra.mxu0 0.0
  %788 = vmatprep.subr.mxu0 0.0
  %789 = vmatpush1.msra.mxu0 0.0
  %790 = vmatprep.subr.mxu0 0.0
  %791 = vmatpush1.msra.mxu0 0.0
  %792 = vmatprep.subr.mxu0 0.0
  %793 = vmatpush1.msra.mxu0 0.0
  %794 = vmatprep.subr.mxu0 0.0
  %795 = vmatpush1.msra.mxu0 0.0
  %796 = vmatprep.mubr.f32.mxu0 0.0
  %797 = vmatmul.mubr.f32.gmra.mrb[0].mxu0 %v728
  %v798 = vpop.f32.mrb[0].mxu0
  %v799 = vadd.f32 0.0, %v798
  %v800 = vpop.f32.mrb[0].mxu0
  %801 = vmatprep.mubr.f32.mxu0 0.0
  %802 = vmatmul.mubr.f32.gmra.mrb[0].mxu0 %v730
  %v803 = vpop.f32.mrb[0].mxu0
  %v804 = vadd.f32 0.0, %v803
  %v805 = vpop.f32.mrb[0].mxu0
  %806 = vdwg.mxu0
  %v807 = vadd.f32 %v398, %v799
  %v808 = vadd.f32 %v403, %v804
  %v809 = vxor.u32 %v807, 2147483648
  %v810 = vxor.u32 %v808, 2147483648
  %v811 = vmul.f32 %v809, 1.442695
  %v812 = vpow.pop %v811
  %v813 = vmul.f32 %v810, 1.442695
  %v814 = vpow.pop %v813
  %v815 = vadd.f32 %v812, 1.0
  %v816 = vadd.f32 %v814, 1.0
  %v817 = vrcp.pop %v815
  %v818 = vmul.f32 1.0, %v817
  %v819 = vrcp.pop %v816
  %v820 = vmul.f32 1.0, %v819
  %v821 = vtanh.pop %v807
  %v822 = vtanh.pop %v808
  %v823 = vmul.f32 %v818, %v708
  %v824 = vmul.f32 %v820, %v709
  %827 = vrot.lane.b32.xlu0 %v821, 96
  %v828 = vpop.permute.xlu0 %827
  %829 = vrot.lane.b32.xlu0 %v822, 96
  %v830 = vpop.permute.xlu0 %829
  %v833 = vmul.f32 %v818, %v828
  %v834 = vmul.f32 %v820, %v830
  %837 = vrot.lane.b32.xlu0 %v833, 16
  %v838 = vpop.permute.xlu0 %837
  %839 = vrot.lane.b32.xlu0 %v834, 16
  %v840 = vpop.permute.xlu0 %839
  %v843 = vadd.f32 %v823, %v838
  %v844 = vadd.f32 %v824, %v840
  %v845 = vtanh.pop %v843
  %v846 = vtanh.pop %v844
  %849 = vrot.lane.b32.xlu0 %v845, 32
  %v850 = vpop.permute.xlu0 %849
  %851 = vrot.lane.b32.xlu0 %v846, 32
  %v852 = vpop.permute.xlu0 %851
  %v855 = vmul.f32 %v818, %v850
  %v856 = vmul.f32 %v820, %v852
  %859 = vrot.lane.b32.xlu0 %v855, 80
  %v860 = vpop.permute.xlu0 %859
  %861 = vrot.lane.b32.xlu0 %v856, 80
  %v862 = vpop.permute.xlu0 %861
  %v863 = vsel %vm458, %v860, 0
  %v865 = vsel %vm458, %v862, 0
  %867 = vmatprep.subr.mxu0 0.0
  %868 = vmatpush1.msra.mxu0 %v456
  %869 = vmatprep.subr.mxu0 0.0
  %870 = vmatpush1.msra.mxu0 %v457
  %871 = vmatprep.subr.mxu0 0.0
  %872 = vmatpush1.msra.mxu0 0.0
  %873 = vmatprep.subr.mxu0 0.0
  %874 = vmatpush1.msra.mxu0 0.0
  %875 = vmatprep.subr.mxu0 0.0
  %876 = vmatpush1.msra.mxu0 0.0
  %877 = vmatprep.subr.mxu0 0.0
  %878 = vmatpush1.msra.mxu0 0.0
  %879 = vmatprep.subr.mxu0 0.0
  %880 = vmatpush1.msra.mxu0 0.0
  %881 = vmatprep.subr.mxu0 0.0
  %882 = vmatpush1.msra.mxu0 0.0
  %883 = vmatprep.subr.mxu0 0.0
  %884 = vmatpush1.msra.mxu0 0.0
  %885 = vmatprep.subr.mxu0 0.0
  %886 = vmatpush1.msra.mxu0 0.0
  %887 = vmatprep.subr.mxu0 0.0
  %888 = vmatpush1.msra.mxu0 0.0
  %889 = vmatprep.subr.mxu0 0.0
  %890 = vmatpush1.msra.mxu0 0.0
  %891 = vmatprep.subr.mxu0 0.0
  %892 = vmatpush1.msra.mxu0 0.0
  %893 = vmatprep.subr.mxu0 0.0
  %894 = vmatpush1.msra.mxu0 0.0
  %895 = vmatprep.subr.mxu0 0.0
  %896 = vmatpush1.msra.mxu0 0.0
  %897 = vmatprep.subr.mxu0 0.0
  %898 = vmatpush1.msra.mxu0 0.0
  %899 = vmatprep.subr.mxu0 0.0
  %900 = vmatpush1.msra.mxu0 0.0
  %901 = vmatprep.subr.mxu0 0.0
  %902 = vmatpush1.msra.mxu0 0.0
  %903 = vmatprep.subr.mxu0 0.0
  %904 = vmatpush1.msra.mxu0 0.0
  %905 = vmatprep.subr.mxu0 0.0
  %906 = vmatpush1.msra.mxu0 0.0
  %907 = vmatprep.subr.mxu0 0.0
  %908 = vmatpush1.msra.mxu0 0.0
  %909 = vmatprep.subr.mxu0 0.0
  %910 = vmatpush1.msra.mxu0 0.0
  %911 = vmatprep.subr.mxu0 0.0
  %912 = vmatpush1.msra.mxu0 0.0
  %913 = vmatprep.subr.mxu0 0.0
  %914 = vmatpush1.msra.mxu0 0.0
  %915 = vmatprep.subr.mxu0 0.0
  %916 = vmatpush1.msra.mxu0 0.0
  %917 = vmatprep.subr.mxu0 0.0
  %918 = vmatpush1.msra.mxu0 0.0
  %919 = vmatprep.subr.mxu0 0.0
  %920 = vmatpush1.msra.mxu0 0.0
  %921 = vmatprep.subr.mxu0 0.0
  %922 = vmatpush1.msra.mxu0 0.0
  %923 = vmatprep.subr.mxu0 0.0
  %924 = vmatpush1.msra.mxu0 0.0
  %925 = vmatprep.subr.mxu0 0.0
  %926 = vmatpush1.msra.mxu0 0.0
  %927 = vmatprep.subr.mxu0 0.0
  %928 = vmatpush1.msra.mxu0 0.0
  %929 = vmatprep.subr.mxu0 0.0
  %930 = vmatpush1.msra.mxu0 0.0
  %931 = vmatprep.mubr.f32.mxu0 0.0
  %932 = vmatmul.mubr.f32.gmra.mrb[0].mxu0 %v863
  %v933 = vpop.f32.mrb[0].mxu0
  %v934 = vadd.f32 0.0, %v933
  %v935 = vpop.f32.mrb[0].mxu0
  %936 = vmatprep.mubr.f32.mxu0 0.0
  %937 = vmatmul.mubr.f32.gmra.mrb[0].mxu0 %v865
  %v938 = vpop.f32.mrb[0].mxu0
  %v939 = vadd.f32 0.0, %v938
  %v940 = vpop.f32.mrb[0].mxu0
  %941 = vdwg.mxu0
  %v942 = vadd.f32 %v408, %v934
  %v943 = vadd.f32 %v413, %v939
  %v944 = vxor.u32 %v942, 2147483648
  %v945 = vxor.u32 %v943, 2147483648
  %v946 = vmul.f32 %v944, 1.442695
  %v947 = vpow.pop %v946
  %v948 = vmul.f32 %v945, 1.442695
  %v949 = vpow.pop %v948
  %v950 = vadd.f32 %v947, 1.0
  %v951 = vadd.f32 %v949, 1.0
  %v952 = vrcp.pop %v950
  %v953 = vmul.f32 1.0, %v952
  %v954 = vrcp.pop %v951
  %v955 = vmul.f32 1.0, %v954
  %v956 = vtanh.pop %v942
  %v957 = vtanh.pop %v943
  %v958 = vmul.f32 %v953, %v843
  %v959 = vmul.f32 %v955, %v844
  %962 = vrot.lane.b32.xlu0 %v956, 96
  %v963 = vpop.permute.xlu0 %962
  %964 = vrot.lane.b32.xlu0 %v957, 96
  %v965 = vpop.permute.xlu0 %964
  %v968 = vmul.f32 %v953, %v963
  %v969 = vmul.f32 %v955, %v965
  %972 = vrot.lane.b32.xlu0 %v968, 16
  %v973 = vpop.permute.xlu0 %972
  %974 = vrot.lane.b32.xlu0 %v969, 16
  %v975 = vpop.permute.xlu0 %974
  %v978 = vadd.f32 %v958, %v973
  %v979 = vadd.f32 %v959, %v975
  %v980 = vtanh.pop %v978
  %v981 = vtanh.pop %v979
  %984 = vrot.lane.b32.xlu0 %v980, 32
  %v985 = vpop.permute.xlu0 %984
  %986 = vrot.lane.b32.xlu0 %v981, 32
  %v987 = vpop.permute.xlu0 %986
  %v990 = vmul.f32 %v953, %v985
  %v991 = vmul.f32 %v955, %v987
  %994 = vrot.lane.b32.xlu0 %v990, 80
  %v995 = vpop.permute.xlu0 %994
  %996 = vrot.lane.b32.xlu0 %v991, 80
  %v997 = vpop.permute.xlu0 %996
  %v998 = vsel %vm458, %v995, 0
  %v1000 = vsel %vm458, %v997, 0
  %1002 = vmatprep.subr.mxu0 0.0
  %1003 = vmatpush1.msra.mxu0 %v456
  %1004 = vmatprep.subr.mxu0 0.0
  %1005 = vmatpush1.msra.mxu0 %v457
  %1006 = vmatprep.subr.mxu0 0.0
  %1007 = vmatpush1.msra.mxu0 0.0
  %1008 = vmatprep.subr.mxu0 0.0
  %1009 = vmatpush1.msra.mxu0 0.0
  %1010 = vmatprep.subr.mxu0 0.0
  %1011 = vmatpush1.msra.mxu0 0.0
  %1012 = vmatprep.subr.mxu0 0.0
  %1013 = vmatpush1.msra.mxu0 0.0
  %1014 = vmatprep.subr.mxu0 0.0
  %1015 = vmatpush1.msra.mxu0 0.0
  %1016 = vmatprep.subr.mxu0 0.0
  %1017 = vmatpush1.msra.mxu0 0.0
  %1018 = vmatprep.subr.mxu0 0.0
  %1019 = vmatpush1.msra.mxu0 0.0
  %1020 = vmatprep.subr.mxu0 0.0
  %1021 = vmatpush1.msra.mxu0 0.0
  %1022 = vmatprep.subr.mxu0 0.0
  %1023 = vmatpush1.msra.mxu0 0.0
  %1024 = vmatprep.subr.mxu0 0.0
  %1025 = vmatpush1.msra.mxu0 0.0
  %1026 = vmatprep.subr.mxu0 0.0
  %1027 = vmatpush1.msra.mxu0 0.0
  %1028 = vmatprep.subr.mxu0 0.0
  %1029 = vmatpush1.msra.mxu0 0.0
  %1030 = vmatprep.subr.mxu0 0.0
  %1031 = vmatpush1.msra.mxu0 0.0
  %1032 = vmatprep.subr.mxu0 0.0
  %1033 = vmatpush1.msra.mxu0 0.0
  %1034 = vmatprep.subr.mxu0 0.0
  %1035 = vmatpush1.msra.mxu0 0.0
  %1036 = vmatprep.subr.mxu0 0.0
  %1037 = vmatpush1.msra.mxu0 0.0
  %1038 = vmatprep.subr.mxu0 0.0
  %1039 = vmatpush1.msra.mxu0 0.0
  %1040 = vmatprep.subr.mxu0 0.0
  %1041 = vmatpush1.msra.mxu0 0.0
  %1042 = vmatprep.subr.mxu0 0.0
  %1043 = vmatpush1.msra.mxu0 0.0
  %1044 = vmatprep.subr.mxu0 0.0
  %1045 = vmatpush1.msra.mxu0 0.0
  %1046 = vmatprep.subr.mxu0 0.0
  %1047 = vmatpush1.msra.mxu0 0.0
  %1048 = vmatprep.subr.mxu0 0.0
  %1049 = vmatpush1.msra.mxu0 0.0
  %1050 = vmatprep.subr.mxu0 0.0
  %1051 = vmatpush1.msra.mxu0 0.0
  %1052 = vmatprep.subr.mxu0 0.0
  %1053 = vmatpush1.msra.mxu0 0.0
  %1054 = vmatprep.subr.mxu0 0.0
  %1055 = vmatpush1.msra.mxu0 0.0
  %1056 = vmatprep.subr.mxu0 0.0
  %1057 = vmatpush1.msra.mxu0 0.0
  %1058 = vmatprep.subr.mxu0 0.0
  %1059 = vmatpush1.msra.mxu0 0.0
  %1060 = vmatprep.subr.mxu0 0.0
  %1061 = vmatpush1.msra.mxu0 0.0
  %1062 = vmatprep.subr.mxu0 0.0
  %1063 = vmatpush1.msra.mxu0 0.0
  %1064 = vmatprep.subr.mxu0 0.0
  %1065 = vmatpush1.msra.mxu0 0.0
  %1066 = vmatprep.mubr.f32.mxu0 0.0
  %1067 = vmatmul.mubr.f32.gmra.mrb[0].mxu0 %v998
  %v1068 = vpop.f32.mrb[0].mxu0
  %v1069 = vadd.f32 0.0, %v1068
  %v1070 = vpop.f32.mrb[0].mxu0
  %1071 = vmatprep.mubr.f32.mxu0 0.0
  %1072 = vmatmul.mubr.f32.gmra.mrb[0].mxu0 %v1000
  %v1073 = vpop.f32.mrb[0].mxu0
  %v1074 = vadd.f32 0.0, %v1073
  %v1075 = vpop.f32.mrb[0].mxu0
  %1076 = vdwg.mxu0
  %v1077 = vadd.f32 %v418, %v1069
  %v1078 = vadd.f32 %v423, %v1074
  %v1079 = vxor.u32 %v1077, 2147483648
  %v1080 = vxor.u32 %v1078, 2147483648
  %v1081 = vmul.f32 %v1079, 1.442695
  %v1082 = vpow.pop %v1081
  %v1083 = vmul.f32 %v1080, 1.442695
  %v1084 = vpow.pop %v1083
  %v1085 = vadd.f32 %v1082, 1.0
  %v1086 = vadd.f32 %v1084, 1.0
  %v1087 = vrcp.pop %v1085
  %v1088 = vmul.f32 1.0, %v1087
  %v1089 = vrcp.pop %v1086
  %v1090 = vmul.f32 1.0, %v1089
  %v1091 = vtanh.pop %v1077
  %v1092 = vtanh.pop %v1078
  %v1093 = vmul.f32 %v1088, %v978
  %v1094 = vmul.f32 %v1090, %v979
  %1097 = vrot.lane.b32.xlu0 %v1091, 96
  %v1098 = vpop.permute.xlu0 %1097
  %1099 = vrot.lane.b32.xlu0 %v1092, 96
  %v1100 = vpop.permute.xlu0 %1099
  %v1103 = vmul.f32 %v1088, %v1098
  %v1104 = vmul.f32 %v1090, %v1100
  %1107 = vrot.lane.b32.xlu0 %v1103, 16
  %v1108 = vpop.permute.xlu0 %1107
  %1109 = vrot.lane.b32.xlu0 %v1104, 16
  %v1110 = vpop.permute.xlu0 %1109
  %v1113 = vadd.f32 %v1093, %v1108
  %v1114 = vadd.f32 %v1094, %v1110
  %v1115 = vtanh.pop %v1113
  %v1116 = vtanh.pop %v1114
  %1119 = vrot.lane.b32.xlu0 %v1115, 32
  %v1120 = vpop.permute.xlu0 %1119
  %1121 = vrot.lane.b32.xlu0 %v1116, 32
  %v1122 = vpop.permute.xlu0 %1121
  %v1125 = vmul.f32 %v1088, %v1120
  %v1126 = vmul.f32 %v1090, %v1122
  %1129 = vrot.lane.b32.xlu0 %v1125, 80
  %v1130 = vpop.permute.xlu0 %1129
  %1131 = vrot.lane.b32.xlu0 %v1126, 80
  %v1132 = vpop.permute.xlu0 %1131
  %v1133 = vsel %vm458, %v1130, 0
  %v1135 = vsel %vm458, %v1132, 0
  %1137 = vmatprep.subr.mxu0 0.0
  %1138 = vmatpush1.msra.mxu0 %v456
  %1139 = vmatprep.subr.mxu0 0.0
  %1140 = vmatpush1.msra.mxu0 %v457
  %1141 = vmatprep.subr.mxu0 0.0
  %1142 = vmatpush1.msra.mxu0 0.0
  %1143 = vmatprep.subr.mxu0 0.0
  %1144 = vmatpush1.msra.mxu0 0.0
  %1145 = vmatprep.subr.mxu0 0.0
  %1146 = vmatpush1.msra.mxu0 0.0
  %1147 = vmatprep.subr.mxu0 0.0
  %1148 = vmatpush1.msra.mxu0 0.0
  %1149 = vmatprep.subr.mxu0 0.0
  %1150 = vmatpush1.msra.mxu0 0.0
  %1151 = vmatprep.subr.mxu0 0.0
  %1152 = vmatpush1.msra.mxu0 0.0
  %1153 = vmatprep.subr.mxu0 0.0
  %1154 = vmatpush1.msra.mxu0 0.0
  %1155 = vmatprep.subr.mxu0 0.0
  %1156 = vmatpush1.msra.mxu0 0.0
  %1157 = vmatprep.subr.mxu0 0.0
  %1158 = vmatpush1.msra.mxu0 0.0
  %1159 = vmatprep.subr.mxu0 0.0
  %1160 = vmatpush1.msra.mxu0 0.0
  %1161 = vmatprep.subr.mxu0 0.0
  %1162 = vmatpush1.msra.mxu0 0.0
  %1163 = vmatprep.subr.mxu0 0.0
  %1164 = vmatpush1.msra.mxu0 0.0
  %1165 = vmatprep.subr.mxu0 0.0
  %1166 = vmatpush1.msra.mxu0 0.0
  %1167 = vmatprep.subr.mxu0 0.0
  %1168 = vmatpush1.msra.mxu0 0.0
  %1169 = vmatprep.subr.mxu0 0.0
  %1170 = vmatpush1.msra.mxu0 0.0
  %1171 = vmatprep.subr.mxu0 0.0
  %1172 = vmatpush1.msra.mxu0 0.0
  %1173 = vmatprep.subr.mxu0 0.0
  %1174 = vmatpush1.msra.mxu0 0.0
  %1175 = vmatprep.subr.mxu0 0.0
  %1176 = vmatpush1.msra.mxu0 0.0
  %1177 = vmatprep.subr.mxu0 0.0
  %1178 = vmatpush1.msra.mxu0 0.0
  %1179 = vmatprep.subr.mxu0 0.0
  %1180 = vmatpush1.msra.mxu0 0.0
  %1181 = vmatprep.subr.mxu0 0.0
  %1182 = vmatpush1.msra.mxu0 0.0
  %1183 = vmatprep.subr.mxu0 0.0
  %1184 = vmatpush1.msra.mxu0 0.0
  %1185 = vmatprep.subr.mxu0 0.0
  %1186 = vmatpush1.msra.mxu0 0.0
  %1187 = vmatprep.subr.mxu0 0.0
  %1188 = vmatpush1.msra.mxu0 0.0
  %1189 = vmatprep.subr.mxu0 0.0
  %1190 = vmatpush1.msra.mxu0 0.0
  %1191 = vmatprep.subr.mxu0 0.0
  %1192 = vmatpush1.msra.mxu0 0.0
  %1193 = vmatprep.subr.mxu0 0.0
  %1194 = vmatpush1.msra.mxu0 0.0
  %1195 = vmatprep.subr.mxu0 0.0
  %1196 = vmatpush1.msra.mxu0 0.0
  %1197 = vmatprep.subr.mxu0 0.0
  %1198 = vmatpush1.msra.mxu0 0.0
  %1199 = vmatprep.subr.mxu0 0.0
  %1200 = vmatpush1.msra.mxu0 0.0
  %1201 = vmatprep.mubr.f32.mxu0 0.0
  %1202 = vmatmul.mubr.f32.gmra.mrb[0].mxu0 %v1133
  %v1203 = vpop.f32.mrb[0].mxu0
  %v1204 = vadd.f32 0.0, %v1203
  %v1205 = vpop.f32.mrb[0].mxu0
  %1206 = vmatprep.mubr.f32.mxu0 0.0
  %1207 = vmatmul.mubr.f32.gmra.mrb[0].mxu0 %v1135
  %v1208 = vpop.f32.mrb[0].mxu0
  %v1209 = vadd.f32 0.0, %v1208
  %v1210 = vpop.f32.mrb[0].mxu0
  %1211 = vdwg.mxu0
  %v1212 = vadd.f32 %v428, %v1204
  %v1213 = vadd.f32 %v433, %v1209
  %v1214 = vxor.u32 %v1212, 2147483648
  %v1215 = vxor.u32 %v1213, 2147483648
  %v1216 = vmul.f32 %v1214, 1.442695
  %v1217 = vpow.pop %v1216
  %v1218 = vmul.f32 %v1215, 1.442695
  %v1219 = vpow.pop %v1218
  %v1220 = vadd.f32 %v1217, 1.0
  %v1221 = vadd.f32 %v1219, 1.0
  %v1222 = vrcp.pop %v1220
  %v1223 = vmul.f32 1.0, %v1222
  %v1224 = vrcp.pop %v1221
  %v1225 = vmul.f32 1.0, %v1224
  %v1226 = vtanh.pop %v1212
  %v1227 = vtanh.pop %v1213
  %v1228 = vmul.f32 %v1223, %v1113
  %v1229 = vmul.f32 %v1225, %v1114
  %1232 = vrot.lane.b32.xlu0 %v1226, 96
  %v1233 = vpop.permute.xlu0 %1232
  %1234 = vrot.lane.b32.xlu0 %v1227, 96
  %v1235 = vpop.permute.xlu0 %1234
  %v1238 = vmul.f32 %v1223, %v1233
  %v1239 = vmul.f32 %v1225, %v1235
  %1242 = vrot.lane.b32.xlu0 %v1238, 16
  %v1243 = vpop.permute.xlu0 %1242
  %1244 = vrot.lane.b32.xlu0 %v1239, 16
  %v1245 = vpop.permute.xlu0 %1244
  %v1248 = vadd.f32 %v1228, %v1243
  %v1249 = vadd.f32 %v1229, %v1245
  %v1250 = vtanh.pop %v1248
  %v1251 = vtanh.pop %v1249
  %1254 = vrot.lane.b32.xlu0 %v1250, 32
  %v1255 = vpop.permute.xlu0 %1254
  %1256 = vrot.lane.b32.xlu0 %v1251, 32
  %v1257 = vpop.permute.xlu0 %1256
  %v1260 = vmul.f32 %v1223, %v1255
  %v1261 = vmul.f32 %v1225, %v1257
  %1264 = vrot.lane.b32.xlu0 %v1260, 80
  %v1265 = vpop.permute.xlu0 %1264
  %1266 = vrot.lane.b32.xlu0 %v1261, 80
  %v1267 = vpop.permute.xlu0 %1266
  %v1268 = vsel %vm458, %v1265, 0
  %v1270 = vsel %vm458, %v1267, 0
  %1272 = vmatprep.subr.mxu0 0.0
  %1273 = vmatpush1.msra.mxu0 %v456
  %1274 = vmatprep.subr.mxu0 0.0
  %1275 = vmatpush1.msra.mxu0 %v457
  %1276 = vmatprep.subr.mxu0 0.0
  %1277 = vmatpush1.msra.mxu0 0.0
  %1278 = vmatprep.subr.mxu0 0.0
  %1279 = vmatpush1.msra.mxu0 0.0
  %1280 = vmatprep.subr.mxu0 0.0
  %1281 = vmatpush1.msra.mxu0 0.0
  %1282 = vmatprep.subr.mxu0 0.0
  %1283 = vmatpush1.msra.mxu0 0.0
  %1284 = vmatprep.subr.mxu0 0.0
  %1285 = vmatpush1.msra.mxu0 0.0
  %1286 = vmatprep.subr.mxu0 0.0
  %1287 = vmatpush1.msra.mxu0 0.0
  %1288 = vmatprep.subr.mxu0 0.0
  %1289 = vmatpush1.msra.mxu0 0.0
  %1290 = vmatprep.subr.mxu0 0.0
  %1291 = vmatpush1.msra.mxu0 0.0
  %1292 = vmatprep.subr.mxu0 0.0
  %1293 = vmatpush1.msra.mxu0 0.0
  %1294 = vmatprep.subr.mxu0 0.0
  %1295 = vmatpush1.msra.mxu0 0.0
  %1296 = vmatprep.subr.mxu0 0.0
  %1297 = vmatpush1.msra.mxu0 0.0
  %1298 = vmatprep.subr.mxu0 0.0
  %1299 = vmatpush1.msra.mxu0 0.0
  %1300 = vmatprep.subr.mxu0 0.0
  %1301 = vmatpush1.msra.mxu0 0.0
  %1302 = vmatprep.subr.mxu0 0.0
  %1303 = vmatpush1.msra.mxu0 0.0
  %1304 = vmatprep.subr.mxu0 0.0
  %1305 = vmatpush1.msra.mxu0 0.0
  %1306 = vmatprep.subr.mxu0 0.0
  %1307 = vmatpush1.msra.mxu0 0.0
  %1308 = vmatprep.subr.mxu0 0.0
  %1309 = vmatpush1.msra.mxu0 0.0
  %1310 = vmatprep.subr.mxu0 0.0
  %1311 = vmatpush1.msra.mxu0 0.0
  %1312 = vmatprep.subr.mxu0 0.0
  %1313 = vmatpush1.msra.mxu0 0.0
  %1314 = vmatprep.subr.mxu0 0.0
  %1315 = vmatpush1.msra.mxu0 0.0
  %1316 = vmatprep.subr.mxu0 0.0
  %1317 = vmatpush1.msra.mxu0 0.0
  %1318 = vmatprep.subr.mxu0 0.0
  %1319 = vmatpush1.msra.mxu0 0.0
  %1320 = vmatprep.subr.mxu0 0.0
  %1321 = vmatpush1.msra.mxu0 0.0
  %1322 = vmatprep.subr.mxu0 0.0
  %1323 = vmatpush1.msra.mxu0 0.0
  %1324 = vmatprep.subr.mxu0 0.0
  %1325 = vmatpush1.msra.mxu0 0.0
  %1326 = vmatprep.subr.mxu0 0.0
  %1327 = vmatpush1.msra.mxu0 0.0
  %1328 = vmatprep.subr.mxu0 0.0
  %1329 = vmatpush1.msra.mxu0 0.0
  %1330 = vmatprep.subr.mxu0 0.0
  %1331 = vmatpush1.msra.mxu0 0.0
  %1332 = vmatprep.subr.mxu0 0.0
  %1333 = vmatpush1.msra.mxu0 0.0
  %1334 = vmatprep.subr.mxu0 0.0
  %1335 = vmatpush1.msra.mxu0 0.0
  %1336 = vmatprep.mubr.f32.mxu0 0.0
  %1337 = vmatmul.mubr.f32.gmra.mrb[0].mxu0 %v1268
  %v1338 = vpop.f32.mrb[0].mxu0
  %v1339 = vadd.f32 0.0, %v1338
  %v1340 = vpop.f32.mrb[0].mxu0
  %1341 = vmatprep.mubr.f32.mxu0 0.0
  %1342 = vmatmul.mubr.f32.gmra.mrb[0].mxu0 %v1270
  %v1343 = vpop.f32.mrb[0].mxu0
  %v1344 = vadd.f32 0.0, %v1343
  %v1345 = vpop.f32.mrb[0].mxu0
  %1346 = vdwg.mxu0
  %v1347 = vadd.f32 %v438, %v1339
  %v1348 = vadd.f32 %v443, %v1344
  %v1349 = vxor.u32 %v1347, 2147483648
  %v1350 = vxor.u32 %v1348, 2147483648
  %v1351 = vmul.f32 %v1349, 1.442695
  %v1352 = vpow.pop %v1351
  %v1353 = vmul.f32 %v1350, 1.442695
  %v1354 = vpow.pop %v1353
  %v1355 = vadd.f32 %v1352, 1.0
  %v1356 = vadd.f32 %v1354, 1.0
  %v1357 = vrcp.pop %v1355
  %v1358 = vmul.f32 1.0, %v1357
  %v1359 = vrcp.pop %v1356
  %v1360 = vmul.f32 1.0, %v1359
  %v1361 = vtanh.pop %v1347
  %v1362 = vtanh.pop %v1348
  %v1363 = vmul.f32 %v1358, %v1248
  %v1364 = vmul.f32 %v1360, %v1249
  %1367 = vrot.lane.b32.xlu0 %v1361, 96
  %v1368 = vpop.permute.xlu0 %1367
  %1369 = vrot.lane.b32.xlu0 %v1362, 96
  %v1370 = vpop.permute.xlu0 %1369
  %v1373 = vmul.f32 %v1358, %v1368
  %v1374 = vmul.f32 %v1360, %v1370
  %1377 = vrot.lane.b32.xlu0 %v1373, 16
  %v1378 = vpop.permute.xlu0 %1377
  %1379 = vrot.lane.b32.xlu0 %v1374, 16
  %v1380 = vpop.permute.xlu0 %1379
  %v1383 = vadd.f32 %v1363, %v1378
  %v1384 = vadd.f32 %v1364, %v1380
  %v1385 = vtanh.pop %v1383
  %v1386 = vtanh.pop %v1384
  %1389 = vrot.lane.b32.xlu0 %v1385, 32
  %v1390 = vpop.permute.xlu0 %1389
  %1391 = vrot.lane.b32.xlu0 %v1386, 32
  %v1392 = vpop.permute.xlu0 %1391
  %v1395 = vmul.f32 %v1358, %v1390
  %v1396 = vmul.f32 %v1360, %v1392
  %1399 = vrot.lane.b32.xlu0 %v1395, 80
  %v1400 = vpop.permute.xlu0 %1399
  %1401 = vrot.lane.b32.xlu0 %v1396, 80
  %v1402 = vpop.permute.xlu0 %1401
  %v1403 = vsel %vm458, %v1400, 0
  %v1405 = vsel %vm458, %v1402, 0
  %1407 = vmatprep.subr.mxu0 0.0
  %1408 = vmatpush1.msra.mxu0 %v456
  %1409 = vmatprep.subr.mxu0 0.0
  %1410 = vmatpush1.msra.mxu0 %v457
  %1411 = vmatprep.subr.mxu0 0.0
  %1412 = vmatpush1.msra.mxu0 0.0
  %1413 = vmatprep.subr.mxu0 0.0
  %1414 = vmatpush1.msra.mxu0 0.0
  %1415 = vmatprep.subr.mxu0 0.0
  %1416 = vmatpush1.msra.mxu0 0.0
  %1417 = vmatprep.subr.mxu0 0.0
  %1418 = vmatpush1.msra.mxu0 0.0
  %1419 = vmatprep.subr.mxu0 0.0
  %1420 = vmatpush1.msra.mxu0 0.0
  %1421 = vmatprep.subr.mxu0 0.0
  %1422 = vmatpush1.msra.mxu0 0.0
  %1423 = vmatprep.subr.mxu0 0.0
  %1424 = vmatpush1.msra.mxu0 0.0
  %1425 = vmatprep.subr.mxu0 0.0
  %1426 = vmatpush1.msra.mxu0 0.0
  %1427 = vmatprep.subr.mxu0 0.0
  %1428 = vmatpush1.msra.mxu0 0.0
  %1429 = vmatprep.subr.mxu0 0.0
  %1430 = vmatpush1.msra.mxu0 0.0
  %1431 = vmatprep.subr.mxu0 0.0
  %1432 = vmatpush1.msra.mxu0 0.0
  %1433 = vmatprep.subr.mxu0 0.0
  %1434 = vmatpush1.msra.mxu0 0.0
  %1435 = vmatprep.subr.mxu0 0.0
  %1436 = vmatpush1.msra.mxu0 0.0
  %1437 = vmatprep.subr.mxu0 0.0
  %1438 = vmatpush1.msra.mxu0 0.0
  %1439 = vmatprep.subr.mxu0 0.0
  %1440 = vmatpush1.msra.mxu0 0.0
  %1441 = vmatprep.subr.mxu0 0.0
  %1442 = vmatpush1.msra.mxu0 0.0
  %1443 = vmatprep.subr.mxu0 0.0
  %1444 = vmatpush1.msra.mxu0 0.0
  %1445 = vmatprep.subr.mxu0 0.0
  %1446 = vmatpush1.msra.mxu0 0.0
  %1447 = vmatprep.subr.mxu0 0.0
  %1448 = vmatpush1.msra.mxu0 0.0
  %1449 = vmatprep.subr.mxu0 0.0
  %1450 = vmatpush1.msra.mxu0 0.0
  %1451 = vmatprep.subr.mxu0 0.0
  %1452 = vmatpush1.msra.mxu0 0.0
  %1453 = vmatprep.subr.mxu0 0.0
  %1454 = vmatpush1.msra.mxu0 0.0
  %1455 = vmatprep.subr.mxu0 0.0
  %1456 = vmatpush1.msra.mxu0 0.0
  %1457 = vmatprep.subr.mxu0 0.0
  %1458 = vmatpush1.msra.mxu0 0.0
  %1459 = vmatprep.subr.mxu0 0.0
  %1460 = vmatpush1.msra.mxu0 0.0
  %1461 = vmatprep.subr.mxu0 0.0
  %1462 = vmatpush1.msra.mxu0 0.0
  %1463 = vmatprep.subr.mxu0 0.0
  %1464 = vmatpush1.msra.mxu0 0.0
  %1465 = vmatprep.subr.mxu0 0.0
  %1466 = vmatpush1.msra.mxu0 0.0
  %1467 = vmatprep.subr.mxu0 0.0
  %1468 = vmatpush1.msra.mxu0 0.0
  %1469 = vmatprep.subr.mxu0 0.0
  %1470 = vmatpush1.msra.mxu0 0.0
  %1471 = vmatprep.mubr.f32.mxu0 0.0
  %1472 = vmatmul.mubr.f32.gmra.mrb[0].mxu0 %v1403
  %v1473 = vpop.f32.mrb[0].mxu0
  %v1474 = vadd.f32 0.0, %v1473
  %v1475 = vpop.f32.mrb[0].mxu0
  %1476 = vmatprep.mubr.f32.mxu0 0.0
  %1477 = vmatmul.mubr.f32.gmra.mrb[0].mxu0 %v1405
  %v1478 = vpop.f32.mrb[0].mxu0
  %v1479 = vadd.f32 0.0, %v1478
  %v1480 = vpop.f32.mrb[0].mxu0
  %1481 = vdwg.mxu0
  %v1482 = vadd.f32 %v448, %v1474
  %v1483 = vadd.f32 %v453, %v1479
  %v1484 = vxor.u32 %v1482, 2147483648
  %v1485 = vxor.u32 %v1483, 2147483648
  %v1486 = vmul.f32 %v1484, 1.442695
  %v1487 = vpow.pop %v1486
  %v1488 = vmul.f32 %v1485, 1.442695
  %v1489 = vpow.pop %v1488
  %v1490 = vadd.f32 %v1487, 1.0
  %v1491 = vadd.f32 %v1489, 1.0
  %v1492 = vrcp.pop %v1490
  %v1493 = vmul.f32 1.0, %v1492
  %v1494 = vrcp.pop %v1491
  %v1495 = vmul.f32 1.0, %v1494
  %v1496 = vtanh.pop %v1482
  %v1497 = vtanh.pop %v1483
  %v1498 = vmul.f32 %v1493, %v1383
  %v1499 = vmul.f32 %v1495, %v1384
  %1502 = vrot.lane.b32.xlu0 %v1496, 96
  %v1503 = vpop.permute.xlu0 %1502
  %1504 = vrot.lane.b32.xlu0 %v1497, 96
  %v1505 = vpop.permute.xlu0 %1504
  %v1508 = vmul.f32 %v1493, %v1503
  %v1509 = vmul.f32 %v1495, %v1505
  %1512 = vrot.lane.b32.xlu0 %v1508, 16
  %v1513 = vpop.permute.xlu0 %1512
  %1514 = vrot.lane.b32.xlu0 %v1509, 16
  %v1515 = vpop.permute.xlu0 %1514
  %v1518 = vadd.f32 %v1498, %v1513
  %v1519 = vadd.f32 %v1499, %v1515
  %v1520 = vtanh.pop %v1518
  %v1521 = vtanh.pop %v1519
  %1524 = vrot.lane.b32.xlu0 %v1520, 32
  %v1525 = vpop.permute.xlu0 %1524
  %1526 = vrot.lane.b32.xlu0 %v1521, 32
  %v1527 = vpop.permute.xlu0 %1526
  %v1530 = vmul.f32 %v1493, %v1525
  %v1531 = vmul.f32 %v1495, %v1527
  %v1532 = vld [vmem:[%s3] sm:$0xff]
  %v1533 = vld [vmem:[%s3 + $0x8] sm:$0xff]
  %v1534 = vld [vmem:[%s33] sm:$0x3]
  %v1535 = vld [vmem:[%s35] sm:$0x1]
  %v1537 = vlaneseq
  %v1538 = vshrl.u32 %v1537, 7
  %v1539 = vsub.s32 0, %v1538
  %v1540 = vrot.slane %v1535, %v1539
  %vm1542 = vcmask 15360
  %v1544 = vsel %vm1542, %v1532, 0
  %v1547 = vsel %vm1542, %v1533, 0
  %vm1549 = vcmask 1041408
  %v1551 = vsel %vm1549, %v1534, 0
  %1553 = vmatprep.subr.mxu0 0.0
  %1554 = vmatpush1.msra.mxu0 %v1551
  %1555 = vmatprep.subr.mxu0 0.0
  %1556 = vmatpush1.msra.mxu0 0.0
  %1557 = vmatprep.subr.mxu0 0.0
  %1558 = vmatpush1.msra.mxu0 0.0
  %1559 = vmatprep.subr.mxu0 0.0
  %1560 = vmatpush1.msra.mxu0 0.0
  %1561 = vmatprep.subr.mxu0 0.0
  %1562 = vmatpush1.msra.mxu0 0.0
  %1563 = vmatprep.subr.mxu0 0.0
  %1564 = vmatpush1.msra.mxu0 0.0
  %1565 = vmatprep.subr.mxu0 0.0
  %1566 = vmatpush1.msra.mxu0 0.0
  %1567 = vmatprep.subr.mxu0 0.0
  %1568 = vmatpush1.msra.mxu0 0.0
  %1569 = vmatprep.subr.mxu0 0.0
  %1570 = vmatpush1.msra.mxu0 0.0
  %1571 = vmatprep.subr.mxu0 0.0
  %1572 = vmatpush1.msra.mxu0 0.0
  %1573 = vmatprep.subr.mxu0 0.0
  %1574 = vmatpush1.msra.mxu0 0.0
  %1575 = vmatprep.subr.mxu0 0.0
  %1576 = vmatpush1.msra.mxu0 0.0
  %1577 = vmatprep.subr.mxu0 0.0
  %1578 = vmatpush1.msra.mxu0 0.0
  %1579 = vmatprep.subr.mxu0 0.0
  %1580 = vmatpush1.msra.mxu0 0.0
  %1581 = vmatprep.subr.mxu0 0.0
  %1582 = vmatpush1.msra.mxu0 0.0
  %1583 = vmatprep.subr.mxu0 0.0
  %1584 = vmatpush1.msra.mxu0 0.0
  %1585 = vmatprep.subr.mxu0 0.0
  %1586 = vmatpush1.msra.mxu0 0.0
  %1587 = vmatprep.subr.mxu0 0.0
  %1588 = vmatpush1.msra.mxu0 0.0
  %1589 = vmatprep.subr.mxu0 0.0
  %1590 = vmatpush1.msra.mxu0 0.0
  %1591 = vmatprep.subr.mxu0 0.0
  %1592 = vmatpush1.msra.mxu0 0.0
  %1593 = vmatprep.subr.mxu0 0.0
  %1594 = vmatpush1.msra.mxu0 0.0
  %1595 = vmatprep.subr.mxu0 0.0
  %1596 = vmatpush1.msra.mxu0 0.0
  %1597 = vmatprep.subr.mxu0 0.0
  %1598 = vmatpush1.msra.mxu0 0.0
  %1599 = vmatprep.subr.mxu0 0.0
  %1600 = vmatpush1.msra.mxu0 0.0
  %1601 = vmatprep.subr.mxu0 0.0
  %1602 = vmatpush1.msra.mxu0 0.0
  %1603 = vmatprep.subr.mxu0 0.0
  %1604 = vmatpush1.msra.mxu0 0.0
  %1605 = vmatprep.subr.mxu0 0.0
  %1606 = vmatpush1.msra.mxu0 0.0
  %1607 = vmatprep.subr.mxu0 0.0
  %1608 = vmatpush1.msra.mxu0 0.0
  %1609 = vmatprep.subr.mxu0 0.0
  %1610 = vmatpush1.msra.mxu0 0.0
  %1611 = vmatprep.subr.mxu0 0.0
  %1612 = vmatpush1.msra.mxu0 0.0
  %1613 = vmatprep.subr.mxu0 0.0
  %1614 = vmatpush1.msra.mxu0 0.0
  %1615 = vmatprep.subr.mxu0 0.0
  %1616 = vmatpush1.msra.mxu0 0.0
  %1617 = vmatprep.mubr.f32.mxu0 0.0
  %1618 = vmatmul.mubr.f32.gmra.mrb[0].mxu0 %v1544
  %v1619 = vpop.f32.mrb[0].mxu0
  %v1620 = vadd.f32 %v1540, %v1619
  %v1621 = vpop.f32.mrb[0].mxu0
  %1622 = vmatprep.mubr.f32.mxu0 0.0
  %1623 = vmatmul.mubr.f32.gmra.mrb[0].mxu0 %v1547
  %v1624 = vpop.f32.mrb[0].mxu0
  %v1625 = vadd.f32 %v1540, %v1624
  %v1626 = vpop.f32.mrb[0].mxu0
  %1627 = vdwg.mxu0
  %1630 = vrot.lane.b32.xlu0 %v1530, 80
  %v1631 = vpop.permute.xlu0 %1630
  %1632 = vrot.lane.b32.xlu0 %v1531, 80
  %v1633 = vpop.permute.xlu0 %1632
  %1638 = vrot.lane.b32.xlu0 %v1620, 16
  %v1639 = vpop.permute.xlu0 %1638
  %1640 = vrot.lane.b32.xlu0 %v1625, 16
  %v1641 = vpop.permute.xlu0 %1640
  %v1644 = vsel %vm458, %v1631, %v1639
  %v1645 = vsel %vm458, %v1633, %v1641
  %v1646 = vld [vmem:[%s7] sm:$0xff]
  %v1648 = vsel %vm458, %v1646, 0
  %1650 = vmatprep.subr.mxu0 0.0
  %1651 = vmatpush1.msra.mxu0 %v1644
  %1652 = vmatprep.subr.mxu0 0.0
  %1653 = vmatpush1.msra.mxu0 %v1645
  %1654 = vmatprep.subr.mxu0 0.0
  %1655 = vmatpush1.msra.mxu0 0.0
  %1656 = vmatprep.subr.mxu0 0.0
  %1657 = vmatpush1.msra.mxu0 0.0
  %1658 = vmatprep.subr.mxu0 0.0
  %1659 = vmatpush1.msra.mxu0 0.0
  %1660 = vmatprep.subr.mxu0 0.0
  %1661 = vmatpush1.msra.mxu0 0.0
  %1662 = vmatprep.subr.mxu0 0.0
  %1663 = vmatpush1.msra.mxu0 0.0
  %1664 = vmatprep.subr.mxu0 0.0
  %1665 = vmatpush1.msra.mxu0 0.0
  %1666 = vmatprep.subr.mxu0 0.0
  %1667 = vmatpush1.msra.mxu0 0.0
  %1668 = vmatprep.subr.mxu0 0.0
  %1669 = vmatpush1.msra.mxu0 0.0
  %1670 = vmatprep.subr.mxu0 0.0
  %1671 = vmatpush1.msra.mxu0 0.0
  %1672 = vmatprep.subr.mxu0 0.0
  %1673 = vmatpush1.msra.mxu0 0.0
  %1674 = vmatprep.subr.mxu0 0.0
  %1675 = vmatpush1.msra.mxu0 0.0
  %1676 = vmatprep.subr.mxu0 0.0
  %1677 = vmatpush1.msra.mxu0 0.0
  %1678 = vmatprep.subr.mxu0 0.0
  %1679 = vmatpush1.msra.mxu0 0.0
  %1680 = vmatprep.subr.mxu0 0.0
  %1681 = vmatpush1.msra.mxu0 0.0
  %1682 = vmatprep.subr.mxu0 0.0
  %1683 = vmatpush1.msra.mxu0 0.0
  %1684 = vmatprep.subr.mxu0 0.0
  %1685 = vmatpush1.msra.mxu0 0.0
  %1686 = vmatprep.subr.mxu0 0.0
  %1687 = vmatpush1.msra.mxu0 0.0
  %1688 = vmatprep.subr.mxu0 0.0
  %1689 = vmatpush1.msra.mxu0 0.0
  %1690 = vmatprep.subr.mxu0 0.0
  %1691 = vmatpush1.msra.mxu0 0.0
  %1692 = vmatprep.subr.mxu0 0.0
  %1693 = vmatpush1.msra.mxu0 0.0
  %1694 = vmatprep.subr.mxu0 0.0
  %1695 = vmatpush1.msra.mxu0 0.0
  %1696 = vmatprep.subr.mxu0 0.0
  %1697 = vmatpush1.msra.mxu0 0.0
  %1698 = vmatprep.subr.mxu0 0.0
  %1699 = vmatpush1.msra.mxu0 0.0
  %1700 = vmatprep.subr.mxu0 0.0
  %1701 = vmatpush1.msra.mxu0 0.0
  %1702 = vmatprep.subr.mxu0 0.0
  %1703 = vmatpush1.msra.mxu0 0.0
  %1704 = vmatprep.subr.mxu0 0.0
  %1705 = vmatpush1.msra.mxu0 0.0
  %1706 = vmatprep.subr.mxu0 0.0
  %1707 = vmatpush1.msra.mxu0 0.0
  %1708 = vmatprep.subr.mxu0 0.0
  %1709 = vmatpush1.msra.mxu0 0.0
  %1710 = vmatprep.subr.mxu0 0.0
  %1711 = vmatpush1.msra.mxu0 0.0
  %1712 = vmatprep.subr.mxu0 0.0
  %1713 = vmatpush1.msra.mxu0 0.0
  %1714 = vmatprep.mubr.f32.mxu0 0.0
  %1715 = vmatmul.mubr.f32.gmra.mrb[0].mxu0 %v1648
  %v1716 = vpop.f32.mrb[0].mxu0
  %v1717 = vadd.f32 0.0, %v1716
  %v1718 = vpop.f32.mrb[0].mxu0
  %1719 = vdwg.mxu0
  %v1720 = vld [vmem:[%s15] sm:$0xff]
  %v1721 = vld [vmem:[%s15 + $0x8] sm:$0xff]
  %v1722 = vld [vmem:[%s15 + $0x10] sm:$0xff]
  %v1723 = vld [vmem:[%s19] sm:$0xff]
  %v1725 = vsel %vm262, %v1720, 0
  %v1728 = vsel %vm262, %v1721, 0
  %v1731 = vsel %vm262, %v1722, 0
  %1733 = vmatprep.subr.mxu0 0.0
  %1734 = vmatpush1.msra.mxu0 %v1717
  %1735 = vmatprep.subr.mxu0 0.0
  %1736 = vmatpush1.msra.mxu0 0.0
  %1737 = vmatprep.subr.mxu0 0.0
  %1738 = vmatpush1.msra.mxu0 0.0
  %1739 = vmatprep.subr.mxu0 0.0
  %1740 = vmatpush1.msra.mxu0 0.0
  %1741 = vmatprep.subr.mxu0 0.0
  %1742 = vmatpush1.msra.mxu0 0.0
  %1743 = vmatprep.subr.mxu0 0.0
  %1744 = vmatpush1.msra.mxu0 0.0
  %1745 = vmatprep.subr.mxu0 0.0
  %1746 = vmatpush1.msra.mxu0 0.0
  %1747 = vmatprep.subr.mxu0 0.0
  %1748 = vmatpush1.msra.mxu0 0.0
  %1749 = vmatprep.subr.mxu0 0.0
  %1750 = vmatpush1.msra.mxu0 0.0
  %1751 = vmatprep.subr.mxu0 0.0
  %1752 = vmatpush1.msra.mxu0 0.0
  %1753 = vmatprep.subr.mxu0 0.0
  %1754 = vmatpush1.msra.mxu0 0.0
  %1755 = vmatprep.subr.mxu0 0.0
  %1756 = vmatpush1.msra.mxu0 0.0
  %1757 = vmatprep.subr.mxu0 0.0
  %1758 = vmatpush1.msra.mxu0 0.0
  %1759 = vmatprep.subr.mxu0 0.0
  %1760 = vmatpush1.msra.mxu0 0.0
  %1761 = vmatprep.subr.mxu0 0.0
  %1762 = vmatpush1.msra.mxu0 0.0
  %1763 = vmatprep.subr.mxu0 0.0
  %1764 = vmatpush1.msra.mxu0 0.0
  %1765 = vmatprep.subr.mxu0 0.0
  %1766 = vmatpush1.msra.mxu0 0.0
  %1767 = vmatprep.subr.mxu0 0.0
  %1768 = vmatpush1.msra.mxu0 0.0
  %1769 = vmatprep.subr.mxu0 0.0
  %1770 = vmatpush1.msra.mxu0 0.0
  %1771 = vmatprep.subr.mxu0 0.0
  %1772 = vmatpush1.msra.mxu0 0.0
  %1773 = vmatprep.subr.mxu0 0.0
  %1774 = vmatpush1.msra.mxu0 0.0
  %1775 = vmatprep.subr.mxu0 0.0
  %1776 = vmatpush1.msra.mxu0 0.0
  %1777 = vmatprep.subr.mxu0 0.0
  %1778 = vmatpush1.msra.mxu0 0.0
  %1779 = vmatprep.subr.mxu0 0.0
  %1780 = vmatpush1.msra.mxu0 0.0
  %1781 = vmatprep.subr.mxu0 0.0
  %1782 = vmatpush1.msra.mxu0 0.0
  %1783 = vmatprep.subr.mxu0 0.0
  %1784 = vmatpush1.msra.mxu0 0.0
  %1785 = vmatprep.subr.mxu0 0.0
  %1786 = vmatpush1.msra.mxu0 0.0
  %1787 = vmatprep.subr.mxu0 0.0
  %1788 = vmatpush1.msra.mxu0 0.0
  %1789 = vmatprep.subr.mxu0 0.0
  %1790 = vmatpush1.msra.mxu0 0.0
  %1791 = vmatprep.subr.mxu0 0.0
  %1792 = vmatpush1.msra.mxu0 0.0
  %1793 = vmatprep.subr.mxu0 0.0
  %1794 = vmatpush1.msra.mxu0 0.0
  %1795 = vmatprep.subr.mxu0 0.0
  %1796 = vmatpush1.msra.mxu0 0.0
  %1797 = vmatprep.mubr.f32.mxu0 0.0
  %1798 = vmatmul.mubr.f32.gmra.mrb[0].mxu0 %v1725
  %v1799 = vpop.f32.mrb[0].mxu0
  %v1800 = vadd.f32 0.0, %v1799
  %v1801 = vpop.f32.mrb[0].mxu0
  %1802 = vmatprep.mubr.f32.mxu0 0.0
  %1803 = vmatmul.mubr.f32.gmra.mrb[0].mxu0 %v1728
  %v1804 = vpop.f32.mrb[0].mxu0
  %v1805 = vadd.f32 0.0, %v1804
  %v1806 = vpop.f32.mrb[0].mxu0
  %1807 = vmatprep.mubr.f32.mxu0 0.0
  %1808 = vmatmul.mubr.f32.gmra.mrb[0].mxu0 %v1731
  %v1809 = vpop.f32.mrb[0].mxu0
  %v1810 = vadd.f32 0.0, %v1809
  %v1811 = vpop.f32.mrb[0].mxu0
  %1812 = vdwg.mxu0
  %v1813 = vld [vmem:[%s17] sm:$0xff]
  %v1814 = vld [vmem:[%s17 + $0x8] sm:$0xff]
  %v1815 = vld [vmem:[%s17 + $0x10] sm:$0xff]
  %v1817 = vsel %vm262, %v1813, 0
  %v1820 = vsel %vm262, %v1814, 0
  %v1823 = vsel %vm262, %v1815, 0
  %1825 = vmatprep.subr.mxu0 0.0
  %1826 = vmatpush1.msra.mxu0 %v1717
  %1827 = vmatprep.subr.mxu0 0.0
  %1828 = vmatpush1.msra.mxu0 0.0
  %1829 = vmatprep.subr.mxu0 0.0
  %1830 = vmatpush1.msra.mxu0 0.0
  %1831 = vmatprep.subr.mxu0 0.0
  %1832 = vmatpush1.msra.mxu0 0.0
  %1833 = vmatprep.subr.mxu0 0.0
  %1834 = vmatpush1.msra.mxu0 0.0
  %1835 = vmatprep.subr.mxu0 0.0
  %1836 = vmatpush1.msra.mxu0 0.0
  %1837 = vmatprep.subr.mxu0 0.0
  %1838 = vmatpush1.msra.mxu0 0.0
  %1839 = vmatprep.subr.mxu0 0.0
  %1840 = vmatpush1.msra.mxu0 0.0
  %1841 = vmatprep.subr.mxu0 0.0
  %1842 = vmatpush1.msra.mxu0 0.0
  %1843 = vmatprep.subr.mxu0 0.0
  %1844 = vmatpush1.msra.mxu0 0.0
  %1845 = vmatprep.subr.mxu0 0.0
  %1846 = vmatpush1.msra.mxu0 0.0
  %1847 = vmatprep.subr.mxu0 0.0
  %1848 = vmatpush1.msra.mxu0 0.0
  %1849 = vmatprep.subr.mxu0 0.0
  %1850 = vmatpush1.msra.mxu0 0.0
  %1851 = vmatprep.subr.mxu0 0.0
  %1852 = vmatpush1.msra.mxu0 0.0
  %1853 = vmatprep.subr.mxu0 0.0
  %1854 = vmatpush1.msra.mxu0 0.0
  %1855 = vmatprep.subr.mxu0 0.0
  %1856 = vmatpush1.msra.mxu0 0.0
  %1857 = vmatprep.subr.mxu0 0.0
  %1858 = vmatpush1.msra.mxu0 0.0
  %1859 = vmatprep.subr.mxu0 0.0
  %1860 = vmatpush1.msra.mxu0 0.0
  %1861 = vmatprep.subr.mxu0 0.0
  %1862 = vmatpush1.msra.mxu0 0.0
  %1863 = vmatprep.subr.mxu0 0.0
  %1864 = vmatpush1.msra.mxu0 0.0
  %1865 = vmatprep.subr.mxu0 0.0
  %1866 = vmatpush1.msra.mxu0 0.0
  %1867 = vmatprep.subr.mxu0 0.0
  %1868 = vmatpush1.msra.mxu0 0.0
  %1869 = vmatprep.subr.mxu0 0.0
  %1870 = vmatpush1.msra.mxu0 0.0
  %1871 = vmatprep.subr.mxu0 0.0
  %1872 = vmatpush1.msra.mxu0 0.0
  %1873 = vmatprep.subr.mxu0 0.0
  %1874 = vmatpush1.msra.mxu0 0.0
  %1875 = vmatprep.subr.mxu0 0.0
  %1876 = vmatpush1.msra.mxu0 0.0
  %1877 = vmatprep.subr.mxu0 0.0
  %1878 = vmatpush1.msra.mxu0 0.0
  %1879 = vmatprep.subr.mxu0 0.0
  %1880 = vmatpush1.msra.mxu0 0.0
  %1881 = vmatprep.subr.mxu0 0.0
  %1882 = vmatpush1.msra.mxu0 0.0
  %1883 = vmatprep.subr.mxu0 0.0
  %1884 = vmatpush1.msra.mxu0 0.0
  %1885 = vmatprep.subr.mxu0 0.0
  %1886 = vmatpush1.msra.mxu0 0.0
  %1887 = vmatprep.subr.mxu0 0.0
  %1888 = vmatpush1.msra.mxu0 0.0
  %1889 = vmatprep.mubr.f32.mxu0 0.0
  %1890 = vmatmul.mubr.f32.gmra.mrb[0].mxu0 %v1817
  %v1891 = vpop.f32.mrb[0].mxu0
  %v1892 = vadd.f32 0.0, %v1891
  %v1893 = vpop.f32.mrb[0].mxu0
  %1894 = vmatprep.mubr.f32.mxu0 0.0
  %1895 = vmatmul.mubr.f32.gmra.mrb[0].mxu0 %v1820
  %v1896 = vpop.f32.mrb[0].mxu0
  %v1897 = vadd.f32 0.0, %v1896
  %v1898 = vpop.f32.mrb[0].mxu0
  %1899 = vmatprep.mubr.f32.mxu0 0.0
  %1900 = vmatmul.mubr.f32.gmra.mrb[0].mxu0 %v1823
  %v1901 = vpop.f32.mrb[0].mxu0
  %v1902 = vadd.f32 0.0, %v1901
  %v1903 = vpop.f32.mrb[0].mxu0
  %1904 = vdwg.mxu0
  %v1905 = vld [vmem:[%s5] sm:$0xff]
  %v1906 = vld [vmem:[%s5 + $0x8] sm:$0xff]
  %v1907 = vld [vmem:[%s5 + $0x10] sm:$0xff]
  %1911 = vrot.lane.b32.xlu0 %v1892, 20
  %v1912 = vpop.permute.xlu0 %1911
  %1913 = vrot.lane.b32.xlu0 %v1897, 20
  %v1914 = vpop.permute.xlu0 %1913
  %1915 = vrot.lane.b32.xlu0 %v1902, 20
  %v1916 = vpop.permute.xlu0 %1915
  %1923 = vrot.lane.b32.xlu0 %v1905, 40
  %v1924 = vpop.permute.xlu0 %1923
  %1925 = vrot.lane.b32.xlu0 %v1906, 40
  %v1926 = vpop.permute.xlu0 %1925
  %1927 = vrot.lane.b32.xlu0 %v1907, 40
  %v1928 = vpop.permute.xlu0 %1927
  %vm1932 = vcmask 162816
  %v1933 = vsel %vm1932, %v1800, %v1912
  %v1934 = vsel %vm1932, %v1805, %v1914
  %v1935 = vsel %vm1932, %v1810, %v1916
  %vm1936 = vcmask 326656
  %v1937 = vsel %vm1936, %v1933, %v1924
  %v1938 = vsel %vm1936, %v1934, %v1926
  %v1939 = vsel %vm1936, %v1935, %v1928
  %v1940 = vld [vmem:[%s37] sm:$0xff]
  %v1941 = vld [vmem:[%s37 + $0x8] sm:$0xff]
  %v1942 = vld [vmem:[%s37 + $0x10] sm:$0xff]
  %v1943 = vld [vmem:[%s37 + $0x18] sm:$0xff]
  %v1944 = vld [vmem:[%s37 + $0x20] sm:$0xff]
  %v1945 = vld [vmem:[%s37 + $0x28] sm:$0xff]
  %v1946 = vld [vmem:[%s37 + $0x30] sm:$0xf]
  %v1947 = vld [vmem:[%s39] sm:$0x1]
  %v1949 = vlaneseq
  %v1950 = vshrl.u32 %v1949, 7
  %v1951 = vsub.s32 0, %v1950
  %v1952 = vrot.slane %v1947, %v1951
  %vm1954 = vcmask 424960
  %v1956 = vsel %vm1954, %v1937, 0
  %v1959 = vsel %vm1954, %v1938, 0
  %v1962 = vsel %vm1954, %v1939, 0
  %vm1964 = vcmask 1043456
  %v1966 = vsel %vm1964, %v1946, 0
  %1968 = vmatprep.subr.mxu0 0.0
  %1969 = vmatpush1.msra.mxu0 %v1940
  %1970 = vmatprep.subr.mxu0 0.0
  %1971 = vmatpush1.msra.mxu0 %v1941
  %1972 = vmatprep.subr.mxu0 0.0
  %1973 = vmatpush1.msra.mxu0 %v1942
  %1974 = vmatprep.subr.mxu0 0.0
  %1975 = vmatpush1.msra.mxu0 %v1943
  %1976 = vmatprep.subr.mxu0 0.0
  %1977 = vmatpush1.msra.mxu0 %v1944
  %1978 = vmatprep.subr.mxu0 0.0
  %1979 = vmatpush1.msra.mxu0 %v1945
  %1980 = vmatprep.subr.mxu0 0.0
  %1981 = vmatpush1.msra.mxu0 %v1966
  %1982 = vmatprep.subr.mxu0 0.0
  %1983 = vmatpush1.msra.mxu0 0.0
  %1984 = vmatprep.subr.mxu0 0.0
  %1985 = vmatpush1.msra.mxu0 0.0
  %1986 = vmatprep.subr.mxu0 0.0
  %1987 = vmatpush1.msra.mxu0 0.0
  %1988 = vmatprep.subr.mxu0 0.0
  %1989 = vmatpush1.msra.mxu0 0.0
  %1990 = vmatprep.subr.mxu0 0.0
  %1991 = vmatpush1.msra.mxu0 0.0
  %1992 = vmatprep.subr.mxu0 0.0
  %1993 = vmatpush1.msra.mxu0 0.0
  %1994 = vmatprep.subr.mxu0 0.0
  %1995 = vmatpush1.msra.mxu0 0.0
  %1996 = vmatprep.subr.mxu0 0.0
  %1997 = vmatpush1.msra.mxu0 0.0
  %1998 = vmatprep.subr.mxu0 0.0
  %1999 = vmatpush1.msra.mxu0 0.0
  %2000 = vmatprep.subr.mxu0 0.0
  %2001 = vmatpush1.msra.mxu0 0.0
  %2002 = vmatprep.subr.mxu0 0.0
  %2003 = vmatpush1.msra.mxu0 0.0
  %2004 = vmatprep.subr.mxu0 0.0
  %2005 = vmatpush1.msra.mxu0 0.0
  %2006 = vmatprep.subr.mxu0 0.0
  %2007 = vmatpush1.msra.mxu0 0.0
  %2008 = vmatprep.subr.mxu0 0.0
  %2009 = vmatpush1.msra.mxu0 0.0
  %2010 = vmatprep.subr.mxu0 0.0
  %2011 = vmatpush1.msra.mxu0 0.0
  %2012 = vmatprep.subr.mxu0 0.0
  %2013 = vmatpush1.msra.mxu0 0.0
  %2014 = vmatprep.subr.mxu0 0.0
  %2015 = vmatpush1.msra.mxu0 0.0
  %2016 = vmatprep.subr.mxu0 0.0
  %2017 = vmatpush1.msra.mxu0 0.0
  %2018 = vmatprep.subr.mxu0 0.0
  %2019 = vmatpush1.msra.mxu0 0.0
  %2020 = vmatprep.subr.mxu0 0.0
  %2021 = vmatpush1.msra.mxu0 0.0
  %2022 = vmatprep.subr.mxu0 0.0
  %2023 = vmatpush1.msra.mxu0 0.0
  %2024 = vmatprep.subr.mxu0 0.0
  %2025 = vmatpush1.msra.mxu0 0.0
  %2026 = vmatprep.subr.mxu0 0.0
  %2027 = vmatpush1.msra.mxu0 0.0
  %2028 = vmatprep.subr.mxu0 0.0
  %2029 = vmatpush1.msra.mxu0 0.0
  %2030 = vmatprep.subr.mxu0 0.0
  %2031 = vmatpush1.msra.mxu0 0.0
  %2032 = vmatprep.mubr.f32.mxu0 0.0
  %2033 = vmatmul.mubr.f32.gmra.mrb[0].mxu0 %v1956
  %v2034 = vpop.f32.mrb[0].mxu0
  %v2035 = vadd.f32 %v1952, %v2034
  %v2036 = vpop.f32.mrb[0].mxu0
  %2037 = vmatprep.mubr.f32.mxu0 0.0
  %2038 = vmatmul.mubr.f32.gmra.mrb[0].mxu0 %v1959
  %v2039 = vpop.f32.mrb[0].mxu0
  %v2040 = vadd.f32 %v1952, %v2039
  %v2041 = vpop.f32.mrb[0].mxu0
  %2042 = vmatprep.mubr.f32.mxu0 0.0
  %2043 = vmatmul.mubr.f32.gmra.mrb[0].mxu0 %v1962
  %v2044 = vpop.f32.mrb[0].mxu0
  %v2045 = vadd.f32 %v1952, %v2044
  %v2046 = vpop.f32.mrb[0].mxu0
  %2047 = vdwg.mxu0
  %v2048 = vmax.f32 %v2035, 0.0
  %v2049 = vmax.f32 %v2040, 0.0
  %v2050 = vmax.f32 %v2045, 0.0
  %v2051 = vld [vmem:[%s41] sm:$0xff]
  %v2052 = vld [vmem:[%s41 + $0x8] sm:$0xff]
  %v2053 = vld [vmem:[%s41 + $0x10] sm:$0xff]
  %v2054 = vld [vmem:[%s41 + $0x18] sm:$0xff]
  %v2055 = vld [vmem:[%s41 + $0x20] sm:$0xf]
  %v2056 = vld [vmem:[%s43] sm:$0x1]
  %v2057 = vld [vmem:[%s45] sm:$0xff]
  %v2058 = vld [vmem:[%s45 + $0x8] sm:$0xff]
  %v2059 = vld [vmem:[%s45 + $0x10] sm:$0xff]
  %v2060 = vld [vmem:[%s45 + $0x18] sm:$0xff]
  %v2061 = vld [vmem:[%s45 + $0x20] sm:$0xff]
  %v2062 = vld [vmem:[%s45 + $0x28] sm:$0xff]
  %v2063 = vld [vmem:[%s45 + $0x30] sm:$0xf]
  %v2064 = vld [vmem:[%s47] sm:$0x1]
  %2068 = vrot.lane.b32.xlu0 %v2048, 20
  %v2069 = vpop.permute.xlu0 %2068
  %2070 = vrot.lane.b32.xlu0 %v2049, 20
  %v2071 = vpop.permute.xlu0 %2070
  %2072 = vrot.lane.b32.xlu0 %v2050, 20
  %v2073 = vpop.permute.xlu0 %2072
  %v2077 = vsel %vm1932, %v1800, %v2069
  %v2078 = vsel %vm1932, %v1805, %v2071
  %v2079 = vsel %vm1932, %v1810, %v2073
  %v2081 = vlaneseq
  %v2082 = vshrl.u32 %v2081, 7
  %v2083 = vsub.s32 0, %v2082
  %v2084 = vrot.slane %v2056, %v2083
  %vm2086 = vcmask 293888
  %v2088 = vsel %vm2086, %v2077, 0
  %v2091 = vsel %vm2086, %v2078, 0
  %v2094 = vsel %vm2086, %v2079, 0
  %v2097 = vsel %vm1964, %v2055, 0
  %2099 = vmatprep.subr.mxu0 0.0
  %2100 = vmatpush1.msra.mxu0 %v2051
  %2101 = vmatprep.subr.mxu0 0.0
  %2102 = vmatpush1.msra.mxu0 %v2052
  %2103 = vmatprep.subr.mxu0 0.0
  %2104 = vmatpush1.msra.mxu0 %v2053
  %2105 = vmatprep.subr.mxu0 0.0
  %2106 = vmatpush1.msra.mxu0 %v2054
  %2107 = vmatprep.subr.mxu0 0.0
  %2108 = vmatpush1.msra.mxu0 %v2097
  %2109 = vmatprep.subr.mxu0 0.0
  %2110 = vmatpush1.msra.mxu0 0.0
  %2111 = vmatprep.subr.mxu0 0.0
  %2112 = vmatpush1.msra.mxu0 0.0
  %2113 = vmatprep.subr.mxu0 0.0
  %2114 = vmatpush1.msra.mxu0 0.0
  %2115 = vmatprep.subr.mxu0 0.0
  %2116 = vmatpush1.msra.mxu0 0.0
  %2117 = vmatprep.subr.mxu0 0.0
  %2118 = vmatpush1.msra.mxu0 0.0
  %2119 = vmatprep.subr.mxu0 0.0
  %2120 = vmatpush1.msra.mxu0 0.0
  %2121 = vmatprep.subr.mxu0 0.0
  %2122 = vmatpush1.msra.mxu0 0.0
  %2123 = vmatprep.subr.mxu0 0.0
  %2124 = vmatpush1.msra.mxu0 0.0
  %2125 = vmatprep.subr.mxu0 0.0
  %2126 = vmatpush1.msra.mxu0 0.0
  %2127 = vmatprep.subr.mxu0 0.0
  %2128 = vmatpush1.msra.mxu0 0.0
  %2129 = vmatprep.subr.mxu0 0.0
  %2130 = vmatpush1.msra.mxu0 0.0
  %2131 = vmatprep.subr.mxu0 0.0
  %2132 = vmatpush1.msra.mxu0 0.0
  %2133 = vmatprep.subr.mxu0 0.0
  %2134 = vmatpush1.msra.mxu0 0.0
  %2135 = vmatprep.subr.mxu0 0.0
  %2136 = vmatpush1.msra.mxu0 0.0
  %2137 = vmatprep.subr.mxu0 0.0
  %2138 = vmatpush1.msra.mxu0 0.0
  %2139 = vmatprep.subr.mxu0 0.0
  %2140 = vmatpush1.msra.mxu0 0.0
  %2141 = vmatprep.subr.mxu0 0.0
  %2142 = vmatpush1.msra.mxu0 0.0
  %2143 = vmatprep.subr.mxu0 0.0
  %2144 = vmatpush1.msra.mxu0 0.0
  %2145 = vmatprep.subr.mxu0 0.0
  %2146 = vmatpush1.msra.mxu0 0.0
  %2147 = vmatprep.subr.mxu0 0.0
  %2148 = vmatpush1.msra.mxu0 0.0
  %2149 = vmatprep.subr.mxu0 0.0
  %2150 = vmatpush1.msra.mxu0 0.0
  %2151 = vmatprep.subr.mxu0 0.0
  %2152 = vmatpush1.msra.mxu0 0.0
  %2153 = vmatprep.subr.mxu0 0.0
  %2154 = vmatpush1.msra.mxu0 0.0
  %2155 = vmatprep.subr.mxu0 0.0
  %2156 = vmatpush1.msra.mxu0 0.0
  %2157 = vmatprep.subr.mxu0 0.0
  %2158 = vmatpush1.msra.mxu0 0.0
  %2159 = vmatprep.subr.mxu0 0.0
  %2160 = vmatpush1.msra.mxu0 0.0
  %2161 = vmatprep.subr.mxu0 0.0
  %2162 = vmatpush1.msra.mxu0 0.0
  %2163 = vmatprep.mubr.f32.mxu0 0.0
  %2164 = vmatmul.mubr.f32.gmra.mrb[0].mxu0 %v2088
  %v2165 = vpop.f32.mrb[0].mxu0
  %v2166 = vadd.f32 %v2084, %v2165
  %v2167 = vpop.f32.mrb[0].mxu0
  %2168 = vmatprep.mubr.f32.mxu0 0.0
  %2169 = vmatmul.mubr.f32.gmra.mrb[0].mxu0 %v2091
  %v2170 = vpop.f32.mrb[0].mxu0
  %v2171 = vadd.f32 %v2084, %v2170
  %v2172 = vpop.f32.mrb[0].mxu0
  %2173 = vmatprep.mubr.f32.mxu0 0.0
  %2174 = vmatmul.mubr.f32.gmra.mrb[0].mxu0 %v2094
  %v2175 = vpop.f32.mrb[0].mxu0
  %v2176 = vadd.f32 %v2084, %v2175
  %v2177 = vpop.f32.mrb[0].mxu0
  %2178 = vdwg.mxu0
  %v2179 = vmax.f32 %v2166, 0.0
  %v2180 = vmax.f32 %v2171, 0.0
  %v2181 = vmax.f32 %v2176, 0.0
  %vm2182 = vcmask 195584
  %v2184 = vsel %vm2182, %v1723, 0
  %2186 = vmatprep.subr.mxu0 0.0
  %2187 = vmatpush1.msra.mxu0 %v2179
  %2188 = vmatprep.subr.mxu0 0.0
  %2189 = vmatpush1.msra.mxu0 %v2180
  %2190 = vmatprep.subr.mxu0 0.0
  %2191 = vmatpush1.msra.mxu0 %v2181
  %2192 = vmatprep.subr.mxu0 0.0
  %2193 = vmatpush1.msra.mxu0 0.0
  %2194 = vmatprep.subr.mxu0 0.0
  %2195 = vmatpush1.msra.mxu0 0.0
  %2196 = vmatprep.subr.mxu0 0.0
  %2197 = vmatpush1.msra.mxu0 0.0
  %2198 = vmatprep.subr.mxu0 0.0
  %2199 = vmatpush1.msra.mxu0 0.0
  %2200 = vmatprep.subr.mxu0 0.0
  %2201 = vmatpush1.msra.mxu0 0.0
  %2202 = vmatprep.subr.mxu0 0.0
  %2203 = vmatpush1.msra.mxu0 0.0
  %2204 = vmatprep.subr.mxu0 0.0
  %2205 = vmatpush1.msra.mxu0 0.0
  %2206 = vmatprep.subr.mxu0 0.0
  %2207 = vmatpush1.msra.mxu0 0.0
  %2208 = vmatprep.subr.mxu0 0.0
  %2209 = vmatpush1.msra.mxu0 0.0
  %2210 = vmatprep.subr.mxu0 0.0
  %2211 = vmatpush1.msra.mxu0 0.0
  %2212 = vmatprep.subr.mxu0 0.0
  %2213 = vmatpush1.msra.mxu0 0.0
  %2214 = vmatprep.subr.mxu0 0.0
  %2215 = vmatpush1.msra.mxu0 0.0
  %2216 = vmatprep.subr.mxu0 0.0
  %2217 = vmatpush1.msra.mxu0 0.0
  %2218 = vmatprep.subr.mxu0 0.0
  %2219 = vmatpush1.msra.mxu0 0.0
  %2220 = vmatprep.subr.mxu0 0.0
  %2221 = vmatpush1.msra.mxu0 0.0
  %2222 = vmatprep.subr.mxu0 0.0
  %2223 = vmatpush1.msra.mxu0 0.0
  %2224 = vmatprep.subr.mxu0 0.0
  %2225 = vmatpush1.msra.mxu0 0.0
  %2226 = vmatprep.subr.mxu0 0.0
  %2227 = vmatpush1.msra.mxu0 0.0
  %2228 = vmatprep.subr.mxu0 0.0
  %2229 = vmatpush1.msra.mxu0 0.0
  %2230 = vmatprep.subr.mxu0 0.0
  %2231 = vmatpush1.msra.mxu0 0.0
  %2232 = vmatprep.subr.mxu0 0.0
  %2233 = vmatpush1.msra.mxu0 0.0
  %2234 = vmatprep.subr.mxu0 0.0
  %2235 = vmatpush1.msra.mxu0 0.0
  %2236 = vmatprep.subr.mxu0 0.0
  %2237 = vmatpush1.msra.mxu0 0.0
  %2238 = vmatprep.subr.mxu0 0.0
  %2239 = vmatpush1.msra.mxu0 0.0
  %2240 = vmatprep.subr.mxu0 0.0
  %2241 = vmatpush1.msra.mxu0 0.0
  %2242 = vmatprep.subr.mxu0 0.0
  %2243 = vmatpush1.msra.mxu0 0.0
  %2244 = vmatprep.subr.mxu0 0.0
  %2245 = vmatpush1.msra.mxu0 0.0
  %2246 = vmatprep.subr.mxu0 0.0
  %2247 = vmatpush1.msra.mxu0 0.0
  %2248 = vmatprep.subr.mxu0 0.0
  %2249 = vmatpush1.msra.mxu0 0.0
  %2250 = vmatprep.mubr.f32.mxu0 0.0
  %2251 = vmatmul.mubr.f32.gmra.mrb[0].mxu0 %v2184
  %v2252 = vpop.f32.mrb[0].mxu0
  %v2253 = vadd.f32 0.0, %v2252
  %v2254 = vpop.f32.mrb[0].mxu0
  %2255 = vdwg.mxu0
  %2257 = vrot.lane.b32.xlu0 %v2253, 20
  %v2258 = vpop.permute.xlu0 %2257
  %v2260 = vsel %vm1932, %v1717, %v2258
  %v2262 = vlaneseq
  %v2263 = vshrl.u32 %v2262, 7
  %v2264 = vsub.s32 0, %v2263
  %v2265 = vrot.slane %v2064, %v2264
  %v2268 = vsel %vm1954, %v2260, 0
  %v2271 = vsel %vm1964, %v2063, 0
  %2273 = vmatprep.subr.mxu0 0.0
  %2274 = vmatpush1.msra.mxu0 %v2057
  %2275 = vmatprep.subr.mxu0 0.0
  %2276 = vmatpush1.msra.mxu0 %v2058
  %2277 = vmatprep.subr.mxu0 0.0
  %2278 = vmatpush1.msra.mxu0 %v2059
  %2279 = vmatprep.subr.mxu0 0.0
  %2280 = vmatpush1.msra.mxu0 %v2060
  %2281 = vmatprep.subr.mxu0 0.0
  %2282 = vmatpush1.msra.mxu0 %v2061
  %2283 = vmatprep.subr.mxu0 0.0
  %2284 = vmatpush1.msra.mxu0 %v2062
  %2285 = vmatprep.subr.mxu0 0.0
  %2286 = vmatpush1.msra.mxu0 %v2271
  %2287 = vmatprep.subr.mxu0 0.0
  %2288 = vmatpush1.msra.mxu0 0.0
  %2289 = vmatprep.subr.mxu0 0.0
  %2290 = vmatpush1.msra.mxu0 0.0
  %2291 = vmatprep.subr.mxu0 0.0
  %2292 = vmatpush1.msra.mxu0 0.0
  %2293 = vmatprep.subr.mxu0 0.0
  %2294 = vmatpush1.msra.mxu0 0.0
  %2295 = vmatprep.subr.mxu0 0.0
  %2296 = vmatpush1.msra.mxu0 0.0
  %2297 = vmatprep.subr.mxu0 0.0
  %2298 = vmatpush1.msra.mxu0 0.0
  %2299 = vmatprep.subr.mxu0 0.0
  %2300 = vmatpush1.msra.mxu0 0.0
  %2301 = vmatprep.subr.mxu0 0.0
  %2302 = vmatpush1.msra.mxu0 0.0
  %2303 = vmatprep.subr.mxu0 0.0
  %2304 = vmatpush1.msra.mxu0 0.0
  %2305 = vmatprep.subr.mxu0 0.0
  %2306 = vmatpush1.msra.mxu0 0.0
  %2307 = vmatprep.subr.mxu0 0.0
  %2308 = vmatpush1.msra.mxu0 0.0
  %2309 = vmatprep.subr.mxu0 0.0
  %2310 = vmatpush1.msra.mxu0 0.0
  %2311 = vmatprep.subr.mxu0 0.0
  %2312 = vmatpush1.msra.mxu0 0.0
  %2313 = vmatprep.subr.mxu0 0.0
  %2314 = vmatpush1.msra.mxu0 0.0
  %2315 = vmatprep.subr.mxu0 0.0
  %2316 = vmatpush1.msra.mxu0 0.0
  %2317 = vmatprep.subr.mxu0 0.0
  %2318 = vmatpush1.msra.mxu0 0.0
  %2319 = vmatprep.subr.mxu0 0.0
  %2320 = vmatpush1.msra.mxu0 0.0
  %2321 = vmatprep.subr.mxu0 0.0
  %2322 = vmatpush1.msra.mxu0 0.0
  %2323 = vmatprep.subr.mxu0 0.0
  %2324 = vmatpush1.msra.mxu0 0.0
  %2325 = vmatprep.subr.mxu0 0.0
  %2326 = vmatpush1.msra.mxu0 0.0
  %2327 = vmatprep.subr.mxu0 0.0
  %2328 = vmatpush1.msra.mxu0 0.0
  %2329 = vmatprep.subr.mxu0 0.0
  %2330 = vmatpush1.msra.mxu0 0.0
  %2331 = vmatprep.subr.mxu0 0.0
  %2332 = vmatpush1.msra.mxu0 0.0
  %2333 = vmatprep.subr.mxu0 0.0
  %2334 = vmatpush1.msra.mxu0 0.0
  %2335 = vmatprep.subr.mxu0 0.0
  %2336 = vmatpush1.msra.mxu0 0.0
  %2337 = vmatprep.mubr.f32.mxu0 0.0
  %2338 = vmatmul.mubr.f32.gmra.mrb[0].mxu0 %v2268
  %v2339 = vpop.f32.mrb[0].mxu0
  %v2340 = vadd.f32 %v2265, %v2339
  %v2341 = vpop.f32.mrb[0].mxu0
  %2342 = vdwg.mxu0
  %v2343 = vmax.f32 %v2340, 0.0
  %v2344 = vld [vmem:[%s49] sm:$0xff]
  %v2345 = vld [vmem:[%s49 + $0x8] sm:$0xff]
  %v2346 = vld [vmem:[%s49 + $0x10] sm:$0xff]
  %v2347 = vld [vmem:[%s49 + $0x18] sm:$0xff]
  %v2348 = vld [vmem:[%s49 + $0x20] sm:$0xff]
  %v2349 = vld [vmem:[%s49 + $0x28] sm:$0xff]
  %v2350 = vld [vmem:[%s51] sm:$0x1]
  %v2351 = vld [vmem:[%s53] sm:$0xff]
  %v2352 = vld [vmem:[%s53 + $0x8] sm:$0xff]
  %v2353 = vld [vmem:[%s53 + $0x10] sm:$0xff]
  %v2354 = vld [vmem:[%s53 + $0x18] sm:$0xff]
  %v2355 = vld [vmem:[%s53 + $0x20] sm:$0xff]
  %v2356 = vld [vmem:[%s53 + $0x28] sm:$0xff]
  %v2357 = vld [vmem:[%s53 + $0x30] sm:$0xff]
  %v2358 = vld [vmem:[%s53 + $0x38] sm:$0xff]
  %v2359 = vld [vmem:[%s55] sm:$0x1]
  %2360 = vmatprep.subr.mxu0 0.0
  %2361 = vmatpush1.msra.mxu0 %v2343
  %2362 = vmatprep.subr.mxu0 0.0
  %2363 = vmatpush1.msra.mxu0 0.0
  %2364 = vmatprep.subr.mxu0 0.0
  %2365 = vmatpush1.msra.mxu0 0.0
  %2366 = vmatprep.subr.mxu0 0.0
  %2367 = vmatpush1.msra.mxu0 0.0
  %2368 = vmatprep.subr.mxu0 0.0
  %2369 = vmatpush1.msra.mxu0 0.0
  %2370 = vmatprep.subr.mxu0 0.0
  %2371 = vmatpush1.msra.mxu0 0.0
  %2372 = vmatprep.subr.mxu0 0.0
  %2373 = vmatpush1.msra.mxu0 0.0
  %2374 = vmatprep.subr.mxu0 0.0
  %2375 = vmatpush1.msra.mxu0 0.0
  %2376 = vmatprep.subr.mxu0 0.0
  %2377 = vmatpush1.msra.mxu0 0.0
  %2378 = vmatprep.subr.mxu0 0.0
  %2379 = vmatpush1.msra.mxu0 0.0
  %2380 = vmatprep.subr.mxu0 0.0
  %2381 = vmatpush1.msra.mxu0 0.0
  %2382 = vmatprep.subr.mxu0 0.0
  %2383 = vmatpush1.msra.mxu0 0.0
  %2384 = vmatprep.subr.mxu0 0.0
  %2385 = vmatpush1.msra.mxu0 0.0
  %2386 = vmatprep.subr.mxu0 0.0
  %2387 = vmatpush1.msra.mxu0 0.0
  %2388 = vmatprep.subr.mxu0 0.0
  %2389 = vmatpush1.msra.mxu0 0.0
  %2390 = vmatprep.subr.mxu0 0.0
  %2391 = vmatpush1.msra.mxu0 0.0
  %2392 = vmatprep.subr.mxu0 0.0
  %2393 = vmatpush1.msra.mxu0 0.0
  %2394 = vmatprep.subr.mxu0 0.0
  %2395 = vmatpush1.msra.mxu0 0.0
  %2396 = vmatprep.subr.mxu0 0.0
  %2397 = vmatpush1.msra.mxu0 0.0
  %2398 = vmatprep.subr.mxu0 0.0
  %2399 = vmatpush1.msra.mxu0 0.0
  %2400 = vmatprep.subr.mxu0 0.0
  %2401 = vmatpush1.msra.mxu0 0.0
  %2402 = vmatprep.subr.mxu0 0.0
  %2403 = vmatpush1.msra.mxu0 0.0
  %2404 = vmatprep.subr.mxu0 0.0
  %2405 = vmatpush1.msra.mxu0 0.0
  %2406 = vmatprep.subr.mxu0 0.0
  %2407 = vmatpush1.msra.mxu0 0.0
  %2408 = vmatprep.subr.mxu0 0.0
  %2409 = vmatpush1.msra.mxu0 0.0
  %2410 = vmatprep.subr.mxu0 0.0
  %2411 = vmatpush1.msra.mxu0 0.0
  %2412 = vmatprep.subr.mxu0 0.0
  %2413 = vmatpush1.msra.mxu0 0.0
  %2414 = vmatprep.subr.mxu0 0.0
  %2415 = vmatpush1.msra.mxu0 0.0
  %2416 = vmatprep.subr.mxu0 0.0
  %2417 = vmatpush1.msra.mxu0 0.0
  %2418 = vmatprep.subr.mxu0 0.0
  %2419 = vmatpush1.msra.mxu0 0.0
  %2420 = vmatprep.subr.mxu0 0.0
  %2421 = vmatpush1.msra.mxu0 0.0
  %2422 = vmatprep.subr.mxu0 0.0
  %2423 = vmatpush1.msra.mxu0 0.0
  %2424 = vmatprep.mubr.f32.mxu0 0.0
  %2425 = vmatmul.mubr.f32.gmra.mrb[0].mxu0 %v1725
  %v2426 = vpop.f32.mrb[0].mxu0
  %v2427 = vadd.f32 0.0, %v2426
  %v2428 = vpop.f32.mrb[0].mxu0
  %2429 = vmatprep.mubr.f32.mxu0 0.0
  %2430 = vmatmul.mubr.f32.gmra.mrb[0].mxu0 %v1728
  %v2431 = vpop.f32.mrb[0].mxu0
  %v2432 = vadd.f32 0.0, %v2431
  %v2433 = vpop.f32.mrb[0].mxu0
  %2434 = vmatprep.mubr.f32.mxu0 0.0
  %2435 = vmatmul.mubr.f32.gmra.mrb[0].mxu0 %v1731
  %v2436 = vpop.f32.mrb[0].mxu0
  %v2437 = vadd.f32 0.0, %v2436
  %v2438 = vpop.f32.mrb[0].mxu0
  %2439 = vdwg.mxu0
  %2440 = vrot.lane.b32.xlu0 %v2048, 32
  %v2441 = vpop.permute.xlu0 %2440
  %2442 = vrot.lane.b32.xlu0 %v2049, 32
  %v2443 = vpop.permute.xlu0 %2442
  %2444 = vrot.lane.b32.xlu0 %v2050, 32
  %v2445 = vpop.permute.xlu0 %2444
  %vm2449 = vcmask 261120
  %v2450 = vsel %vm2449, %v2427, %v2441
  %v2451 = vsel %vm2449, %v2432, %v2443
  %v2452 = vsel %vm2449, %v2437, %v2445
  %v2454 = vlaneseq
  %v2455 = vshrl.u32 %v2454, 7
  %v2456 = vsub.s32 0, %v2455
  %v2457 = vrot.slane %v2350, %v2456
  %vm2459 = vcmask 392192
  %v2461 = vsel %vm2459, %v2450, 0
  %v2464 = vsel %vm2459, %v2451, 0
  %v2467 = vsel %vm2459, %v2452, 0
  %2469 = vmatprep.subr.mxu0 0.0
  %2470 = vmatpush1.msra.mxu0 %v2344
  %2471 = vmatprep.subr.mxu0 0.0
  %2472 = vmatpush1.msra.mxu0 %v2345
  %2473 = vmatprep.subr.mxu0 0.0
  %2474 = vmatpush1.msra.mxu0 %v2346
  %2475 = vmatprep.subr.mxu0 0.0
  %2476 = vmatpush1.msra.mxu0 %v2347
  %2477 = vmatprep.subr.mxu0 0.0
  %2478 = vmatpush1.msra.mxu0 %v2348
  %2479 = vmatprep.subr.mxu0 0.0
  %2480 = vmatpush1.msra.mxu0 %v2349
  %2481 = vmatprep.subr.mxu0 0.0
  %2482 = vmatpush1.msra.mxu0 0.0
  %2483 = vmatprep.subr.mxu0 0.0
  %2484 = vmatpush1.msra.mxu0 0.0
  %2485 = vmatprep.subr.mxu0 0.0
  %2486 = vmatpush1.msra.mxu0 0.0
  %2487 = vmatprep.subr.mxu0 0.0
  %2488 = vmatpush1.msra.mxu0 0.0
  %2489 = vmatprep.subr.mxu0 0.0
  %2490 = vmatpush1.msra.mxu0 0.0
  %2491 = vmatprep.subr.mxu0 0.0
  %2492 = vmatpush1.msra.mxu0 0.0
  %2493 = vmatprep.subr.mxu0 0.0
  %2494 = vmatpush1.msra.mxu0 0.0
  %2495 = vmatprep.subr.mxu0 0.0
  %2496 = vmatpush1.msra.mxu0 0.0
  %2497 = vmatprep.subr.mxu0 0.0
  %2498 = vmatpush1.msra.mxu0 0.0
  %2499 = vmatprep.subr.mxu0 0.0
  %2500 = vmatpush1.msra.mxu0 0.0
  %2501 = vmatprep.subr.mxu0 0.0
  %2502 = vmatpush1.msra.mxu0 0.0
  %2503 = vmatprep.subr.mxu0 0.0
  %2504 = vmatpush1.msra.mxu0 0.0
  %2505 = vmatprep.subr.mxu0 0.0
  %2506 = vmatpush1.msra.mxu0 0.0
  %2507 = vmatprep.subr.mxu0 0.0
  %2508 = vmatpush1.msra.mxu0 0.0
  %2509 = vmatprep.subr.mxu0 0.0
  %2510 = vmatpush1.msra.mxu0 0.0
  %2511 = vmatprep.subr.mxu0 0.0
  %2512 = vmatpush1.msra.mxu0 0.0
  %2513 = vmatprep.subr.mxu0 0.0
  %2514 = vmatpush1.msra.mxu0 0.0
  %2515 = vmatprep.subr.mxu0 0.0
  %2516 = vmatpush1.msra.mxu0 0.0
  %2517 = vmatprep.subr.mxu0 0.0
  %2518 = vmatpush1.msra.mxu0 0.0
  %2519 = vmatprep.subr.mxu0 0.0
  %2520 = vmatpush1.msra.mxu0 0.0
  %2521 = vmatprep.subr.mxu0 0.0
  %2522 = vmatpush1.msra.mxu0 0.0
  %2523 = vmatprep.subr.mxu0 0.0
  %2524 = vmatpush1.msra.mxu0 0.0
  %2525 = vmatprep.subr.mxu0 0.0
  %2526 = vmatpush1.msra.mxu0 0.0
  %2527 = vmatprep.subr.mxu0 0.0
  %2528 = vmatpush1.msra.mxu0 0.0
  %2529 = vmatprep.subr.mxu0 0.0
  %2530 = vmatpush1.msra.mxu0 0.0
  %2531 = vmatprep.subr.mxu0 0.0
  %2532 = vmatpush1.msra.mxu0 0.0
  %2533 = vmatprep.mubr.f32.mxu0 0.0
  %2534 = vmatmul.mubr.f32.gmra.mrb[0].mxu0 %v2461
  %v2535 = vpop.f32.mrb[0].mxu0
  %v2536 = vadd.f32 %v2457, %v2535
  %v2537 = vpop.f32.mrb[0].mxu0
  %2538 = vmatprep.mubr.f32.mxu0 0.0
  %2539 = vmatmul.mubr.f32.gmra.mrb[0].mxu0 %v2464
  %v2540 = vpop.f32.mrb[0].mxu0
  %v2541 = vadd.f32 %v2457, %v2540
  %v2542 = vpop.f32.mrb[0].mxu0
  %2543 = vmatprep.mubr.f32.mxu0 0.0
  %2544 = vmatmul.mubr.f32.gmra.mrb[0].mxu0 %v2467
  %v2545 = vpop.f32.mrb[0].mxu0
  %v2546 = vadd.f32 %v2457, %v2545
  %v2547 = vpop.f32.mrb[0].mxu0
  %2548 = vdwg.mxu0
  %v2549 = vmax.f32 %v2536, 0.0
  %v2550 = vmax.f32 %v2541, 0.0
  %v2551 = vmax.f32 %v2546, 0.0
  %2552 = vmatprep.subr.mxu0 0.0
  %2553 = vmatpush1.msra.mxu0 %v2549
  %2554 = vmatprep.subr.mxu0 0.0
  %2555 = vmatpush1.msra.mxu0 %v2550
  %2556 = vmatprep.subr.mxu0 0.0
  %2557 = vmatpush1.msra.mxu0 %v2551
  %2558 = vmatprep.subr.mxu0 0.0
  %2559 = vmatpush1.msra.mxu0 0.0
  %2560 = vmatprep.subr.mxu0 0.0
  %2561 = vmatpush1.msra.mxu0 0.0
  %2562 = vmatprep.subr.mxu0 0.0
  %2563 = vmatpush1.msra.mxu0 0.0
  %2564 = vmatprep.subr.mxu0 0.0
  %2565 = vmatpush1.msra.mxu0 0.0
  %2566 = vmatprep.subr.mxu0 0.0
  %2567 = vmatpush1.msra.mxu0 0.0
  %2568 = vmatprep.subr.mxu0 0.0
  %2569 = vmatpush1.msra.mxu0 0.0
  %2570 = vmatprep.subr.mxu0 0.0
  %2571 = vmatpush1.msra.mxu0 0.0
  %2572 = vmatprep.subr.mxu0 0.0
  %2573 = vmatpush1.msra.mxu0 0.0
  %2574 = vmatprep.subr.mxu0 0.0
  %2575 = vmatpush1.msra.mxu0 0.0
  %2576 = vmatprep.subr.mxu0 0.0
  %2577 = vmatpush1.msra.mxu0 0.0
  %2578 = vmatprep.subr.mxu0 0.0
  %2579 = vmatpush1.msra.mxu0 0.0
  %2580 = vmatprep.subr.mxu0 0.0
  %2581 = vmatpush1.msra.mxu0 0.0
  %2582 = vmatprep.subr.mxu0 0.0
  %2583 = vmatpush1.msra.mxu0 0.0
  %2584 = vmatprep.subr.mxu0 0.0
  %2585 = vmatpush1.msra.mxu0 0.0
  %2586 = vmatprep.subr.mxu0 0.0
  %2587 = vmatpush1.msra.mxu0 0.0
  %2588 = vmatprep.subr.mxu0 0.0
  %2589 = vmatpush1.msra.mxu0 0.0
  %2590 = vmatprep.subr.mxu0 0.0
  %2591 = vmatpush1.msra.mxu0 0.0
  %2592 = vmatprep.subr.mxu0 0.0
  %2593 = vmatpush1.msra.mxu0 0.0
  %2594 = vmatprep.subr.mxu0 0.0
  %2595 = vmatpush1.msra.mxu0 0.0
  %2596 = vmatprep.subr.mxu0 0.0
  %2597 = vmatpush1.msra.mxu0 0.0
  %2598 = vmatprep.subr.mxu0 0.0
  %2599 = vmatpush1.msra.mxu0 0.0
  %2600 = vmatprep.subr.mxu0 0.0
  %2601 = vmatpush1.msra.mxu0 0.0
  %2602 = vmatprep.subr.mxu0 0.0
  %2603 = vmatpush1.msra.mxu0 0.0
  %2604 = vmatprep.subr.mxu0 0.0
  %2605 = vmatpush1.msra.mxu0 0.0
  %2606 = vmatprep.subr.mxu0 0.0
  %2607 = vmatpush1.msra.mxu0 0.0
  %2608 = vmatprep.subr.mxu0 0.0
  %2609 = vmatpush1.msra.mxu0 0.0
  %2610 = vmatprep.subr.mxu0 0.0
  %2611 = vmatpush1.msra.mxu0 0.0
  %2612 = vmatprep.subr.mxu0 0.0
  %2613 = vmatpush1.msra.mxu0 0.0
  %2614 = vmatprep.subr.mxu0 0.0
  %2615 = vmatpush1.msra.mxu0 0.0
  %2616 = vmatprep.mubr.f32.mxu0 0.0
  %2617 = vmatmul.mubr.f32.gmra.mrb[0].mxu0 %v2184
  %v2618 = vpop.f32.mrb[0].mxu0
  %v2619 = vadd.f32 0.0, %v2618
  %v2620 = vpop.f32.mrb[0].mxu0
  %2621 = vdwg.mxu0
  %2623 = vrot.lane.b32.xlu0 %v2619, 32
  %v2624 = vpop.permute.xlu0 %2623
  %v2626 = vsel %vm2449, %v2343, %v2624
  %v2628 = vlaneseq
  %v2629 = vshrl.u32 %v2628, 7
  %v2630 = vsub.s32 0, %v2629
  %v2631 = vrot.slane %v2359, %v2630
  %vm2633 = vcmask 523264
  %v2635 = vsel %vm2633, %v2626, 0
  %2637 = vmatprep.subr.mxu0 0.0
  %2638 = vmatpush1.msra.mxu0 %v2351
  %2639 = vmatprep.subr.mxu0 0.0
  %2640 = vmatpush1.msra.mxu0 %v2352
  %2641 = vmatprep.subr.mxu0 0.0
  %2642 = vmatpush1.msra.mxu0 %v2353
  %2643 = vmatprep.subr.mxu0 0.0
  %2644 = vmatpush1.msra.mxu0 %v2354
  %2645 = vmatprep.subr.mxu0 0.0
  %2646 = vmatpush1.msra.mxu0 %v2355
  %2647 = vmatprep.subr.mxu0 0.0
  %2648 = vmatpush1.msra.mxu0 %v2356
  %2649 = vmatprep.subr.mxu0 0.0
  %2650 = vmatpush1.msra.mxu0 %v2357
  %2651 = vmatprep.subr.mxu0 0.0
  %2652 = vmatpush1.msra.mxu0 %v2358
  %2653 = vmatprep.subr.mxu0 0.0
  %2654 = vmatpush1.msra.mxu0 0.0
  %2655 = vmatprep.subr.mxu0 0.0
  %2656 = vmatpush1.msra.mxu0 0.0
  %2657 = vmatprep.subr.mxu0 0.0
  %2658 = vmatpush1.msra.mxu0 0.0
  %2659 = vmatprep.subr.mxu0 0.0
  %2660 = vmatpush1.msra.mxu0 0.0
  %2661 = vmatprep.subr.mxu0 0.0
  %2662 = vmatpush1.msra.mxu0 0.0
  %2663 = vmatprep.subr.mxu0 0.0
  %2664 = vmatpush1.msra.mxu0 0.0
  %2665 = vmatprep.subr.mxu0 0.0
  %2666 = vmatpush1.msra.mxu0 0.0
  %2667 = vmatprep.subr.mxu0 0.0
  %2668 = vmatpush1.msra.mxu0 0.0
  %2669 = vmatprep.subr.mxu0 0.0
  %2670 = vmatpush1.msra.mxu0 0.0
  %2671 = vmatprep.subr.mxu0 0.0
  %2672 = vmatpush1.msra.mxu0 0.0
  %2673 = vmatprep.subr.mxu0 0.0
  %2674 = vmatpush1.msra.mxu0 0.0
  %2675 = vmatprep.subr.mxu0 0.0
  %2676 = vmatpush1.msra.mxu0 0.0
  %2677 = vmatprep.subr.mxu0 0.0
  %2678 = vmatpush1.msra.mxu0 0.0
  %2679 = vmatprep.subr.mxu0 0.0
  %2680 = vmatpush1.msra.mxu0 0.0
  %2681 = vmatprep.subr.mxu0 0.0
  %2682 = vmatpush1.msra.mxu0 0.0
  %2683 = vmatprep.subr.mxu0 0.0
  %2684 = vmatpush1.msra.mxu0 0.0
  %2685 = vmatprep.subr.mxu0 0.0
  %2686 = vmatpush1.msra.mxu0 0.0
  %2687 = vmatprep.subr.mxu0 0.0
  %2688 = vmatpush1.msra.mxu0 0.0
  %2689 = vmatprep.subr.mxu0 0.0
  %2690 = vmatpush1.msra.mxu0 0.0
  %2691 = vmatprep.subr.mxu0 0.0
  %2692 = vmatpush1.msra.mxu0 0.0
  %2693 = vmatprep.subr.mxu0 0.0
  %2694 = vmatpush1.msra.mxu0 0.0
  %2695 = vmatprep.subr.mxu0 0.0
  %2696 = vmatpush1.msra.mxu0 0.0
  %2697 = vmatprep.subr.mxu0 0.0
  %2698 = vmatpush1.msra.mxu0 0.0
  %2699 = vmatprep.subr.mxu0 0.0
  %2700 = vmatpush1.msra.mxu0 0.0
  %2701 = vmatprep.mubr.f32.mxu0 0.0
  %2702 = vmatmul.mubr.f32.gmra.mrb[0].mxu0 %v2635
  %v2703 = vpop.f32.mrb[0].mxu0
  %v2704 = vadd.f32 %v2631, %v2703
  %v2705 = vpop.f32.mrb[0].mxu0
  %2706 = vdwg.mxu0
  %v2707 = vmax.f32 %v2704, 0.0
  %v2708 = vld [vmem:[%s9] sm:$0xff]
  %v2709 = vld [vmem:[%s9 + $0x8] sm:$0xff]
  %v2711 = vsel %vm262, %v2708, 0
  %v2714 = vsel %vm262, %v2709, 0
  %2716 = vmatprep.subr.mxu0 0.0
  %2717 = vmatpush1.msra.mxu0 %v2707
  %2718 = vmatprep.subr.mxu0 0.0
  %2719 = vmatpush1.msra.mxu0 0.0
  %2720 = vmatprep.subr.mxu0 0.0
  %2721 = vmatpush1.msra.mxu0 0.0
  %2722 = vmatprep.subr.mxu0 0.0
  %2723 = vmatpush1.msra.mxu0 0.0
  %2724 = vmatprep.subr.mxu0 0.0
  %2725 = vmatpush1.msra.mxu0 0.0
  %2726 = vmatprep.subr.mxu0 0.0
  %2727 = vmatpush1.msra.mxu0 0.0
  %2728 = vmatprep.subr.mxu0 0.0
  %2729 = vmatpush1.msra.mxu0 0.0
  %2730 = vmatprep.subr.mxu0 0.0
  %2731 = vmatpush1.msra.mxu0 0.0
  %2732 = vmatprep.subr.mxu0 0.0
  %2733 = vmatpush1.msra.mxu0 0.0
  %2734 = vmatprep.subr.mxu0 0.0
  %2735 = vmatpush1.msra.mxu0 0.0
  %2736 = vmatprep.subr.mxu0 0.0
  %2737 = vmatpush1.msra.mxu0 0.0
  %2738 = vmatprep.subr.mxu0 0.0
  %2739 = vmatpush1.msra.mxu0 0.0
  %2740 = vmatprep.subr.mxu0 0.0
  %2741 = vmatpush1.msra.mxu0 0.0
  %2742 = vmatprep.subr.mxu0 0.0
  %2743 = vmatpush1.msra.mxu0 0.0
  %2744 = vmatprep.subr.mxu0 0.0
  %2745 = vmatpush1.msra.mxu0 0.0
  %2746 = vmatprep.subr.mxu0 0.0
  %2747 = vmatpush1.msra.mxu0 0.0
  %2748 = vmatprep.subr.mxu0 0.0
  %2749 = vmatpush1.msra.mxu0 0.0
  %2750 = vmatprep.subr.mxu0 0.0
  %2751 = vmatpush1.msra.mxu0 0.0
  %2752 = vmatprep.subr.mxu0 0.0
  %2753 = vmatpush1.msra.mxu0 0.0
  %2754 = vmatprep.subr.mxu0 0.0
  %2755 = vmatpush1.msra.mxu0 0.0
  %2756 = vmatprep.subr.mxu0 0.0
  %2757 = vmatpush1.msra.mxu0 0.0
  %2758 = vmatprep.subr.mxu0 0.0
  %2759 = vmatpush1.msra.mxu0 0.0
  %2760 = vmatprep.subr.mxu0 0.0
  %2761 = vmatpush1.msra.mxu0 0.0
  %2762 = vmatprep.subr.mxu0 0.0
  %2763 = vmatpush1.msra.mxu0 0.0
  %2764 = vmatprep.subr.mxu0 0.0
  %2765 = vmatpush1.msra.mxu0 0.0
  %2766 = vmatprep.subr.mxu0 0.0
  %2767 = vmatpush1.msra.mxu0 0.0
  %2768 = vmatprep.subr.mxu0 0.0
  %2769 = vmatpush1.msra.mxu0 0.0
  %2770 = vmatprep.subr.mxu0 0.0
  %2771 = vmatpush1.msra.mxu0 0.0
  %2772 = vmatprep.subr.mxu0 0.0
  %2773 = vmatpush1.msra.mxu0 0.0
  %2774 = vmatprep.subr.mxu0 0.0
  %2775 = vmatpush1.msra.mxu0 0.0
  %2776 = vmatprep.subr.mxu0 0.0
  %2777 = vmatpush1.msra.mxu0 0.0
  %2778 = vmatprep.subr.mxu0 0.0
  %2779 = vmatpush1.msra.mxu0 0.0
  %2780 = vmatprep.mubr.f32.mxu0 0.0
  %2781 = vmatmul.mubr.f32.gmra.mrb[0].mxu0 %v2711
  %v2782 = vpop.f32.mrb[0].mxu0
  %v2783 = vadd.f32 0.0, %v2782
  %v2784 = vpop.f32.mrb[0].mxu0
  %2785 = vmatprep.mubr.f32.mxu0 0.0
  %2786 = vmatmul.mubr.f32.gmra.mrb[0].mxu0 %v2714
  %v2787 = vpop.f32.mrb[0].mxu0
  %v2788 = vadd.f32 0.0, %v2787
  %v2789 = vpop.f32.mrb[0].mxu0
  %2790 = vdwg.mxu0
  %v2791 = vld [vmem:[%s21] sm:$0xff]
  %v2792 = vld [vmem:[%s21 + $0x8] sm:$0xff]
  %v2793 = vld [vmem:[%s21 + $0x10] sm:$0xff]
  %v2794 = vld [vmem:[%s21 + $0x18] sm:$0xff]
  %v2795 = vld [vmem:[%s23] sm:$0xff]
  %v2796 = vld [vmem:[%s23 + $0x8] sm:$0xff]
  %v2797 = vld [vmem:[%s25] sm:$0xff]
  %v2798 = vld [vmem:[%s25 + $0x8] sm:$0xff]
  %v2799 = vld [vmem:[%s25 + $0x10] sm:$0xff]
  %v2800 = vld [vmem:[%s25 + $0x18] sm:$0xff]
  %2803 = vrot.lane.b32.xlu0 %v2783, 16
  %v2804 = vpop.permute.xlu0 %2803
  %2805 = vrot.lane.b32.xlu0 %v2788, 16
  %v2806 = vpop.permute.xlu0 %2805
  %v2809 = vsel %vm458, %v1631, %v2804
  %v2810 = vsel %vm458, %v1633, %v2806
  %v2811 = vld [vmem:[%s57] sm:$0xff]
  %v2812 = vld [vmem:[%s57 + $0x8] sm:$0xff]
  %v2813 = vld [vmem:[%s57 + $0x10] sm:$0xff]
  %v2814 = vld [vmem:[%s57 + $0x18] sm:$0xff]
  %v2815 = vld [vmem:[%s57 + $0x20] sm:$0xff]
  %v2816 = vld [vmem:[%s57 + $0x28] sm:$0xff]
  %v2817 = vld [vmem:[%s57 + $0x30] sm:$0x1]
  %v2818 = vld [vmem:[%s59] sm:$0x1]
  %v2819 = vld [vmem:[%s61] sm:$0xff]
  %v2820 = vld [vmem:[%s61 + $0x8] sm:$0xff]
  %v2821 = vld [vmem:[%s61 + $0x10] sm:$0xff]
  %v2822 = vld [vmem:[%s61 + $0x18] sm:$0xff]
  %v2823 = vld [vmem:[%s61 + $0x20] sm:$0xff]
  %v2824 = vld [vmem:[%s61 + $0x28] sm:$0xff]
  %v2825 = vld [vmem:[%s61 + $0x30] sm:$0xff]
  %v2826 = vld [vmem:[%s61 + $0x38] sm:$0xff]
  %v2827 = vld [vmem:[%s61 + $0x40] sm:$0xff]
  %v2828 = vld [vmem:[%s61 + $0x48] sm:$0xff]
  %v2829 = vld [vmem:[%s63] sm:$0x1]
  %v2831 = vsel %vm458, %v2791, 0
  %v2834 = vsel %vm458, %v2792, 0
  %v2837 = vsel %vm458, %v2793, 0
  %v2840 = vsel %vm458, %v2794, 0
  %2842 = vmatprep.subr.mxu0 0.0
  %2843 = vmatpush1.msra.mxu0 %v2809
  %2844 = vmatprep.subr.mxu0 0.0
  %2845 = vmatpush1.msra.mxu0 %v2810
  %2846 = vmatprep.subr.mxu0 0.0
  %2847 = vmatpush1.msra.mxu0 0.0
  %2848 = vmatprep.subr.mxu0 0.0
  %2849 = vmatpush1.msra.mxu0 0.0
  %2850 = vmatprep.subr.mxu0 0.0
  %2851 = vmatpush1.msra.mxu0 0.0
  %2852 = vmatprep.subr.mxu0 0.0
  %2853 = vmatpush1.msra.mxu0 0.0
  %2854 = vmatprep.subr.mxu0 0.0
  %2855 = vmatpush1.msra.mxu0 0.0
  %2856 = vmatprep.subr.mxu0 0.0
  %2857 = vmatpush1.msra.mxu0 0.0
  %2858 = vmatprep.subr.mxu0 0.0
  %2859 = vmatpush1.msra.mxu0 0.0
  %2860 = vmatprep.subr.mxu0 0.0
  %2861 = vmatpush1.msra.mxu0 0.0
  %2862 = vmatprep.subr.mxu0 0.0
  %2863 = vmatpush1.msra.mxu0 0.0
  %2864 = vmatprep.subr.mxu0 0.0
  %2865 = vmatpush1.msra.mxu0 0.0
  %2866 = vmatprep.subr.mxu0 0.0
  %2867 = vmatpush1.msra.mxu0 0.0
  %2868 = vmatprep.subr.mxu0 0.0
  %2869 = vmatpush1.msra.mxu0 0.0
  %2870 = vmatprep.subr.mxu0 0.0
  %2871 = vmatpush1.msra.mxu0 0.0
  %2872 = vmatprep.subr.mxu0 0.0
  %2873 = vmatpush1.msra.mxu0 0.0
  %2874 = vmatprep.subr.mxu0 0.0
  %2875 = vmatpush1.msra.mxu0 0.0
  %2876 = vmatprep.subr.mxu0 0.0
  %2877 = vmatpush1.msra.mxu0 0.0
  %2878 = vmatprep.subr.mxu0 0.0
  %2879 = vmatpush1.msra.mxu0 0.0
  %2880 = vmatprep.subr.mxu0 0.0
  %2881 = vmatpush1.msra.mxu0 0.0
  %2882 = vmatprep.subr.mxu0 0.0
  %2883 = vmatpush1.msra.mxu0 0.0
  %2884 = vmatprep.subr.mxu0 0.0
  %2885 = vmatpush1.msra.mxu0 0.0
  %2886 = vmatprep.subr.mxu0 0.0
  %2887 = vmatpush1.msra.mxu0 0.0
  %2888 = vmatprep.subr.mxu0 0.0
  %2889 = vmatpush1.msra.mxu0 0.0
  %2890 = vmatprep.subr.mxu0 0.0
  %2891 = vmatpush1.msra.mxu0 0.0
  %2892 = vmatprep.subr.mxu0 0.0
  %2893 = vmatpush1.msra.mxu0 0.0
  %2894 = vmatprep.subr.mxu0 0.0
  %2895 = vmatpush1.msra.mxu0 0.0
  %2896 = vmatprep.subr.mxu0 0.0
  %2897 = vmatpush1.msra.mxu0 0.0
  %2898 = vmatprep.subr.mxu0 0.0
  %2899 = vmatpush1.msra.mxu0 0.0
  %2900 = vmatprep.subr.mxu0 0.0
  %2901 = vmatpush1.msra.mxu0 0.0
  %2902 = vmatprep.subr.mxu0 0.0
  %2903 = vmatpush1.msra.mxu0 0.0
  %2904 = vmatprep.subr.mxu0 0.0
  %2905 = vmatpush1.msra.mxu0 0.0
  %2906 = vmatprep.mubr.f32.mxu0 0.0
  %2907 = vmatmul.mubr.f32.gmra.mrb[0].mxu0 %v2831
  %v2908 = vpop.f32.mrb[0].mxu0
  %v2909 = vadd.f32 0.0, %v2908
  %v2910 = vpop.f32.mrb[0].mxu0
  %2911 = vmatprep.mubr.f32.mxu0 0.0
  %2912 = vmatmul.mubr.f32.gmra.mrb[0].mxu0 %v2834
  %v2913 = vpop.f32.mrb[0].mxu0
  %v2914 = vadd.f32 0.0, %v2913
  %v2915 = vpop.f32.mrb[0].mxu0
  %2916 = vmatprep.mubr.f32.mxu0 0.0
  %2917 = vmatmul.mubr.f32.gmra.mrb[0].mxu0 %v2837
  %v2918 = vpop.f32.mrb[0].mxu0
  %v2919 = vadd.f32 0.0, %v2918
  %v2920 = vpop.f32.mrb[0].mxu0
  %2921 = vmatprep.mubr.f32.mxu0 0.0
  %2922 = vmatmul.mubr.f32.gmra.mrb[0].mxu0 %v2840
  %v2923 = vpop.f32.mrb[0].mxu0
  %v2924 = vadd.f32 0.0, %v2923
  %v2925 = vpop.f32.mrb[0].mxu0
  %2926 = vdwg.mxu0
  %2931 = vrot.lane.b32.xlu0 %v2797, 48
  %v2932 = vpop.permute.xlu0 %2931
  %2933 = vrot.lane.b32.xlu0 %v2798, 48
  %v2934 = vpop.permute.xlu0 %2933
  %2935 = vrot.lane.b32.xlu0 %v2799, 48
  %v2936 = vpop.permute.xlu0 %2935
  %2937 = vrot.lane.b32.xlu0 %v2800, 48
  %v2938 = vpop.permute.xlu0 %2937
  %v2943 = vsel %vm2459, %v2909, %v2932
  %v2944 = vsel %vm2459, %v2914, %v2934
  %v2945 = vsel %vm2459, %v2919, %v2936
  %v2946 = vsel %vm2459, %v2924, %v2938
  %v2948 = vlaneseq
  %v2949 = vshrl.u32 %v2948, 7
  %v2950 = vsub.s32 0, %v2949
  %v2951 = vrot.slane %v2818, %v2950
  %vm2953 = vcmask 400384
  %v2955 = vsel %vm2953, %v2943, 0
  %v2958 = vsel %vm2953, %v2944, 0
  %v2961 = vsel %vm2953, %v2945, 0
  %v2964 = vsel %vm2953, %v2946, 0
  %vm2966 = vcmask 1040384
  %v2968 = vsel %vm2966, %v2817, 0
  %2970 = vmatprep.subr.mxu0 0.0
  %2971 = vmatpush1.msra.mxu0 %v2811
  %2972 = vmatprep.subr.mxu0 0.0
  %2973 = vmatpush1.msra.mxu0 %v2812
  %2974 = vmatprep.subr.mxu0 0.0
  %2975 = vmatpush1.msra.mxu0 %v2813
  %2976 = vmatprep.subr.mxu0 0.0
  %2977 = vmatpush1.msra.mxu0 %v2814
  %2978 = vmatprep.subr.mxu0 0.0
  %2979 = vmatpush1.msra.mxu0 %v2815
  %2980 = vmatprep.subr.mxu0 0.0
  %2981 = vmatpush1.msra.mxu0 %v2816
  %2982 = vmatprep.subr.mxu0 0.0
  %2983 = vmatpush1.msra.mxu0 %v2968
  %2984 = vmatprep.subr.mxu0 0.0
  %2985 = vmatpush1.msra.mxu0 0.0
  %2986 = vmatprep.subr.mxu0 0.0
  %2987 = vmatpush1.msra.mxu0 0.0
  %2988 = vmatprep.subr.mxu0 0.0
  %2989 = vmatpush1.msra.mxu0 0.0
  %2990 = vmatprep.subr.mxu0 0.0
  %2991 = vmatpush1.msra.mxu0 0.0
  %2992 = vmatprep.subr.mxu0 0.0
  %2993 = vmatpush1.msra.mxu0 0.0
  %2994 = vmatprep.subr.mxu0 0.0
  %2995 = vmatpush1.msra.mxu0 0.0
  %2996 = vmatprep.subr.mxu0 0.0
  %2997 = vmatpush1.msra.mxu0 0.0
  %2998 = vmatprep.subr.mxu0 0.0
  %2999 = vmatpush1.msra.mxu0 0.0
  %3000 = vmatprep.subr.mxu0 0.0
  %3001 = vmatpush1.msra.mxu0 0.0
  %3002 = vmatprep.subr.mxu0 0.0
  %3003 = vmatpush1.msra.mxu0 0.0
  %3004 = vmatprep.subr.mxu0 0.0
  %3005 = vmatpush1.msra.mxu0 0.0
  %3006 = vmatprep.subr.mxu0 0.0
  %3007 = vmatpush1.msra.mxu0 0.0
  %3008 = vmatprep.subr.mxu0 0.0
  %3009 = vmatpush1.msra.mxu0 0.0
  %3010 = vmatprep.subr.mxu0 0.0
  %3011 = vmatpush1.msra.mxu0 0.0
  %3012 = vmatprep.subr.mxu0 0.0
  %3013 = vmatpush1.msra.mxu0 0.0
  %3014 = vmatprep.subr.mxu0 0.0
  %3015 = vmatpush1.msra.mxu0 0.0
  %3016 = vmatprep.subr.mxu0 0.0
  %3017 = vmatpush1.msra.mxu0 0.0
  %3018 = vmatprep.subr.mxu0 0.0
  %3019 = vmatpush1.msra.mxu0 0.0
  %3020 = vmatprep.subr.mxu0 0.0
  %3021 = vmatpush1.msra.mxu0 0.0
  %3022 = vmatprep.subr.mxu0 0.0
  %3023 = vmatpush1.msra.mxu0 0.0
  %3024 = vmatprep.subr.mxu0 0.0
  %3025 = vmatpush1.msra.mxu0 0.0
  %3026 = vmatprep.subr.mxu0 0.0
  %3027 = vmatpush1.msra.mxu0 0.0
  %3028 = vmatprep.subr.mxu0 0.0
  %3029 = vmatpush1.msra.mxu0 0.0
  %3030 = vmatprep.subr.mxu0 0.0
  %3031 = vmatpush1.msra.mxu0 0.0
  %3032 = vmatprep.subr.mxu0 0.0
  %3033 = vmatpush1.msra.mxu0 0.0
  %3034 = vmatprep.mubr.f32.mxu0 0.0
  %3035 = vmatmul.mubr.f32.gmra.mrb[0].mxu0 %v2955
  %v3036 = vpop.f32.mrb[0].mxu0
  %v3037 = vadd.f32 %v2951, %v3036
  %v3038 = vpop.f32.mrb[0].mxu0
  %3039 = vmatprep.mubr.f32.mxu0 0.0
  %3040 = vmatmul.mubr.f32.gmra.mrb[0].mxu0 %v2958
  %v3041 = vpop.f32.mrb[0].mxu0
  %v3042 = vadd.f32 %v2951, %v3041
  %v3043 = vpop.f32.mrb[0].mxu0
  %3044 = vmatprep.mubr.f32.mxu0 0.0
  %3045 = vmatmul.mubr.f32.gmra.mrb[0].mxu0 %v2961
  %v3046 = vpop.f32.mrb[0].mxu0
  %v3047 = vadd.f32 %v2951, %v3046
  %v3048 = vpop.f32.mrb[0].mxu0
  %3049 = vmatprep.mubr.f32.mxu0 0.0
  %3050 = vmatmul.mubr.f32.gmra.mrb[0].mxu0 %v2964
  %v3051 = vpop.f32.mrb[0].mxu0
  %v3052 = vadd.f32 %v2951, %v3051
  %v3053 = vpop.f32.mrb[0].mxu0
  %3054 = vdwg.mxu0
  %v3055 = vmax.f32 %v3037, 0.0
  %v3056 = vmax.f32 %v3042, 0.0
  %v3057 = vmax.f32 %v3047, 0.0
  %v3058 = vmax.f32 %v3052, 0.0
  %v3060 = vsel %vm2449, %v2795, 0
  %v3063 = vsel %vm2449, %v2796, 0
  %3065 = vmatprep.subr.mxu0 0.0
  %3066 = vmatpush1.msra.mxu0 %v3055
  %3067 = vmatprep.subr.mxu0 0.0
  %3068 = vmatpush1.msra.mxu0 %v3056
  %3069 = vmatprep.subr.mxu0 0.0
  %3070 = vmatpush1.msra.mxu0 %v3057
  %3071 = vmatprep.subr.mxu0 0.0
  %3072 = vmatpush1.msra.mxu0 %v3058
  %3073 = vmatprep.subr.mxu0 0.0
  %3074 = vmatpush1.msra.mxu0 0.0
  %3075 = vmatprep.subr.mxu0 0.0
  %3076 = vmatpush1.msra.mxu0 0.0
  %3077 = vmatprep.subr.mxu0 0.0
  %3078 = vmatpush1.msra.mxu0 0.0
  %3079 = vmatprep.subr.mxu0 0.0
  %3080 = vmatpush1.msra.mxu0 0.0
  %3081 = vmatprep.subr.mxu0 0.0
  %3082 = vmatpush1.msra.mxu0 0.0
  %3083 = vmatprep.subr.mxu0 0.0
  %3084 = vmatpush1.msra.mxu0 0.0
  %3085 = vmatprep.subr.mxu0 0.0
  %3086 = vmatpush1.msra.mxu0 0.0
  %3087 = vmatprep.subr.mxu0 0.0
  %3088 = vmatpush1.msra.mxu0 0.0
  %3089 = vmatprep.subr.mxu0 0.0
  %3090 = vmatpush1.msra.mxu0 0.0
  %3091 = vmatprep.subr.mxu0 0.0
  %3092 = vmatpush1.msra.mxu0 0.0
  %3093 = vmatprep.subr.mxu0 0.0
  %3094 = vmatpush1.msra.mxu0 0.0
  %3095 = vmatprep.subr.mxu0 0.0
  %3096 = vmatpush1.msra.mxu0 0.0
  %3097 = vmatprep.subr.mxu0 0.0
  %3098 = vmatpush1.msra.mxu0 0.0
  %3099 = vmatprep.subr.mxu0 0.0
  %3100 = vmatpush1.msra.mxu0 0.0
  %3101 = vmatprep.subr.mxu0 0.0
  %3102 = vmatpush1.msra.mxu0 0.0
  %3103 = vmatprep.subr.mxu0 0.0
  %3104 = vmatpush1.msra.mxu0 0.0
  %3105 = vmatprep.subr.mxu0 0.0
  %3106 = vmatpush1.msra.mxu0 0.0
  %3107 = vmatprep.subr.mxu0 0.0
  %3108 = vmatpush1.msra.mxu0 0.0
  %3109 = vmatprep.subr.mxu0 0.0
  %3110 = vmatpush1.msra.mxu0 0.0
  %3111 = vmatprep.subr.mxu0 0.0
  %3112 = vmatpush1.msra.mxu0 0.0
  %3113 = vmatprep.subr.mxu0 0.0
  %3114 = vmatpush1.msra.mxu0 0.0
  %3115 = vmatprep.subr.mxu0 0.0
  %3116 = vmatpush1.msra.mxu0 0.0
  %3117 = vmatprep.subr.mxu0 0.0
  %3118 = vmatpush1.msra.mxu0 0.0
  %3119 = vmatprep.subr.mxu0 0.0
  %3120 = vmatpush1.msra.mxu0 0.0
  %3121 = vmatprep.subr.mxu0 0.0
  %3122 = vmatpush1.msra.mxu0 0.0
  %3123 = vmatprep.subr.mxu0 0.0
  %3124 = vmatpush1.msra.mxu0 0.0
  %3125 = vmatprep.subr.mxu0 0.0
  %3126 = vmatpush1.msra.mxu0 0.0
  %3127 = vmatprep.subr.mxu0 0.0
  %3128 = vmatpush1.msra.mxu0 0.0
  %3129 = vmatprep.mubr.f32.mxu0 0.0
  %3130 = vmatmul.mubr.f32.gmra.mrb[0].mxu0 %v3060
  %v3131 = vpop.f32.mrb[0].mxu0
  %v3132 = vadd.f32 0.0, %v3131
  %v3133 = vpop.f32.mrb[0].mxu0
  %3134 = vmatprep.mubr.f32.mxu0 0.0
  %3135 = vmatmul.mubr.f32.gmra.mrb[0].mxu0 %v3063
  %v3136 = vpop.f32.mrb[0].mxu0
  %v3137 = vadd.f32 0.0, %v3136
  %v3138 = vpop.f32.mrb[0].mxu0
  %3139 = vdwg.mxu0
  %3142 = vrot.lane.b32.xlu0 %v3132, 48
  %v3143 = vpop.permute.xlu0 %3142
  %3144 = vrot.lane.b32.xlu0 %v3137, 48
  %v3145 = vpop.permute.xlu0 %3144
  %v3148 = vsel %vm2459, %v2809, %v3143
  %v3149 = vsel %vm2459, %v2810, %v3145
  %v3151 = vlaneseq
  %v3152 = vshrl.u32 %v3151, 7
  %v3153 = vsub.s32 0, %v3152
  %v3154 = vrot.slane %v2829, %v3153
  %vm3156 = vcmask 654336
  %v3158 = vsel %vm3156, %v3148, 0
  %v3161 = vsel %vm3156, %v3149, 0
  %3163 = vmatprep.subr.mxu0 0.0
  %3164 = vmatpush1.msra.mxu0 %v2819
  %3165 = vmatprep.subr.mxu0 0.0
  %3166 = vmatpush1.msra.mxu0 %v2820
  %3167 = vmatprep.subr.mxu0 0.0
  %3168 = vmatpush1.msra.mxu0 %v2821
  %3169 = vmatprep.subr.mxu0 0.0
  %3170 = vmatpush1.msra.mxu0 %v2822
  %3171 = vmatprep.subr.mxu0 0.0
  %3172 = vmatpush1.msra.mxu0 %v2823
  %3173 = vmatprep.subr.mxu0 0.0
  %3174 = vmatpush1.msra.mxu0 %v2824
  %3175 = vmatprep.subr.mxu0 0.0
  %3176 = vmatpush1.msra.mxu0 %v2825
  %3177 = vmatprep.subr.mxu0 0.0
  %3178 = vmatpush1.msra.mxu0 %v2826
  %3179 = vmatprep.subr.mxu0 0.0
  %3180 = vmatpush1.msra.mxu0 %v2827
  %3181 = vmatprep.subr.mxu0 0.0
  %3182 = vmatpush1.msra.mxu0 %v2828
  %3183 = vmatprep.subr.mxu0 0.0
  %3184 = vmatpush1.msra.mxu0 0.0
  %3185 = vmatprep.subr.mxu0 0.0
  %3186 = vmatpush1.msra.mxu0 0.0
  %3187 = vmatprep.subr.mxu0 0.0
  %3188 = vmatpush1.msra.mxu0 0.0
  %3189 = vmatprep.subr.mxu0 0.0
  %3190 = vmatpush1.msra.mxu0 0.0
  %3191 = vmatprep.subr.mxu0 0.0
  %3192 = vmatpush1.msra.mxu0 0.0
  %3193 = vmatprep.subr.mxu0 0.0
  %3194 = vmatpush1.msra.mxu0 0.0
  %3195 = vmatprep.subr.mxu0 0.0
  %3196 = vmatpush1.msra.mxu0 0.0
  %3197 = vmatprep.subr.mxu0 0.0
  %3198 = vmatpush1.msra.mxu0 0.0
  %3199 = vmatprep.subr.mxu0 0.0
  %3200 = vmatpush1.msra.mxu0 0.0
  %3201 = vmatprep.subr.mxu0 0.0
  %3202 = vmatpush1.msra.mxu0 0.0
  %3203 = vmatprep.subr.mxu0 0.0
  %3204 = vmatpush1.msra.mxu0 0.0
  %3205 = vmatprep.subr.mxu0 0.0
  %3206 = vmatpush1.msra.mxu0 0.0
  %3207 = vmatprep.subr.mxu0 0.0
  %3208 = vmatpush1.msra.mxu0 0.0
  %3209 = vmatprep.subr.mxu0 0.0
  %3210 = vmatpush1.msra.mxu0 0.0
  %3211 = vmatprep.subr.mxu0 0.0
  %3212 = vmatpush1.msra.mxu0 0.0
  %3213 = vmatprep.subr.mxu0 0.0
  %3214 = vmatpush1.msra.mxu0 0.0
  %3215 = vmatprep.subr.mxu0 0.0
  %3216 = vmatpush1.msra.mxu0 0.0
  %3217 = vmatprep.subr.mxu0 0.0
  %3218 = vmatpush1.msra.mxu0 0.0
  %3219 = vmatprep.subr.mxu0 0.0
  %3220 = vmatpush1.msra.mxu0 0.0
  %3221 = vmatprep.subr.mxu0 0.0
  %3222 = vmatpush1.msra.mxu0 0.0
  %3223 = vmatprep.subr.mxu0 0.0
  %3224 = vmatpush1.msra.mxu0 0.0
  %3225 = vmatprep.subr.mxu0 0.0
  %3226 = vmatpush1.msra.mxu0 0.0
  %3227 = vmatprep.mubr.f32.mxu0 0.0
  %3228 = vmatmul.mubr.f32.gmra.mrb[0].mxu0 %v3158
  %v3229 = vpop.f32.mrb[0].mxu0
  %v3230 = vadd.f32 %v3154, %v3229
  %v3231 = vpop.f32.mrb[0].mxu0
  %3232 = vmatprep.mubr.f32.mxu0 0.0
  %3233 = vmatmul.mubr.f32.gmra.mrb[0].mxu0 %v3161
  %v3234 = vpop.f32.mrb[0].mxu0
  %v3235 = vadd.f32 %v3154, %v3234
  %v3236 = vpop.f32.mrb[0].mxu0
  %3237 = vdwg.mxu0
  %v3238 = vmax.f32 %v3230, 0.0
  %v3239 = vmax.f32 %v3235, 0.0
  %v3240 = vld [vmem:[%s65] sm:$0xff]
  %v3241 = vld [vmem:[%s65 + $0x8] sm:$0xff]
  %v3242 = vld [vmem:[%s65 + $0x10] sm:$0xff]
  %v3243 = vld [vmem:[%s65 + $0x18] sm:$0xff]
  %v3244 = vld [vmem:[%s65 + $0x20] sm:$0x1]
  %v3245 = vld [vmem:[%s67] sm:$0x1]
  %v3246 = vld [vmem:[%s69] sm:$0xff]
  %v3247 = vld [vmem:[%s69 + $0x8] sm:$0xff]
  %v3248 = vld [vmem:[%s69 + $0x10] sm:$0xff]
  %v3249 = vld [vmem:[%s69 + $0x18] sm:$0xff]
  %v3250 = vld [vmem:[%s69 + $0x20] sm:$0xff]
  %v3251 = vld [vmem:[%s69 + $0x28] sm:$0xff]
  %v3252 = vld [vmem:[%s69 + $0x30] sm:$0xff]
  %v3253 = vld [vmem:[%s69 + $0x38] sm:$0xff]
  %v3254 = vld [vmem:[%s71] sm:$0x1]
  %3255 = vmatprep.subr.mxu0 0.0
  %3256 = vmatpush1.msra.mxu0 %v3238
  %3257 = vmatprep.subr.mxu0 0.0
  %3258 = vmatpush1.msra.mxu0 %v3239
  %3259 = vmatprep.subr.mxu0 0.0
  %3260 = vmatpush1.msra.mxu0 0.0
  %3261 = vmatprep.subr.mxu0 0.0
  %3262 = vmatpush1.msra.mxu0 0.0
  %3263 = vmatprep.subr.mxu0 0.0
  %3264 = vmatpush1.msra.mxu0 0.0
  %3265 = vmatprep.subr.mxu0 0.0
  %3266 = vmatpush1.msra.mxu0 0.0
  %3267 = vmatprep.subr.mxu0 0.0
  %3268 = vmatpush1.msra.mxu0 0.0
  %3269 = vmatprep.subr.mxu0 0.0
  %3270 = vmatpush1.msra.mxu0 0.0
  %3271 = vmatprep.subr.mxu0 0.0
  %3272 = vmatpush1.msra.mxu0 0.0
  %3273 = vmatprep.subr.mxu0 0.0
  %3274 = vmatpush1.msra.mxu0 0.0
  %3275 = vmatprep.subr.mxu0 0.0
  %3276 = vmatpush1.msra.mxu0 0.0
  %3277 = vmatprep.subr.mxu0 0.0
  %3278 = vmatpush1.msra.mxu0 0.0
  %3279 = vmatprep.subr.mxu0 0.0
  %3280 = vmatpush1.msra.mxu0 0.0
  %3281 = vmatprep.subr.mxu0 0.0
  %3282 = vmatpush1.msra.mxu0 0.0
  %3283 = vmatprep.subr.mxu0 0.0
  %3284 = vmatpush1.msra.mxu0 0.0
  %3285 = vmatprep.subr.mxu0 0.0
  %3286 = vmatpush1.msra.mxu0 0.0
  %3287 = vmatprep.subr.mxu0 0.0
  %3288 = vmatpush1.msra.mxu0 0.0
  %3289 = vmatprep.subr.mxu0 0.0
  %3290 = vmatpush1.msra.mxu0 0.0
  %3291 = vmatprep.subr.mxu0 0.0
  %3292 = vmatpush1.msra.mxu0 0.0
  %3293 = vmatprep.subr.mxu0 0.0
  %3294 = vmatpush1.msra.mxu0 0.0
  %3295 = vmatprep.subr.mxu0 0.0
  %3296 = vmatpush1.msra.mxu0 0.0
  %3297 = vmatprep.subr.mxu0 0.0
  %3298 = vmatpush1.msra.mxu0 0.0
  %3299 = vmatprep.subr.mxu0 0.0
  %3300 = vmatpush1.msra.mxu0 0.0
  %3301 = vmatprep.subr.mxu0 0.0
  %3302 = vmatpush1.msra.mxu0 0.0
  %3303 = vmatprep.subr.mxu0 0.0
  %3304 = vmatpush1.msra.mxu0 0.0
  %3305 = vmatprep.subr.mxu0 0.0
  %3306 = vmatpush1.msra.mxu0 0.0
  %3307 = vmatprep.subr.mxu0 0.0
  %3308 = vmatpush1.msra.mxu0 0.0
  %3309 = vmatprep.subr.mxu0 0.0
  %3310 = vmatpush1.msra.mxu0 0.0
  %3311 = vmatprep.subr.mxu0 0.0
  %3312 = vmatpush1.msra.mxu0 0.0
  %3313 = vmatprep.subr.mxu0 0.0
  %3314 = vmatpush1.msra.mxu0 0.0
  %3315 = vmatprep.subr.mxu0 0.0
  %3316 = vmatpush1.msra.mxu0 0.0
  %3317 = vmatprep.subr.mxu0 0.0
  %3318 = vmatpush1.msra.mxu0 0.0
  %3319 = vmatprep.mubr.f32.mxu0 0.0
  %3320 = vmatmul.mubr.f32.gmra.mrb[0].mxu0 %v2831
  %v3321 = vpop.f32.mrb[0].mxu0
  %v3322 = vadd.f32 0.0, %v3321
  %v3323 = vpop.f32.mrb[0].mxu0
  %3324 = vmatprep.mubr.f32.mxu0 0.0
  %3325 = vmatmul.mubr.f32.gmra.mrb[0].mxu0 %v2834
  %v3326 = vpop.f32.mrb[0].mxu0
  %v3327 = vadd.f32 0.0, %v3326
  %v3328 = vpop.f32.mrb[0].mxu0
  %3329 = vmatprep.mubr.f32.mxu0 0.0
  %3330 = vmatmul.mubr.f32.gmra.mrb[0].mxu0 %v2837
  %v3331 = vpop.f32.mrb[0].mxu0
  %v3332 = vadd.f32 0.0, %v3331
  %v3333 = vpop.f32.mrb[0].mxu0
  %3334 = vmatprep.mubr.f32.mxu0 0.0
  %3335 = vmatmul.mubr.f32.gmra.mrb[0].mxu0 %v2840
  %v3336 = vpop.f32.mrb[0].mxu0
  %v3337 = vadd.f32 0.0, %v3336
  %v3338 = vpop.f32.mrb[0].mxu0
  %3339 = vdwg.mxu0
  %3340 = vrot.lane.b32.xlu0 %v2797, 32
  %v3341 = vpop.permute.xlu0 %3340
  %3342 = vrot.lane.b32.xlu0 %v2798, 32
  %v3343 = vpop.permute.xlu0 %3342
  %3344 = vrot.lane.b32.xlu0 %v2799, 32
  %v3345 = vpop.permute.xlu0 %3344
  %3346 = vrot.lane.b32.xlu0 %v2800, 32
  %v3347 = vpop.permute.xlu0 %3346
  %v3352 = vsel %vm2449, %v3322, %v3341
  %v3353 = vsel %vm2449, %v3327, %v3343
  %v3354 = vsel %vm2449, %v3332, %v3345
  %v3355 = vsel %vm2449, %v3337, %v3347
  %v3357 = vlaneseq
  %v3358 = vshrl.u32 %v3357, 7
  %v3359 = vsub.s32 0, %v3358
  %v3360 = vrot.slane %v3245, %v3359
  %vm3362 = vcmask 269312
  %v3364 = vsel %vm3362, %v3352, 0
  %v3367 = vsel %vm3362, %v3353, 0
  %v3370 = vsel %vm3362, %v3354, 0
  %v3373 = vsel %vm3362, %v3355, 0
  %v3376 = vsel %vm2966, %v3244, 0
  %3378 = vmatprep.subr.mxu0 0.0
  %3379 = vmatpush1.msra.mxu0 %v3240
  %3380 = vmatprep.subr.mxu0 0.0
  %3381 = vmatpush1.msra.mxu0 %v3241
  %3382 = vmatprep.subr.mxu0 0.0
  %3383 = vmatpush1.msra.mxu0 %v3242
  %3384 = vmatprep.subr.mxu0 0.0
  %3385 = vmatpush1.msra.mxu0 %v3243
  %3386 = vmatprep.subr.mxu0 0.0
  %3387 = vmatpush1.msra.mxu0 %v3376
  %3388 = vmatprep.subr.mxu0 0.0
  %3389 = vmatpush1.msra.mxu0 0.0
  %3390 = vmatprep.subr.mxu0 0.0
  %3391 = vmatpush1.msra.mxu0 0.0
  %3392 = vmatprep.subr.mxu0 0.0
  %3393 = vmatpush1.msra.mxu0 0.0
  %3394 = vmatprep.subr.mxu0 0.0
  %3395 = vmatpush1.msra.mxu0 0.0
  %3396 = vmatprep.subr.mxu0 0.0
  %3397 = vmatpush1.msra.mxu0 0.0
  %3398 = vmatprep.subr.mxu0 0.0
  %3399 = vmatpush1.msra.mxu0 0.0
  %3400 = vmatprep.subr.mxu0 0.0
  %3401 = vmatpush1.msra.mxu0 0.0
  %3402 = vmatprep.subr.mxu0 0.0
  %3403 = vmatpush1.msra.mxu0 0.0
  %3404 = vmatprep.subr.mxu0 0.0
  %3405 = vmatpush1.msra.mxu0 0.0
  %3406 = vmatprep.subr.mxu0 0.0
  %3407 = vmatpush1.msra.mxu0 0.0
  %3408 = vmatprep.subr.mxu0 0.0
  %3409 = vmatpush1.msra.mxu0 0.0
  %3410 = vmatprep.subr.mxu0 0.0
  %3411 = vmatpush1.msra.mxu0 0.0
  %3412 = vmatprep.subr.mxu0 0.0
  %3413 = vmatpush1.msra.mxu0 0.0
  %3414 = vmatprep.subr.mxu0 0.0
  %3415 = vmatpush1.msra.mxu0 0.0
  %3416 = vmatprep.subr.mxu0 0.0
  %3417 = vmatpush1.msra.mxu0 0.0
  %3418 = vmatprep.subr.mxu0 0.0
  %3419 = vmatpush1.msra.mxu0 0.0
  %3420 = vmatprep.subr.mxu0 0.0
  %3421 = vmatpush1.msra.mxu0 0.0
  %3422 = vmatprep.subr.mxu0 0.0
  %3423 = vmatpush1.msra.mxu0 0.0
  %3424 = vmatprep.subr.mxu0 0.0
  %3425 = vmatpush1.msra.mxu0 0.0
  %3426 = vmatprep.subr.mxu0 0.0
  %3427 = vmatpush1.msra.mxu0 0.0
  %3428 = vmatprep.subr.mxu0 0.0
  %3429 = vmatpush1.msra.mxu0 0.0
  %3430 = vmatprep.subr.mxu0 0.0
  %3431 = vmatpush1.msra.mxu0 0.0
  %3432 = vmatprep.subr.mxu0 0.0
  %3433 = vmatpush1.msra.mxu0 0.0
  %3434 = vmatprep.subr.mxu0 0.0
  %3435 = vmatpush1.msra.mxu0 0.0
  %3436 = vmatprep.subr.mxu0 0.0
  %3437 = vmatpush1.msra.mxu0 0.0
  %3438 = vmatprep.subr.mxu0 0.0
  %3439 = vmatpush1.msra.mxu0 0.0
  %3440 = vmatprep.subr.mxu0 0.0
  %3441 = vmatpush1.msra.mxu0 0.0
  %3442 = vmatprep.mubr.f32.mxu0 0.0
  %3443 = vmatmul.mubr.f32.gmra.mrb[0].mxu0 %v3364
  %v3444 = vpop.f32.mrb[0].mxu0
  %v3445 = vadd.f32 %v3360, %v3444
  %v3446 = vpop.f32.mrb[0].mxu0
  %3447 = vmatprep.mubr.f32.mxu0 0.0
  %3448 = vmatmul.mubr.f32.gmra.mrb[0].mxu0 %v3367
  %v3449 = vpop.f32.mrb[0].mxu0
  %v3450 = vadd.f32 %v3360, %v3449
  %v3451 = vpop.f32.mrb[0].mxu0
  %3452 = vmatprep.mubr.f32.mxu0 0.0
  %3453 = vmatmul.mubr.f32.gmra.mrb[0].mxu0 %v3370
  %v3454 = vpop.f32.mrb[0].mxu0
  %v3455 = vadd.f32 %v3360, %v3454
  %v3456 = vpop.f32.mrb[0].mxu0
  %3457 = vmatprep.mubr.f32.mxu0 0.0
  %3458 = vmatmul.mubr.f32.gmra.mrb[0].mxu0 %v3373
  %v3459 = vpop.f32.mrb[0].mxu0
  %v3460 = vadd.f32 %v3360, %v3459
  %v3461 = vpop.f32.mrb[0].mxu0
  %3462 = vdwg.mxu0
  %v3463 = vmax.f32 %v3445, 0.0
  %v3464 = vmax.f32 %v3450, 0.0
  %v3465 = vmax.f32 %v3455, 0.0
  %v3466 = vmax.f32 %v3460, 0.0
  %3467 = vmatprep.subr.mxu0 0.0
  %3468 = vmatpush1.msra.mxu0 %v3463
  %3469 = vmatprep.subr.mxu0 0.0
  %3470 = vmatpush1.msra.mxu0 %v3464
  %3471 = vmatprep.subr.mxu0 0.0
  %3472 = vmatpush1.msra.mxu0 %v3465
  %3473 = vmatprep.subr.mxu0 0.0
  %3474 = vmatpush1.msra.mxu0 %v3466
  %3475 = vmatprep.subr.mxu0 0.0
  %3476 = vmatpush1.msra.mxu0 0.0
  %3477 = vmatprep.subr.mxu0 0.0
  %3478 = vmatpush1.msra.mxu0 0.0
  %3479 = vmatprep.subr.mxu0 0.0
  %3480 = vmatpush1.msra.mxu0 0.0
  %3481 = vmatprep.subr.mxu0 0.0
  %3482 = vmatpush1.msra.mxu0 0.0
  %3483 = vmatprep.subr.mxu0 0.0
  %3484 = vmatpush1.msra.mxu0 0.0
  %3485 = vmatprep.subr.mxu0 0.0
  %3486 = vmatpush1.msra.mxu0 0.0
  %3487 = vmatprep.subr.mxu0 0.0
  %3488 = vmatpush1.msra.mxu0 0.0
  %3489 = vmatprep.subr.mxu0 0.0
  %3490 = vmatpush1.msra.mxu0 0.0
  %3491 = vmatprep.subr.mxu0 0.0
  %3492 = vmatpush1.msra.mxu0 0.0
  %3493 = vmatprep.subr.mxu0 0.0
  %3494 = vmatpush1.msra.mxu0 0.0
  %3495 = vmatprep.subr.mxu0 0.0
  %3496 = vmatpush1.msra.mxu0 0.0
  %3497 = vmatprep.subr.mxu0 0.0
  %3498 = vmatpush1.msra.mxu0 0.0
  %3499 = vmatprep.subr.mxu0 0.0
  %3500 = vmatpush1.msra.mxu0 0.0
  %3501 = vmatprep.subr.mxu0 0.0
  %3502 = vmatpush1.msra.mxu0 0.0
  %3503 = vmatprep.subr.mxu0 0.0
  %3504 = vmatpush1.msra.mxu0 0.0
  %3505 = vmatprep.subr.mxu0 0.0
  %3506 = vmatpush1.msra.mxu0 0.0
  %3507 = vmatprep.subr.mxu0 0.0
  %3508 = vmatpush1.msra.mxu0 0.0
  %3509 = vmatprep.subr.mxu0 0.0
  %3510 = vmatpush1.msra.mxu0 0.0
  %3511 = vmatprep.subr.mxu0 0.0
  %3512 = vmatpush1.msra.mxu0 0.0
  %3513 = vmatprep.subr.mxu0 0.0
  %3514 = vmatpush1.msra.mxu0 0.0
  %3515 = vmatprep.subr.mxu0 0.0
  %3516 = vmatpush1.msra.mxu0 0.0
  %3517 = vmatprep.subr.mxu0 0.0
  %3518 = vmatpush1.msra.mxu0 0.0
  %3519 = vmatprep.subr.mxu0 0.0
  %3520 = vmatpush1.msra.mxu0 0.0
  %3521 = vmatprep.subr.mxu0 0.0
  %3522 = vmatpush1.msra.mxu0 0.0
  %3523 = vmatprep.subr.mxu0 0.0
  %3524 = vmatpush1.msra.mxu0 0.0
  %3525 = vmatprep.subr.mxu0 0.0
  %3526 = vmatpush1.msra.mxu0 0.0
  %3527 = vmatprep.subr.mxu0 0.0
  %3528 = vmatpush1.msra.mxu0 0.0
  %3529 = vmatprep.subr.mxu0 0.0
  %3530 = vmatpush1.msra.mxu0 0.0
  %3531 = vmatprep.mubr.f32.mxu0 0.0
  %3532 = vmatmul.mubr.f32.gmra.mrb[0].mxu0 %v3060
  %v3533 = vpop.f32.mrb[0].mxu0
  %v3534 = vadd.f32 0.0, %v3533
  %v3535 = vpop.f32.mrb[0].mxu0
  %3536 = vmatprep.mubr.f32.mxu0 0.0
  %3537 = vmatmul.mubr.f32.gmra.mrb[0].mxu0 %v3063
  %v3538 = vpop.f32.mrb[0].mxu0
  %v3539 = vadd.f32 0.0, %v3538
  %v3540 = vpop.f32.mrb[0].mxu0
  %3541 = vdwg.mxu0
  %3544 = vrot.lane.b32.xlu0 %v3534, 32
  %v3545 = vpop.permute.xlu0 %3544
  %3546 = vrot.lane.b32.xlu0 %v3539, 32
  %v3547 = vpop.permute.xlu0 %3546
  %v3550 = vsel %vm2449, %v3238, %v3545
  %v3551 = vsel %vm2449, %v3239, %v3547
  %v3553 = vlaneseq
  %v3554 = vshrl.u32 %v3553, 7
  %v3555 = vsub.s32 0, %v3554
  %v3556 = vrot.slane %v3254, %v3555
  %v3559 = vsel %vm2633, %v3550, 0
  %v3562 = vsel %vm2633, %v3551, 0
  %3564 = vmatprep.subr.mxu0 0.0
  %3565 = vmatpush1.msra.mxu0 %v3246
  %3566 = vmatprep.subr.mxu0 0.0
  %3567 = vmatpush1.msra.mxu0 %v3247
  %3568 = vmatprep.subr.mxu0 0.0
  %3569 = vmatpush1.msra.mxu0 %v3248
  %3570 = vmatprep.subr.mxu0 0.0
  %3571 = vmatpush1.msra.mxu0 %v3249
  %3572 = vmatprep.subr.mxu0 0.0
  %3573 = vmatpush1.msra.mxu0 %v3250
  %3574 = vmatprep.subr.mxu0 0.0
  %3575 = vmatpush1.msra.mxu0 %v3251
  %3576 = vmatprep.subr.mxu0 0.0
  %3577 = vmatpush1.msra.mxu0 %v3252
  %3578 = vmatprep.subr.mxu0 0.0
  %3579 = vmatpush1.msra.mxu0 %v3253
  %3580 = vmatprep.subr.mxu0 0.0
  %3581 = vmatpush1.msra.mxu0 0.0
  %3582 = vmatprep.subr.mxu0 0.0
  %3583 = vmatpush1.msra.mxu0 0.0
  %3584 = vmatprep.subr.mxu0 0.0
  %3585 = vmatpush1.msra.mxu0 0.0
  %3586 = vmatprep.subr.mxu0 0.0
  %3587 = vmatpush1.msra.mxu0 0.0
  %3588 = vmatprep.subr.mxu0 0.0
  %3589 = vmatpush1.msra.mxu0 0.0
  %3590 = vmatprep.subr.mxu0 0.0
  %3591 = vmatpush1.msra.mxu0 0.0
  %3592 = vmatprep.subr.mxu0 0.0
  %3593 = vmatpush1.msra.mxu0 0.0
  %3594 = vmatprep.subr.mxu0 0.0
  %3595 = vmatpush1.msra.mxu0 0.0
  %3596 = vmatprep.subr.mxu0 0.0
  %3597 = vmatpush1.msra.mxu0 0.0
  %3598 = vmatprep.subr.mxu0 0.0
  %3599 = vmatpush1.msra.mxu0 0.0
  %3600 = vmatprep.subr.mxu0 0.0
  %3601 = vmatpush1.msra.mxu0 0.0
  %3602 = vmatprep.subr.mxu0 0.0
  %3603 = vmatpush1.msra.mxu0 0.0
  %3604 = vmatprep.subr.mxu0 0.0
  %3605 = vmatpush1.msra.mxu0 0.0
  %3606 = vmatprep.subr.mxu0 0.0
  %3607 = vmatpush1.msra.mxu0 0.0
  %3608 = vmatprep.subr.mxu0 0.0
  %3609 = vmatpush1.msra.mxu0 0.0
  %3610 = vmatprep.subr.mxu0 0.0
  %3611 = vmatpush1.msra.mxu0 0.0
  %3612 = vmatprep.subr.mxu0 0.0
  %3613 = vmatpush1.msra.mxu0 0.0
  %3614 = vmatprep.subr.mxu0 0.0
  %3615 = vmatpush1.msra.mxu0 0.0
  %3616 = vmatprep.subr.mxu0 0.0
  %3617 = vmatpush1.msra.mxu0 0.0
  %3618 = vmatprep.subr.mxu0 0.0
  %3619 = vmatpush1.msra.mxu0 0.0
  %3620 = vmatprep.subr.mxu0 0.0
  %3621 = vmatpush1.msra.mxu0 0.0
  %3622 = vmatprep.subr.mxu0 0.0
  %3623 = vmatpush1.msra.mxu0 0.0
  %3624 = vmatprep.subr.mxu0 0.0
  %3625 = vmatpush1.msra.mxu0 0.0
  %3626 = vmatprep.subr.mxu0 0.0
  %3627 = vmatpush1.msra.mxu0 0.0
  %3628 = vmatprep.mubr.f32.mxu0 0.0
  %3629 = vmatmul.mubr.f32.gmra.mrb[0].mxu0 %v3559
  %v3630 = vpop.f32.mrb[0].mxu0
  %v3631 = vadd.f32 %v3556, %v3630
  %v3632 = vpop.f32.mrb[0].mxu0
  %3633 = vmatprep.mubr.f32.mxu0 0.0
  %3634 = vmatmul.mubr.f32.gmra.mrb[0].mxu0 %v3562
  %v3635 = vpop.f32.mrb[0].mxu0
  %v3636 = vadd.f32 %v3556, %v3635
  %v3637 = vpop.f32.mrb[0].mxu0
  %3638 = vdwg.mxu0
  %v3639 = vmax.f32 %v3631, 0.0
  %v3640 = vmax.f32 %v3636, 0.0
  %v3641 = vld [vmem:[%s73] sm:$0xff]
  %v3642 = vld [vmem:[%s73 + $0x8] sm:$0xff]
  %v3643 = vld [vmem:[%s73 + $0x10] sm:$0xff]
  %v3644 = vld [vmem:[%s73 + $0x18] sm:$0xff]
  %v3645 = vld [vmem:[%s75] sm:$0x1]
  %v3647 = vlaneseq
  %v3648 = vshrl.u32 %v3647, 7
  %v3649 = vsub.s32 0, %v3648
  %v3650 = vrot.slane %v3645, %v3649
  %v3653 = vsel %vm2449, %v3639, 0
  %v3656 = vsel %vm2449, %v3640, 0
  %3658 = vmatprep.subr.mxu0 0.0
  %3659 = vmatpush1.msra.mxu0 %v3641
  %3660 = vmatprep.subr.mxu0 0.0
  %3661 = vmatpush1.msra.mxu0 %v3642
  %3662 = vmatprep.subr.mxu0 0.0
  %3663 = vmatpush1.msra.mxu0 %v3643
  %3664 = vmatprep.subr.mxu0 0.0
  %3665 = vmatpush1.msra.mxu0 %v3644
  %3666 = vmatprep.subr.mxu0 0.0
  %3667 = vmatpush1.msra.mxu0 0.0
  %3668 = vmatprep.subr.mxu0 0.0
  %3669 = vmatpush1.msra.mxu0 0.0
  %3670 = vmatprep.subr.mxu0 0.0
  %3671 = vmatpush1.msra.mxu0 0.0
  %3672 = vmatprep.subr.mxu0 0.0
  %3673 = vmatpush1.msra.mxu0 0.0
  %3674 = vmatprep.subr.mxu0 0.0
  %3675 = vmatpush1.msra.mxu0 0.0
  %3676 = vmatprep.subr.mxu0 0.0
  %3677 = vmatpush1.msra.mxu0 0.0
  %3678 = vmatprep.subr.mxu0 0.0
  %3679 = vmatpush1.msra.mxu0 0.0
  %3680 = vmatprep.subr.mxu0 0.0
  %3681 = vmatpush1.msra.mxu0 0.0
  %3682 = vmatprep.subr.mxu0 0.0
  %3683 = vmatpush1.msra.mxu0 0.0
  %3684 = vmatprep.subr.mxu0 0.0
  %3685 = vmatpush1.msra.mxu0 0.0
  %3686 = vmatprep.subr.mxu0 0.0
  %3687 = vmatpush1.msra.mxu0 0.0
  %3688 = vmatprep.subr.mxu0 0.0
  %3689 = vmatpush1.msra.mxu0 0.0
  %3690 = vmatprep.subr.mxu0 0.0
  %3691 = vmatpush1.msra.mxu0 0.0
  %3692 = vmatprep.subr.mxu0 0.0
  %3693 = vmatpush1.msra.mxu0 0.0
  %3694 = vmatprep.subr.mxu0 0.0
  %3695 = vmatpush1.msra.mxu0 0.0
  %3696 = vmatprep.subr.mxu0 0.0
  %3697 = vmatpush1.msra.mxu0 0.0
  %3698 = vmatprep.subr.mxu0 0.0
  %3699 = vmatpush1.msra.mxu0 0.0
  %3700 = vmatprep.subr.mxu0 0.0
  %3701 = vmatpush1.msra.mxu0 0.0
  %3702 = vmatprep.subr.mxu0 0.0
  %3703 = vmatpush1.msra.mxu0 0.0
  %3704 = vmatprep.subr.mxu0 0.0
  %3705 = vmatpush1.msra.mxu0 0.0
  %3706 = vmatprep.subr.mxu0 0.0
  %3707 = vmatpush1.msra.mxu0 0.0
  %3708 = vmatprep.subr.mxu0 0.0
  %3709 = vmatpush1.msra.mxu0 0.0
  %3710 = vmatprep.subr.mxu0 0.0
  %3711 = vmatpush1.msra.mxu0 0.0
  %3712 = vmatprep.subr.mxu0 0.0
  %3713 = vmatpush1.msra.mxu0 0.0
  %3714 = vmatprep.subr.mxu0 0.0
  %3715 = vmatpush1.msra.mxu0 0.0
  %3716 = vmatprep.subr.mxu0 0.0
  %3717 = vmatpush1.msra.mxu0 0.0
  %3718 = vmatprep.subr.mxu0 0.0
  %3719 = vmatpush1.msra.mxu0 0.0
  %3720 = vmatprep.subr.mxu0 0.0
  %3721 = vmatpush1.msra.mxu0 0.0
  %3722 = vmatprep.mubr.f32.mxu0 0.0
  %3723 = vmatmul.mubr.f32.gmra.mrb[0].mxu0 %v3653
  %v3724 = vpop.f32.mrb[0].mxu0
  %v3725 = vadd.f32 %v3650, %v3724
  %v3726 = vpop.f32.mrb[0].mxu0
  %3727 = vmatprep.mubr.f32.mxu0 0.0
  %3728 = vmatmul.mubr.f32.gmra.mrb[0].mxu0 %v3656
  %v3729 = vpop.f32.mrb[0].mxu0
  %v3730 = vadd.f32 %v3650, %v3729
  %v3731 = vpop.f32.mrb[0].mxu0
  %3732 = vdwg.mxu0
  %v3733 = vld [vmem:[%s11] sm:$0xff]
  %v3735 = vsel %vm458, %v3733, 0
  %3737 = vmatprep.subr.mxu0 0.0
  %3738 = vmatpush1.msra.mxu0 %v3725
  %3739 = vmatprep.subr.mxu0 0.0
  %3740 = vmatpush1.msra.mxu0 %v3730
  %3741 = vmatprep.subr.mxu0 0.0
  %3742 = vmatpush1.msra.mxu0 0.0
  %3743 = vmatprep.subr.mxu0 0.0
  %3744 = vmatpush1.msra.mxu0 0.0
  %3745 = vmatprep.subr.mxu0 0.0
  %3746 = vmatpush1.msra.mxu0 0.0
  %3747 = vmatprep.subr.mxu0 0.0
  %3748 = vmatpush1.msra.mxu0 0.0
  %3749 = vmatprep.subr.mxu0 0.0
  %3750 = vmatpush1.msra.mxu0 0.0
  %3751 = vmatprep.subr.mxu0 0.0
  %3752 = vmatpush1.msra.mxu0 0.0
  %3753 = vmatprep.subr.mxu0 0.0
  %3754 = vmatpush1.msra.mxu0 0.0
  %3755 = vmatprep.subr.mxu0 0.0
  %3756 = vmatpush1.msra.mxu0 0.0
  %3757 = vmatprep.subr.mxu0 0.0
  %3758 = vmatpush1.msra.mxu0 0.0
  %3759 = vmatprep.subr.mxu0 0.0
  %3760 = vmatpush1.msra.mxu0 0.0
  %3761 = vmatprep.subr.mxu0 0.0
  %3762 = vmatpush1.msra.mxu0 0.0
  %3763 = vmatprep.subr.mxu0 0.0
  %3764 = vmatpush1.msra.mxu0 0.0
  %3765 = vmatprep.subr.mxu0 0.0
  %3766 = vmatpush1.msra.mxu0 0.0
  %3767 = vmatprep.subr.mxu0 0.0
  %3768 = vmatpush1.msra.mxu0 0.0
  %3769 = vmatprep.subr.mxu0 0.0
  %3770 = vmatpush1.msra.mxu0 0.0
  %3771 = vmatprep.subr.mxu0 0.0
  %3772 = vmatpush1.msra.mxu0 0.0
  %3773 = vmatprep.subr.mxu0 0.0
  %3774 = vmatpush1.msra.mxu0 0.0
  %3775 = vmatprep.subr.mxu0 0.0
  %3776 = vmatpush1.msra.mxu0 0.0
  %3777 = vmatprep.subr.mxu0 0.0
  %3778 = vmatpush1.msra.mxu0 0.0
  %3779 = vmatprep.subr.mxu0 0.0
  %3780 = vmatpush1.msra.mxu0 0.0
  %3781 = vmatprep.subr.mxu0 0.0
  %3782 = vmatpush1.msra.mxu0 0.0
  %3783 = vmatprep.subr.mxu0 0.0
  %3784 = vmatpush1.msra.mxu0 0.0
  %3785 = vmatprep.subr.mxu0 0.0
  %3786 = vmatpush1.msra.mxu0 0.0
  %3787 = vmatprep.subr.mxu0 0.0
  %3788 = vmatpush1.msra.mxu0 0.0
  %3789 = vmatprep.subr.mxu0 0.0
  %3790 = vmatpush1.msra.mxu0 0.0
  %3791 = vmatprep.subr.mxu0 0.0
  %3792 = vmatpush1.msra.mxu0 0.0
  %3793 = vmatprep.subr.mxu0 0.0
  %3794 = vmatpush1.msra.mxu0 0.0
  %3795 = vmatprep.subr.mxu0 0.0
  %3796 = vmatpush1.msra.mxu0 0.0
  %3797 = vmatprep.subr.mxu0 0.0
  %3798 = vmatpush1.msra.mxu0 0.0
  %3799 = vmatprep.subr.mxu0 0.0
  %3800 = vmatpush1.msra.mxu0 0.0
  %3801 = vmatprep.mubr.f32.mxu0 0.0
  %3802 = vmatmul.mubr.f32.gmra.mrb[0].mxu0 %v3735
  %v3803 = vpop.f32.mrb[0].mxu0
  %v3804 = vadd.f32 0.0, %v3803
  %v3805 = vpop.f32.mrb[0].mxu0
  %3806 = vdwg.mxu0
  %v3807 = vld [vmem:[%s77] sm:$0xff]
  %v3808 = vld [vmem:[%s77 + $0x8] sm:$0xff]
  %v3809 = vld [vmem:[%s77 + $0x10] sm:$0xff]
  %v3810 = vld [vmem:[%s77 + $0x18] sm:$0xff]
  %v3811 = vld [vmem:[%s79] sm:$0x1]
  %v3812 = vld [vmem:[%s81] sm:$0xff]
  %v3813 = vld [vmem:[%s81 + $0x8] sm:$0xff]
  %v3814 = vld [vmem:[%s81 + $0x10] sm:$0xff]
  %v3815 = vld [vmem:[%s81 + $0x18] sm:$0xff]
  %v3816 = vld [vmem:[%s81 + $0x20] sm:$0xff]
  %v3817 = vld [vmem:[%s81 + $0x28] sm:$0xff]
  %v3818 = vld [vmem:[%s83] sm:$0x1]
  %3819 = vmatprep.subr.mxu0 0.0
  %3820 = vmatpush1.msra.mxu0 %v3804
  %3821 = vmatprep.subr.mxu0 0.0
  %3822 = vmatpush1.msra.mxu0 0.0
  %3823 = vmatprep.subr.mxu0 0.0
  %3824 = vmatpush1.msra.mxu0 0.0
  %3825 = vmatprep.subr.mxu0 0.0
  %3826 = vmatpush1.msra.mxu0 0.0
  %3827 = vmatprep.subr.mxu0 0.0
  %3828 = vmatpush1.msra.mxu0 0.0
  %3829 = vmatprep.subr.mxu0 0.0
  %3830 = vmatpush1.msra.mxu0 0.0
  %3831 = vmatprep.subr.mxu0 0.0
  %3832 = vmatpush1.msra.mxu0 0.0
  %3833 = vmatprep.subr.mxu0 0.0
  %3834 = vmatpush1.msra.mxu0 0.0
  %3835 = vmatprep.subr.mxu0 0.0
  %3836 = vmatpush1.msra.mxu0 0.0
  %3837 = vmatprep.subr.mxu0 0.0
  %3838 = vmatpush1.msra.mxu0 0.0
  %3839 = vmatprep.subr.mxu0 0.0
  %3840 = vmatpush1.msra.mxu0 0.0
  %3841 = vmatprep.subr.mxu0 0.0
  %3842 = vmatpush1.msra.mxu0 0.0
  %3843 = vmatprep.subr.mxu0 0.0
  %3844 = vmatpush1.msra.mxu0 0.0
  %3845 = vmatprep.subr.mxu0 0.0
  %3846 = vmatpush1.msra.mxu0 0.0
  %3847 = vmatprep.subr.mxu0 0.0
  %3848 = vmatpush1.msra.mxu0 0.0
  %3849 = vmatprep.subr.mxu0 0.0
  %3850 = vmatpush1.msra.mxu0 0.0
  %3851 = vmatprep.subr.mxu0 0.0
  %3852 = vmatpush1.msra.mxu0 0.0
  %3853 = vmatprep.subr.mxu0 0.0
  %3854 = vmatpush1.msra.mxu0 0.0
  %3855 = vmatprep.subr.mxu0 0.0
  %3856 = vmatpush1.msra.mxu0 0.0
  %3857 = vmatprep.subr.mxu0 0.0
  %3858 = vmatpush1.msra.mxu0 0.0
  %3859 = vmatprep.subr.mxu0 0.0
  %3860 = vmatpush1.msra.mxu0 0.0
  %3861 = vmatprep.subr.mxu0 0.0
  %3862 = vmatpush1.msra.mxu0 0.0
  %3863 = vmatprep.subr.mxu0 0.0
  %3864 = vmatpush1.msra.mxu0 0.0
  %3865 = vmatprep.subr.mxu0 0.0
  %3866 = vmatpush1.msra.mxu0 0.0
  %3867 = vmatprep.subr.mxu0 0.0
  %3868 = vmatpush1.msra.mxu0 0.0
  %3869 = vmatprep.subr.mxu0 0.0
  %3870 = vmatpush1.msra.mxu0 0.0
  %3871 = vmatprep.subr.mxu0 0.0
  %3872 = vmatpush1.msra.mxu0 0.0
  %3873 = vmatprep.subr.mxu0 0.0
  %3874 = vmatpush1.msra.mxu0 0.0
  %3875 = vmatprep.subr.mxu0 0.0
  %3876 = vmatpush1.msra.mxu0 0.0
  %3877 = vmatprep.subr.mxu0 0.0
  %3878 = vmatpush1.msra.mxu0 0.0
  %3879 = vmatprep.subr.mxu0 0.0
  %3880 = vmatpush1.msra.mxu0 0.0
  %3881 = vmatprep.subr.mxu0 0.0
  %3882 = vmatpush1.msra.mxu0 0.0
  %3883 = vmatprep.mubr.f32.mxu0 0.0
  %3884 = vmatmul.mubr.f32.gmra.mrb[0].mxu0 %v1725
  %v3885 = vpop.f32.mrb[0].mxu0
  %v3886 = vadd.f32 0.0, %v3885
  %v3887 = vpop.f32.mrb[0].mxu0
  %3888 = vmatprep.mubr.f32.mxu0 0.0
  %3889 = vmatmul.mubr.f32.gmra.mrb[0].mxu0 %v1728
  %v3890 = vpop.f32.mrb[0].mxu0
  %v3891 = vadd.f32 0.0, %v3890
  %v3892 = vpop.f32.mrb[0].mxu0
  %3893 = vmatprep.mubr.f32.mxu0 0.0
  %3894 = vmatmul.mubr.f32.gmra.mrb[0].mxu0 %v1731
  %v3895 = vpop.f32.mrb[0].mxu0
  %v3896 = vadd.f32 0.0, %v3895
  %v3897 = vpop.f32.mrb[0].mxu0
  %3898 = vdwg.mxu0
  %3899 = vrot.lane.b32.xlu0 %v2048, 16
  %v3900 = vpop.permute.xlu0 %3899
  %3901 = vrot.lane.b32.xlu0 %v2049, 16
  %v3902 = vpop.permute.xlu0 %3901
  %3903 = vrot.lane.b32.xlu0 %v2050, 16
  %v3904 = vpop.permute.xlu0 %3903
  %v3908 = vsel %vm458, %v3886, %v3900
  %v3909 = vsel %vm458, %v3891, %v3902
  %v3910 = vsel %vm458, %v3896, %v3904
  %v3912 = vlaneseq
  %v3913 = vshrl.u32 %v3912, 7
  %v3914 = vsub.s32 0, %v3913
  %v3915 = vrot.slane %v3811, %v3914
  %v3918 = vsel %vm2449, %v3908, 0
  %v3921 = vsel %vm2449, %v3909, 0
  %v3924 = vsel %vm2449, %v3910, 0
  %3926 = vmatprep.subr.mxu0 0.0
  %3927 = vmatpush1.msra.mxu0 %v3807
  %3928 = vmatprep.subr.mxu0 0.0
  %3929 = vmatpush1.msra.mxu0 %v3808
  %3930 = vmatprep.subr.mxu0 0.0
  %3931 = vmatpush1.msra.mxu0 %v3809
  %3932 = vmatprep.subr.mxu0 0.0
  %3933 = vmatpush1.msra.mxu0 %v3810
  %3934 = vmatprep.subr.mxu0 0.0
  %3935 = vmatpush1.msra.mxu0 0.0
  %3936 = vmatprep.subr.mxu0 0.0
  %3937 = vmatpush1.msra.mxu0 0.0
  %3938 = vmatprep.subr.mxu0 0.0
  %3939 = vmatpush1.msra.mxu0 0.0
  %3940 = vmatprep.subr.mxu0 0.0
  %3941 = vmatpush1.msra.mxu0 0.0
  %3942 = vmatprep.subr.mxu0 0.0
  %3943 = vmatpush1.msra.mxu0 0.0
  %3944 = vmatprep.subr.mxu0 0.0
  %3945 = vmatpush1.msra.mxu0 0.0
  %3946 = vmatprep.subr.mxu0 0.0
  %3947 = vmatpush1.msra.mxu0 0.0
  %3948 = vmatprep.subr.mxu0 0.0
  %3949 = vmatpush1.msra.mxu0 0.0
  %3950 = vmatprep.subr.mxu0 0.0
  %3951 = vmatpush1.msra.mxu0 0.0
  %3952 = vmatprep.subr.mxu0 0.0
  %3953 = vmatpush1.msra.mxu0 0.0
  %3954 = vmatprep.subr.mxu0 0.0
  %3955 = vmatpush1.msra.mxu0 0.0
  %3956 = vmatprep.subr.mxu0 0.0
  %3957 = vmatpush1.msra.mxu0 0.0
  %3958 = vmatprep.subr.mxu0 0.0
  %3959 = vmatpush1.msra.mxu0 0.0
  %3960 = vmatprep.subr.mxu0 0.0
  %3961 = vmatpush1.msra.mxu0 0.0
  %3962 = vmatprep.subr.mxu0 0.0
  %3963 = vmatpush1.msra.mxu0 0.0
  %3964 = vmatprep.subr.mxu0 0.0
  %3965 = vmatpush1.msra.mxu0 0.0
  %3966 = vmatprep.subr.mxu0 0.0
  %3967 = vmatpush1.msra.mxu0 0.0
  %3968 = vmatprep.subr.mxu0 0.0
  %3969 = vmatpush1.msra.mxu0 0.0
  %3970 = vmatprep.subr.mxu0 0.0
  %3971 = vmatpush1.msra.mxu0 0.0
  %3972 = vmatprep.subr.mxu0 0.0
  %3973 = vmatpush1.msra.mxu0 0.0
  %3974 = vmatprep.subr.mxu0 0.0
  %3975 = vmatpush1.msra.mxu0 0.0
  %3976 = vmatprep.subr.mxu0 0.0
  %3977 = vmatpush1.msra.mxu0 0.0
  %3978 = vmatprep.subr.mxu0 0.0
  %3979 = vmatpush1.msra.mxu0 0.0
  %3980 = vmatprep.subr.mxu0 0.0
  %3981 = vmatpush1.msra.mxu0 0.0
  %3982 = vmatprep.subr.mxu0 0.0
  %3983 = vmatpush1.msra.mxu0 0.0
  %3984 = vmatprep.subr.mxu0 0.0
  %3985 = vmatpush1.msra.mxu0 0.0
  %3986 = vmatprep.subr.mxu0 0.0
  %3987 = vmatpush1.msra.mxu0 0.0
  %3988 = vmatprep.subr.mxu0 0.0
  %3989 = vmatpush1.msra.mxu0 0.0
  %3990 = vmatprep.mubr.f32.mxu0 0.0
  %3991 = vmatmul.mubr.f32.gmra.mrb[0].mxu0 %v3918
  %v3992 = vpop.f32.mrb[0].mxu0
  %v3993 = vadd.f32 %v3915, %v3992
  %v3994 = vpop.f32.mrb[0].mxu0
  %3995 = vmatprep.mubr.f32.mxu0 0.0
  %3996 = vmatmul.mubr.f32.gmra.mrb[0].mxu0 %v3921
  %v3997 = vpop.f32.mrb[0].mxu0
  %v3998 = vadd.f32 %v3915, %v3997
  %v3999 = vpop.f32.mrb[0].mxu0
  %4000 = vmatprep.mubr.f32.mxu0 0.0
  %4001 = vmatmul.mubr.f32.gmra.mrb[0].mxu0 %v3924
  %v4002 = vpop.f32.mrb[0].mxu0
  %v4003 = vadd.f32 %v3915, %v4002
  %v4004 = vpop.f32.mrb[0].mxu0
  %4005 = vdwg.mxu0
  %v4006 = vmax.f32 %v3993, 0.0
  %v4007 = vmax.f32 %v3998, 0.0
  %v4008 = vmax.f32 %v4003, 0.0
  %4009 = vmatprep.subr.mxu0 0.0
  %4010 = vmatpush1.msra.mxu0 %v4006
  %4011 = vmatprep.subr.mxu0 0.0
  %4012 = vmatpush1.msra.mxu0 %v4007
  %4013 = vmatprep.subr.mxu0 0.0
  %4014 = vmatpush1.msra.mxu0 %v4008
  %4015 = vmatprep.subr.mxu0 0.0
  %4016 = vmatpush1.msra.mxu0 0.0
  %4017 = vmatprep.subr.mxu0 0.0
  %4018 = vmatpush1.msra.mxu0 0.0
  %4019 = vmatprep.subr.mxu0 0.0
  %4020 = vmatpush1.msra.mxu0 0.0
  %4021 = vmatprep.subr.mxu0 0.0
  %4022 = vmatpush1.msra.mxu0 0.0
  %4023 = vmatprep.subr.mxu0 0.0
  %4024 = vmatpush1.msra.mxu0 0.0
  %4025 = vmatprep.subr.mxu0 0.0
  %4026 = vmatpush1.msra.mxu0 0.0
  %4027 = vmatprep.subr.mxu0 0.0
  %4028 = vmatpush1.msra.mxu0 0.0
  %4029 = vmatprep.subr.mxu0 0.0
  %4030 = vmatpush1.msra.mxu0 0.0
  %4031 = vmatprep.subr.mxu0 0.0
  %4032 = vmatpush1.msra.mxu0 0.0
  %4033 = vmatprep.subr.mxu0 0.0
  %4034 = vmatpush1.msra.mxu0 0.0
  %4035 = vmatprep.subr.mxu0 0.0
  %4036 = vmatpush1.msra.mxu0 0.0
  %4037 = vmatprep.subr.mxu0 0.0
  %4038 = vmatpush1.msra.mxu0 0.0
  %4039 = vmatprep.subr.mxu0 0.0
  %4040 = vmatpush1.msra.mxu0 0.0
  %4041 = vmatprep.subr.mxu0 0.0
  %4042 = vmatpush1.msra.mxu0 0.0
  %4043 = vmatprep.subr.mxu0 0.0
  %4044 = vmatpush1.msra.mxu0 0.0
  %4045 = vmatprep.subr.mxu0 0.0
  %4046 = vmatpush1.msra.mxu0 0.0
  %4047 = vmatprep.subr.mxu0 0.0
  %4048 = vmatpush1.msra.mxu0 0.0
  %4049 = vmatprep.subr.mxu0 0.0
  %4050 = vmatpush1.msra.mxu0 0.0
  %4051 = vmatprep.subr.mxu0 0.0
  %4052 = vmatpush1.msra.mxu0 0.0
  %4053 = vmatprep.subr.mxu0 0.0
  %4054 = vmatpush1.msra.mxu0 0.0
  %4055 = vmatprep.subr.mxu0 0.0
  %4056 = vmatpush1.msra.mxu0 0.0
  %4057 = vmatprep.subr.mxu0 0.0
  %4058 = vmatpush1.msra.mxu0 0.0
  %4059 = vmatprep.subr.mxu0 0.0
  %4060 = vmatpush1.msra.mxu0 0.0
  %4061 = vmatprep.subr.mxu0 0.0
  %4062 = vmatpush1.msra.mxu0 0.0
  %4063 = vmatprep.subr.mxu0 0.0
  %4064 = vmatpush1.msra.mxu0 0.0
  %4065 = vmatprep.subr.mxu0 0.0
  %4066 = vmatpush1.msra.mxu0 0.0
  %4067 = vmatprep.subr.mxu0 0.0
  %4068 = vmatpush1.msra.mxu0 0.0
  %4069 = vmatprep.subr.mxu0 0.0
  %4070 = vmatpush1.msra.mxu0 0.0
  %4071 = vmatprep.subr.mxu0 0.0
  %4072 = vmatpush1.msra.mxu0 0.0
  %4073 = vmatprep.mubr.f32.mxu0 0.0
  %4074 = vmatmul.mubr.f32.gmra.mrb[0].mxu0 %v2184
  %v4075 = vpop.f32.mrb[0].mxu0
  %v4076 = vadd.f32 0.0, %v4075
  %v4077 = vpop.f32.mrb[0].mxu0
  %4078 = vdwg.mxu0
  %4080 = vrot.lane.b32.xlu0 %v4076, 16
  %v4081 = vpop.permute.xlu0 %4080
  %v4083 = vsel %vm458, %v3804, %v4081
  %v4085 = vlaneseq
  %v4086 = vshrl.u32 %v4085, 7
  %v4087 = vsub.s32 0, %v4086
  %v4088 = vrot.slane %v3818, %v4087
  %v4091 = vsel %vm2459, %v4083, 0
  %4093 = vmatprep.subr.mxu0 0.0
  %4094 = vmatpush1.msra.mxu0 %v3812
  %4095 = vmatprep.subr.mxu0 0.0
  %4096 = vmatpush1.msra.mxu0 %v3813
  %4097 = vmatprep.subr.mxu0 0.0
  %4098 = vmatpush1.msra.mxu0 %v3814
  %4099 = vmatprep.subr.mxu0 0.0
  %4100 = vmatpush1.msra.mxu0 %v3815
  %4101 = vmatprep.subr.mxu0 0.0
  %4102 = vmatpush1.msra.mxu0 %v3816
  %4103 = vmatprep.subr.mxu0 0.0
  %4104 = vmatpush1.msra.mxu0 %v3817
  %4105 = vmatprep.subr.mxu0 0.0
  %4106 = vmatpush1.msra.mxu0 0.0
  %4107 = vmatprep.subr.mxu0 0.0
  %4108 = vmatpush1.msra.mxu0 0.0
  %4109 = vmatprep.subr.mxu0 0.0
  %4110 = vmatpush1.msra.mxu0 0.0
  %4111 = vmatprep.subr.mxu0 0.0
  %4112 = vmatpush1.msra.mxu0 0.0
  %4113 = vmatprep.subr.mxu0 0.0
  %4114 = vmatpush1.msra.mxu0 0.0
  %4115 = vmatprep.subr.mxu0 0.0
  %4116 = vmatpush1.msra.mxu0 0.0
  %4117 = vmatprep.subr.mxu0 0.0
  %4118 = vmatpush1.msra.mxu0 0.0
  %4119 = vmatprep.subr.mxu0 0.0
  %4120 = vmatpush1.msra.mxu0 0.0
  %4121 = vmatprep.subr.mxu0 0.0
  %4122 = vmatpush1.msra.mxu0 0.0
  %4123 = vmatprep.subr.mxu0 0.0
  %4124 = vmatpush1.msra.mxu0 0.0
  %4125 = vmatprep.subr.mxu0 0.0
  %4126 = vmatpush1.msra.mxu0 0.0
  %4127 = vmatprep.subr.mxu0 0.0
  %4128 = vmatpush1.msra.mxu0 0.0
  %4129 = vmatprep.subr.mxu0 0.0
  %4130 = vmatpush1.msra.mxu0 0.0
  %4131 = vmatprep.subr.mxu0 0.0
  %4132 = vmatpush1.msra.mxu0 0.0
  %4133 = vmatprep.subr.mxu0 0.0
  %4134 = vmatpush1.msra.mxu0 0.0
  %4135 = vmatprep.subr.mxu0 0.0
  %4136 = vmatpush1.msra.mxu0 0.0
  %4137 = vmatprep.subr.mxu0 0.0
  %4138 = vmatpush1.msra.mxu0 0.0
  %4139 = vmatprep.subr.mxu0 0.0
  %4140 = vmatpush1.msra.mxu0 0.0
  %4141 = vmatprep.subr.mxu0 0.0
  %4142 = vmatpush1.msra.mxu0 0.0
  %4143 = vmatprep.subr.mxu0 0.0
  %4144 = vmatpush1.msra.mxu0 0.0
  %4145 = vmatprep.subr.mxu0 0.0
  %4146 = vmatpush1.msra.mxu0 0.0
  %4147 = vmatprep.subr.mxu0 0.0
  %4148 = vmatpush1.msra.mxu0 0.0
  %4149 = vmatprep.subr.mxu0 0.0
  %4150 = vmatpush1.msra.mxu0 0.0
  %4151 = vmatprep.subr.mxu0 0.0
  %4152 = vmatpush1.msra.mxu0 0.0
  %4153 = vmatprep.subr.mxu0 0.0
  %4154 = vmatpush1.msra.mxu0 0.0
  %4155 = vmatprep.subr.mxu0 0.0
  %4156 = vmatpush1.msra.mxu0 0.0
  %4157 = vmatprep.mubr.f32.mxu0 0.0
  %4158 = vmatmul.mubr.f32.gmra.mrb[0].mxu0 %v4091
  %v4159 = vpop.f32.mrb[0].mxu0
  %v4160 = vadd.f32 %v4088, %v4159
  %v4161 = vpop.f32.mrb[0].mxu0
  %4162 = vdwg.mxu0
  %v4163 = vmax.f32 %v4160, 0.0
  %v4164 = vld [vmem:[%s85] sm:$0xff]
  %v4165 = vld [vmem:[%s85 + $0x8] sm:$0xff]
  %v4166 = vld [vmem:[%s85 + $0x10] sm:$0xff]
  %v4167 = vld [vmem:[%s85 + $0x18] sm:$0xff]
  %v4168 = vld [vmem:[%s85 + $0x20] sm:$0xff]
  %v4169 = vld [vmem:[%s85 + $0x28] sm:$0xff]
  %v4170 = vld [vmem:[%s87] sm:$0x1]
  %v4171 = vld [vmem:[%s89] sm:$0xff]
  %v4172 = vld [vmem:[%s89 + $0x8] sm:$0xff]
  %v4173 = vld [vmem:[%s89 + $0x10] sm:$0xff]
  %v4174 = vld [vmem:[%s89 + $0x18] sm:$0xff]
  %v4175 = vld [vmem:[%s89 + $0x20] sm:$0xff]
  %v4176 = vld [vmem:[%s89 + $0x28] sm:$0xff]
  %v4177 = vld [vmem:[%s89 + $0x30] sm:$0xff]
  %v4178 = vld [vmem:[%s89 + $0x38] sm:$0xff]
  %v4179 = vld [vmem:[%s91] sm:$0x1]
  %4180 = vmatprep.subr.mxu0 0.0
  %4181 = vmatpush1.msra.mxu0 %v4163
  %4182 = vmatprep.subr.mxu0 0.0
  %4183 = vmatpush1.msra.mxu0 0.0
  %4184 = vmatprep.subr.mxu0 0.0
  %4185 = vmatpush1.msra.mxu0 0.0
  %4186 = vmatprep.subr.mxu0 0.0
  %4187 = vmatpush1.msra.mxu0 0.0
  %4188 = vmatprep.subr.mxu0 0.0
  %4189 = vmatpush1.msra.mxu0 0.0
  %4190 = vmatprep.subr.mxu0 0.0
  %4191 = vmatpush1.msra.mxu0 0.0
  %4192 = vmatprep.subr.mxu0 0.0
  %4193 = vmatpush1.msra.mxu0 0.0
  %4194 = vmatprep.subr.mxu0 0.0
  %4195 = vmatpush1.msra.mxu0 0.0
  %4196 = vmatprep.subr.mxu0 0.0
  %4197 = vmatpush1.msra.mxu0 0.0
  %4198 = vmatprep.subr.mxu0 0.0
  %4199 = vmatpush1.msra.mxu0 0.0
  %4200 = vmatprep.subr.mxu0 0.0
  %4201 = vmatpush1.msra.mxu0 0.0
  %4202 = vmatprep.subr.mxu0 0.0
  %4203 = vmatpush1.msra.mxu0 0.0
  %4204 = vmatprep.subr.mxu0 0.0
  %4205 = vmatpush1.msra.mxu0 0.0
  %4206 = vmatprep.subr.mxu0 0.0
  %4207 = vmatpush1.msra.mxu0 0.0
  %4208 = vmatprep.subr.mxu0 0.0
  %4209 = vmatpush1.msra.mxu0 0.0
  %4210 = vmatprep.subr.mxu0 0.0
  %4211 = vmatpush1.msra.mxu0 0.0
  %4212 = vmatprep.subr.mxu0 0.0
  %4213 = vmatpush1.msra.mxu0 0.0
  %4214 = vmatprep.subr.mxu0 0.0
  %4215 = vmatpush1.msra.mxu0 0.0
  %4216 = vmatprep.subr.mxu0 0.0
  %4217 = vmatpush1.msra.mxu0 0.0
  %4218 = vmatprep.subr.mxu0 0.0
  %4219 = vmatpush1.msra.mxu0 0.0
  %4220 = vmatprep.subr.mxu0 0.0
  %4221 = vmatpush1.msra.mxu0 0.0
  %4222 = vmatprep.subr.mxu0 0.0
  %4223 = vmatpush1.msra.mxu0 0.0
  %4224 = vmatprep.subr.mxu0 0.0
  %4225 = vmatpush1.msra.mxu0 0.0
  %4226 = vmatprep.subr.mxu0 0.0
  %4227 = vmatpush1.msra.mxu0 0.0
  %4228 = vmatprep.subr.mxu0 0.0
  %4229 = vmatpush1.msra.mxu0 0.0
  %4230 = vmatprep.subr.mxu0 0.0
  %4231 = vmatpush1.msra.mxu0 0.0
  %4232 = vmatprep.subr.mxu0 0.0
  %4233 = vmatpush1.msra.mxu0 0.0
  %4234 = vmatprep.subr.mxu0 0.0
  %4235 = vmatpush1.msra.mxu0 0.0
  %4236 = vmatprep.subr.mxu0 0.0
  %4237 = vmatpush1.msra.mxu0 0.0
  %4238 = vmatprep.subr.mxu0 0.0
  %4239 = vmatpush1.msra.mxu0 0.0
  %4240 = vmatprep.subr.mxu0 0.0
  %4241 = vmatpush1.msra.mxu0 0.0
  %4242 = vmatprep.subr.mxu0 0.0
  %4243 = vmatpush1.msra.mxu0 0.0
  %4244 = vmatprep.mubr.f32.mxu0 0.0
  %4245 = vmatmul.mubr.f32.gmra.mrb[0].mxu0 %v1725
  %v4246 = vpop.f32.mrb[0].mxu0
  %v4247 = vadd.f32 0.0, %v4246
  %v4248 = vpop.f32.mrb[0].mxu0
  %4249 = vmatprep.mubr.f32.mxu0 0.0
  %4250 = vmatmul.mubr.f32.gmra.mrb[0].mxu0 %v1728
  %v4251 = vpop.f32.mrb[0].mxu0
  %v4252 = vadd.f32 0.0, %v4251
  %v4253 = vpop.f32.mrb[0].mxu0
  %4254 = vmatprep.mubr.f32.mxu0 0.0
  %4255 = vmatmul.mubr.f32.gmra.mrb[0].mxu0 %v1731
  %v4256 = vpop.f32.mrb[0].mxu0
  %v4257 = vadd.f32 0.0, %v4256
  %v4258 = vpop.f32.mrb[0].mxu0
  %4259 = vdwg.mxu0
  %v4260 = vsel %vm2449, %v4247, %v2441
  %v4261 = vsel %vm2449, %v4252, %v2443
  %v4262 = vsel %vm2449, %v4257, %v2445
  %v4264 = vlaneseq
  %v4265 = vshrl.u32 %v4264, 7
  %v4266 = vsub.s32 0, %v4265
  %v4267 = vrot.slane %v4170, %v4266
  %v4270 = vsel %vm2459, %v4260, 0
  %v4273 = vsel %vm2459, %v4261, 0
  %v4276 = vsel %vm2459, %v4262, 0
  %4278 = vmatprep.subr.mxu0 0.0
  %4279 = vmatpush1.msra.mxu0 %v4164
  %4280 = vmatprep.subr.mxu0 0.0
  %4281 = vmatpush1.msra.mxu0 %v4165
  %4282 = vmatprep.subr.mxu0 0.0
  %4283 = vmatpush1.msra.mxu0 %v4166
  %4284 = vmatprep.subr.mxu0 0.0
  %4285 = vmatpush1.msra.mxu0 %v4167
  %4286 = vmatprep.subr.mxu0 0.0
  %4287 = vmatpush1.msra.mxu0 %v4168
  %4288 = vmatprep.subr.mxu0 0.0
  %4289 = vmatpush1.msra.mxu0 %v4169
  %4290 = vmatprep.subr.mxu0 0.0
  %4291 = vmatpush1.msra.mxu0 0.0
  %4292 = vmatprep.subr.mxu0 0.0
  %4293 = vmatpush1.msra.mxu0 0.0
  %4294 = vmatprep.subr.mxu0 0.0
  %4295 = vmatpush1.msra.mxu0 0.0
  %4296 = vmatprep.subr.mxu0 0.0
  %4297 = vmatpush1.msra.mxu0 0.0
  %4298 = vmatprep.subr.mxu0 0.0
  %4299 = vmatpush1.msra.mxu0 0.0
  %4300 = vmatprep.subr.mxu0 0.0
  %4301 = vmatpush1.msra.mxu0 0.0
  %4302 = vmatprep.subr.mxu0 0.0
  %4303 = vmatpush1.msra.mxu0 0.0
  %4304 = vmatprep.subr.mxu0 0.0
  %4305 = vmatpush1.msra.mxu0 0.0
  %4306 = vmatprep.subr.mxu0 0.0
  %4307 = vmatpush1.msra.mxu0 0.0
  %4308 = vmatprep.subr.mxu0 0.0
  %4309 = vmatpush1.msra.mxu0 0.0
  %4310 = vmatprep.subr.mxu0 0.0
  %4311 = vmatpush1.msra.mxu0 0.0
  %4312 = vmatprep.subr.mxu0 0.0
  %4313 = vmatpush1.msra.mxu0 0.0
  %4314 = vmatprep.subr.mxu0 0.0
  %4315 = vmatpush1.msra.mxu0 0.0
  %4316 = vmatprep.subr.mxu0 0.0
  %4317 = vmatpush1.msra.mxu0 0.0
  %4318 = vmatprep.subr.mxu0 0.0
  %4319 = vmatpush1.msra.mxu0 0.0
  %4320 = vmatprep.subr.mxu0 0.0
  %4321 = vmatpush1.msra.mxu0 0.0
  %4322 = vmatprep.subr.mxu0 0.0
  %4323 = vmatpush1.msra.mxu0 0.0
  %4324 = vmatprep.subr.mxu0 0.0
  %4325 = vmatpush1.msra.mxu0 0.0
  %4326 = vmatprep.subr.mxu0 0.0
  %4327 = vmatpush1.msra.mxu0 0.0
  %4328 = vmatprep.subr.mxu0 0.0
  %4329 = vmatpush1.msra.mxu0 0.0
  %4330 = vmatprep.subr.mxu0 0.0
  %4331 = vmatpush1.msra.mxu0 0.0
  %4332 = vmatprep.subr.mxu0 0.0
  %4333 = vmatpush1.msra.mxu0 0.0
  %4334 = vmatprep.subr.mxu0 0.0
  %4335 = vmatpush1.msra.mxu0 0.0
  %4336 = vmatprep.subr.mxu0 0.0
  %4337 = vmatpush1.msra.mxu0 0.0
  %4338 = vmatprep.subr.mxu0 0.0
  %4339 = vmatpush1.msra.mxu0 0.0
  %4340 = vmatprep.subr.mxu0 0.0
  %4341 = vmatpush1.msra.mxu0 0.0
  %4342 = vmatprep.mubr.f32.mxu0 0.0
  %4343 = vmatmul.mubr.f32.gmra.mrb[0].mxu0 %v4270
  %v4344 = vpop.f32.mrb[0].mxu0
  %v4345 = vadd.f32 %v4267, %v4344
  %v4346 = vpop.f32.mrb[0].mxu0
  %4347 = vmatprep.mubr.f32.mxu0 0.0
  %4348 = vmatmul.mubr.f32.gmra.mrb[0].mxu0 %v4273
  %v4349 = vpop.f32.mrb[0].mxu0
  %v4350 = vadd.f32 %v4267, %v4349
  %v4351 = vpop.f32.mrb[0].mxu0
  %4352 = vmatprep.mubr.f32.mxu0 0.0
  %4353 = vmatmul.mubr.f32.gmra.mrb[0].mxu0 %v4276
  %v4354 = vpop.f32.mrb[0].mxu0
  %v4355 = vadd.f32 %v4267, %v4354
  %v4356 = vpop.f32.mrb[0].mxu0
  %4357 = vdwg.mxu0
  %v4358 = vmax.f32 %v4345, 0.0
  %v4359 = vmax.f32 %v4350, 0.0
  %v4360 = vmax.f32 %v4355, 0.0
  %4361 = vmatprep.subr.mxu0 0.0
  %4362 = vmatpush1.msra.mxu0 %v4358
  %4363 = vmatprep.subr.mxu0 0.0
  %4364 = vmatpush1.msra.mxu0 %v4359
  %4365 = vmatprep.subr.mxu0 0.0
  %4366 = vmatpush1.msra.mxu0 %v4360
  %4367 = vmatprep.subr.mxu0 0.0
  %4368 = vmatpush1.msra.mxu0 0.0
  %4369 = vmatprep.subr.mxu0 0.0
  %4370 = vmatpush1.msra.mxu0 0.0
  %4371 = vmatprep.subr.mxu0 0.0
  %4372 = vmatpush1.msra.mxu0 0.0
  %4373 = vmatprep.subr.mxu0 0.0
  %4374 = vmatpush1.msra.mxu0 0.0
  %4375 = vmatprep.subr.mxu0 0.0
  %4376 = vmatpush1.msra.mxu0 0.0
  %4377 = vmatprep.subr.mxu0 0.0
  %4378 = vmatpush1.msra.mxu0 0.0
  %4379 = vmatprep.subr.mxu0 0.0
  %4380 = vmatpush1.msra.mxu0 0.0
  %4381 = vmatprep.subr.mxu0 0.0
  %4382 = vmatpush1.msra.mxu0 0.0
  %4383 = vmatprep.subr.mxu0 0.0
  %4384 = vmatpush1.msra.mxu0 0.0
  %4385 = vmatprep.subr.mxu0 0.0
  %4386 = vmatpush1.msra.mxu0 0.0
  %4387 = vmatprep.subr.mxu0 0.0
  %4388 = vmatpush1.msra.mxu0 0.0
  %4389 = vmatprep.subr.mxu0 0.0
  %4390 = vmatpush1.msra.mxu0 0.0
  %4391 = vmatprep.subr.mxu0 0.0
  %4392 = vmatpush1.msra.mxu0 0.0
  %4393 = vmatprep.subr.mxu0 0.0
  %4394 = vmatpush1.msra.mxu0 0.0
  %4395 = vmatprep.subr.mxu0 0.0
  %4396 = vmatpush1.msra.mxu0 0.0
  %4397 = vmatprep.subr.mxu0 0.0
  %4398 = vmatpush1.msra.mxu0 0.0
  %4399 = vmatprep.subr.mxu0 0.0
  %4400 = vmatpush1.msra.mxu0 0.0
  %4401 = vmatprep.subr.mxu0 0.0
  %4402 = vmatpush1.msra.mxu0 0.0
  %4403 = vmatprep.subr.mxu0 0.0
  %4404 = vmatpush1.msra.mxu0 0.0
  %4405 = vmatprep.subr.mxu0 0.0
  %4406 = vmatpush1.msra.mxu0 0.0
  %4407 = vmatprep.subr.mxu0 0.0
  %4408 = vmatpush1.msra.mxu0 0.0
  %4409 = vmatprep.subr.mxu0 0.0
  %4410 = vmatpush1.msra.mxu0 0.0
  %4411 = vmatprep.subr.mxu0 0.0
  %4412 = vmatpush1.msra.mxu0 0.0
  %4413 = vmatprep.subr.mxu0 0.0
  %4414 = vmatpush1.msra.mxu0 0.0
  %4415 = vmatprep.subr.mxu0 0.0
  %4416 = vmatpush1.msra.mxu0 0.0
  %4417 = vmatprep.subr.mxu0 0.0
  %4418 = vmatpush1.msra.mxu0 0.0
  %4419 = vmatprep.subr.mxu0 0.0
  %4420 = vmatpush1.msra.mxu0 0.0
  %4421 = vmatprep.subr.mxu0 0.0
  %4422 = vmatpush1.msra.mxu0 0.0
  %4423 = vmatprep.subr.mxu0 0.0
  %4424 = vmatpush1.msra.mxu0 0.0
  %4425 = vmatprep.mubr.f32.mxu0 0.0
  %4426 = vmatmul.mubr.f32.gmra.mrb[0].mxu0 %v2184
  %v4427 = vpop.f32.mrb[0].mxu0
  %v4428 = vadd.f32 0.0, %v4427
  %v4429 = vpop.f32.mrb[0].mxu0
  %4430 = vdwg.mxu0
  %4432 = vrot.lane.b32.xlu0 %v4428, 32
  %v4433 = vpop.permute.xlu0 %4432
  %v4435 = vsel %vm2449, %v4163, %v4433
  %v4437 = vlaneseq
  %v4438 = vshrl.u32 %v4437, 7
  %v4439 = vsub.s32 0, %v4438
  %v4440 = vrot.slane %v4179, %v4439
  %v4443 = vsel %vm2633, %v4435, 0
  %4445 = vmatprep.subr.mxu0 0.0
  %4446 = vmatpush1.msra.mxu0 %v4171
  %4447 = vmatprep.subr.mxu0 0.0
  %4448 = vmatpush1.msra.mxu0 %v4172
  %4449 = vmatprep.subr.mxu0 0.0
  %4450 = vmatpush1.msra.mxu0 %v4173
  %4451 = vmatprep.subr.mxu0 0.0
  %4452 = vmatpush1.msra.mxu0 %v4174
  %4453 = vmatprep.subr.mxu0 0.0
  %4454 = vmatpush1.msra.mxu0 %v4175
  %4455 = vmatprep.subr.mxu0 0.0
  %4456 = vmatpush1.msra.mxu0 %v4176
  %4457 = vmatprep.subr.mxu0 0.0
  %4458 = vmatpush1.msra.mxu0 %v4177
  %4459 = vmatprep.subr.mxu0 0.0
  %4460 = vmatpush1.msra.mxu0 %v4178
  %4461 = vmatprep.subr.mxu0 0.0
  %4462 = vmatpush1.msra.mxu0 0.0
  %4463 = vmatprep.subr.mxu0 0.0
  %4464 = vmatpush1.msra.mxu0 0.0
  %4465 = vmatprep.subr.mxu0 0.0
  %4466 = vmatpush1.msra.mxu0 0.0
  %4467 = vmatprep.subr.mxu0 0.0
  %4468 = vmatpush1.msra.mxu0 0.0
  %4469 = vmatprep.subr.mxu0 0.0
  %4470 = vmatpush1.msra.mxu0 0.0
  %4471 = vmatprep.subr.mxu0 0.0
  %4472 = vmatpush1.msra.mxu0 0.0
  %4473 = vmatprep.subr.mxu0 0.0
  %4474 = vmatpush1.msra.mxu0 0.0
  %4475 = vmatprep.subr.mxu0 0.0
  %4476 = vmatpush1.msra.mxu0 0.0
  %4477 = vmatprep.subr.mxu0 0.0
  %4478 = vmatpush1.msra.mxu0 0.0
  %4479 = vmatprep.subr.mxu0 0.0
  %4480 = vmatpush1.msra.mxu0 0.0
  %4481 = vmatprep.subr.mxu0 0.0
  %4482 = vmatpush1.msra.mxu0 0.0
  %4483 = vmatprep.subr.mxu0 0.0
  %4484 = vmatpush1.msra.mxu0 0.0
  %4485 = vmatprep.subr.mxu0 0.0
  %4486 = vmatpush1.msra.mxu0 0.0
  %4487 = vmatprep.subr.mxu0 0.0
  %4488 = vmatpush1.msra.mxu0 0.0
  %4489 = vmatprep.subr.mxu0 0.0
  %4490 = vmatpush1.msra.mxu0 0.0
  %4491 = vmatprep.subr.mxu0 0.0
  %4492 = vmatpush1.msra.mxu0 0.0
  %4493 = vmatprep.subr.mxu0 0.0
  %4494 = vmatpush1.msra.mxu0 0.0
  %4495 = vmatprep.subr.mxu0 0.0
  %4496 = vmatpush1.msra.mxu0 0.0
  %4497 = vmatprep.subr.mxu0 0.0
  %4498 = vmatpush1.msra.mxu0 0.0
  %4499 = vmatprep.subr.mxu0 0.0
  %4500 = vmatpush1.msra.mxu0 0.0
  %4501 = vmatprep.subr.mxu0 0.0
  %4502 = vmatpush1.msra.mxu0 0.0
  %4503 = vmatprep.subr.mxu0 0.0
  %4504 = vmatpush1.msra.mxu0 0.0
  %4505 = vmatprep.subr.mxu0 0.0
  %4506 = vmatpush1.msra.mxu0 0.0
  %4507 = vmatprep.subr.mxu0 0.0
  %4508 = vmatpush1.msra.mxu0 0.0
  %4509 = vmatprep.mubr.f32.mxu0 0.0
  %4510 = vmatmul.mubr.f32.gmra.mrb[0].mxu0 %v4443
  %v4511 = vpop.f32.mrb[0].mxu0
  %v4512 = vadd.f32 %v4440, %v4511
  %v4513 = vpop.f32.mrb[0].mxu0
  %4514 = vdwg.mxu0
  %v4515 = vmax.f32 %v4512, 0.0
  %v4516 = vld [vmem:[%s13] sm:$0xff]
  %v4517 = vld [vmem:[%s13 + $0x8] sm:$0xff]
  %v4519 = vsel %vm262, %v4516, 0
  %v4522 = vsel %vm262, %v4517, 0
  %4524 = vmatprep.subr.mxu0 0.0
  %4525 = vmatpush1.msra.mxu0 %v4515
  %4526 = vmatprep.subr.mxu0 0.0
  %4527 = vmatpush1.msra.mxu0 0.0
  %4528 = vmatprep.subr.mxu0 0.0
  %4529 = vmatpush1.msra.mxu0 0.0
  %4530 = vmatprep.subr.mxu0 0.0
  %4531 = vmatpush1.msra.mxu0 0.0
  %4532 = vmatprep.subr.mxu0 0.0
  %4533 = vmatpush1.msra.mxu0 0.0
  %4534 = vmatprep.subr.mxu0 0.0
  %4535 = vmatpush1.msra.mxu0 0.0
  %4536 = vmatprep.subr.mxu0 0.0
  %4537 = vmatpush1.msra.mxu0 0.0
  %4538 = vmatprep.subr.mxu0 0.0
  %4539 = vmatpush1.msra.mxu0 0.0
  %4540 = vmatprep.subr.mxu0 0.0
  %4541 = vmatpush1.msra.mxu0 0.0
  %4542 = vmatprep.subr.mxu0 0.0
  %4543 = vmatpush1.msra.mxu0 0.0
  %4544 = vmatprep.subr.mxu0 0.0
  %4545 = vmatpush1.msra.mxu0 0.0
  %4546 = vmatprep.subr.mxu0 0.0
  %4547 = vmatpush1.msra.mxu0 0.0
  %4548 = vmatprep.subr.mxu0 0.0
  %4549 = vmatpush1.msra.mxu0 0.0
  %4550 = vmatprep.subr.mxu0 0.0
  %4551 = vmatpush1.msra.mxu0 0.0
  %4552 = vmatprep.subr.mxu0 0.0
  %4553 = vmatpush1.msra.mxu0 0.0
  %4554 = vmatprep.subr.mxu0 0.0
  %4555 = vmatpush1.msra.mxu0 0.0
  %4556 = vmatprep.subr.mxu0 0.0
  %4557 = vmatpush1.msra.mxu0 0.0
  %4558 = vmatprep.subr.mxu0 0.0
  %4559 = vmatpush1.msra.mxu0 0.0
  %4560 = vmatprep.subr.mxu0 0.0
  %4561 = vmatpush1.msra.mxu0 0.0
  %4562 = vmatprep.subr.mxu0 0.0
  %4563 = vmatpush1.msra.mxu0 0.0
  %4564 = vmatprep.subr.mxu0 0.0
  %4565 = vmatpush1.msra.mxu0 0.0
  %4566 = vmatprep.subr.mxu0 0.0
  %4567 = vmatpush1.msra.mxu0 0.0
  %4568 = vmatprep.subr.mxu0 0.0
  %4569 = vmatpush1.msra.mxu0 0.0
  %4570 = vmatprep.subr.mxu0 0.0
  %4571 = vmatpush1.msra.mxu0 0.0
  %4572 = vmatprep.subr.mxu0 0.0
  %4573 = vmatpush1.msra.mxu0 0.0
  %4574 = vmatprep.subr.mxu0 0.0
  %4575 = vmatpush1.msra.mxu0 0.0
  %4576 = vmatprep.subr.mxu0 0.0
  %4577 = vmatpush1.msra.mxu0 0.0
  %4578 = vmatprep.subr.mxu0 0.0
  %4579 = vmatpush1.msra.mxu0 0.0
  %4580 = vmatprep.subr.mxu0 0.0
  %4581 = vmatpush1.msra.mxu0 0.0
  %4582 = vmatprep.subr.mxu0 0.0
  %4583 = vmatpush1.msra.mxu0 0.0
  %4584 = vmatprep.subr.mxu0 0.0
  %4585 = vmatpush1.msra.mxu0 0.0
  %4586 = vmatprep.subr.mxu0 0.0
  %4587 = vmatpush1.msra.mxu0 0.0
  %4588 = vmatprep.mubr.f32.mxu0 0.0
  %4589 = vmatmul.mubr.f32.gmra.mrb[0].mxu0 %v4519
  %v4590 = vpop.f32.mrb[0].mxu0
  %v4591 = vadd.f32 0.0, %v4590
  %v4592 = vpop.f32.mrb[0].mxu0
  %4593 = vmatprep.mubr.f32.mxu0 0.0
  %4594 = vmatmul.mubr.f32.gmra.mrb[0].mxu0 %v4522
  %v4595 = vpop.f32.mrb[0].mxu0
  %v4596 = vadd.f32 0.0, %v4595
  %v4597 = vpop.f32.mrb[0].mxu0
  %4598 = vdwg.mxu0
  %4601 = vrot.lane.b32.xlu0 %v4591, 16
  %v4602 = vpop.permute.xlu0 %4601
  %4603 = vrot.lane.b32.xlu0 %v4596, 16
  %v4604 = vpop.permute.xlu0 %4603
  %v4607 = vsel %vm458, %v3725, %v4602
  %v4608 = vsel %vm458, %v3730, %v4604
  %v4609 = vld [vmem:[%s93] sm:$0xff]
  %v4610 = vld [vmem:[%s93 + $0x8] sm:$0xff]
  %v4611 = vld [vmem:[%s93 + $0x10] sm:$0xff]
  %v4612 = vld [vmem:[%s93 + $0x18] sm:$0xff]
  %v4613 = vld [vmem:[%s93 + $0x20] sm:$0xff]
  %v4614 = vld [vmem:[%s93 + $0x28] sm:$0xff]
  %v4615 = vld [vmem:[%s93 + $0x30] sm:$0x1]
  %v4616 = vld [vmem:[%s95] sm:$0x1]
  %v4617 = vld [vmem:[%s97] sm:$0xff]
  %v4618 = vld [vmem:[%s97 + $0x8] sm:$0xff]
  %v4619 = vld [vmem:[%s97 + $0x10] sm:$0xff]
  %v4620 = vld [vmem:[%s97 + $0x18] sm:$0xff]
  %v4621 = vld [vmem:[%s97 + $0x20] sm:$0xff]
  %v4622 = vld [vmem:[%s97 + $0x28] sm:$0xff]
  %v4623 = vld [vmem:[%s97 + $0x30] sm:$0xff]
  %v4624 = vld [vmem:[%s97 + $0x38] sm:$0xff]
  %v4625 = vld [vmem:[%s97 + $0x40] sm:$0xff]
  %v4626 = vld [vmem:[%s97 + $0x48] sm:$0xff]
  %v4627 = vld [vmem:[%s99] sm:$0x1]
  %4628 = vmatprep.subr.mxu0 0.0
  %4629 = vmatpush1.msra.mxu0 %v4607
  %4630 = vmatprep.subr.mxu0 0.0
  %4631 = vmatpush1.msra.mxu0 %v4608
  %4632 = vmatprep.subr.mxu0 0.0
  %4633 = vmatpush1.msra.mxu0 0.0
  %4634 = vmatprep.subr.mxu0 0.0
  %4635 = vmatpush1.msra.mxu0 0.0
  %4636 = vmatprep.subr.mxu0 0.0
  %4637 = vmatpush1.msra.mxu0 0.0
  %4638 = vmatprep.subr.mxu0 0.0
  %4639 = vmatpush1.msra.mxu0 0.0
  %4640 = vmatprep.subr.mxu0 0.0
  %4641 = vmatpush1.msra.mxu0 0.0
  %4642 = vmatprep.subr.mxu0 0.0
  %4643 = vmatpush1.msra.mxu0 0.0
  %4644 = vmatprep.subr.mxu0 0.0
  %4645 = vmatpush1.msra.mxu0 0.0
  %4646 = vmatprep.subr.mxu0 0.0
  %4647 = vmatpush1.msra.mxu0 0.0
  %4648 = vmatprep.subr.mxu0 0.0
  %4649 = vmatpush1.msra.mxu0 0.0
  %4650 = vmatprep.subr.mxu0 0.0
  %4651 = vmatpush1.msra.mxu0 0.0
  %4652 = vmatprep.subr.mxu0 0.0
  %4653 = vmatpush1.msra.mxu0 0.0
  %4654 = vmatprep.subr.mxu0 0.0
  %4655 = vmatpush1.msra.mxu0 0.0
  %4656 = vmatprep.subr.mxu0 0.0
  %4657 = vmatpush1.msra.mxu0 0.0
  %4658 = vmatprep.subr.mxu0 0.0
  %4659 = vmatpush1.msra.mxu0 0.0
  %4660 = vmatprep.subr.mxu0 0.0
  %4661 = vmatpush1.msra.mxu0 0.0
  %4662 = vmatprep.subr.mxu0 0.0
  %4663 = vmatpush1.msra.mxu0 0.0
  %4664 = vmatprep.subr.mxu0 0.0
  %4665 = vmatpush1.msra.mxu0 0.0
  %4666 = vmatprep.subr.mxu0 0.0
  %4667 = vmatpush1.msra.mxu0 0.0
  %4668 = vmatprep.subr.mxu0 0.0
  %4669 = vmatpush1.msra.mxu0 0.0
  %4670 = vmatprep.subr.mxu0 0.0
  %4671 = vmatpush1.msra.mxu0 0.0
  %4672 = vmatprep.subr.mxu0 0.0
  %4673 = vmatpush1.msra.mxu0 0.0
  %4674 = vmatprep.subr.mxu0 0.0
  %4675 = vmatpush1.msra.mxu0 0.0
  %4676 = vmatprep.subr.mxu0 0.0
  %4677 = vmatpush1.msra.mxu0 0.0
  %4678 = vmatprep.subr.mxu0 0.0
  %4679 = vmatpush1.msra.mxu0 0.0
  %4680 = vmatprep.subr.mxu0 0.0
  %4681 = vmatpush1.msra.mxu0 0.0
  %4682 = vmatprep.subr.mxu0 0.0
  %4683 = vmatpush1.msra.mxu0 0.0
  %4684 = vmatprep.subr.mxu0 0.0
  %4685 = vmatpush1.msra.mxu0 0.0
  %4686 = vmatprep.subr.mxu0 0.0
  %4687 = vmatpush1.msra.mxu0 0.0
  %4688 = vmatprep.subr.mxu0 0.0
  %4689 = vmatpush1.msra.mxu0 0.0
  %4690 = vmatprep.subr.mxu0 0.0
  %4691 = vmatpush1.msra.mxu0 0.0
  %4692 = vmatprep.mubr.f32.mxu0 0.0
  %4693 = vmatmul.mubr.f32.gmra.mrb[0].mxu0 %v2831
  %v4694 = vpop.f32.mrb[0].mxu0
  %v4695 = vadd.f32 0.0, %v4694
  %v4696 = vpop.f32.mrb[0].mxu0
  %4697 = vmatprep.mubr.f32.mxu0 0.0
  %4698 = vmatmul.mubr.f32.gmra.mrb[0].mxu0 %v2834
  %v4699 = vpop.f32.mrb[0].mxu0
  %v4700 = vadd.f32 0.0, %v4699
  %v4701 = vpop.f32.mrb[0].mxu0
  %4702 = vmatprep.mubr.f32.mxu0 0.0
  %4703 = vmatmul.mubr.f32.gmra.mrb[0].mxu0 %v2837
  %v4704 = vpop.f32.mrb[0].mxu0
  %v4705 = vadd.f32 0.0, %v4704
  %v4706 = vpop.f32.mrb[0].mxu0
  %4707 = vmatprep.mubr.f32.mxu0 0.0
  %4708 = vmatmul.mubr.f32.gmra.mrb[0].mxu0 %v2840
  %v4709 = vpop.f32.mrb[0].mxu0
  %v4710 = vadd.f32 0.0, %v4709
  %v4711 = vpop.f32.mrb[0].mxu0
  %4712 = vdwg.mxu0
  %v4713 = vsel %vm2459, %v4695, %v2932
  %v4714 = vsel %vm2459, %v4700, %v2934
  %v4715 = vsel %vm2459, %v4705, %v2936
  %v4716 = vsel %vm2459, %v4710, %v2938
  %v4718 = vlaneseq
  %v4719 = vshrl.u32 %v4718, 7
  %v4720 = vsub.s32 0, %v4719
  %v4721 = vrot.slane %v4616, %v4720
  %v4724 = vsel %vm2953, %v4713, 0
  %v4727 = vsel %vm2953, %v4714, 0
  %v4730 = vsel %vm2953, %v4715, 0
  %v4733 = vsel %vm2953, %v4716, 0
  %v4736 = vsel %vm2966, %v4615, 0
  %4738 = vmatprep.subr.mxu0 0.0
  %4739 = vmatpush1.msra.mxu0 %v4609
  %4740 = vmatprep.subr.mxu0 0.0
  %4741 = vmatpush1.msra.mxu0 %v4610
  %4742 = vmatprep.subr.mxu0 0.0
  %4743 = vmatpush1.msra.mxu0 %v4611
  %4744 = vmatprep.subr.mxu0 0.0
  %4745 = vmatpush1.msra.mxu0 %v4612
  %4746 = vmatprep.subr.mxu0 0.0
  %4747 = vmatpush1.msra.mxu0 %v4613
  %4748 = vmatprep.subr.mxu0 0.0
  %4749 = vmatpush1.msra.mxu0 %v4614
  %4750 = vmatprep.subr.mxu0 0.0
  %4751 = vmatpush1.msra.mxu0 %v4736
  %4752 = vmatprep.subr.mxu0 0.0
  %4753 = vmatpush1.msra.mxu0 0.0
  %4754 = vmatprep.subr.mxu0 0.0
  %4755 = vmatpush1.msra.mxu0 0.0
  %4756 = vmatprep.subr.mxu0 0.0
  %4757 = vmatpush1.msra.mxu0 0.0
  %4758 = vmatprep.subr.mxu0 0.0
  %4759 = vmatpush1.msra.mxu0 0.0
  %4760 = vmatprep.subr.mxu0 0.0
  %4761 = vmatpush1.msra.mxu0 0.0
  %4762 = vmatprep.subr.mxu0 0.0
  %4763 = vmatpush1.msra.mxu0 0.0
  %4764 = vmatprep.subr.mxu0 0.0
  %4765 = vmatpush1.msra.mxu0 0.0
  %4766 = vmatprep.subr.mxu0 0.0
  %4767 = vmatpush1.msra.mxu0 0.0
  %4768 = vmatprep.subr.mxu0 0.0
  %4769 = vmatpush1.msra.mxu0 0.0
  %4770 = vmatprep.subr.mxu0 0.0
  %4771 = vmatpush1.msra.mxu0 0.0
  %4772 = vmatprep.subr.mxu0 0.0
  %4773 = vmatpush1.msra.mxu0 0.0
  %4774 = vmatprep.subr.mxu0 0.0
  %4775 = vmatpush1.msra.mxu0 0.0
  %4776 = vmatprep.subr.mxu0 0.0
  %4777 = vmatpush1.msra.mxu0 0.0
  %4778 = vmatprep.subr.mxu0 0.0
  %4779 = vmatpush1.msra.mxu0 0.0
  %4780 = vmatprep.subr.mxu0 0.0
  %4781 = vmatpush1.msra.mxu0 0.0
  %4782 = vmatprep.subr.mxu0 0.0
  %4783 = vmatpush1.msra.mxu0 0.0
  %4784 = vmatprep.subr.mxu0 0.0
  %4785 = vmatpush1.msra.mxu0 0.0
  %4786 = vmatprep.subr.mxu0 0.0
  %4787 = vmatpush1.msra.mxu0 0.0
  %4788 = vmatprep.subr.mxu0 0.0
  %4789 = vmatpush1.msra.mxu0 0.0
  %4790 = vmatprep.subr.mxu0 0.0
  %4791 = vmatpush1.msra.mxu0 0.0
  %4792 = vmatprep.subr.mxu0 0.0
  %4793 = vmatpush1.msra.mxu0 0.0
  %4794 = vmatprep.subr.mxu0 0.0
  %4795 = vmatpush1.msra.mxu0 0.0
  %4796 = vmatprep.subr.mxu0 0.0
  %4797 = vmatpush1.msra.mxu0 0.0
  %4798 = vmatprep.subr.mxu0 0.0
  %4799 = vmatpush1.msra.mxu0 0.0
  %4800 = vmatprep.subr.mxu0 0.0
  %4801 = vmatpush1.msra.mxu0 0.0
  %4802 = vmatprep.mubr.f32.mxu0 0.0
  %4803 = vmatmul.mubr.f32.gmra.mrb[0].mxu0 %v4724
  %v4804 = vpop.f32.mrb[0].mxu0
  %v4805 = vadd.f32 %v4721, %v4804
  %v4806 = vpop.f32.mrb[0].mxu0
  %4807 = vmatprep.mubr.f32.mxu0 0.0
  %4808 = vmatmul.mubr.f32.gmra.mrb[0].mxu0 %v4727
  %v4809 = vpop.f32.mrb[0].mxu0
  %v4810 = vadd.f32 %v4721, %v4809
  %v4811 = vpop.f32.mrb[0].mxu0
  %4812 = vmatprep.mubr.f32.mxu0 0.0
  %4813 = vmatmul.mubr.f32.gmra.mrb[0].mxu0 %v4730
  %v4814 = vpop.f32.mrb[0].mxu0
  %v4815 = vadd.f32 %v4721, %v4814
  %v4816 = vpop.f32.mrb[0].mxu0
  %4817 = vmatprep.mubr.f32.mxu0 0.0
  %4818 = vmatmul.mubr.f32.gmra.mrb[0].mxu0 %v4733
  %v4819 = vpop.f32.mrb[0].mxu0
  %v4820 = vadd.f32 %v4721, %v4819
  %v4821 = vpop.f32.mrb[0].mxu0
  %4822 = vdwg.mxu0
  %v4823 = vmax.f32 %v4805, 0.0
  %v4824 = vmax.f32 %v4810, 0.0
  %v4825 = vmax.f32 %v4815, 0.0
  %v4826 = vmax.f32 %v4820, 0.0
  %4827 = vmatprep.subr.mxu0 0.0
  %4828 = vmatpush1.msra.mxu0 %v4823
  %4829 = vmatprep.subr.mxu0 0.0
  %4830 = vmatpush1.msra.mxu0 %v4824
  %4831 = vmatprep.subr.mxu0 0.0
  %4832 = vmatpush1.msra.mxu0 %v4825
  %4833 = vmatprep.subr.mxu0 0.0
  %4834 = vmatpush1.msra.mxu0 %v4826
  %4835 = vmatprep.subr.mxu0 0.0
  %4836 = vmatpush1.msra.mxu0 0.0
  %4837 = vmatprep.subr.mxu0 0.0
  %4838 = vmatpush1.msra.mxu0 0.0
  %4839 = vmatprep.subr.mxu0 0.0
  %4840 = vmatpush1.msra.mxu0 0.0
  %4841 = vmatprep.subr.mxu0 0.0
  %4842 = vmatpush1.msra.mxu0 0.0
  %4843 = vmatprep.subr.mxu0 0.0
  %4844 = vmatpush1.msra.mxu0 0.0
  %4845 = vmatprep.subr.mxu0 0.0
  %4846 = vmatpush1.msra.mxu0 0.0
  %4847 = vmatprep.subr.mxu0 0.0
  %4848 = vmatpush1.msra.mxu0 0.0
  %4849 = vmatprep.subr.mxu0 0.0
  %4850 = vmatpush1.msra.mxu0 0.0
  %4851 = vmatprep.subr.mxu0 0.0
  %4852 = vmatpush1.msra.mxu0 0.0
  %4853 = vmatprep.subr.mxu0 0.0
  %4854 = vmatpush1.msra.mxu0 0.0
  %4855 = vmatprep.subr.mxu0 0.0
  %4856 = vmatpush1.msra.mxu0 0.0
  %4857 = vmatprep.subr.mxu0 0.0
  %4858 = vmatpush1.msra.mxu0 0.0
  %4859 = vmatprep.subr.mxu0 0.0
  %4860 = vmatpush1.msra.mxu0 0.0
  %4861 = vmatprep.subr.mxu0 0.0
  %4862 = vmatpush1.msra.mxu0 0.0
  %4863 = vmatprep.subr.mxu0 0.0
  %4864 = vmatpush1.msra.mxu0 0.0
  %4865 = vmatprep.subr.mxu0 0.0
  %4866 = vmatpush1.msra.mxu0 0.0
  %4867 = vmatprep.subr.mxu0 0.0
  %4868 = vmatpush1.msra.mxu0 0.0
  %4869 = vmatprep.subr.mxu0 0.0
  %4870 = vmatpush1.msra.mxu0 0.0
  %4871 = vmatprep.subr.mxu0 0.0
  %4872 = vmatpush1.msra.mxu0 0.0
  %4873 = vmatprep.subr.mxu0 0.0
  %4874 = vmatpush1.msra.mxu0 0.0
  %4875 = vmatprep.subr.mxu0 0.0
  %4876 = vmatpush1.msra.mxu0 0.0
  %4877 = vmatprep.subr.mxu0 0.0
  %4878 = vmatpush1.msra.mxu0 0.0
  %4879 = vmatprep.subr.mxu0 0.0
  %4880 = vmatpush1.msra.mxu0 0.0
  %4881 = vmatprep.subr.mxu0 0.0
  %4882 = vmatpush1.msra.mxu0 0.0
  %4883 = vmatprep.subr.mxu0 0.0
  %4884 = vmatpush1.msra.mxu0 0.0
  %4885 = vmatprep.subr.mxu0 0.0
  %4886 = vmatpush1.msra.mxu0 0.0
  %4887 = vmatprep.subr.mxu0 0.0
  %4888 = vmatpush1.msra.mxu0 0.0
  %4889 = vmatprep.subr.mxu0 0.0
  %4890 = vmatpush1.msra.mxu0 0.0
  %4891 = vmatprep.mubr.f32.mxu0 0.0
  %4892 = vmatmul.mubr.f32.gmra.mrb[0].mxu0 %v3060
  %v4893 = vpop.f32.mrb[0].mxu0
  %v4894 = vadd.f32 0.0, %v4893
  %v4895 = vpop.f32.mrb[0].mxu0
  %4896 = vmatprep.mubr.f32.mxu0 0.0
  %4897 = vmatmul.mubr.f32.gmra.mrb[0].mxu0 %v3063
  %v4898 = vpop.f32.mrb[0].mxu0
  %v4899 = vadd.f32 0.0, %v4898
  %v4900 = vpop.f32.mrb[0].mxu0
  %4901 = vdwg.mxu0
  %4904 = vrot.lane.b32.xlu0 %v4894, 48
  %v4905 = vpop.permute.xlu0 %4904
  %4906 = vrot.lane.b32.xlu0 %v4899, 48
  %v4907 = vpop.permute.xlu0 %4906
  %v4910 = vsel %vm2459, %v4607, %v4905
  %v4911 = vsel %vm2459, %v4608, %v4907
  %v4913 = vlaneseq
  %v4914 = vshrl.u32 %v4913, 7
  %v4915 = vsub.s32 0, %v4914
  %v4916 = vrot.slane %v4627, %v4915
  %v4919 = vsel %vm3156, %v4910, 0
  %v4922 = vsel %vm3156, %v4911, 0
  %4924 = vmatprep.subr.mxu0 0.0
  %4925 = vmatpush1.msra.mxu0 %v4617
  %4926 = vmatprep.subr.mxu0 0.0
  %4927 = vmatpush1.msra.mxu0 %v4618
  %4928 = vmatprep.subr.mxu0 0.0
  %4929 = vmatpush1.msra.mxu0 %v4619
  %4930 = vmatprep.subr.mxu0 0.0
  %4931 = vmatpush1.msra.mxu0 %v4620
  %4932 = vmatprep.subr.mxu0 0.0
  %4933 = vmatpush1.msra.mxu0 %v4621
  %4934 = vmatprep.subr.mxu0 0.0
  %4935 = vmatpush1.msra.mxu0 %v4622
  %4936 = vmatprep.subr.mxu0 0.0
  %4937 = vmatpush1.msra.mxu0 %v4623
  %4938 = vmatprep.subr.mxu0 0.0
  %4939 = vmatpush1.msra.mxu0 %v4624
  %4940 = vmatprep.subr.mxu0 0.0
  %4941 = vmatpush1.msra.mxu0 %v4625
  %4942 = vmatprep.subr.mxu0 0.0
  %4943 = vmatpush1.msra.mxu0 %v4626
  %4944 = vmatprep.subr.mxu0 0.0
  %4945 = vmatpush1.msra.mxu0 0.0
  %4946 = vmatprep.subr.mxu0 0.0
  %4947 = vmatpush1.msra.mxu0 0.0
  %4948 = vmatprep.subr.mxu0 0.0
  %4949 = vmatpush1.msra.mxu0 0.0
  %4950 = vmatprep.subr.mxu0 0.0
  %4951 = vmatpush1.msra.mxu0 0.0
  %4952 = vmatprep.subr.mxu0 0.0
  %4953 = vmatpush1.msra.mxu0 0.0
  %4954 = vmatprep.subr.mxu0 0.0
  %4955 = vmatpush1.msra.mxu0 0.0
  %4956 = vmatprep.subr.mxu0 0.0
  %4957 = vmatpush1.msra.mxu0 0.0
  %4958 = vmatprep.subr.mxu0 0.0
  %4959 = vmatpush1.msra.mxu0 0.0
  %4960 = vmatprep.subr.mxu0 0.0
  %4961 = vmatpush1.msra.mxu0 0.0
  %4962 = vmatprep.subr.mxu0 0.0
  %4963 = vmatpush1.msra.mxu0 0.0
  %4964 = vmatprep.subr.mxu0 0.0
  %4965 = vmatpush1.msra.mxu0 0.0
  %4966 = vmatprep.subr.mxu0 0.0
  %4967 = vmatpush1.msra.mxu0 0.0
  %4968 = vmatprep.subr.mxu0 0.0
  %4969 = vmatpush1.msra.mxu0 0.0
  %4970 = vmatprep.subr.mxu0 0.0
  %4971 = vmatpush1.msra.mxu0 0.0
  %4972 = vmatprep.subr.mxu0 0.0
  %4973 = vmatpush1.msra.mxu0 0.0
  %4974 = vmatprep.subr.mxu0 0.0
  %4975 = vmatpush1.msra.mxu0 0.0
  %4976 = vmatprep.subr.mxu0 0.0
  %4977 = vmatpush1.msra.mxu0 0.0
  %4978 = vmatprep.subr.mxu0 0.0
  %4979 = vmatpush1.msra.mxu0 0.0
  %4980 = vmatprep.subr.mxu0 0.0
  %4981 = vmatpush1.msra.mxu0 0.0
  %4982 = vmatprep.subr.mxu0 0.0
  %4983 = vmatpush1.msra.mxu0 0.0
  %4984 = vmatprep.subr.mxu0 0.0
  %4985 = vmatpush1.msra.mxu0 0.0
  %4986 = vmatprep.subr.mxu0 0.0
  %4987 = vmatpush1.msra.mxu0 0.0
  %4988 = vmatprep.mubr.f32.mxu0 0.0
  %4989 = vmatmul.mubr.f32.gmra.mrb[0].mxu0 %v4919
  %v4990 = vpop.f32.mrb[0].mxu0
  %v4991 = vadd.f32 %v4916, %v4990
  %v4992 = vpop.f32.mrb[0].mxu0
  %4993 = vmatprep.mubr.f32.mxu0 0.0
  %4994 = vmatmul.mubr.f32.gmra.mrb[0].mxu0 %v4922
  %v4995 = vpop.f32.mrb[0].mxu0
  %v4996 = vadd.f32 %v4916, %v4995
  %v4997 = vpop.f32.mrb[0].mxu0
  %4998 = vdwg.mxu0
  %v4999 = vmax.f32 %v4991, 0.0
  %v5000 = vmax.f32 %v4996, 0.0
  %v5001 = vld [vmem:[%s101] sm:$0xff]
  %v5002 = vld [vmem:[%s101 + $0x8] sm:$0xff]
  %v5003 = vld [vmem:[%s101 + $0x10] sm:$0xff]
  %v5004 = vld [vmem:[%s101 + $0x18] sm:$0xff]
  %v5005 = vld [vmem:[%s101 + $0x20] sm:$0x1]
  %v5006 = vld [vmem:[%s103] sm:$0x1]
  %v5007 = vld [vmem:[%s105] sm:$0xff]
  %v5008 = vld [vmem:[%s105 + $0x8] sm:$0xff]
  %v5009 = vld [vmem:[%s105 + $0x10] sm:$0xff]
  %v5010 = vld [vmem:[%s105 + $0x18] sm:$0xff]
  %v5011 = vld [vmem:[%s105 + $0x20] sm:$0xff]
  %v5012 = vld [vmem:[%s105 + $0x28] sm:$0xff]
  %v5013 = vld [vmem:[%s105 + $0x30] sm:$0xff]
  %v5014 = vld [vmem:[%s105 + $0x38] sm:$0xff]
  %v5015 = vld [vmem:[%s107] sm:$0x1]
  %5016 = vmatprep.subr.mxu0 0.0
  %5017 = vmatpush1.msra.mxu0 %v4999
  %5018 = vmatprep.subr.mxu0 0.0
  %5019 = vmatpush1.msra.mxu0 %v5000
  %5020 = vmatprep.subr.mxu0 0.0
  %5021 = vmatpush1.msra.mxu0 0.0
  %5022 = vmatprep.subr.mxu0 0.0
  %5023 = vmatpush1.msra.mxu0 0.0
  %5024 = vmatprep.subr.mxu0 0.0
  %5025 = vmatpush1.msra.mxu0 0.0
  %5026 = vmatprep.subr.mxu0 0.0
  %5027 = vmatpush1.msra.mxu0 0.0
  %5028 = vmatprep.subr.mxu0 0.0
  %5029 = vmatpush1.msra.mxu0 0.0
  %5030 = vmatprep.subr.mxu0 0.0
  %5031 = vmatpush1.msra.mxu0 0.0
  %5032 = vmatprep.subr.mxu0 0.0
  %5033 = vmatpush1.msra.mxu0 0.0
  %5034 = vmatprep.subr.mxu0 0.0
  %5035 = vmatpush1.msra.mxu0 0.0
  %5036 = vmatprep.subr.mxu0 0.0
  %5037 = vmatpush1.msra.mxu0 0.0
  %5038 = vmatprep.subr.mxu0 0.0
  %5039 = vmatpush1.msra.mxu0 0.0
  %5040 = vmatprep.subr.mxu0 0.0
  %5041 = vmatpush1.msra.mxu0 0.0
  %5042 = vmatprep.subr.mxu0 0.0
  %5043 = vmatpush1.msra.mxu0 0.0
  %5044 = vmatprep.subr.mxu0 0.0
  %5045 = vmatpush1.msra.mxu0 0.0
  %5046 = vmatprep.subr.mxu0 0.0
  %5047 = vmatpush1.msra.mxu0 0.0
  %5048 = vmatprep.subr.mxu0 0.0
  %5049 = vmatpush1.msra.mxu0 0.0
  %5050 = vmatprep.subr.mxu0 0.0
  %5051 = vmatpush1.msra.mxu0 0.0
  %5052 = vmatprep.subr.mxu0 0.0
  %5053 = vmatpush1.msra.mxu0 0.0
  %5054 = vmatprep.subr.mxu0 0.0
  %5055 = vmatpush1.msra.mxu0 0.0
  %5056 = vmatprep.subr.mxu0 0.0
  %5057 = vmatpush1.msra.mxu0 0.0
  %5058 = vmatprep.subr.mxu0 0.0
  %5059 = vmatpush1.msra.mxu0 0.0
  %5060 = vmatprep.subr.mxu0 0.0
  %5061 = vmatpush1.msra.mxu0 0.0
  %5062 = vmatprep.subr.mxu0 0.0
  %5063 = vmatpush1.msra.mxu0 0.0
  %5064 = vmatprep.subr.mxu0 0.0
  %5065 = vmatpush1.msra.mxu0 0.0
  %5066 = vmatprep.subr.mxu0 0.0
  %5067 = vmatpush1.msra.mxu0 0.0
  %5068 = vmatprep.subr.mxu0 0.0
  %5069 = vmatpush1.msra.mxu0 0.0
  %5070 = vmatprep.subr.mxu0 0.0
  %5071 = vmatpush1.msra.mxu0 0.0
  %5072 = vmatprep.subr.mxu0 0.0
  %5073 = vmatpush1.msra.mxu0 0.0
  %5074 = vmatprep.subr.mxu0 0.0
  %5075 = vmatpush1.msra.mxu0 0.0
  %5076 = vmatprep.subr.mxu0 0.0
  %5077 = vmatpush1.msra.mxu0 0.0
  %5078 = vmatprep.subr.mxu0 0.0
  %5079 = vmatpush1.msra.mxu0 0.0
  %5080 = vmatprep.mubr.f32.mxu0 0.0
  %5081 = vmatmul.mubr.f32.gmra.mrb[0].mxu0 %v2831
  %v5082 = vpop.f32.mrb[0].mxu0
  %v5083 = vadd.f32 0.0, %v5082
  %v5084 = vpop.f32.mrb[0].mxu0
  %5085 = vmatprep.mubr.f32.mxu0 0.0
  %5086 = vmatmul.mubr.f32.gmra.mrb[0].mxu0 %v2834
  %v5087 = vpop.f32.mrb[0].mxu0
  %v5088 = vadd.f32 0.0, %v5087
  %v5089 = vpop.f32.mrb[0].mxu0
  %5090 = vmatprep.mubr.f32.mxu0 0.0
  %5091 = vmatmul.mubr.f32.gmra.mrb[0].mxu0 %v2837
  %v5092 = vpop.f32.mrb[0].mxu0
  %v5093 = vadd.f32 0.0, %v5092
  %v5094 = vpop.f32.mrb[0].mxu0
  %5095 = vmatprep.mubr.f32.mxu0 0.0
  %5096 = vmatmul.mubr.f32.gmra.mrb[0].mxu0 %v2840
  %v5097 = vpop.f32.mrb[0].mxu0
  %v5098 = vadd.f32 0.0, %v5097
  %v5099 = vpop.f32.mrb[0].mxu0
  %5100 = vdwg.mxu0
  %v5101 = vsel %vm2449, %v5083, %v3341
  %v5102 = vsel %vm2449, %v5088, %v3343
  %v5103 = vsel %vm2449, %v5093, %v3345
  %v5104 = vsel %vm2449, %v5098, %v3347
  %v5106 = vlaneseq
  %v5107 = vshrl.u32 %v5106, 7
  %v5108 = vsub.s32 0, %v5107
  %v5109 = vrot.slane %v5006, %v5108
  %v5112 = vsel %vm3362, %v5101, 0
  %v5115 = vsel %vm3362, %v5102, 0
  %v5118 = vsel %vm3362, %v5103, 0
  %v5121 = vsel %vm3362, %v5104, 0
  %v5124 = vsel %vm2966, %v5005, 0
  %5126 = vmatprep.subr.mxu0 0.0
  %5127 = vmatpush1.msra.mxu0 %v5001
  %5128 = vmatprep.subr.mxu0 0.0
  %5129 = vmatpush1.msra.mxu0 %v5002
  %5130 = vmatprep.subr.mxu0 0.0
  %5131 = vmatpush1.msra.mxu0 %v5003
  %5132 = vmatprep.subr.mxu0 0.0
  %5133 = vmatpush1.msra.mxu0 %v5004
  %5134 = vmatprep.subr.mxu0 0.0
  %5135 = vmatpush1.msra.mxu0 %v5124
  %5136 = vmatprep.subr.mxu0 0.0
  %5137 = vmatpush1.msra.mxu0 0.0
  %5138 = vmatprep.subr.mxu0 0.0
  %5139 = vmatpush1.msra.mxu0 0.0
  %5140 = vmatprep.subr.mxu0 0.0
  %5141 = vmatpush1.msra.mxu0 0.0
  %5142 = vmatprep.subr.mxu0 0.0
  %5143 = vmatpush1.msra.mxu0 0.0
  %5144 = vmatprep.subr.mxu0 0.0
  %5145 = vmatpush1.msra.mxu0 0.0
  %5146 = vmatprep.subr.mxu0 0.0
  %5147 = vmatpush1.msra.mxu0 0.0
  %5148 = vmatprep.subr.mxu0 0.0
  %5149 = vmatpush1.msra.mxu0 0.0
  %5150 = vmatprep.subr.mxu0 0.0
  %5151 = vmatpush1.msra.mxu0 0.0
  %5152 = vmatprep.subr.mxu0 0.0
  %5153 = vmatpush1.msra.mxu0 0.0
  %5154 = vmatprep.subr.mxu0 0.0
  %5155 = vmatpush1.msra.mxu0 0.0
  %5156 = vmatprep.subr.mxu0 0.0
  %5157 = vmatpush1.msra.mxu0 0.0
  %5158 = vmatprep.subr.mxu0 0.0
  %5159 = vmatpush1.msra.mxu0 0.0
  %5160 = vmatprep.subr.mxu0 0.0
  %5161 = vmatpush1.msra.mxu0 0.0
  %5162 = vmatprep.subr.mxu0 0.0
  %5163 = vmatpush1.msra.mxu0 0.0
  %5164 = vmatprep.subr.mxu0 0.0
  %5165 = vmatpush1.msra.mxu0 0.0
  %5166 = vmatprep.subr.mxu0 0.0
  %5167 = vmatpush1.msra.mxu0 0.0
  %5168 = vmatprep.subr.mxu0 0.0
  %5169 = vmatpush1.msra.mxu0 0.0
  %5170 = vmatprep.subr.mxu0 0.0
  %5171 = vmatpush1.msra.mxu0 0.0
  %5172 = vmatprep.subr.mxu0 0.0
  %5173 = vmatpush1.msra.mxu0 0.0
  %5174 = vmatprep.subr.mxu0 0.0
  %5175 = vmatpush1.msra.mxu0 0.0
  %5176 = vmatprep.subr.mxu0 0.0
  %5177 = vmatpush1.msra.mxu0 0.0
  %5178 = vmatprep.subr.mxu0 0.0
  %5179 = vmatpush1.msra.mxu0 0.0
  %5180 = vmatprep.subr.mxu0 0.0
  %5181 = vmatpush1.msra.mxu0 0.0
  %5182 = vmatprep.subr.mxu0 0.0
  %5183 = vmatpush1.msra.mxu0 0.0
  %5184 = vmatprep.subr.mxu0 0.0
  %5185 = vmatpush1.msra.mxu0 0.0
  %5186 = vmatprep.subr.mxu0 0.0
  %5187 = vmatpush1.msra.mxu0 0.0
  %5188 = vmatprep.subr.mxu0 0.0
  %5189 = vmatpush1.msra.mxu0 0.0
  %5190 = vmatprep.mubr.f32.mxu0 0.0
  %5191 = vmatmul.mubr.f32.gmra.mrb[0].mxu0 %v5112
  %v5192 = vpop.f32.mrb[0].mxu0
  %v5193 = vadd.f32 %v5109, %v5192
  %v5194 = vpop.f32.mrb[0].mxu0
  %5195 = vmatprep.mubr.f32.mxu0 0.0
  %5196 = vmatmul.mubr.f32.gmra.mrb[0].mxu0 %v5115
  %v5197 = vpop.f32.mrb[0].mxu0
  %v5198 = vadd.f32 %v5109, %v5197
  %v5199 = vpop.f32.mrb[0].mxu0
  %5200 = vmatprep.mubr.f32.mxu0 0.0
  %5201 = vmatmul.mubr.f32.gmra.mrb[0].mxu0 %v5118
  %v5202 = vpop.f32.mrb[0].mxu0
  %v5203 = vadd.f32 %v5109, %v5202
  %v5204 = vpop.f32.mrb[0].mxu0
  %5205 = vmatprep.mubr.f32.mxu0 0.0
  %5206 = vmatmul.mubr.f32.gmra.mrb[0].mxu0 %v5121
  %v5207 = vpop.f32.mrb[0].mxu0
  %v5208 = vadd.f32 %v5109, %v5207
  %v5209 = vpop.f32.mrb[0].mxu0
  %5210 = vdwg.mxu0
  %v5211 = vmax.f32 %v5193, 0.0
  %v5212 = vmax.f32 %v5198, 0.0
  %v5213 = vmax.f32 %v5203, 0.0
  %v5214 = vmax.f32 %v5208, 0.0
  %5215 = vmatprep.subr.mxu0 0.0
  %5216 = vmatpush1.msra.mxu0 %v5211
  %5217 = vmatprep.subr.mxu0 0.0
  %5218 = vmatpush1.msra.mxu0 %v5212
  %5219 = vmatprep.subr.mxu0 0.0
  %5220 = vmatpush1.msra.mxu0 %v5213
  %5221 = vmatprep.subr.mxu0 0.0
  %5222 = vmatpush1.msra.mxu0 %v5214
  %5223 = vmatprep.subr.mxu0 0.0
  %5224 = vmatpush1.msra.mxu0 0.0
  %5225 = vmatprep.subr.mxu0 0.0
  %5226 = vmatpush1.msra.mxu0 0.0
  %5227 = vmatprep.subr.mxu0 0.0
  %5228 = vmatpush1.msra.mxu0 0.0
  %5229 = vmatprep.subr.mxu0 0.0
  %5230 = vmatpush1.msra.mxu0 0.0
  %5231 = vmatprep.subr.mxu0 0.0
  %5232 = vmatpush1.msra.mxu0 0.0
  %5233 = vmatprep.subr.mxu0 0.0
  %5234 = vmatpush1.msra.mxu0 0.0
  %5235 = vmatprep.subr.mxu0 0.0
  %5236 = vmatpush1.msra.mxu0 0.0
  %5237 = vmatprep.subr.mxu0 0.0
  %5238 = vmatpush1.msra.mxu0 0.0
  %5239 = vmatprep.subr.mxu0 0.0
  %5240 = vmatpush1.msra.mxu0 0.0
  %5241 = vmatprep.subr.mxu0 0.0
  %5242 = vmatpush1.msra.mxu0 0.0
  %5243 = vmatprep.subr.mxu0 0.0
  %5244 = vmatpush1.msra.mxu0 0.0
  %5245 = vmatprep.subr.mxu0 0.0
  %5246 = vmatpush1.msra.mxu0 0.0
  %5247 = vmatprep.subr.mxu0 0.0
  %5248 = vmatpush1.msra.mxu0 0.0
  %5249 = vmatprep.subr.mxu0 0.0
  %5250 = vmatpush1.msra.mxu0 0.0
  %5251 = vmatprep.subr.mxu0 0.0
  %5252 = vmatpush1.msra.mxu0 0.0
  %5253 = vmatprep.subr.mxu0 0.0
  %5254 = vmatpush1.msra.mxu0 0.0
  %5255 = vmatprep.subr.mxu0 0.0
  %5256 = vmatpush1.msra.mxu0 0.0
  %5257 = vmatprep.subr.mxu0 0.0
  %5258 = vmatpush1.msra.mxu0 0.0
  %5259 = vmatprep.subr.mxu0 0.0
  %5260 = vmatpush1.msra.mxu0 0.0
  %5261 = vmatprep.subr.mxu0 0.0
  %5262 = vmatpush1.msra.mxu0 0.0
  %5263 = vmatprep.subr.mxu0 0.0
  %5264 = vmatpush1.msra.mxu0 0.0
  %5265 = vmatprep.subr.mxu0 0.0
  %5266 = vmatpush1.msra.mxu0 0.0
  %5267 = vmatprep.subr.mxu0 0.0
  %5268 = vmatpush1.msra.mxu0 0.0
  %5269 = vmatprep.subr.mxu0 0.0
  %5270 = vmatpush1.msra.mxu0 0.0
  %5271 = vmatprep.subr.mxu0 0.0
  %5272 = vmatpush1.msra.mxu0 0.0
  %5273 = vmatprep.subr.mxu0 0.0
  %5274 = vmatpush1.msra.mxu0 0.0
  %5275 = vmatprep.subr.mxu0 0.0
  %5276 = vmatpush1.msra.mxu0 0.0
  %5277 = vmatprep.subr.mxu0 0.0
  %5278 = vmatpush1.msra.mxu0 0.0
  %5279 = vmatprep.mubr.f32.mxu0 0.0
  %5280 = vmatmul.mubr.f32.gmra.mrb[0].mxu0 %v3060
  %v5281 = vpop.f32.mrb[0].mxu0
  %v5282 = vadd.f32 0.0, %v5281
  %v5283 = vpop.f32.mrb[0].mxu0
  %5284 = vmatprep.mubr.f32.mxu0 0.0
  %5285 = vmatmul.mubr.f32.gmra.mrb[0].mxu0 %v3063
  %v5286 = vpop.f32.mrb[0].mxu0
  %v5287 = vadd.f32 0.0, %v5286
  %v5288 = vpop.f32.mrb[0].mxu0
  %5289 = vdwg.mxu0
  %5292 = vrot.lane.b32.xlu0 %v5282, 32
  %v5293 = vpop.permute.xlu0 %5292
  %5294 = vrot.lane.b32.xlu0 %v5287, 32
  %v5295 = vpop.permute.xlu0 %5294
  %v5298 = vsel %vm2449, %v4999, %v5293
  %v5299 = vsel %vm2449, %v5000, %v5295
  %v5301 = vlaneseq
  %v5302 = vshrl.u32 %v5301, 7
  %v5303 = vsub.s32 0, %v5302
  %v5304 = vrot.slane %v5015, %v5303
  %v5307 = vsel %vm2633, %v5298, 0
  %v5310 = vsel %vm2633, %v5299, 0
  %5312 = vmatprep.subr.mxu0 0.0
  %5313 = vmatpush1.msra.mxu0 %v5007
  %5314 = vmatprep.subr.mxu0 0.0
  %5315 = vmatpush1.msra.mxu0 %v5008
  %5316 = vmatprep.subr.mxu0 0.0
  %5317 = vmatpush1.msra.mxu0 %v5009
  %5318 = vmatprep.subr.mxu0 0.0
  %5319 = vmatpush1.msra.mxu0 %v5010
  %5320 = vmatprep.subr.mxu0 0.0
  %5321 = vmatpush1.msra.mxu0 %v5011
  %5322 = vmatprep.subr.mxu0 0.0
  %5323 = vmatpush1.msra.mxu0 %v5012
  %5324 = vmatprep.subr.mxu0 0.0
  %5325 = vmatpush1.msra.mxu0 %v5013
  %5326 = vmatprep.subr.mxu0 0.0
  %5327 = vmatpush1.msra.mxu0 %v5014
  %5328 = vmatprep.subr.mxu0 0.0
  %5329 = vmatpush1.msra.mxu0 0.0
  %5330 = vmatprep.subr.mxu0 0.0
  %5331 = vmatpush1.msra.mxu0 0.0
  %5332 = vmatprep.subr.mxu0 0.0
  %5333 = vmatpush1.msra.mxu0 0.0
  %5334 = vmatprep.subr.mxu0 0.0
  %5335 = vmatpush1.msra.mxu0 0.0
  %5336 = vmatprep.subr.mxu0 0.0
  %5337 = vmatpush1.msra.mxu0 0.0
  %5338 = vmatprep.subr.mxu0 0.0
  %5339 = vmatpush1.msra.mxu0 0.0
  %5340 = vmatprep.subr.mxu0 0.0
  %5341 = vmatpush1.msra.mxu0 0.0
  %5342 = vmatprep.subr.mxu0 0.0
  %5343 = vmatpush1.msra.mxu0 0.0
  %5344 = vmatprep.subr.mxu0 0.0
  %5345 = vmatpush1.msra.mxu0 0.0
  %5346 = vmatprep.subr.mxu0 0.0
  %5347 = vmatpush1.msra.mxu0 0.0
  %5348 = vmatprep.subr.mxu0 0.0
  %5349 = vmatpush1.msra.mxu0 0.0
  %5350 = vmatprep.subr.mxu0 0.0
  %5351 = vmatpush1.msra.mxu0 0.0
  %5352 = vmatprep.subr.mxu0 0.0
  %5353 = vmatpush1.msra.mxu0 0.0
  %5354 = vmatprep.subr.mxu0 0.0
  %5355 = vmatpush1.msra.mxu0 0.0
  %5356 = vmatprep.subr.mxu0 0.0
  %5357 = vmatpush1.msra.mxu0 0.0
  %5358 = vmatprep.subr.mxu0 0.0
  %5359 = vmatpush1.msra.mxu0 0.0
  %5360 = vmatprep.subr.mxu0 0.0
  %5361 = vmatpush1.msra.mxu0 0.0
  %5362 = vmatprep.subr.mxu0 0.0
  %5363 = vmatpush1.msra.mxu0 0.0
  %5364 = vmatprep.subr.mxu0 0.0
  %5365 = vmatpush1.msra.mxu0 0.0
  %5366 = vmatprep.subr.mxu0 0.0
  %5367 = vmatpush1.msra.mxu0 0.0
  %5368 = vmatprep.subr.mxu0 0.0
  %5369 = vmatpush1.msra.mxu0 0.0
  %5370 = vmatprep.subr.mxu0 0.0
  %5371 = vmatpush1.msra.mxu0 0.0
  %5372 = vmatprep.subr.mxu0 0.0
  %5373 = vmatpush1.msra.mxu0 0.0
  %5374 = vmatprep.subr.mxu0 0.0
  %5375 = vmatpush1.msra.mxu0 0.0
  %5376 = vmatprep.mubr.f32.mxu0 0.0
  %5377 = vmatmul.mubr.f32.gmra.mrb[0].mxu0 %v5307
  %v5378 = vpop.f32.mrb[0].mxu0
  %v5379 = vadd.f32 %v5304, %v5378
  %v5380 = vpop.f32.mrb[0].mxu0
  %5381 = vmatprep.mubr.f32.mxu0 0.0
  %5382 = vmatmul.mubr.f32.gmra.mrb[0].mxu0 %v5310
  %v5383 = vpop.f32.mrb[0].mxu0
  %v5384 = vadd.f32 %v5304, %v5383
  %v5385 = vpop.f32.mrb[0].mxu0
  %5386 = vdwg.mxu0
  %v5387 = vmax.f32 %v5379, 0.0
  %v5388 = vmax.f32 %v5384, 0.0
  %v5389 = vld [vmem:[%s109] sm:$0xff]
  %v5390 = vld [vmem:[%s109 + $0x8] sm:$0xff]
  %v5391 = vld [vmem:[%s109 + $0x10] sm:$0xff]
  %v5392 = vld [vmem:[%s109 + $0x18] sm:$0xff]
  %v5393 = vld [vmem:[%s111] sm:$0x1]
  %v5395 = vlaneseq
  %v5396 = vshrl.u32 %v5395, 7
  %v5397 = vsub.s32 0, %v5396
  %v5398 = vrot.slane %v5393, %v5397
  %v5401 = vsel %vm2449, %v5387, 0
  %v5404 = vsel %vm2449, %v5388, 0
  %5406 = vmatprep.subr.mxu0 0.0
  %5407 = vmatpush1.msra.mxu0 %v5389
  %5408 = vmatprep.subr.mxu0 0.0
  %5409 = vmatpush1.msra.mxu0 %v5390
  %5410 = vmatprep.subr.mxu0 0.0
  %5411 = vmatpush1.msra.mxu0 %v5391
  %5412 = vmatprep.subr.mxu0 0.0
  %5413 = vmatpush1.msra.mxu0 %v5392
  %5414 = vmatprep.subr.mxu0 0.0
  %5415 = vmatpush1.msra.mxu0 0.0
  %5416 = vmatprep.subr.mxu0 0.0
  %5417 = vmatpush1.msra.mxu0 0.0
  %5418 = vmatprep.subr.mxu0 0.0
  %5419 = vmatpush1.msra.mxu0 0.0
  %5420 = vmatprep.subr.mxu0 0.0
  %5421 = vmatpush1.msra.mxu0 0.0
  %5422 = vmatprep.subr.mxu0 0.0
  %5423 = vmatpush1.msra.mxu0 0.0
  %5424 = vmatprep.subr.mxu0 0.0
  %5425 = vmatpush1.msra.mxu0 0.0
  %5426 = vmatprep.subr.mxu0 0.0
  %5427 = vmatpush1.msra.mxu0 0.0
  %5428 = vmatprep.subr.mxu0 0.0
  %5429 = vmatpush1.msra.mxu0 0.0
  %5430 = vmatprep.subr.mxu0 0.0
  %5431 = vmatpush1.msra.mxu0 0.0
  %5432 = vmatprep.subr.mxu0 0.0
  %5433 = vmatpush1.msra.mxu0 0.0
  %5434 = vmatprep.subr.mxu0 0.0
  %5435 = vmatpush1.msra.mxu0 0.0
  %5436 = vmatprep.subr.mxu0 0.0
  %5437 = vmatpush1.msra.mxu0 0.0
  %5438 = vmatprep.subr.mxu0 0.0
  %5439 = vmatpush1.msra.mxu0 0.0
  %5440 = vmatprep.subr.mxu0 0.0
  %5441 = vmatpush1.msra.mxu0 0.0
  %5442 = vmatprep.subr.mxu0 0.0
  %5443 = vmatpush1.msra.mxu0 0.0
  %5444 = vmatprep.subr.mxu0 0.0
  %5445 = vmatpush1.msra.mxu0 0.0
  %5446 = vmatprep.subr.mxu0 0.0
  %5447 = vmatpush1.msra.mxu0 0.0
  %5448 = vmatprep.subr.mxu0 0.0
  %5449 = vmatpush1.msra.mxu0 0.0
  %5450 = vmatprep.subr.mxu0 0.0
  %5451 = vmatpush1.msra.mxu0 0.0
  %5452 = vmatprep.subr.mxu0 0.0
  %5453 = vmatpush1.msra.mxu0 0.0
  %5454 = vmatprep.subr.mxu0 0.0
  %5455 = vmatpush1.msra.mxu0 0.0
  %5456 = vmatprep.subr.mxu0 0.0
  %5457 = vmatpush1.msra.mxu0 0.0
  %5458 = vmatprep.subr.mxu0 0.0
  %5459 = vmatpush1.msra.mxu0 0.0
  %5460 = vmatprep.subr.mxu0 0.0
  %5461 = vmatpush1.msra.mxu0 0.0
  %5462 = vmatprep.subr.mxu0 0.0
  %5463 = vmatpush1.msra.mxu0 0.0
  %5464 = vmatprep.subr.mxu0 0.0
  %5465 = vmatpush1.msra.mxu0 0.0
  %5466 = vmatprep.subr.mxu0 0.0
  %5467 = vmatpush1.msra.mxu0 0.0
  %5468 = vmatprep.subr.mxu0 0.0
  %5469 = vmatpush1.msra.mxu0 0.0
  %5470 = vmatprep.mubr.f32.mxu0 0.0
  %5471 = vmatmul.mubr.f32.gmra.mrb[0].mxu0 %v5401
  %v5472 = vpop.f32.mrb[0].mxu0
  %v5473 = vadd.f32 %v5398, %v5472
  %v5474 = vpop.f32.mrb[0].mxu0
  %5475 = vmatprep.mubr.f32.mxu0 0.0
  %5476 = vmatmul.mubr.f32.gmra.mrb[0].mxu0 %v5404
  %v5477 = vpop.f32.mrb[0].mxu0
  %v5478 = vadd.f32 %v5398, %v5477
  %v5479 = vpop.f32.mrb[0].mxu0
  %5480 = vdwg.mxu0
  %v5481 = vmax.f32 %v5473, 0.0
  %v5482 = vmax.f32 %v5478, 0.0
  %v5483 = vld [vmem:[%s113] sm:$0xff]
  %v5484 = vld [vmem:[%s113 + $0x8] sm:$0xff]
  %v5485 = vld [vmem:[%s115] sm:$0x1]
  %v5487 = vlaneseq
  %v5488 = vshrl.u32 %v5487, 7
  %v5489 = vsub.s32 0, %v5488
  %v5490 = vrot.slane %v5485, %v5489
  %v5493 = vsel %vm458, %v5481, 0
  %v5496 = vsel %vm458, %v5482, 0
  %5498 = vmatprep.subr.mxu0 0.0
  %5499 = vmatpush1.msra.mxu0 %v5483
  %5500 = vmatprep.subr.mxu0 0.0
  %5501 = vmatpush1.msra.mxu0 %v5484
  %5502 = vmatprep.subr.mxu0 0.0
  %5503 = vmatpush1.msra.mxu0 0.0
  %5504 = vmatprep.subr.mxu0 0.0
  %5505 = vmatpush1.msra.mxu0 0.0
  %5506 = vmatprep.subr.mxu0 0.0
  %5507 = vmatpush1.msra.mxu0 0.0
  %5508 = vmatprep.subr.mxu0 0.0
  %5509 = vmatpush1.msra.mxu0 0.0
  %5510 = vmatprep.subr.mxu0 0.0
  %5511 = vmatpush1.msra.mxu0 0.0
  %5512 = vmatprep.subr.mxu0 0.0
  %5513 = vmatpush1.msra.mxu0 0.0
  %5514 = vmatprep.subr.mxu0 0.0
  %5515 = vmatpush1.msra.mxu0 0.0
  %5516 = vmatprep.subr.mxu0 0.0
  %5517 = vmatpush1.msra.mxu0 0.0
  %5518 = vmatprep.subr.mxu0 0.0
  %5519 = vmatpush1.msra.mxu0 0.0
  %5520 = vmatprep.subr.mxu0 0.0
  %5521 = vmatpush1.msra.mxu0 0.0
  %5522 = vmatprep.subr.mxu0 0.0
  %5523 = vmatpush1.msra.mxu0 0.0
  %5524 = vmatprep.subr.mxu0 0.0
  %5525 = vmatpush1.msra.mxu0 0.0
  %5526 = vmatprep.subr.mxu0 0.0
  %5527 = vmatpush1.msra.mxu0 0.0
  %5528 = vmatprep.subr.mxu0 0.0
  %5529 = vmatpush1.msra.mxu0 0.0
  %5530 = vmatprep.subr.mxu0 0.0
  %5531 = vmatpush1.msra.mxu0 0.0
  %5532 = vmatprep.subr.mxu0 0.0
  %5533 = vmatpush1.msra.mxu0 0.0
  %5534 = vmatprep.subr.mxu0 0.0
  %5535 = vmatpush1.msra.mxu0 0.0
  %5536 = vmatprep.subr.mxu0 0.0
  %5537 = vmatpush1.msra.mxu0 0.0
  %5538 = vmatprep.subr.mxu0 0.0
  %5539 = vmatpush1.msra.mxu0 0.0
  %5540 = vmatprep.subr.mxu0 0.0
  %5541 = vmatpush1.msra.mxu0 0.0
  %5542 = vmatprep.subr.mxu0 0.0
  %5543 = vmatpush1.msra.mxu0 0.0
  %5544 = vmatprep.subr.mxu0 0.0
  %5545 = vmatpush1.msra.mxu0 0.0
  %5546 = vmatprep.subr.mxu0 0.0
  %5547 = vmatpush1.msra.mxu0 0.0
  %5548 = vmatprep.subr.mxu0 0.0
  %5549 = vmatpush1.msra.mxu0 0.0
  %5550 = vmatprep.subr.mxu0 0.0
  %5551 = vmatpush1.msra.mxu0 0.0
  %5552 = vmatprep.subr.mxu0 0.0
  %5553 = vmatpush1.msra.mxu0 0.0
  %5554 = vmatprep.subr.mxu0 0.0
  %5555 = vmatpush1.msra.mxu0 0.0
  %5556 = vmatprep.subr.mxu0 0.0
  %5557 = vmatpush1.msra.mxu0 0.0
  %5558 = vmatprep.subr.mxu0 0.0
  %5559 = vmatpush1.msra.mxu0 0.0
  %5560 = vmatprep.subr.mxu0 0.0
  %5561 = vmatpush1.msra.mxu0 0.0
  %5562 = vmatprep.mubr.f32.mxu0 0.0
  %5563 = vmatmul.mubr.f32.gmra.mrb[0].mxu0 %v5493
  %v5564 = vpop.f32.mrb[0].mxu0
  %v5565 = vadd.f32 %v5490, %v5564
  %v5566 = vpop.f32.mrb[0].mxu0
  %5567 = vmatprep.mubr.f32.mxu0 0.0
  %5568 = vmatmul.mubr.f32.gmra.mrb[0].mxu0 %v5496
  %v5569 = vpop.f32.mrb[0].mxu0
  %v5570 = vadd.f32 %v5490, %v5569
  %v5571 = vpop.f32.mrb[0].mxu0
  %5572 = vdwg.mxu0
  %5573 = vst [vmem:[%s117] sm:$0xff] %v5565
  %5574 = vst [vmem:[%s117 + $0x8] sm:$0xff] %v5570
  // Predicated region
  $region234: #{gagnn_forward.1} parent=0 // pred_check
    _
  $region235: #{gagnn_forward.1} parent=0 // pred_check_branch
    %5576 = sbr.rel (0) target = $region237
  $region236: #{gagnn_forward.1} parent=0 // pred_region
    _
  $region237: #{gagnn_forward.1} parent=0 // pred_fallthru
    _
  // Predicated region
  $region238: #{gagnn_forward.1} parent=0 // pred_check
    _
  $region239: #{gagnn_forward.1} parent=0 // pred_check_branch
    %5578 = sbr.rel (0) target = $region241
  $region240: #{gagnn_forward.1} parent=0 // pred_region
    _
  $region241: #{gagnn_forward.1} parent=0 // pred_fallthru
    _

</llo_original>
